<compile_context>
chip_gen: v7x
topology: tpu7x:2x2x1
jax: 0.10.0
libtpu: 0.0.40
codegen_flags: <defaults>
</compile_context>

<pallas_src>
import math
import functools

import jax
import jax.numpy as jnp
from jax.experimental import pallas as pl
from jax.experimental.pallas import tpu as pltpu


# ----------------------------------------------------------------------------
# TPU sizing helpers (per-generation row tile + VMEM limit)
# ----------------------------------------------------------------------------

def _tpu_vmem_bytes():
    try:
        return int(pltpu.get_tpu_info().vmem_capacity_bytes)
    except Exception:
        return 64 << 20          # conservative (v7x-sized) fallback

_VMEM_BYTES = _tpu_vmem_bytes()
# v5e/v6e have 128 MiB VMEM -> 512-row tiles; v7x has 64 MiB per TC -> 256-row tiles.
_ROW_TILE = 512 if _VMEM_BYTES >= (96 << 20) else 256
_VMEM_LIMIT = min(int(_VMEM_BYTES * 3 // 4), 96 << 20)

_LN_EPS = 1e-5
_INV_SQRT2 = 1.0 / math.sqrt(2.0)


def _row_tile(m):
    return m if m <= _ROW_TILE else _ROW_TILE


def _cparams(dim_sems):
    return pltpu.CompilerParams(dimension_semantics=dim_sems,
                                vmem_limit_bytes=_VMEM_LIMIT)


# ----------------------------------------------------------------------------
# Pallas kernels
# ----------------------------------------------------------------------------

def _qkv_kernel(x_ref, wq_ref, wk_ref, wv_ref, bq_ref, bk_ref, bv_ref,
                q_ref, k_ref, v_ref, *, scale):
    # Fused Q/K/V projection: one x-tile read, three MXU matmuls (bf16 in, f32 acc).
    # q/k scaling (1/sqrt(sqrt(head_dim))) fused with the bias add (VPU, free slot).
    x = x_ref[...].astype(jnp.bfloat16)
    q_ref[...] = (jnp.dot(x, wq_ref[...], preferred_element_type=jnp.float32)
                  + bq_ref[...]) * scale
    k_ref[...] = (jnp.dot(x, wk_ref[...], preferred_element_type=jnp.float32)
                  + bk_ref[...]) * scale
    v_ref[...] = jnp.dot(x, wv_ref[...], preferred_element_type=jnp.float32) + bv_ref[...]


def _linear_kernel(x_ref, w_ref, b_ref, o_ref):
    o_ref[...] = (jnp.dot(x_ref[...].astype(jnp.bfloat16), w_ref[...],
                          preferred_element_type=jnp.float32) + b_ref[...]).astype(o_ref.dtype)


def _mlp_kernel(x_ref, w1_ref, b1_ref, w2_ref, b2_ref, o_ref):
    h = jnp.dot(x_ref[...].astype(jnp.bfloat16), w1_ref[...],
                preferred_element_type=jnp.float32) + b1_ref[...]
    # exact (erf-based) GELU in f32, matching torch.nn.functional.gelu default
    h = 0.5 * h * (1.0 + jax.lax.erf(h * _INV_SQRT2))
    o_ref[...] = (jnp.dot(h.astype(jnp.bfloat16), w2_ref[...],
                          preferred_element_type=jnp.float32) + b2_ref[...]).astype(o_ref.dtype)


def _layernorm_kernel(x_ref, g_ref, b_ref, o_ref):
    x = x_ref[...]
    mean = jnp.mean(x, axis=-1, keepdims=True)
    var = jnp.mean((x - mean) ** 2, axis=-1, keepdims=True)
    o_ref[...] = (x - mean) * jax.lax.rsqrt(var + _LN_EPS) * g_ref[...] + b_ref[...]


def _add_layernorm_kernel(x_ref, r_ref, g_ref, b_ref, o_ref):
    # Fused residual add + LayerNorm (post-norm block), one pass over the rows.
    x = x_ref[...] + r_ref[...]
    mean = jnp.mean(x, axis=-1, keepdims=True)
    var = jnp.mean((x - mean) ** 2, axis=-1, keepdims=True)
    o_ref[...] = (x - mean) * jax.lax.rsqrt(var + _LN_EPS) * g_ref[...] + b_ref[...]


def _softmax_rows(x):
    # softmax along last axis, f32; reciprocal goes to EUP (free bundle slot)
    x = x - jnp.max(x, axis=-1, keepdims=True)
    e = jnp.exp(x)
    return e * pl.reciprocal(jnp.sum(e, axis=-1, keepdims=True), approx=True)


def _merge_heads_dense_out(attn, wo, bo):
    # Fused head-merge + dense_out:  out = sum_h attn_h @ Wo_h + bo
    # -> lane-dense (S, emb_dim) result, no combine-heads transpose in VMEM/HBM.
    H, S, _ = attn.shape
    acc = jnp.zeros((S, wo.shape[-1]), dtype=jnp.float32)
    for h in range(H):      # H is small & static; unrolled MXU matmuls
        acc = acc + jnp.dot(attn[h].astype(jnp.bfloat16), wo[h],
                            preferred_element_type=jnp.float32)
    return acc + bo


def _nystrom_attn_kernel(inv_ref, q_ref, k_ref, v_ref, ql_ref, kl_ref, wo_ref, bo_ref,
                         o_ref, *, n_iter):
    # One batch element, ALL heads at once (batched einsums over the head axis).
    f32, bf16 = jnp.float32, jnp.bfloat16

    q = q_ref[0]              # (H, S, d)  f32 (q/k already scaled in the QKV kernel)
    k = k_ref[0]              # (H, S, d)
    v = v_ref[0]              # (H, S, d)
    ql = ql_ref[0]            # (H, m, d)
    kl = kl_ref[0]            # (H, m, d)
    H, S, d = q.shape
    m = ql.shape[1]

    qb, kb, vb = q.astype(bf16), k.astype(bf16), v.astype(bf16)
    qlb, klb = ql.astype(bf16), kl.astype(bf16)

    # Contractions over the last dims (no materialized transposes of K / K_landmarks).
    kernel_1 = _softmax_rows(jnp.einsum("hsd,hmd->hsm", qb, klb,
                                        preferred_element_type=f32))     # (H, S, m)
    kernel_2 = _softmax_rows(jnp.einsum("hmd,hnd->hmn", ql, kl,
                                        preferred_element_type=f32))     # (H, m, m) f32
    kernel_3 = _softmax_rows(jnp.einsum("hmd,hsd->hms", qlb, kb,
                                        preferred_element_type=f32))     # (H, m, S)

    # Newton-Schulz pseudo-inverse of kernel_2 (batched over heads, f32).
    eye = jnp.broadcast_to(jnp.eye(m, dtype=f32), (H, m, m))
    inv0 = inv_ref[0]                                    # global 'original'-init scalar (SMEM)
    Vmat = inv0 * jnp.swapaxes(kernel_2, -1, -2)         # (H, m, m) batched transpose (XLU)
    for _ in range(n_iter):                              # n_iter static -> unrolled
        KV = jnp.einsum("hij,hjk->hik", kernel_2, Vmat, preferred_element_type=f32)
        t = 7.0 * eye - KV
        t = 15.0 * eye - jnp.einsum("hij,hjk->hik", KV, t, preferred_element_type=f32)
        t = 13.0 * eye - jnp.einsum("hij,hjk->hik", KV, t, preferred_element_type=f32)
        Vmat = 0.25 * jnp.einsum("hij,hjk->hik", Vmat, t, preferred_element_type=f32)

    k3v = jnp.einsum("hms,hsd->hmd", kernel_3.astype(bf16), vb,
                     preferred_element_type=f32)                         # (H, m, d)
    left = jnp.einsum("hsm,hmn->hsn", kernel_1.astype(bf16), Vmat.astype(bf16),
                      preferred_element_type=f32)                        # (H, S, m)
    attn = jnp.einsum("hsn,hnd->hsd", left.astype(bf16), k3v.astype(bf16),
                      preferred_element_type=f32)                        # (H, S, d)

    o_ref[0] = _merge_heads_dense_out(attn, wo_ref[...], bo_ref[...])


def _full_attn_kernel(q_ref, k_ref, v_ref, wo_ref, bo_ref, o_ref):
    # num_landmarks == full_len branch of the reference: plain softmax attention.
    f32, bf16 = jnp.float32, jnp.bfloat16
    q = q_ref[0]; k = k_ref[0]; v = v_ref[0]              # (H, S, d)
    qb, kb, vb = q.astype(bf16), k.astype(bf16), v.astype(bf16)
    s = jnp.einsum("hsd,htd->hst", qb, kb, preferred_element_type=f32)   # (H, S, S)
    p = _softmax_rows(s)
    attn = jnp.einsum("hst,htd->hsd", p.astype(bf16), vb,
                      preferred_element_type=f32)                        # (H, S, d)
    o_ref[0] = _merge_heads_dense_out(attn, wo_ref[...], bo_ref[...])


# ----------------------------------------------------------------------------
# Pallas wrappers (row-tiled, pipelined)
# ----------------------------------------------------------------------------

def pallas_qkv(x2d, wq, bq, wk, bk, wv, bv, scale):
    M, E = x2d.shape
    N = wq.shape[1]
    tm = _row_tile(M)
    x_spec = pl.BlockSpec((tm, E), lambda i: (i, 0))
    w_spec = pl.BlockSpec((E, N), lambda i: (0, 0))
    b_spec = pl.BlockSpec((1, N), lambda i: (0, 0))
    o_spec = pl.BlockSpec((tm, N), lambda i: (i, 0))
    out_sds = jax.ShapeDtypeStruct((M, N), jnp.float32)
    return pl.pallas_call(
        functools.partial(_qkv_kernel, scale=float(scale)),
        out_shape=(out_sds, out_sds, out_sds),
        grid=(pl.cdiv(M, tm),),
        in_specs=[x_spec, w_spec, w_spec, w_spec, b_spec, b_spec, b_spec],
        out_specs=(o_spec, o_spec, o_spec),
        compiler_params=_cparams(("parallel",)),
    )(x2d,
      wq.astype(jnp.bfloat16), wk.astype(jnp.bfloat16), wv.astype(jnp.bfloat16),
      bq.reshape(1, -1), bk.reshape(1, -1), bv.reshape(1, -1))


def pallas_linear(x2d, w, b):
    M, K = x2d.shape
    N = w.shape[1]
    tm = _row_tile(M)
    return pl.pallas_call(
        _linear_kernel,
        out_shape=jax.ShapeDtypeStruct((M, N), jnp.float32),
        grid=(pl.cdiv(M, tm),),
        in_specs=[pl.BlockSpec((tm, K), lambda i: (i, 0)),
                  pl.BlockSpec((K, N), lambda i: (0, 0)),
                  pl.BlockSpec((1, N), lambda i: (0, 0))],
        out_specs=pl.BlockSpec((tm, N), lambda i: (i, 0)),
        compiler_params=_cparams(("parallel",)),
    )(x2d, w.astype(jnp.bfloat16), b.reshape(1, -1))


def pallas_mlp(x2d, w1, b1, w2, b2):
    M, E = x2d.shape
    Fd = w1.shape[1]
    tm = _row_tile(M)
    return pl.pallas_call(
        _mlp_kernel,
        out_shape=jax.ShapeDtypeStruct((M, E), jnp.float32),
        grid=(pl.cdiv(M, tm),),
        in_specs=[pl.BlockSpec((tm, E), lambda i: (i, 0)),
                  pl.BlockSpec((E, Fd), lambda i: (0, 0)),
                  pl.BlockSpec((1, Fd), lambda i: (0, 0)),
                  pl.BlockSpec((Fd, E), lambda i: (0, 0)),
                  pl.BlockSpec((1, E), lambda i: (0, 0))],
        out_specs=pl.BlockSpec((tm, E), lambda i: (i, 0)),
        compiler_params=_cparams(("parallel",)),
    )(x2d, w1.astype(jnp.bfloat16), b1.reshape(1, -1),
      w2.astype(jnp.bfloat16), b2.reshape(1, -1))


def pallas_layernorm(x3d, g, b):
    B, S, E = x3d.shape
    M = B * S
    tm = _row_tile(M)
    y = pl.pallas_call(
        _layernorm_kernel,
        out_shape=jax.ShapeDtypeStruct((M, E), jnp.float32),
        grid=(pl.cdiv(M, tm),),
        in_specs=[pl.BlockSpec((tm, E), lambda i: (i, 0)),
                  pl.BlockSpec((1, E), lambda i: (0, 0)),
                  pl.BlockSpec((1, E), lambda i: (0, 0))],
        out_specs=pl.BlockSpec((tm, E), lambda i: (i, 0)),
        compiler_params=_cparams(("parallel",)),
    )(x3d.reshape(M, E), g.reshape(1, -1), b.reshape(1, -1))
    return y.reshape(B, S, E)


def pallas_add_layernorm(x3d, res3d, g, b):
    B, S, E = x3d.shape
    M = B * S
    tm = _row_tile(M)
    y = pl.pallas_call(
        _add_layernorm_kernel,
        out_shape=jax.ShapeDtypeStruct((M, E), jnp.float32),
        grid=(pl.cdiv(M, tm),),
        in_specs=[pl.BlockSpec((tm, E), lambda i: (i, 0)),
                  pl.BlockSpec((tm, E), lambda i: (i, 0)),
                  pl.BlockSpec((1, E), lambda i: (0, 0)),
                  pl.BlockSpec((1, E), lambda i: (0, 0))],
        out_specs=pl.BlockSpec((tm, E), lambda i: (i, 0)),
        compiler_params=_cparams(("parallel",)),
    )(x3d.reshape(M, E), res3d.reshape(M, E), g.reshape(1, -1), b.reshape(1, -1))
    return y.reshape(B, S, E)


def nystrom_attention_core(q, k, v, ql, kl, inv_max, wo_heads, bo, *, n_iter=6):
    """q,k,v: (B,H,S,d); ql,kl: (B,H,m,d); wo_heads: (H,d,E) bf16; bo: (E,)."""
    B, H, S, d = q.shape
    m = ql.shape[2]
    E = wo_heads.shape[-1]
    kern = functools.partial(_nystrom_attn_kernel, n_iter=n_iter)
    spec_qkv = pl.BlockSpec((1, H, S, d), lambda b: (b, 0, 0, 0))
    spec_lm = pl.BlockSpec((1, H, m, d), lambda b: (b, 0, 0, 0))
    spec_wo = pl.BlockSpec((H, d, E), lambda b: (0, 0, 0))
    spec_bo = pl.BlockSpec((1, E), lambda b: (0, 0))
    spec_inv = pl.BlockSpec(memory_space=pltpu.MemorySpace.SMEM)   # scalar lives in SMEM
    return pl.pallas_call(
        kern,
        out_shape=jax.ShapeDtypeStruct((B, S, E), jnp.float32),
        grid=(B,),
        in_specs=[spec_inv, spec_qkv, spec_qkv, spec_qkv, spec_lm, spec_lm,
                  spec_wo, spec_bo],
        out_specs=pl.BlockSpec((1, S, E), lambda b: (b, 0, 0)),
        compiler_params=_cparams(("parallel",)),
    )(inv_max.reshape(1).astype(jnp.float32), q, k, v, ql, kl,
      wo_heads, bo.reshape(1, -1))


def full_attention_core(q, k, v, wo_heads, bo):
    """Plain softmax attention (num_landmarks == full_len branch)."""
    B, H, S, d = q.shape
    E = wo_heads.shape[-1]
    spec_qkv = pl.BlockSpec((1, H, S, d), lambda b: (b, 0, 0, 0))
    spec_wo = pl.BlockSpec((H, d, E), lambda b: (0, 0, 0))
    spec_bo = pl.BlockSpec((1, E), lambda b: (0, 0))
    return pl.pallas_call(
        _full_attn_kernel,
        out_shape=jax.ShapeDtypeStruct((B, S, E), jnp.float32),
        grid=(B,),
        in_specs=[spec_qkv, spec_qkv, spec_qkv, spec_wo, spec_bo],
        out_specs=pl.BlockSpec((1, S, E), lambda b: (b, 0, 0)),
        compiler_params=_cparams(("parallel",)),
    )(q, k, v, wo_heads, bo.reshape(1, -1))


# ----------------------------------------------------------------------------
# Model glue (plain JAX: padding, head split, landmark means, pooling)
# ----------------------------------------------------------------------------

def nystrom_attention(p, x, num_heads, num_landmarks, n_iter=6):
    B, S, E = x.shape
    m = num_landmarks
    if S % m != 0:
        pad_len = m - S % m
        full_len = S + pad_len
        x = jnp.pad(x, ((0, 0), (0, pad_len), (0, 0)))   # pad_tensor: zero-pad along seq
    else:
        full_len = S

    qkv_dim = p["wq"].shape[1]
    head_dim = qkv_dim // num_heads
    scale = 1.0 / math.sqrt(math.sqrt(head_dim))

    # Fused QKV projection; q/k scaling applied inside the kernel.
    xf = x.reshape(B * full_len, E)
    q, k, v = pallas_qkv(xf, p["wq"], p["bq"], p["wk"], p["bk"], p["wv"], p["bv"], scale)

    def split(t):
        return t.reshape(B, full_len, num_heads, head_dim).transpose(0, 2, 1, 3)

    q, k, v = split(q), split(k), split(v)

    # dense_out folded into the attention kernel: Wo reshaped per-head (H, d, E).
    wo_heads = p["wo"].reshape(num_heads, head_dim, E).astype(jnp.bfloat16)

    if m == full_len:
        out = full_attention_core(q, k, v, wo_heads, p["bo"])           # (B, full_len, E)
        return out[:, :S, :]

    L = full_len // m
    ql = q.reshape(B, num_heads, m, L, head_dim).mean(axis=-2)   # (B,H,m,d)
    kl = k.reshape(B, num_heads, m, L, head_dim).mean(axis=-2)

    # 'original' iterative-inverse init: global scalar 1 / max(sum(softmax(ql kl^T), dim=-2)).
    # Tiny landmark-only reduction kept in plain JAX; passed to the kernel via SMEM.
    k2_full = jax.nn.softmax(jnp.einsum("bhmd,bhnd->bhmn", ql, kl), axis=-1)
    inv_max = 1.0 / jnp.max(jnp.sum(k2_full, axis=-2))

    out = nystrom_attention_core(q, k, v, ql, kl, inv_max, wo_heads, p["bo"],
                                 n_iter=n_iter)                  # (B, full_len, E)
    return out[:, :S, :]      # drop padded rows (dense_out is row-wise -> equivalent)


def nystromformer_block(p, x, num_heads, num_landmarks):
    B, S, E = x.shape
    a = nystrom_attention(p["attn"], x, num_heads, num_landmarks)      # incl. dense_out
    x = pallas_add_layernorm(a, x, p["ln1_g"], p["ln1_b"])             # LN(residual + attn)
    h = pallas_mlp(x.reshape(B * S, E), p["mlp_w1"], p["mlp_b1"],
                   p["mlp_w2"], p["mlp_b2"]).reshape(B, S, E)
    x = pallas_add_layernorm(h, x, p["ln2_g"], p["ln2_b"])             # LN(residual + mlp)
    return x


def nystromformer_forward(params, feat, num_heads, num_landmarks, feat_select):
    B, S, E = feat.shape
    for lp in params["layers"]:
        feat = nystromformer_block(lp, feat, num_heads, num_landmarks)
    feat = pallas_layernorm(feat, params["ln_g"], params["ln_b"])
    if feat_select == "last":
        pooled = feat[:, 0, :]
    elif feat_select == "mean":
        pooled = jnp.mean(feat, axis=1)
    elif feat_select == "fc":
        # lane-width-1 matmul -> expressed as a seq-axis reduction in plain JAX
        pooled = jnp.einsum("bse,s->be", feat, params["fc_s_w"][:, 0]) + params["fc_s_b"]
    else:
        raise NotImplementedError(feat_select)
    return pallas_linear(pooled, params["fc_w"], params["fc_b"])


# ----------------------------------------------------------------------------
# Deterministic parameter init
# ----------------------------------------------------------------------------

def _linear_init(key, fan_in, fan_out, bias_std=1e-3):
    kw, kb = jax.random.split(key)
    limit = math.sqrt(6.0 / (fan_in + fan_out))
    w = jax.random.uniform(kw, (fan_in, fan_out), jnp.float32, -limit, limit)
    b = jax.random.normal(kb, (fan_out,), jnp.float32) * bias_std
    return w, b


def init_params(key, num_layers, emb_dim, qkv_dim, ff_dim, out_dim, seqlen, feat_select):
    params = {"layers": []}
    for _ in range(num_layers):
        keys = jax.random.split(key, 8)
        key = keys[0]
        wq, bq = _linear_init(keys[1], emb_dim, qkv_dim)
        wk, bk = _linear_init(keys[2], emb_dim, qkv_dim)
        wv, bv = _linear_init(keys[3], emb_dim, qkv_dim)
        wo, bo = _linear_init(keys[4], qkv_dim, emb_dim)
        w1, b1 = _linear_init(keys[5], emb_dim, ff_dim)
        w2, b2 = _linear_init(keys[6], ff_dim, emb_dim)
        layer = {
            "attn": {"wq": wq, "bq": bq, "wk": wk, "bk": bk, "wv": wv, "bv": bv,
                     "wo": wo, "bo": bo},
            "ln1_g": jnp.ones((emb_dim,), jnp.float32),
            "ln1_b": jnp.zeros((emb_dim,), jnp.float32),
            "ln2_g": jnp.ones((emb_dim,), jnp.float32),
            "ln2_b": jnp.zeros((emb_dim,), jnp.float32),
            "mlp_w1": w1, "mlp_b1": b1, "mlp_w2": w2, "mlp_b2": b2,
        }
        params["layers"].append(layer)
    keys = jax.random.split(key, 3)
    params["ln_g"] = jnp.ones((emb_dim,), jnp.float32)
    params["ln_b"] = jnp.zeros((emb_dim,), jnp.float32)
    fcw, fcb = _linear_init(keys[1], emb_dim, out_dim)
    params["fc_w"], params["fc_b"] = fcw, fcb
    if feat_select == "fc":
        fsw, fsb = _linear_init(keys[2], seqlen, 1)
        params["fc_s_w"], params["fc_s_b"] = fsw, fsb
    return params


# ----------------------------------------------------------------------------
# Demo
# ----------------------------------------------------------------------------

if __name__ == "__main__":
    # Config (small, consistent with NystromformerModel(num_layers, num_heads, ...))
    num_layers = 2
    num_heads = 2
    num_landmarks = 8
    emb_dim = 32
    qkv_dim = 32
    ff_dim = 64
    out_dim = 8
    feat_select = "mean"
    batch = 2
    seqlen = 16

    key = jax.random.PRNGKey(0)
    kx, kp = jax.random.split(key)
    feat = jax.random.normal(kx, (batch, seqlen, emb_dim), jnp.float32)
    params = init_params(kp, num_layers, emb_dim, qkv_dim, ff_dim, out_dim,
                         seqlen, feat_select)

    fwd = jax.jit(functools.partial(nystromformer_forward,
                                    num_heads=num_heads,
                                    num_landmarks=num_landmarks,
                                    feat_select=feat_select))
    out = jax.block_until_ready(fwd(params, feat))
    assert out.shape == (batch, out_dim), out.shape
    print("KERNEL_OK")
</pallas_src>

<mosaic_0001>
module attributes {stable_mosaic.version = 11 : i64} {
  func.func @_qkv_kernel(%arg0: i32, %arg1: memref<32x32xf32, #tpu.memory_space<vmem>>, %arg2: memref<32x32xbf16, #tpu.memory_space<vmem>>, %arg3: memref<32x32xbf16, #tpu.memory_space<vmem>>, %arg4: memref<32x32xbf16, #tpu.memory_space<vmem>>, %arg5: memref<1x32xf32, #tpu.memory_space<vmem>>, %arg6: memref<1x32xf32, #tpu.memory_space<vmem>>, %arg7: memref<1x32xf32, #tpu.memory_space<vmem>>, %arg8: memref<32x32xf32, #tpu.memory_space<vmem>>, %arg9: memref<32x32xf32, #tpu.memory_space<vmem>>, %arg10: memref<32x32xf32, #tpu.memory_space<vmem>>) attributes {dimension_semantics = [#tpu.dimension_semantics<parallel>], iteration_bounds = array<i64: 1>, scalar_prefetch = 0 : i64, scratch_operands = 0 : i64, tpu.core_type = #tpu.core_type<tc>, window_params = [{transform_indices = @transform_0, window_bounds = array<i64: 32, 32>}, {pipeline_mode = #tpu.pipeline_mode<synchronous>, transform_indices = @transform_1, window_bounds = array<i64: 32, 32>}, {pipeline_mode = #tpu.pipeline_mode<synchronous>, transform_indices = @transform_2, window_bounds = array<i64: 32, 32>}, {pipeline_mode = #tpu.pipeline_mode<synchronous>, transform_indices = @transform_3, window_bounds = array<i64: 32, 32>}, {pipeline_mode = #tpu.pipeline_mode<synchronous>, transform_indices = @transform_4, window_bounds = array<i64: 1, 32>}, {pipeline_mode = #tpu.pipeline_mode<synchronous>, transform_indices = @transform_5, window_bounds = array<i64: 1, 32>}, {pipeline_mode = #tpu.pipeline_mode<synchronous>, transform_indices = @transform_6, window_bounds = array<i64: 1, 32>}, {transform_indices = @transform_7, window_bounds = array<i64: 32, 32>}, {transform_indices = @transform_8, window_bounds = array<i64: 32, 32>}, {transform_indices = @transform_9, window_bounds = array<i64: 32, 32>}]} {
    %c0 = arith.constant 0 : index
    %c0_0 = arith.constant 0 : index
    %0 = vector.load %arg1[%c0, %c0_0] : memref<32x32xf32, #tpu.memory_space<vmem>>, vector<32x32xf32>
    %1 = arith.truncf %0 : vector<32x32xf32> to vector<32x32xbf16>
    %c0_1 = arith.constant 0 : index
    %c0_2 = arith.constant 0 : index
    %2 = vector.load %arg2[%c0_1, %c0_2] : memref<32x32xbf16, #tpu.memory_space<vmem>>, vector<32x32xbf16>
    %cst = arith.constant dense<0.000000e+00> : vector<32x32xf32>
    %3 = tpu.matmul %1, %2, %cst {dimension_numbers = #tpu.dot_dimension_numbers<[1], [0], [0], [1], [0, 0, 1, 1], [], []>} : vector<32x32xbf16>, vector<32x32xbf16>, vector<32x32xf32> -> vector<32x32xf32>
    %c0_3 = arith.constant 0 : index
    %c0_4 = arith.constant 0 : index
    %4 = vector.load %arg5[%c0_3, %c0_4] : memref<1x32xf32, #tpu.memory_space<vmem>>, vector<1x32xf32>
    %5 = vector.broadcast %4 : vector<1x32xf32> to vector<32x32xf32>
    %6 = arith.addf %3, %5 : vector<32x32xf32>
    %cst_5 = arith.constant 5.000000e-01 : f32
    %7 = vector.broadcast %cst_5 : f32 to vector<32x32xf32>
    %8 = arith.mulf %6, %7 : vector<32x32xf32>
    %c0_6 = arith.constant 0 : index
    %c0_7 = arith.constant 0 : index
    %9 = vector.load %arg8[%c0_6, %c0_7] : memref<32x32xf32, #tpu.memory_space<vmem>>, vector<32x32xf32>
    tpu.vector_store %arg8[%c0_6, %c0_7], %8 {strides = array<i32>} : memref<32x32xf32, #tpu.memory_space<vmem>>, vector<32x32xf32>,
    %c0_8 = arith.constant 0 : index
    %c0_9 = arith.constant 0 : index
    %10 = vector.load %arg3[%c0_8, %c0_9] : memref<32x32xbf16, #tpu.memory_space<vmem>>, vector<32x32xbf16>
    %cst_10 = arith.constant dense<0.000000e+00> : vector<32x32xf32>
    %11 = tpu.matmul %1, %10, %cst_10 {dimension_numbers = #tpu.dot_dimension_numbers<[1], [0], [0], [1], [0, 0, 1, 1], [], []>} : vector<32x32xbf16>, vector<32x32xbf16>, vector<32x32xf32> -> vector<32x32xf32>
    %c0_11 = arith.constant 0 : index
    %c0_12 = arith.constant 0 : index
    %12 = vector.load %arg6[%c0_11, %c0_12] : memref<1x32xf32, #tpu.memory_space<vmem>>, vector<1x32xf32>
    %13 = vector.broadcast %12 : vector<1x32xf32> to vector<32x32xf32>
    %14 = arith.addf %11, %13 : vector<32x32xf32>
    %cst_13 = arith.constant 5.000000e-01 : f32
    %15 = vector.broadcast %cst_13 : f32 to vector<32x32xf32>
    %16 = arith.mulf %14, %15 : vector<32x32xf32>
    %c0_14 = arith.constant 0 : index
    %c0_15 = arith.constant 0 : index
    %17 = vector.load %arg9[%c0_14, %c0_15] : memref<32x32xf32, #tpu.memory_space<vmem>>, vector<32x32xf32>
    tpu.vector_store %arg9[%c0_14, %c0_15], %16 {strides = array<i32>} : memref<32x32xf32, #tpu.memory_space<vmem>>, vector<32x32xf32>,
    %c0_16 = arith.constant 0 : index
    %c0_17 = arith.constant 0 : index
    %18 = vector.load %arg4[%c0_16, %c0_17] : memref<32x32xbf16, #tpu.memory_space<vmem>>, vector<32x32xbf16>
    %cst_18 = arith.constant dense<0.000000e+00> : vector<32x32xf32>
    %19 = tpu.matmul %1, %18, %cst_18 {dimension_numbers = #tpu.dot_dimension_numbers<[1], [0], [0], [1], [0, 0, 1, 1], [], []>} : vector<32x32xbf16>, vector<32x32xbf16>, vector<32x32xf32> -> vector<32x32xf32>
    %c0_19 = arith.constant 0 : index
    %c0_20 = arith.constant 0 : index
    %20 = vector.load %arg7[%c0_19, %c0_20] : memref<1x32xf32, #tpu.memory_space<vmem>>, vector<1x32xf32>
    %21 = vector.broadcast %20 : vector<1x32xf32> to vector<32x32xf32>
    %22 = arith.addf %19, %21 : vector<32x32xf32>
    %c0_21 = arith.constant 0 : index
    %c0_22 = arith.constant 0 : index
    %23 = vector.load %arg10[%c0_21, %c0_22] : memref<32x32xf32, #tpu.memory_space<vmem>>, vector<32x32xf32>
    tpu.vector_store %arg10[%c0_21, %c0_22], %22 {strides = array<i32>} : memref<32x32xf32, #tpu.memory_space<vmem>>, vector<32x32xf32>,
    return
  }
  func.func @transform_0(%arg0: i32) -> (i32, i32) {
    %c0_i32 = arith.constant 0 : i32
    %c0_i32_0 = arith.constant 0 : i32
    return %arg0, %c0_i32 : i32, i32
  }
  func.func @transform_1(%arg0: i32) -> (i32, i32) {
    %c0_i32 = arith.constant 0 : i32
    %c0_i32_0 = arith.constant 0 : i32
    %c0_i32_1 = arith.constant 0 : i32
    return %c0_i32, %c0_i32_0 : i32, i32
  }
  func.func @transform_2(%arg0: i32) -> (i32, i32) {
    %c0_i32 = arith.constant 0 : i32
    %c0_i32_0 = arith.constant 0 : i32
    %c0_i32_1 = arith.constant 0 : i32
    return %c0_i32, %c0_i32_0 : i32, i32
  }
  func.func @transform_3(%arg0: i32) -> (i32, i32) {
    %c0_i32 = arith.constant 0 : i32
    %c0_i32_0 = arith.constant 0 : i32
    %c0_i32_1 = arith.constant 0 : i32
    return %c0_i32, %c0_i32_0 : i32, i32
  }
  func.func @transform_4(%arg0: i32) -> (i32, i32) {
    %c0_i32 = arith.constant 0 : i32
    %c0_i32_0 = arith.constant 0 : i32
    %c0_i32_1 = arith.constant 0 : i32
    return %c0_i32, %c0_i32_0 : i32, i32
  }
  func.func @transform_5(%arg0: i32) -> (i32, i32) {
    %c0_i32 = arith.constant 0 : i32
    %c0_i32_0 = arith.constant 0 : i32
    %c0_i32_1 = arith.constant 0 : i32
    return %c0_i32, %c0_i32_0 : i32, i32
  }
  func.func @transform_6(%arg0: i32) -> (i32, i32) {
    %c0_i32 = arith.constant 0 : i32
    %c0_i32_0 = arith.constant 0 : i32
    %c0_i32_1 = arith.constant 0 : i32
    return %c0_i32, %c0_i32_0 : i32, i32
  }
  func.func @transform_7(%arg0: i32) -> (i32, i32) {
    %c0_i32 = arith.constant 0 : i32
    %c0_i32_0 = arith.constant 0 : i32
    return %arg0, %c0_i32 : i32, i32
  }
  func.func @transform_8(%arg0: i32) -> (i32, i32) {
    %c0_i32 = arith.constant 0 : i32
    %c0_i32_0 = arith.constant 0 : i32
    return %arg0, %c0_i32 : i32, i32
  }
  func.func @transform_9(%arg0: i32) -> (i32, i32) {
    %c0_i32 = arith.constant 0 : i32
    %c0_i32_0 = arith.constant 0 : i32
    return %arg0, %c0_i32 : i32, i32
  }
}

module attributes {stable_mosaic.version = 11 : i64} {
  func.func @_add_layernorm_kernel(%arg0: i32, %arg1: memref<32x32xf32, #tpu.memory_space<vmem>>, %arg2: memref<32x32xf32, #tpu.memory_space<vmem>>, %arg3: memref<1x32xf32, #tpu.memory_space<vmem>>, %arg4: memref<1x32xf32, #tpu.memory_space<vmem>>, %arg5: memref<32x32xf32, #tpu.memory_space<vmem>>) attributes {dimension_semantics = [#tpu.dimension_semantics<parallel>], iteration_bounds = array<i64: 1>, scalar_prefetch = 0 : i64, scratch_operands = 0 : i64, tpu.core_type = #tpu.core_type<tc>, window_params = [{transform_indices = @transform_0, window_bounds = array<i64: 32, 32>}, {transform_indices = @transform_1, window_bounds = array<i64: 32, 32>}, {pipeline_mode = #tpu.pipeline_mode<synchronous>, transform_indices = @transform_2, window_bounds = array<i64: 1, 32>}, {pipeline_mode = #tpu.pipeline_mode<synchronous>, transform_indices = @transform_3, window_bounds = array<i64: 1, 32>}, {transform_indices = @transform_4, window_bounds = array<i64: 32, 32>}]} {
    %c0 = arith.constant 0 : index
    %c0_0 = arith.constant 0 : index
    %0 = vector.load %arg1[%c0, %c0_0] : memref<32x32xf32, #tpu.memory_space<vmem>>, vector<32x32xf32>
    %c0_1 = arith.constant 0 : index
    %c0_2 = arith.constant 0 : index
    %1 = vector.load %arg2[%c0_1, %c0_2] : memref<32x32xf32, #tpu.memory_space<vmem>>, vector<32x32xf32>
    %2 = arith.addf %0, %1 : vector<32x32xf32>
    %cst = arith.constant dense<0.000000e+00> : vector<32xf32>
    %3 = vector.multi_reduction <add>, %2, %cst [1] : vector<32x32xf32> to vector<32xf32>
    %4 = vector.shape_cast %3 : vector<32xf32> to vector<32x1xf32>
    %cst_3 = arith.constant 3.200000e+01 : f32
    %5 = vector.broadcast %cst_3 : f32 to vector<32x1xf32>
    %6 = arith.divf %4, %5 : vector<32x1xf32>
    %7 = vector.broadcast %6 : vector<32x1xf32> to vector<32x32xf32>
    %8 = arith.subf %2, %7 : vector<32x32xf32>
    %9 = arith.mulf %8, %8 : vector<32x32xf32>
    %cst_4 = arith.constant dense<0.000000e+00> : vector<32xf32>
    %10 = vector.multi_reduction <add>, %9, %cst_4 [1] : vector<32x32xf32> to vector<32xf32>
    %11 = vector.shape_cast %10 : vector<32xf32> to vector<32x1xf32>
    %cst_5 = arith.constant 3.200000e+01 : f32
    %12 = vector.broadcast %cst_5 : f32 to vector<32x1xf32>
    %13 = arith.divf %11, %12 : vector<32x1xf32>
    %14 = vector.broadcast %6 : vector<32x1xf32> to vector<32x32xf32>
    %15 = arith.subf %2, %14 : vector<32x32xf32>
    %cst_6 = arith.constant 9.99999974E-6 : f32
    %16 = vector.broadcast %cst_6 : f32 to vector<32x1xf32>
    %17 = arith.addf %13, %16 : vector<32x1xf32>
    %18 = math.rsqrt %17 : vector<32x1xf32>
    %19 = vector.broadcast %18 : vector<32x1xf32> to vector<32x32xf32>
    %20 = arith.mulf %15, %19 : vector<32x32xf32>
    %c0_7 = arith.constant 0 : index
    %c0_8 = arith.constant 0 : index
    %21 = vector.load %arg3[%c0_7, %c0_8] : memref<1x32xf32, #tpu.memory_space<vmem>>, vector<1x32xf32>
    %22 = vector.broadcast %21 : vector<1x32xf32> to vector<32x32xf32>
    %23 = arith.mulf %20, %22 : vector<32x32xf32>
    %c0_9 = arith.constant 0 : index
    %c0_10 = arith.constant 0 : index
    %24 = vector.load %arg4[%c0_9, %c0_10] : memref<1x32xf32, #tpu.memory_space<vmem>>, vector<1x32xf32>
    %25 = vector.broadcast %24 : vector<1x32xf32> to vector<32x32xf32>
    %26 = arith.addf %23, %25 : vector<32x32xf32>
    %c0_11 = arith.constant 0 : index
    %c0_12 = arith.constant 0 : index
    %27 = vector.load %arg5[%c0_11, %c0_12] : memref<32x32xf32, #tpu.memory_space<vmem>>, vector<32x32xf32>
    tpu.vector_store %arg5[%c0_11, %c0_12], %26 {strides = array<i32>} : memref<32x32xf32, #tpu.memory_space<vmem>>, vector<32x32xf32>,
    return
  }
  func.func @transform_0(%arg0: i32) -> (i32, i32) {
    %c0_i32 = arith.constant 0 : i32
    %c0_i32_0 = arith.constant 0 : i32
    return %arg0, %c0_i32 : i32, i32
  }
  func.func @transform_1(%arg0: i32) -> (i32, i32) {
    %c0_i32 = arith.constant 0 : i32
    %c0_i32_0 = arith.constant 0 : i32
    return %arg0, %c0_i32 : i32, i32
  }
  func.func @transform_2(%arg0: i32) -> (i32, i32) {
    %c0_i32 = arith.constant 0 : i32
    %c0_i32_0 = arith.constant 0 : i32
    %c0_i32_1 = arith.constant 0 : i32
    return %c0_i32, %c0_i32_0 : i32, i32
  }
  func.func @transform_3(%arg0: i32) -> (i32, i32) {
    %c0_i32 = arith.constant 0 : i32
    %c0_i32_0 = arith.constant 0 : i32
    %c0_i32_1 = arith.constant 0 : i32
    return %c0_i32, %c0_i32_0 : i32, i32
  }
  func.func @transform_4(%arg0: i32) -> (i32, i32) {
    %c0_i32 = arith.constant 0 : i32
    %c0_i32_0 = arith.constant 0 : i32
    return %arg0, %c0_i32 : i32, i32
  }
}

module attributes {stable_mosaic.version = 11 : i64} {
  func.func @_nystrom_attn_kernel(%arg0: i32, %arg1: memref<1xf32, #tpu.memory_space<smem>>, %arg2: memref<1x2x16x16xf32, #tpu.memory_space<vmem>>, %arg3: memref<1x2x16x16xf32, #tpu.memory_space<vmem>>, %arg4: memref<1x2x16x16xf32, #tpu.memory_space<vmem>>, %arg5: memref<1x2x8x16xf32, #tpu.memory_space<vmem>>, %arg6: memref<1x2x8x16xf32, #tpu.memory_space<vmem>>, %arg7: memref<2x16x32xbf16, #tpu.memory_space<vmem>>, %arg8: memref<1x32xf32, #tpu.memory_space<vmem>>, %arg9: memref<1x16x32xf32, #tpu.memory_space<vmem>>) attributes {dimension_semantics = [#tpu.dimension_semantics<parallel>], iteration_bounds = array<i64: 2>, scalar_prefetch = 0 : i64, scratch_operands = 0 : i64, tpu.core_type = #tpu.core_type<tc>, window_params = [{transform_indices = @transform_0, window_bounds = array<i64: 1>}, {transform_indices = @transform_1, window_bounds = array<i64: 1, 2, 16, 16>}, {transform_indices = @transform_2, window_bounds = array<i64: 1, 2, 16, 16>}, {transform_indices = @transform_3, window_bounds = array<i64: 1, 2, 16, 16>}, {transform_indices = @transform_4, window_bounds = array<i64: 1, 2, 8, 16>}, {transform_indices = @transform_5, window_bounds = array<i64: 1, 2, 8, 16>}, {pipeline_mode = #tpu.pipeline_mode<synchronous>, transform_indices = @transform_6, window_bounds = array<i64: 2, 16, 32>}, {pipeline_mode = #tpu.pipeline_mode<synchronous>, transform_indices = @transform_7, window_bounds = array<i64: 1, 32>}, {transform_indices = @transform_8, window_bounds = array<i64: 1, 16, 32>}]} {
    %c0 = arith.constant 0 : index
    %c0_0 = arith.constant 0 : index
    %c0_1 = arith.constant 0 : index
    %c0_2 = arith.constant 0 : index
    %0 = vector.load %arg2[%c0, %c0_0, %c0_1, %c0_2] : memref<1x2x16x16xf32, #tpu.memory_space<vmem>>, vector<1x2x16x16xf32>
    %1 = vector.shape_cast %0 : vector<1x2x16x16xf32> to vector<2x16x16xf32>
    %c0_3 = arith.constant 0 : index
    %c0_4 = arith.constant 0 : index
    %c0_5 = arith.constant 0 : index
    %c0_6 = arith.constant 0 : index
    %2 = vector.load %arg3[%c0_3, %c0_4, %c0_5, %c0_6] : memref<1x2x16x16xf32, #tpu.memory_space<vmem>>, vector<1x2x16x16xf32>
    %3 = vector.shape_cast %2 : vector<1x2x16x16xf32> to vector<2x16x16xf32>
    %c0_7 = arith.constant 0 : index
    %c0_8 = arith.constant 0 : index
    %c0_9 = arith.constant 0 : index
    %c0_10 = arith.constant 0 : index
    %4 = vector.load %arg4[%c0_7, %c0_8, %c0_9, %c0_10] : memref<1x2x16x16xf32, #tpu.memory_space<vmem>>, vector<1x2x16x16xf32>
    %5 = vector.shape_cast %4 : vector<1x2x16x16xf32> to vector<2x16x16xf32>
    %c0_11 = arith.constant 0 : index
    %c0_12 = arith.constant 0 : index
    %c0_13 = arith.constant 0 : index
    %c0_14 = arith.constant 0 : index
    %6 = vector.load %arg5[%c0_11, %c0_12, %c0_13, %c0_14] : memref<1x2x8x16xf32, #tpu.memory_space<vmem>>, vector<1x2x8x16xf32>
    %7 = vector.shape_cast %6 : vector<1x2x8x16xf32> to vector<2x8x16xf32>
    %c0_15 = arith.constant 0 : index
    %c0_16 = arith.constant 0 : index
    %c0_17 = arith.constant 0 : index
    %c0_18 = arith.constant 0 : index
    %8 = vector.load %arg6[%c0_15, %c0_16, %c0_17, %c0_18] : memref<1x2x8x16xf32, #tpu.memory_space<vmem>>, vector<1x2x8x16xf32>
    %9 = vector.shape_cast %8 : vector<1x2x8x16xf32> to vector<2x8x16xf32>
    %10 = arith.truncf %1 : vector<2x16x16xf32> to vector<2x16x16xbf16>
    %11 = arith.truncf %3 : vector<2x16x16xf32> to vector<2x16x16xbf16>
    %12 = arith.truncf %5 : vector<2x16x16xf32> to vector<2x16x16xbf16>
    %13 = arith.truncf %7 : vector<2x8x16xf32> to vector<2x8x16xbf16>
    %14 = arith.truncf %9 : vector<2x8x16xf32> to vector<2x8x16xbf16>
    "tpu.trace_start"() <{level = 10 : i32, message = "hsd,hmd->hsm"}> : () -> ()
    %cst = arith.constant dense<0.000000e+00> : vector<2x16x8xf32>
    %15 = tpu.matmul %10, %14, %cst {dimension_numbers = #tpu.dot_dimension_numbers<[2], [2], [1], [1], [0, 0, 0, 1, 1, 1], [0], [0]>} : vector<2x16x16xbf16>, vector<2x8x16xbf16>, vector<2x16x8xf32> -> vector<2x16x8xf32>
    "tpu.trace_stop"() : () -> ()
    %cst_19 = arith.constant dense<0xFF800000> : vector<2x16xf32>
    %16 = vector.multi_reduction <maximumf>, %15, %cst_19 [2] : vector<2x16x8xf32> to vector<2x16xf32>
    %17 = vector.shape_cast %16 : vector<2x16xf32> to vector<2x16x1xf32>
    %18 = vector.broadcast %17 : vector<2x16x1xf32> to vector<2x16x8xf32>
    %19 = arith.subf %15, %18 : vector<2x16x8xf32>
    %20 = math.exp %19 : vector<2x16x8xf32>
    %cst_20 = arith.constant dense<0.000000e+00> : vector<2x16xf32>
    %21 = vector.multi_reduction <add>, %20, %cst_20 [2] : vector<2x16x8xf32> to vector<2x16xf32>
    %22 = vector.shape_cast %21 : vector<2x16xf32> to vector<2x16x1xf32>
    %23 = tpu.reciprocal %22 {approx = true} : vector<2x16x1xf32> -> vector<2x16x1xf32>
    %24 = vector.broadcast %23 : vector<2x16x1xf32> to vector<2x16x8xf32>
    %25 = arith.mulf %20, %24 : vector<2x16x8xf32>
    "tpu.trace_start"() <{level = 10 : i32, message = "hmd,hnd->hmn"}> : () -> ()
    %cst_21 = arith.constant dense<0.000000e+00> : vector<2x8x8xf32>
    %26 = tpu.matmul %7, %9, %cst_21 {dimension_numbers = #tpu.dot_dimension_numbers<[2], [2], [1], [1], [0, 0, 0, 1, 1, 1], [0], [0]>} : vector<2x8x16xf32>, vector<2x8x16xf32>, vector<2x8x8xf32> -> vector<2x8x8xf32>
    "tpu.trace_stop"() : () -> ()
    %cst_22 = arith.constant dense<0xFF800000> : vector<2x8xf32>
    %27 = vector.multi_reduction <maximumf>, %26, %cst_22 [2] : vector<2x8x8xf32> to vector<2x8xf32>
    %28 = vector.shape_cast %27 : vector<2x8xf32> to vector<2x8x1xf32>
    %29 = vector.broadcast %28 : vector<2x8x1xf32> to vector<2x8x8xf32>
    %30 = arith.subf %26, %29 : vector<2x8x8xf32>
    %31 = math.exp %30 : vector<2x8x8xf32>
    %cst_23 = arith.constant dense<0.000000e+00> : vector<2x8xf32>
    %32 = vector.multi_reduction <add>, %31, %cst_23 [2] : vector<2x8x8xf32> to vector<2x8xf32>
    %33 = vector.shape_cast %32 : vector<2x8xf32> to vector<2x8x1xf32>
    %34 = tpu.reciprocal %33 {approx = true} : vector<2x8x1xf32> -> vector<2x8x1xf32>
    %35 = vector.broadcast %34 : vector<2x8x1xf32> to vector<2x8x8xf32>
    %36 = arith.mulf %31, %35 : vector<2x8x8xf32>
    "tpu.trace_start"() <{level = 10 : i32, message = "hmd,hsd->hms"}> : () -> ()
    %cst_24 = arith.constant dense<0.000000e+00> : vector<2x8x16xf32>
    %37 = tpu.matmul %13, %11, %cst_24 {dimension_numbers = #tpu.dot_dimension_numbers<[2], [2], [1], [1], [0, 0, 0, 1, 1, 1], [0], [0]>} : vector<2x8x16xbf16>, vector<2x16x16xbf16>, vector<2x8x16xf32> -> vector<2x8x16xf32>
    "tpu.trace_stop"() : () -> ()
    %cst_25 = arith.constant dense<0xFF800000> : vector<2x8xf32>
    %38 = vector.multi_reduction <maximumf>, %37, %cst_25 [2] : vector<2x8x16xf32> to vector<2x8xf32>
    %39 = vector.shape_cast %38 : vector<2x8xf32> to vector<2x8x1xf32>
    %40 = vector.broadcast %39 : vector<2x8x1xf32> to vector<2x8x16xf32>
    %41 = arith.subf %37, %40 : vector<2x8x16xf32>
    %42 = math.exp %41 : vector<2x8x16xf32>
    %cst_26 = arith.constant dense<0.000000e+00> : vector<2x8xf32>
    %43 = vector.multi_reduction <add>, %42, %cst_26 [2] : vector<2x8x16xf32> to vector<2x8xf32>
    %44 = vector.shape_cast %43 : vector<2x8xf32> to vector<2x8x1xf32>
    %45 = tpu.reciprocal %44 {approx = true} : vector<2x8x1xf32> -> vector<2x8x1xf32>
    %46 = vector.broadcast %45 : vector<2x8x1xf32> to vector<2x8x16xf32>
    %47 = arith.mulf %42, %46 : vector<2x8x16xf32>
    %48 = tpu.iota {dimensions = array<i32: 0>} : vector<8x8xi32>
    %49 = tpu.iota {dimensions = array<i32: 1>} : vector<8x8xi32>
    %c0_i32 = arith.constant 0 : i32
    %50 = vector.broadcast %c0_i32 : i32 to vector<8x8xi32>
    %51 = arith.addi %48, %50 : vector<8x8xi32>
    %52 = arith.cmpi eq, %51, %49 : vector<8x8xi32>
    %53 = arith.extui %52 : vector<8x8xi1> to vector<8x8xi32>
    %54 = arith.sitofp %53 : vector<8x8xi32> to vector<8x8xf32>
    %55 = vector.shape_cast %54 : vector<8x8xf32> to vector<1x8x8xf32>
    %56 = vector.broadcast %55 : vector<1x8x8xf32> to vector<2x8x8xf32>
    %c0_27 = arith.constant 0 : index
    %57 = memref.load %arg1[%c0_27] : memref<1xf32, #tpu.memory_space<smem>>
    %58 = tpu.transpose %36, [0, 2, 1] : vector<2x8x8xf32> -> vector<2x8x8xf32>
    %59 = vector.broadcast %57 : f32 to vector<2x8x8xf32>
    %60 = arith.mulf %59, %58 : vector<2x8x8xf32>
    "tpu.trace_start"() <{level = 10 : i32, message = "hij,hjk->hik"}> : () -> ()
    %cst_28 = arith.constant dense<0.000000e+00> : vector<2x8x8xf32>
    %61 = tpu.matmul %36, %60, %cst_28 {dimension_numbers = #tpu.dot_dimension_numbers<[2], [1], [1], [2], [0, 0, 0, 1, 1, 2], [0], [0]>} : vector<2x8x8xf32>, vector<2x8x8xf32>, vector<2x8x8xf32> -> vector<2x8x8xf32>
    "tpu.trace_stop"() : () -> ()
    %cst_29 = arith.constant 7.000000e+00 : f32
    %62 = vector.broadcast %cst_29 : f32 to vector<2x8x8xf32>
    %63 = arith.mulf %62, %56 : vector<2x8x8xf32>
    %64 = arith.subf %63, %61 : vector<2x8x8xf32>
    %cst_30 = arith.constant 1.500000e+01 : f32
    %65 = vector.broadcast %cst_30 : f32 to vector<2x8x8xf32>
    %66 = arith.mulf %65, %56 : vector<2x8x8xf32>
    "tpu.trace_start"() <{level = 10 : i32, message = "hij,hjk->hik"}> : () -> ()
    %cst_31 = arith.constant dense<0.000000e+00> : vector<2x8x8xf32>
    %67 = tpu.matmul %61, %64, %cst_31 {dimension_numbers = #tpu.dot_dimension_numbers<[2], [1], [1], [2], [0, 0, 0, 1, 1, 2], [0], [0]>} : vector<2x8x8xf32>, vector<2x8x8xf32>, vector<2x8x8xf32> -> vector<2x8x8xf32>
    "tpu.trace_stop"() : () -> ()
    %68 = arith.subf %66, %67 : vector<2x8x8xf32>
    %cst_32 = arith.constant 1.300000e+01 : f32
    %69 = vector.broadcast %cst_32 : f32 to vector<2x8x8xf32>
    %70 = arith.mulf %69, %56 : vector<2x8x8xf32>
    "tpu.trace_start"() <{level = 10 : i32, message = "hij,hjk->hik"}> : () -> ()
    %cst_33 = arith.constant dense<0.000000e+00> : vector<2x8x8xf32>
    %71 = tpu.matmul %61, %68, %cst_33 {dimension_numbers = #tpu.dot_dimension_numbers<[2], [1], [1], [2], [0, 0, 0, 1, 1, 2], [0], [0]>} : vector<2x8x8xf32>, vector<2x8x8xf32>, vector<2x8x8xf32> -> vector<2x8x8xf32>
    "tpu.trace_stop"() : () -> ()
    %72 = arith.subf %70, %71 : vector<2x8x8xf32>
    "tpu.trace_start"() <{level = 10 : i32, message = "hij,hjk->hik"}> : () -> ()
    %cst_34 = arith.constant dense<0.000000e+00> : vector<2x8x8xf32>
    %73 = tpu.matmul %60, %72, %cst_34 {dimension_numbers = #tpu.dot_dimension_numbers<[2], [1], [1], [2], [0, 0, 0, 1, 1, 2], [0], [0]>} : vector<2x8x8xf32>, vector<2x8x8xf32>, vector<2x8x8xf32> -> vector<2x8x8xf32>
    "tpu.trace_stop"() : () -> ()
    %cst_35 = arith.constant 2.500000e-01 : f32
    %74 = vector.broadcast %cst_35 : f32 to vector<2x8x8xf32>
    %75 = arith.mulf %74, %73 : vector<2x8x8xf32>
    "tpu.trace_start"() <{level = 10 : i32, message = "hij,hjk->hik"}> : () -> ()
    %cst_36 = arith.constant dense<0.000000e+00> : vector<2x8x8xf32>
    %76 = tpu.matmul %36, %75, %cst_36 {dimension_numbers = #tpu.dot_dimension_numbers<[2], [1], [1], [2], [0, 0, 0, 1, 1, 2], [0], [0]>} : vector<2x8x8xf32>, vector<2x8x8xf32>, vector<2x8x8xf32> -> vector<2x8x8xf32>
    "tpu.trace_stop"() : () -> ()
    %cst_37 = arith.constant 7.000000e+00 : f32
    %77 = vector.broadcast %cst_37 : f32 to vector<2x8x8xf32>
    %78 = arith.mulf %77, %56 : vector<2x8x8xf32>
    %79 = arith.subf %78, %76 : vector<2x8x8xf32>
    %cst_38 = arith.constant 1.500000e+01 : f32
    %80 = vector.broadcast %cst_38 : f32 to vector<2x8x8xf32>
    %81 = arith.mulf %80, %56 : vector<2x8x8xf32>
    "tpu.trace_start"() <{level = 10 : i32, message = "hij,hjk->hik"}> : () -> ()
    %cst_39 = arith.constant dense<0.000000e+00> : vector<2x8x8xf32>
    %82 = tpu.matmul %76, %79, %cst_39 {dimension_numbers = #tpu.dot_dimension_numbers<[2], [1], [1], [2], [0, 0, 0, 1, 1, 2], [0], [0]>} : vector<2x8x8xf32>, vector<2x8x8xf32>, vector<2x8x8xf32> -> vector<2x8x8xf32>
    "tpu.trace_stop"() : () -> ()
    %83 = arith.subf %81, %82 : vector<2x8x8xf32>
    %cst_40 = arith.constant 1.300000e+01 : f32
    %84 = vector.broadcast %cst_40 : f32 to vector<2x8x8xf32>
    %85 = arith.mulf %84, %56 : vector<2x8x8xf32>
    "tpu.trace_start"() <{level = 10 : i32, message = "hij,hjk->hik"}> : () -> ()
    %cst_41 = arith.constant dense<0.000000e+00> : vector<2x8x8xf32>
    %86 = tpu.matmul %76, %83, %cst_41 {dimension_numbers = #tpu.dot_dimension_numbers<[2], [1], [1], [2], [0, 0, 0, 1, 1, 2], [0], [0]>} : vector<2x8x8xf32>, vector<2x8x8xf32>, vector<2x8x8xf32> -> vector<2x8x8xf32>
    "tpu.trace_stop"() : () -> ()
    %87 = arith.subf %85, %86 : vector<2x8x8xf32>
    "tpu.trace_start"() <{level = 10 : i32, message = "hij,hjk->hik"}> : () -> ()
    %cst_42 = arith.constant dense<0.000000e+00> : vector<2x8x8xf32>
    %88 = tpu.matmul %75, %87, %cst_42 {dimension_numbers = #tpu.dot_dimension_numbers<[2], [1], [1], [2], [0, 0, 0, 1, 1, 2], [0], [0]>} : vector<2x8x8xf32>, vector<2x8x8xf32>, vector<2x8x8xf32> -> vector<2x8x8xf32>
    "tpu.trace_stop"() : () -> ()
    %cst_43 = arith.constant 2.500000e-01 : f32
    %89 = vector.broadcast %cst_43 : f32 to vector<2x8x8xf32>
    %90 = arith.mulf %89, %88 : vector<2x8x8xf32>
    "tpu.trace_start"() <{level = 10 : i32, message = "hij,hjk->hik"}> : () -> ()
    %cst_44 = arith.constant dense<0.000000e+00> : vector<2x8x8xf32>
    %91 = tpu.matmul %36, %90, %cst_44 {dimension_numbers = #tpu.dot_dimension_numbers<[2], [1], [1], [2], [0, 0, 0, 1, 1, 2], [0], [0]>} : vector<2x8x8xf32>, vector<2x8x8xf32>, vector<2x8x8xf32> -> vector<2x8x8xf32>
    "tpu.trace_stop"() : () -> ()
    %cst_45 = arith.constant 7.000000e+00 : f32
    %92 = vector.broadcast %cst_45 : f32 to vector<2x8x8xf32>
    %93 = arith.mulf %92, %56 : vector<2x8x8xf32>
    %94 = arith.subf %93, %91 : vector<2x8x8xf32>
    %cst_46 = arith.constant 1.500000e+01 : f32
    %95 = vector.broadcast %cst_46 : f32 to vector<2x8x8xf32>
    %96 = arith.mulf %95, %56 : vector<2x8x8xf32>
    "tpu.trace_start"() <{level = 10 : i32, message = "hij,hjk->hik"}> : () -> ()
    %cst_47 = arith.constant dense<0.000000e+00> : vector<2x8x8xf32>
    %97 = tpu.matmul %91, %94, %cst_47 {dimension_numbers = #tpu.dot_dimension_numbers<[2], [1], [1], [2], [0, 0, 0, 1, 1, 2], [0], [0]>} : vector<2x8x8xf32>, vector<2x8x8xf32>, vector<2x8x8xf32> -> vector<2x8x8xf32>
    "tpu.trace_stop"() : () -> ()
    %98 = arith.subf %96, %97 : vector<2x8x8xf32>
    %cst_48 = arith.constant 1.300000e+01 : f32
    %99 = vector.broadcast %cst_48 : f32 to vector<2x8x8xf32>
    %100 = arith.mulf %99, %56 : vector<2x8x8xf32>
    "tpu.trace_start"() <{level = 10 : i32, message = "hij,hjk->hik"}> : () -> ()
    %cst_49 = arith.constant dense<0.000000e+00> : vector<2x8x8xf32>
    %101 = tpu.matmul %91, %98, %cst_49 {dimension_numbers = #tpu.dot_dimension_numbers<[2], [1], [1], [2], [0, 0, 0, 1, 1, 2], [0], [0]>} : vector<2x8x8xf32>, vector<2x8x8xf32>, vector<2x8x8xf32> -> vector<2x8x8xf32>
    "tpu.trace_stop"() : () -> ()
    %102 = arith.subf %100, %101 : vector<2x8x8xf32>
    "tpu.trace_start"() <{level = 10 : i32, message = "hij,hjk->hik"}> : () -> ()
    %cst_50 = arith.constant dense<0.000000e+00> : vector<2x8x8xf32>
    %103 = tpu.matmul %90, %102, %cst_50 {dimension_numbers = #tpu.dot_dimension_numbers<[2], [1], [1], [2], [0, 0, 0, 1, 1, 2], [0], [0]>} : vector<2x8x8xf32>, vector<2x8x8xf32>, vector<2x8x8xf32> -> vector<2x8x8xf32>
    "tpu.trace_stop"() : () -> ()
    %cst_51 = arith.constant 2.500000e-01 : f32
    %104 = vector.broadcast %cst_51 : f32 to vector<2x8x8xf32>
    %105 = arith.mulf %104, %103 : vector<2x8x8xf32>
    "tpu.trace_start"() <{level = 10 : i32, message = "hij,hjk->hik"}> : () -> ()
    %cst_52 = arith.constant dense<0.000000e+00> : vector<2x8x8xf32>
    %106 = tpu.matmul %36, %105, %cst_52 {dimension_numbers = #tpu.dot_dimension_numbers<[2], [1], [1], [2], [0, 0, 0, 1, 1, 2], [0], [0]>} : vector<2x8x8xf32>, vector<2x8x8xf32>, vector<2x8x8xf32> -> vector<2x8x8xf32>
    "tpu.trace_stop"() : () -> ()
    %cst_53 = arith.constant 7.000000e+00 : f32
    %107 = vector.broadcast %cst_53 : f32 to vector<2x8x8xf32>
    %108 = arith.mulf %107, %56 : vector<2x8x8xf32>
    %109 = arith.subf %108, %106 : vector<2x8x8xf32>
    %cst_54 = arith.constant 1.500000e+01 : f32
    %110 = vector.broadcast %cst_54 : f32 to vector<2x8x8xf32>
    %111 = arith.mulf %110, %56 : vector<2x8x8xf32>
    "tpu.trace_start"() <{level = 10 : i32, message = "hij,hjk->hik"}> : () -> ()
    %cst_55 = arith.constant dense<0.000000e+00> : vector<2x8x8xf32>
    %112 = tpu.matmul %106, %109, %cst_55 {dimension_numbers = #tpu.dot_dimension_numbers<[2], [1], [1], [2], [0, 0, 0, 1, 1, 2], [0], [0]>} : vector<2x8x8xf32>, vector<2x8x8xf32>, vector<2x8x8xf32> -> vector<2x8x8xf32>
    "tpu.trace_stop"() : () -> ()
    %113 = arith.subf %111, %112 : vector<2x8x8xf32>
    %cst_56 = arith.constant 1.300000e+01 : f32
    %114 = vector.broadcast %cst_56 : f32 to vector<2x8x8xf32>
    %115 = arith.mulf %114, %56 : vector<2x8x8xf32>
    "tpu.trace_start"() <{level = 10 : i32, message = "hij,hjk->hik"}> : () -> ()
    %cst_57 = arith.constant dense<0.000000e+00> : vector<2x8x8xf32>
    %116 = tpu.matmul %106, %113, %cst_57 {dimension_numbers = #tpu.dot_dimension_numbers<[2], [1], [1], [2], [0, 0, 0, 1, 1, 2], [0], [0]>} : vector<2x8x8xf32>, vector<2x8x8xf32>, vector<2x8x8xf32> -> vector<2x8x8xf32>
    "tpu.trace_stop"() : () -> ()
    %117 = arith.subf %115, %116 : vector<2x8x8xf32>
    "tpu.trace_start"() <{level = 10 : i32, message = "hij,hjk->hik"}> : () -> ()
    %cst_58 = arith.constant dense<0.000000e+00> : vector<2x8x8xf32>
    %118 = tpu.matmul %105, %117, %cst_58 {dimension_numbers = #tpu.dot_dimension_numbers<[2], [1], [1], [2], [0, 0, 0, 1, 1, 2], [0], [0]>} : vector<2x8x8xf32>, vector<2x8x8xf32>, vector<2x8x8xf32> -> vector<2x8x8xf32>
    "tpu.trace_stop"() : () -> ()
    %cst_59 = arith.constant 2.500000e-01 : f32
    %119 = vector.broadcast %cst_59 : f32 to vector<2x8x8xf32>
    %120 = arith.mulf %119, %118 : vector<2x8x8xf32>
    "tpu.trace_start"() <{level = 10 : i32, message = "hij,hjk->hik"}> : () -> ()
    %cst_60 = arith.constant dense<0.000000e+00> : vector<2x8x8xf32>
    %121 = tpu.matmul %36, %120, %cst_60 {dimension_numbers = #tpu.dot_dimension_numbers<[2], [1], [1], [2], [0, 0, 0, 1, 1, 2], [0], [0]>} : vector<2x8x8xf32>, vector<2x8x8xf32>, vector<2x8x8xf32> -> vector<2x8x8xf32>
    "tpu.trace_stop"() : () -> ()
    %cst_61 = arith.constant 7.000000e+00 : f32
    %122 = vector.broadcast %cst_61 : f32 to vector<2x8x8xf32>
    %123 = arith.mulf %122, %56 : vector<2x8x8xf32>
    %124 = arith.subf %123, %121 : vector<2x8x8xf32>
    %cst_62 = arith.constant 1.500000e+01 : f32
    %125 = vector.broadcast %cst_62 : f32 to vector<2x8x8xf32>
    %126 = arith.mulf %125, %56 : vector<2x8x8xf32>
    "tpu.trace_start"() <{level = 10 : i32, message = "hij,hjk->hik"}> : () -> ()
    %cst_63 = arith.constant dense<0.000000e+00> : vector<2x8x8xf32>
    %127 = tpu.matmul %121, %124, %cst_63 {dimension_numbers = #tpu.dot_dimension_numbers<[2], [1], [1], [2], [0, 0, 0, 1, 1, 2], [0], [0]>} : vector<2x8x8xf32>, vector<2x8x8xf32>, vector<2x8x8xf32> -> vector<2x8x8xf32>
    "tpu.trace_stop"() : () -> ()
    %128 = arith.subf %126, %127 : vector<2x8x8xf32>
    %cst_64 = arith.constant 1.300000e+01 : f32
    %129 = vector.broadcast %cst_64 : f32 to vector<2x8x8xf32>
    %130 = arith.mulf %129, %56 : vector<2x8x8xf32>
    "tpu.trace_start"() <{level = 10 : i32, message = "hij,hjk->hik"}> : () -> ()
    %cst_65 = arith.constant dense<0.000000e+00> : vector<2x8x8xf32>
    %131 = tpu.matmul %121, %128, %cst_65 {dimension_numbers = #tpu.dot_dimension_numbers<[2], [1], [1], [2], [0, 0, 0, 1, 1, 2], [0], [0]>} : vector<2x8x8xf32>, vector<2x8x8xf32>, vector<2x8x8xf32> -> vector<2x8x8xf32>
    "tpu.trace_stop"() : () -> ()
    %132 = arith.subf %130, %131 : vector<2x8x8xf32>
    "tpu.trace_start"() <{level = 10 : i32, message = "hij,hjk->hik"}> : () -> ()
    %cst_66 = arith.constant dense<0.000000e+00> : vector<2x8x8xf32>
    %133 = tpu.matmul %120, %132, %cst_66 {dimension_numbers = #tpu.dot_dimension_numbers<[2], [1], [1], [2], [0, 0, 0, 1, 1, 2], [0], [0]>} : vector<2x8x8xf32>, vector<2x8x8xf32>, vector<2x8x8xf32> -> vector<2x8x8xf32>
    "tpu.trace_stop"() : () -> ()
    %cst_67 = arith.constant 2.500000e-01 : f32
    %134 = vector.broadcast %cst_67 : f32 to vector<2x8x8xf32>
    %135 = arith.mulf %134, %133 : vector<2x8x8xf32>
    "tpu.trace_start"() <{level = 10 : i32, message = "hij,hjk->hik"}> : () -> ()
    %cst_68 = arith.constant dense<0.000000e+00> : vector<2x8x8xf32>
    %136 = tpu.matmul %36, %135, %cst_68 {dimension_numbers = #tpu.dot_dimension_numbers<[2], [1], [1], [2], [0, 0, 0, 1, 1, 2], [0], [0]>} : vector<2x8x8xf32>, vector<2x8x8xf32>, vector<2x8x8xf32> -> vector<2x8x8xf32>
    "tpu.trace_stop"() : () -> ()
    %cst_69 = arith.constant 7.000000e+00 : f32
    %137 = vector.broadcast %cst_69 : f32 to vector<2x8x8xf32>
    %138 = arith.mulf %137, %56 : vector<2x8x8xf32>
    %139 = arith.subf %138, %136 : vector<2x8x8xf32>
    %cst_70 = arith.constant 1.500000e+01 : f32
    %140 = vector.broadcast %cst_70 : f32 to vector<2x8x8xf32>
    %141 = arith.mulf %140, %56 : vector<2x8x8xf32>
    "tpu.trace_start"() <{level = 10 : i32, message = "hij,hjk->hik"}> : () -> ()
    %cst_71 = arith.constant dense<0.000000e+00> : vector<2x8x8xf32>
    %142 = tpu.matmul %136, %139, %cst_71 {dimension_numbers = #tpu.dot_dimension_numbers<[2], [1], [1], [2], [0, 0, 0, 1, 1, 2], [0], [0]>} : vector<2x8x8xf32>, vector<2x8x8xf32>, vector<2x8x8xf32> -> vector<2x8x8xf32>
    "tpu.trace_stop"() : () -> ()
    %143 = arith.subf %141, %142 : vector<2x8x8xf32>
    %cst_72 = arith.constant 1.300000e+01 : f32
    %144 = vector.broadcast %cst_72 : f32 to vector<2x8x8xf32>
    %145 = arith.mulf %144, %56 : vector<2x8x8xf32>
    "tpu.trace_start"() <{level = 10 : i32, message = "hij,hjk->hik"}> : () -> ()
    %cst_73 = arith.constant dense<0.000000e+00> : vector<2x8x8xf32>
    %146 = tpu.matmul %136, %143, %cst_73 {dimension_numbers = #tpu.dot_dimension_numbers<[2], [1], [1], [2], [0, 0, 0, 1, 1, 2], [0], [0]>} : vector<2x8x8xf32>, vector<2x8x8xf32>, vector<2x8x8xf32> -> vector<2x8x8xf32>
    "tpu.trace_stop"() : () -> ()
    %147 = arith.subf %145, %146 : vector<2x8x8xf32>
    "tpu.trace_start"() <{level = 10 : i32, message = "hij,hjk->hik"}> : () -> ()
    %cst_74 = arith.constant dense<0.000000e+00> : vector<2x8x8xf32>
    %148 = tpu.matmul %135, %147, %cst_74 {dimension_numbers = #tpu.dot_dimension_numbers<[2], [1], [1], [2], [0, 0, 0, 1, 1, 2], [0], [0]>} : vector<2x8x8xf32>, vector<2x8x8xf32>, vector<2x8x8xf32> -> vector<2x8x8xf32>
    "tpu.trace_stop"() : () -> ()
    %cst_75 = arith.constant 2.500000e-01 : f32
    %149 = vector.broadcast %cst_75 : f32 to vector<2x8x8xf32>
    %150 = arith.mulf %149, %148 : vector<2x8x8xf32>
    %151 = arith.truncf %47 : vector<2x8x16xf32> to vector<2x8x16xbf16>
    "tpu.trace_start"() <{level = 10 : i32, message = "hms,hsd->hmd"}> : () -> ()
    %cst_76 = arith.constant dense<0.000000e+00> : vector<2x8x16xf32>
    %152 = tpu.matmul %151, %12, %cst_76 {dimension_numbers = #tpu.dot_dimension_numbers<[2], [1], [1], [2], [0, 0, 0, 1, 1, 2], [0], [0]>} : vector<2x8x16xbf16>, vector<2x16x16xbf16>, vector<2x8x16xf32> -> vector<2x8x16xf32>
    "tpu.trace_stop"() : () -> ()
    %153 = arith.truncf %25 : vector<2x16x8xf32> to vector<2x16x8xbf16>
    %154 = arith.truncf %150 : vector<2x8x8xf32> to vector<2x8x8xbf16>
    "tpu.trace_start"() <{level = 10 : i32, message = "hsm,hmn->hsn"}> : () -> ()
    %cst_77 = arith.constant dense<0.000000e+00> : vector<2x16x8xf32>
    %155 = tpu.matmul %153, %154, %cst_77 {dimension_numbers = #tpu.dot_dimension_numbers<[2], [1], [1], [2], [0, 0, 0, 1, 1, 2], [0], [0]>} : vector<2x16x8xbf16>, vector<2x8x8xbf16>, vector<2x16x8xf32> -> vector<2x16x8xf32>
    "tpu.trace_stop"() : () -> ()
    %156 = arith.truncf %155 : vector<2x16x8xf32> to vector<2x16x8xbf16>
    %157 = arith.truncf %152 : vector<2x8x16xf32> to vector<2x8x16xbf16>
    "tpu.trace_start"() <{level = 10 : i32, message = "hsn,hnd->hsd"}> : () -> ()
    %cst_78 = arith.constant dense<0.000000e+00> : vector<2x16x16xf32>
    %158 = tpu.matmul %156, %157, %cst_78 {dimension_numbers = #tpu.dot_dimension_numbers<[2], [1], [1], [2], [0, 0, 0, 1, 1, 2], [0], [0]>} : vector<2x16x8xbf16>, vector<2x8x16xbf16>, vector<2x16x16xf32> -> vector<2x16x16xf32>
    "tpu.trace_stop"() : () -> ()
    %c0_79 = arith.constant 0 : index
    %c0_80 = arith.constant 0 : index
    %c0_81 = arith.constant 0 : index
    %159 = vector.load %arg7[%c0_79, %c0_80, %c0_81] : memref<2x16x32xbf16, #tpu.memory_space<vmem>>, vector<2x16x32xbf16>
    %c0_82 = arith.constant 0 : index
    %c0_83 = arith.constant 0 : index
    %160 = vector.load %arg8[%c0_82, %c0_83] : memref<1x32xf32, #tpu.memory_space<vmem>>, vector<1x32xf32>
    %cst_84 = arith.constant 0.000000e+00 : f32
    %161 = vector.broadcast %cst_84 : f32 to vector<16x32xf32>
    %162 = vector.extract_strided_slice %158 {offsets = [0, 0, 0], sizes = [1, 16, 16], strides = [1, 1, 1]} : vector<2x16x16xf32> to vector<1x16x16xf32>
    %163 = vector.shape_cast %162 : vector<1x16x16xf32> to vector<16x16xf32>
    %164 = arith.truncf %163 : vector<16x16xf32> to vector<16x16xbf16>
    %165 = vector.extract_strided_slice %159 {offsets = [0, 0, 0], sizes = [1, 16, 32], strides = [1, 1, 1]} : vector<2x16x32xbf16> to vector<1x16x32xbf16>
    %166 = vector.shape_cast %165 : vector<1x16x32xbf16> to vector<16x32xbf16>
    %cst_85 = arith.constant dense<0.000000e+00> : vector<16x32xf32>
    %167 = tpu.matmul %164, %166, %cst_85 {dimension_numbers = #tpu.dot_dimension_numbers<[1], [0], [0], [1], [0, 0, 1, 1], [], []>} : vector<16x16xbf16>, vector<16x32xbf16>, vector<16x32xf32> -> vector<16x32xf32>
    %168 = arith.addf %161, %167 : vector<16x32xf32>
    %169 = vector.extract_strided_slice %158 {offsets = [1, 0, 0], sizes = [1, 16, 16], strides = [1, 1, 1]} : vector<2x16x16xf32> to vector<1x16x16xf32>
    %170 = vector.shape_cast %169 : vector<1x16x16xf32> to vector<16x16xf32>
    %171 = arith.truncf %170 : vector<16x16xf32> to vector<16x16xbf16>
    %172 = vector.extract_strided_slice %159 {offsets = [1, 0, 0], sizes = [1, 16, 32], strides = [1, 1, 1]} : vector<2x16x32xbf16> to vector<1x16x32xbf16>
    %173 = vector.shape_cast %172 : vector<1x16x32xbf16> to vector<16x32xbf16>
    %cst_86 = arith.constant dense<0.000000e+00> : vector<16x32xf32>
    %174 = tpu.matmul %171, %173, %cst_86 {dimension_numbers = #tpu.dot_dimension_numbers<[1], [0], [0], [1], [0, 0, 1, 1], [], []>} : vector<16x16xbf16>, vector<16x32xbf16>, vector<16x32xf32> -> vector<16x32xf32>
    %175 = arith.addf %168, %174 : vector<16x32xf32>
    %176 = vector.broadcast %160 : vector<1x32xf32> to vector<16x32xf32>
    %177 = arith.addf %175, %176 : vector<16x32xf32>
    %c0_87 = arith.constant 0 : index
    %c0_88 = arith.constant 0 : index
    %c0_89 = arith.constant 0 : index
    %178 = vector.load %arg9[%c0_87, %c0_88, %c0_89] : memref<1x16x32xf32, #tpu.memory_space<vmem>>, vector<1x16x32xf32>
    %179 = vector.shape_cast %178 : vector<1x16x32xf32> to vector<16x32xf32>
    %180 = vector.shape_cast %177 : vector<16x32xf32> to vector<1x16x32xf32>
    tpu.vector_store %arg9[%c0_87, %c0_88, %c0_89], %180 {strides = array<i32>} : memref<1x16x32xf32, #tpu.memory_space<vmem>>, vector<1x16x32xf32>,
    return
  }
  func.func @transform_0(%arg0: i32) -> i32 {
    %c0_i32 = arith.constant 0 : i32
    %c0_i32_0 = arith.constant 0 : i32
    return %c0_i32 : i32
  }
  func.func @transform_1(%arg0: i32) -> (i32, i32, i32, i32) {
    %c0_i32 = arith.constant 0 : i32
    %c0_i32_0 = arith.constant 0 : i32
    %c0_i32_1 = arith.constant 0 : i32
    %c0_i32_2 = arith.constant 0 : i32
    return %arg0, %c0_i32, %c0_i32_0, %c0_i32_1 : i32, i32, i32, i32
  }
  func.func @transform_2(%arg0: i32) -> (i32, i32, i32, i32) {
    %c0_i32 = arith.constant 0 : i32
    %c0_i32_0 = arith.constant 0 : i32
    %c0_i32_1 = arith.constant 0 : i32
    %c0_i32_2 = arith.constant 0 : i32
    return %arg0, %c0_i32, %c0_i32_0, %c0_i32_1 : i32, i32, i32, i32
  }
  func.func @transform_3(%arg0: i32) -> (i32, i32, i32, i32) {
    %c0_i32 = arith.constant 0 : i32
    %c0_i32_0 = arith.constant 0 : i32
    %c0_i32_1 = arith.constant 0 : i32
    %c0_i32_2 = arith.constant 0 : i32
    return %arg0, %c0_i32, %c0_i32_0, %c0_i32_1 : i32, i32, i32, i32
  }
  func.func @transform_4(%arg0: i32) -> (i32, i32, i32, i32) {
    %c0_i32 = arith.constant 0 : i32
    %c0_i32_0 = arith.constant 0 : i32
    %c0_i32_1 = arith.constant 0 : i32
    %c0_i32_2 = arith.constant 0 : i32
    return %arg0, %c0_i32, %c0_i32_0, %c0_i32_1 : i32, i32, i32, i32
  }
  func.func @transform_5(%arg0: i32) -> (i32, i32, i32, i32) {
    %c0_i32 = arith.constant 0 : i32
    %c0_i32_0 = arith.constant 0 : i32
    %c0_i32_1 = arith.constant 0 : i32
    %c0_i32_2 = arith.constant 0 : i32
    return %arg0, %c0_i32, %c0_i32_0, %c0_i32_1 : i32, i32, i32, i32
  }
  func.func @transform_6(%arg0: i32) -> (i32, i32, i32) {
    %c0_i32 = arith.constant 0 : i32
    %c0_i32_0 = arith.constant 0 : i32
    %c0_i32_1 = arith.constant 0 : i32
    %c0_i32_2 = arith.constant 0 : i32
    return %c0_i32, %c0_i32_0, %c0_i32_1 : i32, i32, i32
  }
  func.func @transform_7(%arg0: i32) -> (i32, i32) {
    %c0_i32 = arith.constant 0 : i32
    %c0_i32_0 = arith.constant 0 : i32
    %c0_i32_1 = arith.constant 0 : i32
    return %c0_i32, %c0_i32_0 : i32, i32
  }
  func.func @transform_8(%arg0: i32) -> (i32, i32, i32) {
    %c0_i32 = arith.constant 0 : i32
    %c0_i32_0 = arith.constant 0 : i32
    %c0_i32_1 = arith.constant 0 : i32
    return %arg0, %c0_i32, %c0_i32_0 : i32, i32, i32
  }
}

module attributes {stable_mosaic.version = 11 : i64} {
  func.func @_mlp_kernel(%arg0: i32, %arg1: memref<32x32xf32, #tpu.memory_space<vmem>>, %arg2: memref<32x64xbf16, #tpu.memory_space<vmem>>, %arg3: memref<1x64xf32, #tpu.memory_space<vmem>>, %arg4: memref<64x32xbf16, #tpu.memory_space<vmem>>, %arg5: memref<1x32xf32, #tpu.memory_space<vmem>>, %arg6: memref<32x32xf32, #tpu.memory_space<vmem>>) attributes {dimension_semantics = [#tpu.dimension_semantics<parallel>], iteration_bounds = array<i64: 1>, scalar_prefetch = 0 : i64, scratch_operands = 0 : i64, tpu.core_type = #tpu.core_type<tc>, window_params = [{transform_indices = @transform_0, window_bounds = array<i64: 32, 32>}, {pipeline_mode = #tpu.pipeline_mode<synchronous>, transform_indices = @transform_1, window_bounds = array<i64: 32, 64>}, {pipeline_mode = #tpu.pipeline_mode<synchronous>, transform_indices = @transform_2, window_bounds = array<i64: 1, 64>}, {pipeline_mode = #tpu.pipeline_mode<synchronous>, transform_indices = @transform_3, window_bounds = array<i64: 64, 32>}, {pipeline_mode = #tpu.pipeline_mode<synchronous>, transform_indices = @transform_4, window_bounds = array<i64: 1, 32>}, {transform_indices = @transform_5, window_bounds = array<i64: 32, 32>}]} {
    %c0 = arith.constant 0 : index
    %c0_0 = arith.constant 0 : index
    %0 = vector.load %arg1[%c0, %c0_0] : memref<32x32xf32, #tpu.memory_space<vmem>>, vector<32x32xf32>
    %1 = arith.truncf %0 : vector<32x32xf32> to vector<32x32xbf16>
    %c0_1 = arith.constant 0 : index
    %c0_2 = arith.constant 0 : index
    %2 = vector.load %arg2[%c0_1, %c0_2] : memref<32x64xbf16, #tpu.memory_space<vmem>>, vector<32x64xbf16>
    %cst = arith.constant dense<0.000000e+00> : vector<32x64xf32>
    %3 = tpu.matmul %1, %2, %cst {dimension_numbers = #tpu.dot_dimension_numbers<[1], [0], [0], [1], [0, 0, 1, 1], [], []>} : vector<32x32xbf16>, vector<32x64xbf16>, vector<32x64xf32> -> vector<32x64xf32>
    %c0_3 = arith.constant 0 : index
    %c0_4 = arith.constant 0 : index
    %4 = vector.load %arg3[%c0_3, %c0_4] : memref<1x64xf32, #tpu.memory_space<vmem>>, vector<1x64xf32>
    %5 = vector.broadcast %4 : vector<1x64xf32> to vector<32x64xf32>
    %6 = arith.addf %3, %5 : vector<32x64xf32>
    %cst_5 = arith.constant 5.000000e-01 : f32
    %7 = vector.broadcast %cst_5 : f32 to vector<32x64xf32>
    %8 = arith.mulf %7, %6 : vector<32x64xf32>
    %cst_6 = arith.constant 0.707106769 : f32
    %9 = vector.broadcast %cst_6 : f32 to vector<32x64xf32>
    %10 = arith.mulf %6, %9 : vector<32x64xf32>
    %11 = math.erf %10 : vector<32x64xf32>
    %cst_7 = arith.constant 1.000000e+00 : f32
    %12 = vector.broadcast %cst_7 : f32 to vector<32x64xf32>
    %13 = arith.addf %12, %11 : vector<32x64xf32>
    %14 = arith.mulf %8, %13 : vector<32x64xf32>
    %15 = arith.truncf %14 : vector<32x64xf32> to vector<32x64xbf16>
    %c0_8 = arith.constant 0 : index
    %c0_9 = arith.constant 0 : index
    %16 = vector.load %arg4[%c0_8, %c0_9] : memref<64x32xbf16, #tpu.memory_space<vmem>>, vector<64x32xbf16>
    %cst_10 = arith.constant dense<0.000000e+00> : vector<32x32xf32>
    %17 = tpu.matmul %15, %16, %cst_10 {dimension_numbers = #tpu.dot_dimension_numbers<[1], [0], [0], [1], [0, 0, 1, 1], [], []>} : vector<32x64xbf16>, vector<64x32xbf16>, vector<32x32xf32> -> vector<32x32xf32>
    %c0_11 = arith.constant 0 : index
    %c0_12 = arith.constant 0 : index
    %18 = vector.load %arg5[%c0_11, %c0_12] : memref<1x32xf32, #tpu.memory_space<vmem>>, vector<1x32xf32>
    %19 = vector.broadcast %18 : vector<1x32xf32> to vector<32x32xf32>
    %20 = arith.addf %17, %19 : vector<32x32xf32>
    %c0_13 = arith.constant 0 : index
    %c0_14 = arith.constant 0 : index
    %21 = vector.load %arg6[%c0_13, %c0_14] : memref<32x32xf32, #tpu.memory_space<vmem>>, vector<32x32xf32>
    tpu.vector_store %arg6[%c0_13, %c0_14], %20 {strides = array<i32>} : memref<32x32xf32, #tpu.memory_space<vmem>>, vector<32x32xf32>,
    return
  }
  func.func @transform_0(%arg0: i32) -> (i32, i32) {
    %c0_i32 = arith.constant 0 : i32
    %c0_i32_0 = arith.constant 0 : i32
    return %arg0, %c0_i32 : i32, i32
  }
  func.func @transform_1(%arg0: i32) -> (i32, i32) {
    %c0_i32 = arith.constant 0 : i32
    %c0_i32_0 = arith.constant 0 : i32
    %c0_i32_1 = arith.constant 0 : i32
    return %c0_i32, %c0_i32_0 : i32, i32
  }
  func.func @transform_2(%arg0: i32) -> (i32, i32) {
    %c0_i32 = arith.constant 0 : i32
    %c0_i32_0 = arith.constant 0 : i32
    %c0_i32_1 = arith.constant 0 : i32
    return %c0_i32, %c0_i32_0 : i32, i32
  }
  func.func @transform_3(%arg0: i32) -> (i32, i32) {
    %c0_i32 = arith.constant 0 : i32
    %c0_i32_0 = arith.constant 0 : i32
    %c0_i32_1 = arith.constant 0 : i32
    return %c0_i32, %c0_i32_0 : i32, i32
  }
  func.func @transform_4(%arg0: i32) -> (i32, i32) {
    %c0_i32 = arith.constant 0 : i32
    %c0_i32_0 = arith.constant 0 : i32
    %c0_i32_1 = arith.constant 0 : i32
    return %c0_i32, %c0_i32_0 : i32, i32
  }
  func.func @transform_5(%arg0: i32) -> (i32, i32) {
    %c0_i32 = arith.constant 0 : i32
    %c0_i32_0 = arith.constant 0 : i32
    return %arg0, %c0_i32 : i32, i32
  }
}

module attributes {stable_mosaic.version = 11 : i64} {
  func.func @_layernorm_kernel(%arg0: i32, %arg1: memref<32x32xf32, #tpu.memory_space<vmem>>, %arg2: memref<1x32xf32, #tpu.memory_space<vmem>>, %arg3: memref<1x32xf32, #tpu.memory_space<vmem>>, %arg4: memref<32x32xf32, #tpu.memory_space<vmem>>) attributes {dimension_semantics = [#tpu.dimension_semantics<parallel>], iteration_bounds = array<i64: 1>, scalar_prefetch = 0 : i64, scratch_operands = 0 : i64, tpu.core_type = #tpu.core_type<tc>, window_params = [{transform_indices = @transform_0, window_bounds = array<i64: 32, 32>}, {pipeline_mode = #tpu.pipeline_mode<synchronous>, transform_indices = @transform_1, window_bounds = array<i64: 1, 32>}, {pipeline_mode = #tpu.pipeline_mode<synchronous>, transform_indices = @transform_2, window_bounds = array<i64: 1, 32>}, {transform_indices = @transform_3, window_bounds = array<i64: 32, 32>}]} {
    %c0 = arith.constant 0 : index
    %c0_0 = arith.constant 0 : index
    %0 = vector.load %arg1[%c0, %c0_0] : memref<32x32xf32, #tpu.memory_space<vmem>>, vector<32x32xf32>
    %cst = arith.constant dense<0.000000e+00> : vector<32xf32>
    %1 = vector.multi_reduction <add>, %0, %cst [1] : vector<32x32xf32> to vector<32xf32>
    %2 = vector.shape_cast %1 : vector<32xf32> to vector<32x1xf32>
    %cst_1 = arith.constant 3.200000e+01 : f32
    %3 = vector.broadcast %cst_1 : f32 to vector<32x1xf32>
    %4 = arith.divf %2, %3 : vector<32x1xf32>
    %5 = vector.broadcast %4 : vector<32x1xf32> to vector<32x32xf32>
    %6 = arith.subf %0, %5 : vector<32x32xf32>
    %7 = arith.mulf %6, %6 : vector<32x32xf32>
    %cst_2 = arith.constant dense<0.000000e+00> : vector<32xf32>
    %8 = vector.multi_reduction <add>, %7, %cst_2 [1] : vector<32x32xf32> to vector<32xf32>
    %9 = vector.shape_cast %8 : vector<32xf32> to vector<32x1xf32>
    %cst_3 = arith.constant 3.200000e+01 : f32
    %10 = vector.broadcast %cst_3 : f32 to vector<32x1xf32>
    %11 = arith.divf %9, %10 : vector<32x1xf32>
    %12 = vector.broadcast %4 : vector<32x1xf32> to vector<32x32xf32>
    %13 = arith.subf %0, %12 : vector<32x32xf32>
    %cst_4 = arith.constant 9.99999974E-6 : f32
    %14 = vector.broadcast %cst_4 : f32 to vector<32x1xf32>
    %15 = arith.addf %11, %14 : vector<32x1xf32>
    %16 = math.rsqrt %15 : vector<32x1xf32>
    %17 = vector.broadcast %16 : vector<32x1xf32> to vector<32x32xf32>
    %18 = arith.mulf %13, %17 : vector<32x32xf32>
    %c0_5 = arith.constant 0 : index
    %c0_6 = arith.constant 0 : index
    %19 = vector.load %arg2[%c0_5, %c0_6] : memref<1x32xf32, #tpu.memory_space<vmem>>, vector<1x32xf32>
    %20 = vector.broadcast %19 : vector<1x32xf32> to vector<32x32xf32>
    %21 = arith.mulf %18, %20 : vector<32x32xf32>
    %c0_7 = arith.constant 0 : index
    %c0_8 = arith.constant 0 : index
    %22 = vector.load %arg3[%c0_7, %c0_8] : memref<1x32xf32, #tpu.memory_space<vmem>>, vector<1x32xf32>
    %23 = vector.broadcast %22 : vector<1x32xf32> to vector<32x32xf32>
    %24 = arith.addf %21, %23 : vector<32x32xf32>
    %c0_9 = arith.constant 0 : index
    %c0_10 = arith.constant 0 : index
    %25 = vector.load %arg4[%c0_9, %c0_10] : memref<32x32xf32, #tpu.memory_space<vmem>>, vector<32x32xf32>
    tpu.vector_store %arg4[%c0_9, %c0_10], %24 {strides = array<i32>} : memref<32x32xf32, #tpu.memory_space<vmem>>, vector<32x32xf32>,
    return
  }
  func.func @transform_0(%arg0: i32) -> (i32, i32) {
    %c0_i32 = arith.constant 0 : i32
    %c0_i32_0 = arith.constant 0 : i32
    return %arg0, %c0_i32 : i32, i32
  }
  func.func @transform_1(%arg0: i32) -> (i32, i32) {
    %c0_i32 = arith.constant 0 : i32
    %c0_i32_0 = arith.constant 0 : i32
    %c0_i32_1 = arith.constant 0 : i32
    return %c0_i32, %c0_i32_0 : i32, i32
  }
  func.func @transform_2(%arg0: i32) -> (i32, i32) {
    %c0_i32 = arith.constant 0 : i32
    %c0_i32_0 = arith.constant 0 : i32
    %c0_i32_1 = arith.constant 0 : i32
    return %c0_i32, %c0_i32_0 : i32, i32
  }
  func.func @transform_3(%arg0: i32) -> (i32, i32) {
    %c0_i32 = arith.constant 0 : i32
    %c0_i32_0 = arith.constant 0 : i32
    return %arg0, %c0_i32 : i32, i32
  }
}

module attributes {stable_mosaic.version = 11 : i64} {
  func.func @_linear_kernel(%arg0: i32, %arg1: memref<2x32xf32, #tpu.memory_space<vmem>>, %arg2: memref<32x8xbf16, #tpu.memory_space<vmem>>, %arg3: memref<1x8xf32, #tpu.memory_space<vmem>>, %arg4: memref<2x8xf32, #tpu.memory_space<vmem>>) attributes {dimension_semantics = [#tpu.dimension_semantics<parallel>], iteration_bounds = array<i64: 1>, scalar_prefetch = 0 : i64, scratch_operands = 0 : i64, tpu.core_type = #tpu.core_type<tc>, window_params = [{transform_indices = @transform_0, window_bounds = array<i64: 2, 32>}, {pipeline_mode = #tpu.pipeline_mode<synchronous>, transform_indices = @transform_1, window_bounds = array<i64: 32, 8>}, {pipeline_mode = #tpu.pipeline_mode<synchronous>, transform_indices = @transform_2, window_bounds = array<i64: 1, 8>}, {transform_indices = @transform_3, window_bounds = array<i64: 2, 8>}]} {
    %c0 = arith.constant 0 : index
    %c0_0 = arith.constant 0 : index
    %0 = vector.load %arg1[%c0, %c0_0] : memref<2x32xf32, #tpu.memory_space<vmem>>, vector<2x32xf32>
    %1 = arith.truncf %0 : vector<2x32xf32> to vector<2x32xbf16>
    %c0_1 = arith.constant 0 : index
    %c0_2 = arith.constant 0 : index
    %2 = vector.load %arg2[%c0_1, %c0_2] : memref<32x8xbf16, #tpu.memory_space<vmem>>, vector<32x8xbf16>
    %cst = arith.constant dense<0.000000e+00> : vector<2x8xf32>
    %3 = tpu.matmul %1, %2, %cst {dimension_numbers = #tpu.dot_dimension_numbers<[1], [0], [0], [1], [0, 0, 1, 1], [], []>} : vector<2x32xbf16>, vector<32x8xbf16>, vector<2x8xf32> -> vector<2x8xf32>
    %c0_3 = arith.constant 0 : index
    %c0_4 = arith.constant 0 : index
    %4 = vector.load %arg3[%c0_3, %c0_4] : memref<1x8xf32, #tpu.memory_space<vmem>>, vector<1x8xf32>
    %5 = vector.broadcast %4 : vector<1x8xf32> to vector<2x8xf32>
    %6 = arith.addf %3, %5 : vector<2x8xf32>
    %c0_5 = arith.constant 0 : index
    %c0_6 = arith.constant 0 : index
    %7 = vector.load %arg4[%c0_5, %c0_6] : memref<2x8xf32, #tpu.memory_space<vmem>>, vector<2x8xf32>
    tpu.vector_store %arg4[%c0_5, %c0_6], %6 {strides = array<i32>} : memref<2x8xf32, #tpu.memory_space<vmem>>, vector<2x8xf32>,
    return
  }
  func.func @transform_0(%arg0: i32) -> (i32, i32) {
    %c0_i32 = arith.constant 0 : i32
    %c0_i32_0 = arith.constant 0 : i32
    return %arg0, %c0_i32 : i32, i32
  }
  func.func @transform_1(%arg0: i32) -> (i32, i32) {
    %c0_i32 = arith.constant 0 : i32
    %c0_i32_0 = arith.constant 0 : i32
    %c0_i32_1 = arith.constant 0 : i32
    return %c0_i32, %c0_i32_0 : i32, i32
  }
  func.func @transform_2(%arg0: i32) -> (i32, i32) {
    %c0_i32 = arith.constant 0 : i32
    %c0_i32_0 = arith.constant 0 : i32
    %c0_i32_1 = arith.constant 0 : i32
    return %c0_i32, %c0_i32_0 : i32, i32
  }
  func.func @transform_3(%arg0: i32) -> (i32, i32) {
    %c0_i32 = arith.constant 0 : i32
    %c0_i32_0 = arith.constant 0 : i32
    return %arg0, %c0_i32 : i32, i32
  }
}

</mosaic_0001>

<llo_original>
// kernel: nystromformer_forward.12
$region0: #{nystromformer_forward.12}
  #allocation0 [shape = 'u32[]', space=smem, size = 0x4, offset = 0x4, fixed_abs, tag = 'smem constant byte address 0x4 - core index']
  #allocation1 [shape = 'u32[144,128]{1,0:T(1,128)}', space=vmem, size = 0x12000, scoped, tag = 'internal scratch']
  %s0 = inlined_call_operand.vmem [shape: f32[32,32], index: 0, kind: input, shape index: {}]
  %s1 = inlined_call_operand.vmem [shape: bf16[32,32], index: 1, kind: input, shape index: {}]
  %s2 = inlined_call_operand.vmem [shape: bf16[32,32], index: 2, kind: input, shape index: {}]
  %s3 = inlined_call_operand.vmem [shape: bf16[32,32], index: 3, kind: input, shape index: {}]
  %s4 = inlined_call_operand.vmem [shape: f32[1,32], index: 4, kind: input, shape index: {}]
  %s5 = inlined_call_operand.vmem [shape: f32[1,32], index: 5, kind: input, shape index: {}]
  %s6 = inlined_call_operand.vmem [shape: f32[1,32], index: 6, kind: input, shape index: {}]
  %s7 = inlined_call_operand.vmem [shape: f32[32,32], index: 7, kind: output, shape index: {0}]
  %s8 = inlined_call_operand.vmem [shape: f32[32,32], index: 8, kind: output, shape index: {1}]
  %s9 = inlined_call_operand.vmem [shape: f32[32,32], index: 9, kind: output, shape index: {2}]
  %10 = xla_tuple %s7, %s8, %s9
  %s11 = sld [smem:[#allocation0]]
  $region54: #{nystromformer_forward.12} parent=0
    _
  %s13 = ssub.s32 1, %s11
  %s14 = scalar_select 0, %s13, %s11
  // Predicated region
  $region2: #{nystromformer_forward.12} parent=0 // pred_check
    _
  $region3: #{nystromformer_forward.12} parent=0 // pred_check_branch
    %16 = sbr.rel (0) target = $region5
  $region4: #{nystromformer_forward.12} parent=0 // pred_region
    _
  $region5: #{nystromformer_forward.12} parent=0 // pred_fallthru
    _
  // Predicated region
  $region6: #{nystromformer_forward.12} parent=0 // pred_check
    _
  $region7: #{nystromformer_forward.12} parent=0 // pred_check_branch
    %18 = sbr.rel (0) target = $region9
  $region8: #{nystromformer_forward.12} parent=0 // pred_region
    _
  $region9: #{nystromformer_forward.12} parent=0 // pred_fallthru
    _
  // Predicated region
  $region10: #{nystromformer_forward.12} parent=0 // pred_check
    _
  $region11: #{nystromformer_forward.12} parent=0 // pred_check_branch
    %20 = sbr.rel (0) target = $region13
  $region12: #{nystromformer_forward.12} parent=0 // pred_region
    _
  $region13: #{nystromformer_forward.12} parent=0 // pred_fallthru
    _
  // Predicated region
  $region14: #{nystromformer_forward.12} parent=0 // pred_check
    _
  $region15: #{nystromformer_forward.12} parent=0 // pred_check_branch
    %22 = sbr.rel (0) target = $region17
  $region16: #{nystromformer_forward.12} parent=0 // pred_region
    _
  $region17: #{nystromformer_forward.12} parent=0 // pred_fallthru
    _
  // Predicated region
  $region18: #{nystromformer_forward.12} parent=0 // pred_check
    _
  $region19: #{nystromformer_forward.12} parent=0 // pred_check_branch
    %24 = sbr.rel (0) target = $region21
  $region20: #{nystromformer_forward.12} parent=0 // pred_region
    _
  $region21: #{nystromformer_forward.12} parent=0 // pred_fallthru
    _
  // Predicated region
  $region22: #{nystromformer_forward.12} parent=0 // pred_check
    _
  $region23: #{nystromformer_forward.12} parent=0 // pred_check_branch
    %26 = sbr.rel (0) target = $region25
  $region24: #{nystromformer_forward.12} parent=0 // pred_region
    _
  $region25: #{nystromformer_forward.12} parent=0 // pred_fallthru
    _
  // Predicated region
  $region26: #{nystromformer_forward.12} parent=0 // pred_check
    _
  $region27: #{nystromformer_forward.12} parent=0 // pred_check_branch
    %28 = sbr.rel (0) target = $region29
  $region28: #{nystromformer_forward.12} parent=0 // pred_region
    _
  $region29: #{nystromformer_forward.12} parent=0 // pred_fallthru
    _
  %v30 = vld [vmem:[%s0] sm:$0xff]
  %v31 = vld [vmem:[%s0 + $0x8] sm:$0xff]
  %v32 = vld [vmem:[%s0 + $0x10] sm:$0xff]
  %v33 = vld [vmem:[%s0 + $0x18] sm:$0xff]
  %v34 = vpack.c.bf16 %v31, %v30
  %v35 = vpack.c.bf16 %v33, %v32
  %v36 = vld [vmem:[%s1] sm:$0xf]
  %v37 = vld [vmem:[%s1 + $0x4] sm:$0xf]
  %v38 = vld [vmem:[%s1 + $0x8] sm:$0xf]
  %v39 = vld [vmem:[%s1 + $0xc] sm:$0xf]
  %v40 = vld [vmem:[%s4] sm:$0x1]
  %v42 = vlaneseq
  %v43 = vshrl.u32 %v42, 7
  %v44 = vsub.s32 0, %v43
  %v45 = vrot.slane %v40, %v44
  %v51 = vunpack.c.l.b16 %v36
  %v52 = vunpack.c.l.b16 %v37
  %v53 = vunpack.c.l.b16 %v38
  %v54 = vunpack.c.l.b16 %v39
  %v55 = vpack.c.b16 %v52, %v51
  %v56 = vpack.c.b16 %v54, %v53
  %vm59 = vcmask 261120
  %v61 = vsel %vm59, %v34, 0
  %v64 = vsel %vm59, %v35, 0
  %66 = vmatprep.subr.bf16.mxu0 0
  %67 = vmatpush1.bf16.msra.mxu0 %v55
  %68 = vmatprep.subr.bf16.mxu0 0
  %69 = vmatpush1.bf16.msra.mxu0 %v56
  %70 = vmatprep.subr.bf16.mxu0 0
  %71 = vmatpush1.bf16.msra.mxu0 0
  %72 = vmatprep.subr.bf16.mxu0 0
  %73 = vmatpush1.bf16.msra.mxu0 0
  %74 = vmatprep.subr.bf16.mxu0 0
  %75 = vmatpush1.bf16.msra.mxu0 0
  %76 = vmatprep.subr.bf16.mxu0 0
  %77 = vmatpush1.bf16.msra.mxu0 0
  %78 = vmatprep.subr.bf16.mxu0 0
  %79 = vmatpush1.bf16.msra.mxu0 0
  %80 = vmatprep.subr.bf16.mxu0 0
  %81 = vmatpush1.bf16.msra.mxu0 0
  %82 = vmatprep.subr.bf16.mxu0 0
  %83 = vmatpush1.bf16.msra.mxu0 0
  %84 = vmatprep.subr.bf16.mxu0 0
  %85 = vmatpush1.bf16.msra.mxu0 0
  %86 = vmatprep.subr.bf16.mxu0 0
  %87 = vmatpush1.bf16.msra.mxu0 0
  %88 = vmatprep.subr.bf16.mxu0 0
  %89 = vmatpush1.bf16.msra.mxu0 0
  %90 = vmatprep.subr.bf16.mxu0 0
  %91 = vmatpush1.bf16.msra.mxu0 0
  %92 = vmatprep.subr.bf16.mxu0 0
  %93 = vmatpush1.bf16.msra.mxu0 0
  %94 = vmatprep.subr.bf16.mxu0 0
  %95 = vmatpush1.bf16.msra.mxu0 0
  %96 = vmatprep.subr.bf16.mxu0 0
  %97 = vmatpush1.bf16.msra.mxu0 0
  %98 = vmatprep.mubr.bf16.mxu0 0
  %99 = vmatmul.mubr.bf16.gmra.mrb[0].mxu0 %v61
  %v100 = vpop.f32.mrb[0].mxu0
  %v101 = vadd.f32 %v45, %v100
  %v102 = vpop.f32.mrb[0].mxu0
  %v103 = vpop.f32.mrb[0].mxu0
  %v104 = vadd.f32 %v45, %v103
  %v105 = vpop.f32.mrb[0].mxu0
  %106 = vmatprep.mubr.bf16.mxu0 0
  %107 = vmatmul.mubr.bf16.gmra.mrb[0].mxu0 %v64
  %v108 = vpop.f32.mrb[0].mxu0
  %v109 = vadd.f32 %v45, %v108
  %v110 = vpop.f32.mrb[0].mxu0
  %v111 = vpop.f32.mrb[0].mxu0
  %v112 = vadd.f32 %v45, %v111
  %v113 = vpop.f32.mrb[0].mxu0
  %114 = vdwg.mxu0
  %v115 = vmul.f32 %v101, 0.5
  %v116 = vmul.f32 %v104, 0.5
  %v117 = vmul.f32 %v109, 0.5
  %v118 = vmul.f32 %v112, 0.5
  %119 = vst.msk [vmem:[%s7] sm:$0xff] %vm59, %v115
  %120 = vst.msk [vmem:[%s7 + $0x8] sm:$0xff] %vm59, %v116
  %121 = vst.msk [vmem:[%s7 + $0x10] sm:$0xff] %vm59, %v117
  %122 = vst.msk [vmem:[%s7 + $0x18] sm:$0xff] %vm59, %v118
  %v123 = vld [vmem:[%s2] sm:$0xf]
  %v124 = vld [vmem:[%s2 + $0x4] sm:$0xf]
  %v125 = vld [vmem:[%s2 + $0x8] sm:$0xf]
  %v126 = vld [vmem:[%s2 + $0xc] sm:$0xf]
  %v127 = vld [vmem:[%s5] sm:$0x1]
  %v129 = vlaneseq
  %v130 = vshrl.u32 %v129, 7
  %v131 = vsub.s32 0, %v130
  %v132 = vrot.slane %v127, %v131
  %v138 = vunpack.c.l.b16 %v123
  %v139 = vunpack.c.l.b16 %v124
  %v140 = vunpack.c.l.b16 %v125
  %v141 = vunpack.c.l.b16 %v126
  %v142 = vpack.c.b16 %v139, %v138
  %v143 = vpack.c.b16 %v141, %v140
  %146 = vmatprep.subr.bf16.mxu0 0
  %147 = vmatpush1.bf16.msra.mxu0 %v142
  %148 = vmatprep.subr.bf16.mxu0 0
  %149 = vmatpush1.bf16.msra.mxu0 %v143
  %150 = vmatprep.subr.bf16.mxu0 0
  %151 = vmatpush1.bf16.msra.mxu0 0
  %152 = vmatprep.subr.bf16.mxu0 0
  %153 = vmatpush1.bf16.msra.mxu0 0
  %154 = vmatprep.subr.bf16.mxu0 0
  %155 = vmatpush1.bf16.msra.mxu0 0
  %156 = vmatprep.subr.bf16.mxu0 0
  %157 = vmatpush1.bf16.msra.mxu0 0
  %158 = vmatprep.subr.bf16.mxu0 0
  %159 = vmatpush1.bf16.msra.mxu0 0
  %160 = vmatprep.subr.bf16.mxu0 0
  %161 = vmatpush1.bf16.msra.mxu0 0
  %162 = vmatprep.subr.bf16.mxu0 0
  %163 = vmatpush1.bf16.msra.mxu0 0
  %164 = vmatprep.subr.bf16.mxu0 0
  %165 = vmatpush1.bf16.msra.mxu0 0
  %166 = vmatprep.subr.bf16.mxu0 0
  %167 = vmatpush1.bf16.msra.mxu0 0
  %168 = vmatprep.subr.bf16.mxu0 0
  %169 = vmatpush1.bf16.msra.mxu0 0
  %170 = vmatprep.subr.bf16.mxu0 0
  %171 = vmatpush1.bf16.msra.mxu0 0
  %172 = vmatprep.subr.bf16.mxu0 0
  %173 = vmatpush1.bf16.msra.mxu0 0
  %174 = vmatprep.subr.bf16.mxu0 0
  %175 = vmatpush1.bf16.msra.mxu0 0
  %176 = vmatprep.subr.bf16.mxu0 0
  %177 = vmatpush1.bf16.msra.mxu0 0
  %178 = vmatprep.mubr.bf16.mxu0 0
  %179 = vmatmul.mubr.bf16.gmra.mrb[0].mxu0 %v61
  %v180 = vpop.f32.mrb[0].mxu0
  %v181 = vadd.f32 %v132, %v180
  %v182 = vpop.f32.mrb[0].mxu0
  %v183 = vpop.f32.mrb[0].mxu0
  %v184 = vadd.f32 %v132, %v183
  %v185 = vpop.f32.mrb[0].mxu0
  %186 = vmatprep.mubr.bf16.mxu0 0
  %187 = vmatmul.mubr.bf16.gmra.mrb[0].mxu0 %v64
  %v188 = vpop.f32.mrb[0].mxu0
  %v189 = vadd.f32 %v132, %v188
  %v190 = vpop.f32.mrb[0].mxu0
  %v191 = vpop.f32.mrb[0].mxu0
  %v192 = vadd.f32 %v132, %v191
  %v193 = vpop.f32.mrb[0].mxu0
  %194 = vdwg.mxu0
  %v195 = vmul.f32 %v181, 0.5
  %v196 = vmul.f32 %v184, 0.5
  %v197 = vmul.f32 %v189, 0.5
  %v198 = vmul.f32 %v192, 0.5
  %199 = vst.msk [vmem:[%s8] sm:$0xff] %vm59, %v195
  %200 = vst.msk [vmem:[%s8 + $0x8] sm:$0xff] %vm59, %v196
  %201 = vst.msk [vmem:[%s8 + $0x10] sm:$0xff] %vm59, %v197
  %202 = vst.msk [vmem:[%s8 + $0x18] sm:$0xff] %vm59, %v198
  %v203 = vld [vmem:[%s3] sm:$0xf]
  %v204 = vld [vmem:[%s3 + $0x4] sm:$0xf]
  %v205 = vld [vmem:[%s3 + $0x8] sm:$0xf]
  %v206 = vld [vmem:[%s3 + $0xc] sm:$0xf]
  %v207 = vld [vmem:[%s6] sm:$0x1]
  %v209 = vlaneseq
  %v210 = vshrl.u32 %v209, 7
  %v211 = vsub.s32 0, %v210
  %v212 = vrot.slane %v207, %v211
  %v218 = vunpack.c.l.b16 %v203
  %v219 = vunpack.c.l.b16 %v204
  %v220 = vunpack.c.l.b16 %v205
  %v221 = vunpack.c.l.b16 %v206
  %v222 = vpack.c.b16 %v219, %v218
  %v223 = vpack.c.b16 %v221, %v220
  %226 = vmatprep.subr.bf16.mxu0 0
  %227 = vmatpush1.bf16.msra.mxu0 %v222
  %228 = vmatprep.subr.bf16.mxu0 0
  %229 = vmatpush1.bf16.msra.mxu0 %v223
  %230 = vmatprep.subr.bf16.mxu0 0
  %231 = vmatpush1.bf16.msra.mxu0 0
  %232 = vmatprep.subr.bf16.mxu0 0
  %233 = vmatpush1.bf16.msra.mxu0 0
  %234 = vmatprep.subr.bf16.mxu0 0
  %235 = vmatpush1.bf16.msra.mxu0 0
  %236 = vmatprep.subr.bf16.mxu0 0
  %237 = vmatpush1.bf16.msra.mxu0 0
  %238 = vmatprep.subr.bf16.mxu0 0
  %239 = vmatpush1.bf16.msra.mxu0 0
  %240 = vmatprep.subr.bf16.mxu0 0
  %241 = vmatpush1.bf16.msra.mxu0 0
  %242 = vmatprep.subr.bf16.mxu0 0
  %243 = vmatpush1.bf16.msra.mxu0 0
  %244 = vmatprep.subr.bf16.mxu0 0
  %245 = vmatpush1.bf16.msra.mxu0 0
  %246 = vmatprep.subr.bf16.mxu0 0
  %247 = vmatpush1.bf16.msra.mxu0 0
  %248 = vmatprep.subr.bf16.mxu0 0
  %249 = vmatpush1.bf16.msra.mxu0 0
  %250 = vmatprep.subr.bf16.mxu0 0
  %251 = vmatpush1.bf16.msra.mxu0 0
  %252 = vmatprep.subr.bf16.mxu0 0
  %253 = vmatpush1.bf16.msra.mxu0 0
  %254 = vmatprep.subr.bf16.mxu0 0
  %255 = vmatpush1.bf16.msra.mxu0 0
  %256 = vmatprep.subr.bf16.mxu0 0
  %257 = vmatpush1.bf16.msra.mxu0 0
  %258 = vmatprep.mubr.bf16.mxu0 0
  %259 = vmatmul.mubr.bf16.gmra.mrb[0].mxu0 %v61
  %v260 = vpop.f32.mrb[0].mxu0
  %v261 = vadd.f32 %v212, %v260
  %v262 = vpop.f32.mrb[0].mxu0
  %v263 = vpop.f32.mrb[0].mxu0
  %v264 = vadd.f32 %v212, %v263
  %v265 = vpop.f32.mrb[0].mxu0
  %266 = vmatprep.mubr.bf16.mxu0 0
  %267 = vmatmul.mubr.bf16.gmra.mrb[0].mxu0 %v64
  %v268 = vpop.f32.mrb[0].mxu0
  %v269 = vadd.f32 %v212, %v268
  %v270 = vpop.f32.mrb[0].mxu0
  %v271 = vpop.f32.mrb[0].mxu0
  %v272 = vadd.f32 %v212, %v271
  %v273 = vpop.f32.mrb[0].mxu0
  %274 = vdwg.mxu0
  %275 = vst.msk [vmem:[%s9] sm:$0xff] %vm59, %v261
  %276 = vst.msk [vmem:[%s9 + $0x8] sm:$0xff] %vm59, %v264
  %277 = vst.msk [vmem:[%s9 + $0x10] sm:$0xff] %vm59, %v269
  %278 = vst.msk [vmem:[%s9 + $0x18] sm:$0xff] %vm59, %v272
  // Predicated region
  $region30: #{nystromformer_forward.12} parent=0 // pred_check
    _
  $region31: #{nystromformer_forward.12} parent=0 // pred_check_branch
    %280 = sbr.rel (0) target = $region33
  $region32: #{nystromformer_forward.12} parent=0 // pred_region
    _
  $region33: #{nystromformer_forward.12} parent=0 // pred_fallthru
    _
  // Predicated region
  $region34: #{nystromformer_forward.12} parent=0 // pred_check
    _
  $region35: #{nystromformer_forward.12} parent=0 // pred_check_branch
    %282 = sbr.rel (0) target = $region37
  $region36: #{nystromformer_forward.12} parent=0 // pred_region
    _
  $region37: #{nystromformer_forward.12} parent=0 // pred_fallthru
    _
  // Predicated region
  $region38: #{nystromformer_forward.12} parent=0 // pred_check
    _
  $region39: #{nystromformer_forward.12} parent=0 // pred_check_branch
    %284 = sbr.rel (0) target = $region41
  $region40: #{nystromformer_forward.12} parent=0 // pred_region
    _
  $region41: #{nystromformer_forward.12} parent=0 // pred_fallthru
    _
  // Predicated region
  $region42: #{nystromformer_forward.12} parent=0 // pred_check
    _
  $region43: #{nystromformer_forward.12} parent=0 // pred_check_branch
    %286 = sbr.rel (0) target = $region45
  $region44: #{nystromformer_forward.12} parent=0 // pred_region
    _
  $region45: #{nystromformer_forward.12} parent=0 // pred_fallthru
    _
  // Predicated region
  $region46: #{nystromformer_forward.12} parent=0 // pred_check
    _
  $region47: #{nystromformer_forward.12} parent=0 // pred_check_branch
    %288 = sbr.rel (0) target = $region49
  $region48: #{nystromformer_forward.12} parent=0 // pred_region
    _
  $region49: #{nystromformer_forward.12} parent=0 // pred_fallthru
    _
  // Predicated region
  $region50: #{nystromformer_forward.12} parent=0 // pred_check
    _
  $region51: #{nystromformer_forward.12} parent=0 // pred_check_branch
    %290 = sbr.rel (0) target = $region53
  $region52: #{nystromformer_forward.12} parent=0 // pred_region
    _
  $region53: #{nystromformer_forward.12} parent=0 // pred_fallthru
    _

// kernel: nystromformer_forward.14
$region0: #{nystromformer_forward.14}
  #allocation0 [shape = 'u32[]', space=smem, size = 0x4, offset = 0x4, fixed_abs, tag = 'smem constant byte address 0x4 - core index']
  #allocation1 [shape = 'u32[144,128]{1,0:T(1,128)}', space=vmem, size = 0x12000, scoped, tag = 'internal scratch']
  %s0 = inlined_call_operand.vmem [shape: f32[32,32], index: 0, kind: input, shape index: {}]
  %s1 = inlined_call_operand.vmem [shape: f32[32,32], index: 1, kind: input, shape index: {}]
  %s2 = inlined_call_operand.vmem [shape: f32[1,32], index: 2, kind: input, shape index: {}]
  %s3 = inlined_call_operand.vmem [shape: f32[1,32], index: 3, kind: input, shape index: {}]
  %s4 = inlined_call_operand.vmem [shape: f32[32,32], index: 4, kind: output, shape index: {}]
  %s5 = sld [smem:[#allocation0]]
  $region26: #{nystromformer_forward.14} parent=0
    _
  %s7 = ssub.s32 1, %s5
  %s8 = scalar_select 0, %s7, %s5
  // Predicated region
  $region2: #{nystromformer_forward.14} parent=0 // pred_check
    _
  $region3: #{nystromformer_forward.14} parent=0 // pred_check_branch
    %10 = sbr.rel (0) target = $region5
  $region4: #{nystromformer_forward.14} parent=0 // pred_region
    _
  $region5: #{nystromformer_forward.14} parent=0 // pred_fallthru
    _
  // Predicated region
  $region6: #{nystromformer_forward.14} parent=0 // pred_check
    _
  $region7: #{nystromformer_forward.14} parent=0 // pred_check_branch
    %12 = sbr.rel (0) target = $region9
  $region8: #{nystromformer_forward.14} parent=0 // pred_region
    _
  $region9: #{nystromformer_forward.14} parent=0 // pred_fallthru
    _
  // Predicated region
  $region10: #{nystromformer_forward.14} parent=0 // pred_check
    _
  $region11: #{nystromformer_forward.14} parent=0 // pred_check_branch
    %14 = sbr.rel (0) target = $region13
  $region12: #{nystromformer_forward.14} parent=0 // pred_region
    _
  $region13: #{nystromformer_forward.14} parent=0 // pred_fallthru
    _
  // Predicated region
  $region14: #{nystromformer_forward.14} parent=0 // pred_check
    _
  $region15: #{nystromformer_forward.14} parent=0 // pred_check_branch
    %16 = sbr.rel (0) target = $region17
  $region16: #{nystromformer_forward.14} parent=0 // pred_region
    _
  $region17: #{nystromformer_forward.14} parent=0 // pred_fallthru
    _
  %v17 = vld [vmem:[%s0] sm:$0xff]
  %v18 = vld [vmem:[%s0 + $0x8] sm:$0xff]
  %v19 = vld [vmem:[%s0 + $0x10] sm:$0xff]
  %v20 = vld [vmem:[%s0 + $0x18] sm:$0xff]
  %v21 = vld [vmem:[%s1] sm:$0xff]
  %v22 = vld [vmem:[%s1 + $0x8] sm:$0xff]
  %v23 = vld [vmem:[%s1 + $0x10] sm:$0xff]
  %v24 = vld [vmem:[%s1 + $0x18] sm:$0xff]
  %v25 = vadd.f32 %v17, %v21
  %v26 = vadd.f32 %v18, %v22
  %v27 = vadd.f32 %v19, %v23
  %v28 = vadd.f32 %v20, %v24
  %vm29 = vcmask 261120
  %v30 = vsel %vm29, %v25, 0.0
  %31 = vadd.xlane.f32.xlu0 %v30
  %v32 = vpop.xlane.xlu0 %31
  %v33 = vsel %vm29, %v26, 0.0
  %34 = vadd.xlane.f32.xlu0 %v33
  %v35 = vpop.xlane.xlu0 %34
  %v36 = vsel %vm29, %v27, 0.0
  %37 = vadd.xlane.f32.xlu0 %v36
  %v38 = vpop.xlane.xlu0 %37
  %v39 = vsel %vm29, %v28, 0.0
  %40 = vadd.xlane.f32.xlu0 %v39
  %v41 = vpop.xlane.xlu0 %40
  %v42 = vrcp.pop 32.0
  %v43 = vmul.f32 %v32, %v42
  %v44 = vmul.f32 %v35, %v42
  %v45 = vmul.f32 %v38, %v42
  %v46 = vmul.f32 %v41, %v42
  %v47 = vsub.f32 %v25, %v43
  %v48 = vsub.f32 %v26, %v44
  %v49 = vsub.f32 %v27, %v45
  %v50 = vsub.f32 %v28, %v46
  %v51 = vmul.f32 %v47, %v47
  %v52 = vmul.f32 %v48, %v48
  %v53 = vmul.f32 %v49, %v49
  %v54 = vmul.f32 %v50, %v50
  %v55 = vsel %vm29, %v51, 0.0
  %56 = vadd.xlane.f32.xlu0 %v55
  %v57 = vpop.xlane.xlu0 %56
  %v58 = vsel %vm29, %v52, 0.0
  %59 = vadd.xlane.f32.xlu0 %v58
  %v60 = vpop.xlane.xlu0 %59
  %v61 = vsel %vm29, %v53, 0.0
  %62 = vadd.xlane.f32.xlu0 %v61
  %v63 = vpop.xlane.xlu0 %62
  %v64 = vsel %vm29, %v54, 0.0
  %65 = vadd.xlane.f32.xlu0 %v64
  %v66 = vpop.xlane.xlu0 %65
  %v67 = vmul.f32 %v57, %v42
  %v68 = vmul.f32 %v60, %v42
  %v69 = vmul.f32 %v63, %v42
  %v70 = vmul.f32 %v66, %v42
  %v71 = vadd.f32 %v67, 1e-05
  %v72 = vadd.f32 %v68, 1e-05
  %v73 = vadd.f32 %v69, 1e-05
  %v74 = vadd.f32 %v70, 1e-05
  %v75 = vrsqrt.pop %v71
  %v76 = vrsqrt.pop %v72
  %v77 = vrsqrt.pop %v73
  %v78 = vrsqrt.pop %v74
  %v79 = vmul.f32 %v47, %v75
  %v80 = vmul.f32 %v48, %v76
  %v81 = vmul.f32 %v49, %v77
  %v82 = vmul.f32 %v50, %v78
  %v83 = vld [vmem:[%s2] sm:$0x1]
  %v85 = vlaneseq
  %v86 = vshrl.u32 %v85, 7
  %v87 = vsub.s32 0, %v86
  %v88 = vrot.slane %v83, %v87
  %v90 = vmul.f32 %v79, %v88
  %v91 = vmul.f32 %v80, %v88
  %v92 = vmul.f32 %v81, %v88
  %v93 = vmul.f32 %v82, %v88
  %v94 = vld [vmem:[%s3] sm:$0x1]
  %v96 = vlaneseq
  %v97 = vshrl.u32 %v96, 7
  %v98 = vsub.s32 0, %v97
  %v99 = vrot.slane %v94, %v98
  %v101 = vadd.f32 %v90, %v99
  %v102 = vadd.f32 %v91, %v99
  %v103 = vadd.f32 %v92, %v99
  %v104 = vadd.f32 %v93, %v99
  %105 = vst.msk [vmem:[%s4] sm:$0xff] %vm29, %v101
  %106 = vst.msk [vmem:[%s4 + $0x8] sm:$0xff] %vm29, %v102
  %107 = vst.msk [vmem:[%s4 + $0x10] sm:$0xff] %vm29, %v103
  %108 = vst.msk [vmem:[%s4 + $0x18] sm:$0xff] %vm29, %v104
  // Predicated region
  $region18: #{nystromformer_forward.14} parent=0 // pred_check
    _
  $region19: #{nystromformer_forward.14} parent=0 // pred_check_branch
    %110 = sbr.rel (0) target = $region21
  $region20: #{nystromformer_forward.14} parent=0 // pred_region
    _
  $region21: #{nystromformer_forward.14} parent=0 // pred_fallthru
    _
  // Predicated region
  $region22: #{nystromformer_forward.14} parent=0 // pred_check
    _
  $region23: #{nystromformer_forward.14} parent=0 // pred_check_branch
    %112 = sbr.rel (0) target = $region25
  $region24: #{nystromformer_forward.14} parent=0 // pred_region
    _
  $region25: #{nystromformer_forward.14} parent=0 // pred_fallthru
    _

// kernel: nystromformer_forward.15
$region0: #{nystromformer_forward.15}
  #allocation0 [shape = 'u32[]', space=smem, size = 0x4, offset = 0x4, fixed_abs, tag = 'smem constant byte address 0x4 - core index']
  #allocation1 [shape = 'u32[144,128]{1,0:T(1,128)}', space=vmem, size = 0x12000, scoped, tag = 'internal scratch']
  %s0 = inlined_call_operand.vmem [shape: f32[32,32], index: 0, kind: input, shape index: {}]
  %s1 = inlined_call_operand.vmem [shape: bf16[32,64], index: 1, kind: input, shape index: {}]
  %s2 = inlined_call_operand.vmem [shape: f32[1,64], index: 2, kind: input, shape index: {}]
  %s3 = inlined_call_operand.vmem [shape: bf16[64,32], index: 3, kind: input, shape index: {}]
  %s4 = inlined_call_operand.vmem [shape: f32[1,32], index: 4, kind: input, shape index: {}]
  %s5 = inlined_call_operand.vmem [shape: f32[32,32], index: 5, kind: output, shape index: {}]
  %s6 = sld [smem:[#allocation0]]
  $region30: #{nystromformer_forward.15} parent=0
    _
  %s8 = ssub.s32 1, %s6
  %s9 = scalar_select 0, %s8, %s6
  // Predicated region
  $region2: #{nystromformer_forward.15} parent=0 // pred_check
    _
  $region3: #{nystromformer_forward.15} parent=0 // pred_check_branch
    %11 = sbr.rel (0) target = $region5
  $region4: #{nystromformer_forward.15} parent=0 // pred_region
    _
  $region5: #{nystromformer_forward.15} parent=0 // pred_fallthru
    _
  // Predicated region
  $region6: #{nystromformer_forward.15} parent=0 // pred_check
    _
  $region7: #{nystromformer_forward.15} parent=0 // pred_check_branch
    %13 = sbr.rel (0) target = $region9
  $region8: #{nystromformer_forward.15} parent=0 // pred_region
    _
  $region9: #{nystromformer_forward.15} parent=0 // pred_fallthru
    _
  // Predicated region
  $region10: #{nystromformer_forward.15} parent=0 // pred_check
    _
  $region11: #{nystromformer_forward.15} parent=0 // pred_check_branch
    %15 = sbr.rel (0) target = $region13
  $region12: #{nystromformer_forward.15} parent=0 // pred_region
    _
  $region13: #{nystromformer_forward.15} parent=0 // pred_fallthru
    _
  // Predicated region
  $region14: #{nystromformer_forward.15} parent=0 // pred_check
    _
  $region15: #{nystromformer_forward.15} parent=0 // pred_check_branch
    %17 = sbr.rel (0) target = $region17
  $region16: #{nystromformer_forward.15} parent=0 // pred_region
    _
  $region17: #{nystromformer_forward.15} parent=0 // pred_fallthru
    _
  // Predicated region
  $region18: #{nystromformer_forward.15} parent=0 // pred_check
    _
  $region19: #{nystromformer_forward.15} parent=0 // pred_check_branch
    %19 = sbr.rel (0) target = $region21
  $region20: #{nystromformer_forward.15} parent=0 // pred_region
    _
  $region21: #{nystromformer_forward.15} parent=0 // pred_fallthru
    _
  %v21 = vld [vmem:[%s0] sm:$0xff]
  %v22 = vld [vmem:[%s0 + $0x8] sm:$0xff]
  %v23 = vld [vmem:[%s0 + $0x10] sm:$0xff]
  %v24 = vld [vmem:[%s0 + $0x18] sm:$0xff]
  %v25 = vpack.c.bf16 %v22, %v21
  %v26 = vpack.c.bf16 %v24, %v23
  %v27 = vld [vmem:[%s1] sm:$0xf]
  %v28 = vld [vmem:[%s1 + $0x4] sm:$0xf]
  %v29 = vld [vmem:[%s1 + $0x8] sm:$0xf]
  %v30 = vld [vmem:[%s1 + $0xc] sm:$0xf]
  %v31 = vld [vmem:[%s2] sm:$0x1]
  %v33 = vlaneseq
  %v34 = vshrl.u32 %v33, 7
  %v35 = vsub.s32 0, %v34
  %v36 = vrot.slane %v31, %v35
  %v42 = vunpack.c.l.b16 %v27
  %v43 = vunpack.c.l.b16 %v28
  %v44 = vunpack.c.l.b16 %v29
  %v45 = vunpack.c.l.b16 %v30
  %v46 = vpack.c.b16 %v43, %v42
  %v47 = vpack.c.b16 %v45, %v44
  %vm50 = vcmask 261120
  %v52 = vsel %vm50, %v25, 0
  %v55 = vsel %vm50, %v26, 0
  %57 = vmatprep.subr.bf16.mxu0 0
  %58 = vmatpush1.bf16.msra.mxu0 %v46
  %59 = vmatprep.subr.bf16.mxu0 0
  %60 = vmatpush1.bf16.msra.mxu0 %v47
  %61 = vmatprep.subr.bf16.mxu0 0
  %62 = vmatpush1.bf16.msra.mxu0 0
  %63 = vmatprep.subr.bf16.mxu0 0
  %64 = vmatpush1.bf16.msra.mxu0 0
  %65 = vmatprep.subr.bf16.mxu0 0
  %66 = vmatpush1.bf16.msra.mxu0 0
  %67 = vmatprep.subr.bf16.mxu0 0
  %68 = vmatpush1.bf16.msra.mxu0 0
  %69 = vmatprep.subr.bf16.mxu0 0
  %70 = vmatpush1.bf16.msra.mxu0 0
  %71 = vmatprep.subr.bf16.mxu0 0
  %72 = vmatpush1.bf16.msra.mxu0 0
  %73 = vmatprep.subr.bf16.mxu0 0
  %74 = vmatpush1.bf16.msra.mxu0 0
  %75 = vmatprep.subr.bf16.mxu0 0
  %76 = vmatpush1.bf16.msra.mxu0 0
  %77 = vmatprep.subr.bf16.mxu0 0
  %78 = vmatpush1.bf16.msra.mxu0 0
  %79 = vmatprep.subr.bf16.mxu0 0
  %80 = vmatpush1.bf16.msra.mxu0 0
  %81 = vmatprep.subr.bf16.mxu0 0
  %82 = vmatpush1.bf16.msra.mxu0 0
  %83 = vmatprep.subr.bf16.mxu0 0
  %84 = vmatpush1.bf16.msra.mxu0 0
  %85 = vmatprep.subr.bf16.mxu0 0
  %86 = vmatpush1.bf16.msra.mxu0 0
  %87 = vmatprep.subr.bf16.mxu0 0
  %88 = vmatpush1.bf16.msra.mxu0 0
  %89 = vmatprep.mubr.bf16.mxu0 0
  %90 = vmatmul.mubr.bf16.gmra.mrb[0].mxu0 %v52
  %v91 = vpop.f32.mrb[0].mxu0
  %v92 = vadd.f32 %v36, %v91
  %v93 = vpop.f32.mrb[0].mxu0
  %v94 = vpop.f32.mrb[0].mxu0
  %v95 = vadd.f32 %v36, %v94
  %v96 = vpop.f32.mrb[0].mxu0
  %97 = vmatprep.mubr.bf16.mxu0 0
  %98 = vmatmul.mubr.bf16.gmra.mrb[0].mxu0 %v55
  %v99 = vpop.f32.mrb[0].mxu0
  %v100 = vadd.f32 %v36, %v99
  %v101 = vpop.f32.mrb[0].mxu0
  %v102 = vpop.f32.mrb[0].mxu0
  %v103 = vadd.f32 %v36, %v102
  %v104 = vpop.f32.mrb[0].mxu0
  %105 = vdwg.mxu0
  %v106 = vmul.f32 %v92, 0.5
  %v107 = vmul.f32 %v95, 0.5
  %v108 = vmul.f32 %v100, 0.5
  %v109 = vmul.f32 %v103, 0.5
  %v110 = vmul.f32 %v92, 0.70710677
  %v111 = vmul.f32 %v95, 0.70710677
  %v112 = vmul.f32 %v100, 0.70710677
  %v113 = vmul.f32 %v103, 0.70710677
  %v114 = verf.f32.pop %v110
  %v115 = verf.f32.pop %v111
  %v116 = verf.f32.pop %v112
  %v117 = verf.f32.pop %v113
  %v118 = vadd.f32 %v114, 1.0
  %v119 = vadd.f32 %v115, 1.0
  %v120 = vadd.f32 %v116, 1.0
  %v121 = vadd.f32 %v117, 1.0
  %v122 = vmul.f32 %v106, %v118
  %v123 = vmul.f32 %v107, %v119
  %v124 = vmul.f32 %v108, %v120
  %v125 = vmul.f32 %v109, %v121
  %v126 = vpack.c.bf16 %v123, %v122
  %v127 = vpack.c.bf16 %v125, %v124
  %v128 = vld [vmem:[%s3] sm:$0xf]
  %v129 = vld [vmem:[%s3 + $0x4] sm:$0xf]
  %v130 = vld [vmem:[%s3 + $0x8] sm:$0xf]
  %v131 = vld [vmem:[%s3 + $0xc] sm:$0xf]
  %v132 = vld [vmem:[%s3 + $0x10] sm:$0xf]
  %v133 = vld [vmem:[%s3 + $0x14] sm:$0xf]
  %v134 = vld [vmem:[%s3 + $0x18] sm:$0xf]
  %v135 = vld [vmem:[%s3 + $0x1c] sm:$0xf]
  %v136 = vld [vmem:[%s4] sm:$0x1]
  %v138 = vlaneseq
  %v139 = vshrl.u32 %v138, 7
  %v140 = vsub.s32 0, %v139
  %v141 = vrot.slane %v136, %v140
  %v151 = vunpack.c.l.b16 %v128
  %v152 = vunpack.c.l.b16 %v129
  %v153 = vunpack.c.l.b16 %v130
  %v154 = vunpack.c.l.b16 %v131
  %v155 = vunpack.c.l.b16 %v132
  %v156 = vunpack.c.l.b16 %v133
  %v157 = vunpack.c.l.b16 %v134
  %v158 = vunpack.c.l.b16 %v135
  %v159 = vpack.c.b16 %v152, %v151
  %v160 = vpack.c.b16 %v154, %v153
  %v161 = vpack.c.b16 %v156, %v155
  %v162 = vpack.c.b16 %v158, %v157
  %vm167 = vcmask 523264
  %v169 = vsel %vm167, %v126, 0
  %v172 = vsel %vm167, %v127, 0
  %174 = vmatprep.subr.bf16.mxu0 0
  %175 = vmatpush1.bf16.msra.mxu0 %v159
  %176 = vmatprep.subr.bf16.mxu0 0
  %177 = vmatpush1.bf16.msra.mxu0 %v160
  %178 = vmatprep.subr.bf16.mxu0 0
  %179 = vmatpush1.bf16.msra.mxu0 %v161
  %180 = vmatprep.subr.bf16.mxu0 0
  %181 = vmatpush1.bf16.msra.mxu0 %v162
  %182 = vmatprep.subr.bf16.mxu0 0
  %183 = vmatpush1.bf16.msra.mxu0 0
  %184 = vmatprep.subr.bf16.mxu0 0
  %185 = vmatpush1.bf16.msra.mxu0 0
  %186 = vmatprep.subr.bf16.mxu0 0
  %187 = vmatpush1.bf16.msra.mxu0 0
  %188 = vmatprep.subr.bf16.mxu0 0
  %189 = vmatpush1.bf16.msra.mxu0 0
  %190 = vmatprep.subr.bf16.mxu0 0
  %191 = vmatpush1.bf16.msra.mxu0 0
  %192 = vmatprep.subr.bf16.mxu0 0
  %193 = vmatpush1.bf16.msra.mxu0 0
  %194 = vmatprep.subr.bf16.mxu0 0
  %195 = vmatpush1.bf16.msra.mxu0 0
  %196 = vmatprep.subr.bf16.mxu0 0
  %197 = vmatpush1.bf16.msra.mxu0 0
  %198 = vmatprep.subr.bf16.mxu0 0
  %199 = vmatpush1.bf16.msra.mxu0 0
  %200 = vmatprep.subr.bf16.mxu0 0
  %201 = vmatpush1.bf16.msra.mxu0 0
  %202 = vmatprep.subr.bf16.mxu0 0
  %203 = vmatpush1.bf16.msra.mxu0 0
  %204 = vmatprep.subr.bf16.mxu0 0
  %205 = vmatpush1.bf16.msra.mxu0 0
  %206 = vmatprep.mubr.bf16.mxu0 0
  %207 = vmatmul.mubr.bf16.gmra.mrb[0].mxu0 %v169
  %v208 = vpop.f32.mrb[0].mxu0
  %v209 = vadd.f32 %v141, %v208
  %v210 = vpop.f32.mrb[0].mxu0
  %v211 = vpop.f32.mrb[0].mxu0
  %v212 = vadd.f32 %v141, %v211
  %v213 = vpop.f32.mrb[0].mxu0
  %214 = vmatprep.mubr.bf16.mxu0 0
  %215 = vmatmul.mubr.bf16.gmra.mrb[0].mxu0 %v172
  %v216 = vpop.f32.mrb[0].mxu0
  %v217 = vadd.f32 %v141, %v216
  %v218 = vpop.f32.mrb[0].mxu0
  %v219 = vpop.f32.mrb[0].mxu0
  %v220 = vadd.f32 %v141, %v219
  %v221 = vpop.f32.mrb[0].mxu0
  %222 = vdwg.mxu0
  %223 = vst.msk [vmem:[%s5] sm:$0xff] %vm50, %v209
  %224 = vst.msk [vmem:[%s5 + $0x8] sm:$0xff] %vm50, %v212
  %225 = vst.msk [vmem:[%s5 + $0x10] sm:$0xff] %vm50, %v217
  %226 = vst.msk [vmem:[%s5 + $0x18] sm:$0xff] %vm50, %v220
  // Predicated region
  $region22: #{nystromformer_forward.15} parent=0 // pred_check
    _
  $region23: #{nystromformer_forward.15} parent=0 // pred_check_branch
    %228 = sbr.rel (0) target = $region25
  $region24: #{nystromformer_forward.15} parent=0 // pred_region
    _
  $region25: #{nystromformer_forward.15} parent=0 // pred_fallthru
    _
  // Predicated region
  $region26: #{nystromformer_forward.15} parent=0 // pred_check
    _
  $region27: #{nystromformer_forward.15} parent=0 // pred_check_branch
    %230 = sbr.rel (0) target = $region29
  $region28: #{nystromformer_forward.15} parent=0 // pred_region
    _
  $region29: #{nystromformer_forward.15} parent=0 // pred_fallthru
    _

// kernel: nystromformer_forward.22
$region0: #{nystromformer_forward.22}
  #allocation0 [shape = 'u32[]', space=smem, size = 0x4, offset = 0x4, fixed_abs, tag = 'smem constant byte address 0x4 - core index']
  #allocation1 [shape = 'u32[144,128]{1,0:T(1,128)}', space=vmem, size = 0x12000, scoped, tag = 'internal scratch']
  %s0 = inlined_call_operand.vmem [shape: f32[32,32], index: 0, kind: input, shape index: {}]
  %s1 = inlined_call_operand.vmem [shape: f32[1,32], index: 1, kind: input, shape index: {}]
  %s2 = inlined_call_operand.vmem [shape: f32[1,32], index: 2, kind: input, shape index: {}]
  %s3 = inlined_call_operand.vmem [shape: f32[32,32], index: 3, kind: output, shape index: {}]
  %s4 = sld [smem:[#allocation0]]
  $region22: #{nystromformer_forward.22} parent=0
    _
  %s6 = ssub.s32 1, %s4
  %s7 = scalar_select 0, %s6, %s4
  // Predicated region
  $region2: #{nystromformer_forward.22} parent=0 // pred_check
    _
  $region3: #{nystromformer_forward.22} parent=0 // pred_check_branch
    %9 = sbr.rel (0) target = $region5
  $region4: #{nystromformer_forward.22} parent=0 // pred_region
    _
  $region5: #{nystromformer_forward.22} parent=0 // pred_fallthru
    _
  // Predicated region
  $region6: #{nystromformer_forward.22} parent=0 // pred_check
    _
  $region7: #{nystromformer_forward.22} parent=0 // pred_check_branch
    %11 = sbr.rel (0) target = $region9
  $region8: #{nystromformer_forward.22} parent=0 // pred_region
    _
  $region9: #{nystromformer_forward.22} parent=0 // pred_fallthru
    _
  // Predicated region
  $region10: #{nystromformer_forward.22} parent=0 // pred_check
    _
  $region11: #{nystromformer_forward.22} parent=0 // pred_check_branch
    %13 = sbr.rel (0) target = $region13
  $region12: #{nystromformer_forward.22} parent=0 // pred_region
    _
  $region13: #{nystromformer_forward.22} parent=0 // pred_fallthru
    _
  %v14 = vld [vmem:[%s0] sm:$0xff]
  %v15 = vld [vmem:[%s0 + $0x8] sm:$0xff]
  %v16 = vld [vmem:[%s0 + $0x10] sm:$0xff]
  %v17 = vld [vmem:[%s0 + $0x18] sm:$0xff]
  %vm18 = vcmask 261120
  %v19 = vsel %vm18, %v14, 0.0
  %20 = vadd.xlane.f32.xlu0 %v19
  %v21 = vpop.xlane.xlu0 %20
  %v22 = vsel %vm18, %v15, 0.0
  %23 = vadd.xlane.f32.xlu0 %v22
  %v24 = vpop.xlane.xlu0 %23
  %v25 = vsel %vm18, %v16, 0.0
  %26 = vadd.xlane.f32.xlu0 %v25
  %v27 = vpop.xlane.xlu0 %26
  %v28 = vsel %vm18, %v17, 0.0
  %29 = vadd.xlane.f32.xlu0 %v28
  %v30 = vpop.xlane.xlu0 %29
  %v31 = vrcp.pop 32.0
  %v32 = vmul.f32 %v21, %v31
  %v33 = vmul.f32 %v24, %v31
  %v34 = vmul.f32 %v27, %v31
  %v35 = vmul.f32 %v30, %v31
  %v36 = vsub.f32 %v14, %v32
  %v37 = vsub.f32 %v15, %v33
  %v38 = vsub.f32 %v16, %v34
  %v39 = vsub.f32 %v17, %v35
  %v40 = vmul.f32 %v36, %v36
  %v41 = vmul.f32 %v37, %v37
  %v42 = vmul.f32 %v38, %v38
  %v43 = vmul.f32 %v39, %v39
  %v44 = vsel %vm18, %v40, 0.0
  %45 = vadd.xlane.f32.xlu0 %v44
  %v46 = vpop.xlane.xlu0 %45
  %v47 = vsel %vm18, %v41, 0.0
  %48 = vadd.xlane.f32.xlu0 %v47
  %v49 = vpop.xlane.xlu0 %48
  %v50 = vsel %vm18, %v42, 0.0
  %51 = vadd.xlane.f32.xlu0 %v50
  %v52 = vpop.xlane.xlu0 %51
  %v53 = vsel %vm18, %v43, 0.0
  %54 = vadd.xlane.f32.xlu0 %v53
  %v55 = vpop.xlane.xlu0 %54
  %v56 = vmul.f32 %v46, %v31
  %v57 = vmul.f32 %v49, %v31
  %v58 = vmul.f32 %v52, %v31
  %v59 = vmul.f32 %v55, %v31
  %v60 = vadd.f32 %v56, 1e-05
  %v61 = vadd.f32 %v57, 1e-05
  %v62 = vadd.f32 %v58, 1e-05
  %v63 = vadd.f32 %v59, 1e-05
  %v64 = vrsqrt.pop %v60
  %v65 = vrsqrt.pop %v61
  %v66 = vrsqrt.pop %v62
  %v67 = vrsqrt.pop %v63
  %v68 = vmul.f32 %v36, %v64
  %v69 = vmul.f32 %v37, %v65
  %v70 = vmul.f32 %v38, %v66
  %v71 = vmul.f32 %v39, %v67
  %v72 = vld [vmem:[%s1] sm:$0x1]
  %v74 = vlaneseq
  %v75 = vshrl.u32 %v74, 7
  %v76 = vsub.s32 0, %v75
  %v77 = vrot.slane %v72, %v76
  %v79 = vmul.f32 %v68, %v77
  %v80 = vmul.f32 %v69, %v77
  %v81 = vmul.f32 %v70, %v77
  %v82 = vmul.f32 %v71, %v77
  %v83 = vld [vmem:[%s2] sm:$0x1]
  %v85 = vlaneseq
  %v86 = vshrl.u32 %v85, 7
  %v87 = vsub.s32 0, %v86
  %v88 = vrot.slane %v83, %v87
  %v90 = vadd.f32 %v79, %v88
  %v91 = vadd.f32 %v80, %v88
  %v92 = vadd.f32 %v81, %v88
  %v93 = vadd.f32 %v82, %v88
  %94 = vst.msk [vmem:[%s3] sm:$0xff] %vm18, %v90
  %95 = vst.msk [vmem:[%s3 + $0x8] sm:$0xff] %vm18, %v91
  %96 = vst.msk [vmem:[%s3 + $0x10] sm:$0xff] %vm18, %v92
  %97 = vst.msk [vmem:[%s3 + $0x18] sm:$0xff] %vm18, %v93
  // Predicated region
  $region14: #{nystromformer_forward.22} parent=0 // pred_check
    _
  $region15: #{nystromformer_forward.22} parent=0 // pred_check_branch
    %99 = sbr.rel (0) target = $region17
  $region16: #{nystromformer_forward.22} parent=0 // pred_region
    _
  $region17: #{nystromformer_forward.22} parent=0 // pred_fallthru
    _
  // Predicated region
  $region18: #{nystromformer_forward.22} parent=0 // pred_check
    _
  $region19: #{nystromformer_forward.22} parent=0 // pred_check_branch
    %101 = sbr.rel (0) target = $region21
  $region20: #{nystromformer_forward.22} parent=0 // pred_region
    _
  $region21: #{nystromformer_forward.22} parent=0 // pred_fallthru
    _

// kernel: nystromformer_forward.23
$region0: #{nystromformer_forward.23}
  #allocation0 [shape = 'u32[]', space=smem, size = 0x4, offset = 0x4, fixed_abs, tag = 'smem constant byte address 0x4 - core index']
  #allocation1 [shape = 'u32[144,128]{1,0:T(1,128)}', space=vmem, size = 0x12000, scoped, tag = 'internal scratch']
  %s0 = inlined_call_operand.vmem [shape: f32[2,32], index: 0, kind: input, shape index: {}]
  %s1 = inlined_call_operand.vmem [shape: bf16[32,8], index: 1, kind: input, shape index: {}]
  %s2 = inlined_call_operand.vmem [shape: f32[1,8], index: 2, kind: input, shape index: {}]
  %s3 = inlined_call_operand.hbm [shape: f32[2,8], index: 3, kind: output, shape index: {}]
  %s4 = sld [smem:[#allocation0]]
  $region22: #{nystromformer_forward.23} parent=0
    _
  %s6 = ssub.s32 1, %s4
  %s7 = scalar_select 0, %s6, %s4
  $region1: #{nystromformer_forward.23} parent=0
    #allocation2 [shape = 'u8[1024]{0}', space=vmem, size = 0x400, scoped, tag = 'output window, operand 0, single buffered']
    #allocation3 [shape = 's32[1]{0}', space=sflag, size = 0x4, scoped, tag = 'scoped memory for nystromformer_forward.23']
    %8 = vsyncpa [#allocation3], 0
    // Predicated region
    $region2: #{nystromformer_forward.23} parent=1 // pred_check
      _
    $region3: #{nystromformer_forward.23} parent=1 // pred_check_branch
      %10 = sbr.rel (0) target = $region5
    $region4: #{nystromformer_forward.23} parent=1 // pred_region
      _
    $region5: #{nystromformer_forward.23} parent=1 // pred_fallthru
      _
    // Predicated region
    $region6: #{nystromformer_forward.23} parent=1 // pred_check
      _
    $region7: #{nystromformer_forward.23} parent=1 // pred_check_branch
      %12 = sbr.rel (0) target = $region9
    $region8: #{nystromformer_forward.23} parent=1 // pred_region
      _
    $region9: #{nystromformer_forward.23} parent=1 // pred_fallthru
      _
    // Predicated region
    $region10: #{nystromformer_forward.23} parent=1 // pred_check
      _
    $region11: #{nystromformer_forward.23} parent=1 // pred_check_branch
      %14 = sbr.rel (0) target = $region13
    $region12: #{nystromformer_forward.23} parent=1 // pred_region
      _
    $region13: #{nystromformer_forward.23} parent=1 // pred_fallthru
      _
    %v16 = vld [vmem:[%s0] sm:$0x3]
    %v17 = vpack.c.bf16 %v16, %v16
    %v18 = vld [vmem:[%s1] sm:$0xf]
    %v19 = vld [vmem:[%s1 + $0x4] sm:$0xf]
    %v20 = vld [vmem:[%s1 + $0x8] sm:$0xf]
    %v21 = vld [vmem:[%s1 + $0xc] sm:$0xf]
    %v22 = vld [vmem:[%s2] sm:$0x1]
    %v24 = vlaneseq
    %v25 = vshrl.u32 %v24, 7
    %v26 = vsub.s32 0, %v25
    %v27 = vrot.slane %v22, %v26
    %v33 = vunpack.c.l.b16 %v18
    %v34 = vunpack.c.l.b16 %v19
    %v35 = vunpack.c.l.b16 %v20
    %v36 = vunpack.c.l.b16 %v21
    %v37 = vpack.c.b16 %v34, %v33
    %v38 = vpack.c.b16 %v36, %v35
    %vm41 = vcmask 261120
    %v43 = vsel %vm41, %v17, 0
    %45 = vmatprep.subr.bf16.mxu0 0
    %46 = vmatpush1.bf16.msra.mxu0 %v37
    %47 = vmatprep.subr.bf16.mxu0 0
    %48 = vmatpush1.bf16.msra.mxu0 %v38
    %49 = vmatprep.subr.bf16.mxu0 0
    %50 = vmatpush1.bf16.msra.mxu0 0
    %51 = vmatprep.subr.bf16.mxu0 0
    %52 = vmatpush1.bf16.msra.mxu0 0
    %53 = vmatprep.subr.bf16.mxu0 0
    %54 = vmatpush1.bf16.msra.mxu0 0
    %55 = vmatprep.subr.bf16.mxu0 0
    %56 = vmatpush1.bf16.msra.mxu0 0
    %57 = vmatprep.subr.bf16.mxu0 0
    %58 = vmatpush1.bf16.msra.mxu0 0
    %59 = vmatprep.subr.bf16.mxu0 0
    %60 = vmatpush1.bf16.msra.mxu0 0
    %61 = vmatprep.subr.bf16.mxu0 0
    %62 = vmatpush1.bf16.msra.mxu0 0
    %63 = vmatprep.subr.bf16.mxu0 0
    %64 = vmatpush1.bf16.msra.mxu0 0
    %65 = vmatprep.subr.bf16.mxu0 0
    %66 = vmatpush1.bf16.msra.mxu0 0
    %67 = vmatprep.subr.bf16.mxu0 0
    %68 = vmatpush1.bf16.msra.mxu0 0
    %69 = vmatprep.subr.bf16.mxu0 0
    %70 = vmatpush1.bf16.msra.mxu0 0
    %71 = vmatprep.subr.bf16.mxu0 0
    %72 = vmatpush1.bf16.msra.mxu0 0
    %73 = vmatprep.subr.bf16.mxu0 0
    %74 = vmatpush1.bf16.msra.mxu0 0
    %75 = vmatprep.subr.bf16.mxu0 0
    %76 = vmatpush1.bf16.msra.mxu0 0
    %77 = vmatprep.mubr.bf16.mxu0 0
    %78 = vmatmul.mubr.bf16.gmra.mrb[0].mxu0 %v43
    %v79 = vpop.f32.mrb[0].mxu0
    %v80 = vadd.f32 %v27, %v79
    %v81 = vpop.f32.mrb[0].mxu0
    %v82 = vpop.f32.mrb[0].mxu0
    %v83 = vpop.f32.mrb[0].mxu0
    %84 = vdwg.mxu0
    %vm85 = vcmask 58368
    %86 = vst.msk [vmem:[#allocation2] sm:$0x3] %vm85, %v80
    // Predicated region
    $region14: #{nystromformer_forward.23} parent=1 // pred_check
      _
    $region15: #{nystromformer_forward.23} parent=1 // pred_check_branch
      %88 = sbr.rel (0) target = $region17
    $region16: #{nystromformer_forward.23} parent=1 // pred_region
      %s90 = ssub.s32 32, 32
      %91 = vsyncadd [#allocation3], %s90
      %s93 = sshll.u32 [#allocation2], 4
      %s94 = int_to_ptr.vmem [resolvable:$true] %s93
      %96 = dma.vmem_to_hbm [thread:$0]  %s94, 32, %s3, [#allocation3]
    $region17: #{nystromformer_forward.23} parent=1 // pred_fallthru
      _
    // Predicated region
    $region18: #{nystromformer_forward.23} parent=1 // pred_check
      _
    $region19: #{nystromformer_forward.23} parent=1 // pred_check_branch
      %98 = sbr.rel (0) target = $region21
    $region20: #{nystromformer_forward.23} parent=1 // pred_region
      %99 = dma.done [#allocation3], 32
    $region21: #{nystromformer_forward.23} parent=1 // pred_fallthru
      _
    %100 = vsyncpa [#allocation3], 1

// kernel: nystromformer_forward.13
$region0: #{nystromformer_forward.13}
  #allocation0 [shape = 'u32[]', space=smem, size = 0x4, offset = 0x4, fixed_abs, tag = 'smem constant byte address 0x4 - core index']
  #allocation1 [shape = 'u32[144,128]{1,0:T(1,128)}', space=vmem, size = 0x12000, scoped, tag = 'internal scratch']
  #allocation2 [shape = 'f32[1]{0:T(128)S(6)}', space=smem, size = 0x200, scoped, tag = 'scoped memory for nystromformer_forward.13']
  %s0 = inlined_call_operand.<no memory space> [shape: f32[1], index: 0, kind: input, shape index: {}]
  %s1 = inlined_call_operand.vmem [shape: f32[2,2,16,16], index: 1, kind: input, shape index: {}]
  %s2 = inlined_call_operand.vmem [shape: f32[2,2,16,16], index: 2, kind: input, shape index: {}]
  %s3 = inlined_call_operand.vmem [shape: f32[2,2,16,16], index: 3, kind: input, shape index: {}]
  %s4 = inlined_call_operand.vmem [shape: f32[2,2,8,16], index: 4, kind: input, shape index: {}]
  %s5 = inlined_call_operand.vmem [shape: f32[2,2,8,16], index: 5, kind: input, shape index: {}]
  %s6 = inlined_call_operand.vmem [shape: bf16[2,16,32], index: 6, kind: input, shape index: {}]
  %s7 = inlined_call_operand.vmem [shape: f32[1,32], index: 7, kind: input, shape index: {}]
  %s8 = inlined_call_operand.vmem [shape: f32[2,16,32], index: 8, kind: output, shape index: {}]
  %s9 = sld [smem:[#allocation0]]
  $region65: #{nystromformer_forward.13} parent=0
    _
  %s11 = ssub.s32 1, %s9
  %s12 = scalar_select 0, %s11, %s9
  %13 = sst [smem:[#allocation2]] %s0
  loop: start=0, step=1, limit=4
  $region2: #{nystromformer_forward.13} parent=0 // loop_pre_header
    _
  $region3: #{nystromformer_forward.13} parent=0 // loop_header
    %s15 = sphi 0, %s19
    %p16 = scmp.ge.s32.totalorder %s15, 4
    %s23 = sphi 0, %s23
    %s25 = sphi 0, %s23
    %s26 = sphi 0, %s25
    %s40 = sphi 0, %s26
    %s46 = sphi 0, %s48
    %s49 = sphi 0, %s46
    %s50 = sphi 0, %s49
    %s66 = sphi 0, %s50
    %s72 = sphi 0, %s74
    %s75 = sphi 0, %s72
    %s76 = sphi 0, %s75
    %s92 = sphi 0, %s76
    %s98 = sphi 0, %s100
    %s101 = sphi 0, %s98
    %s102 = sphi 0, %s101
    %s118 = sphi 0, %s102
    %s124 = sphi 0, %s126
    %s127 = sphi 0, %s124
    %s128 = sphi 0, %s127
    %s144 = sphi 0, %s128
    %s150 = sphi 0, %s152
    %s153 = sphi 0, %s150
    %s154 = sphi 0, %s153
    %s170 = sphi 0, %s154
    %s174 = sphi 0, %s174
    %s176 = sphi 0, %s174
    %s177 = sphi 0, %s176
    %s191 = sphi 0, %s177
    %s195 = sphi 0, %s195
    %s197 = sphi 0, %s195
    %s198 = sphi 0, %s197
    %s212 = sphi 0, %s198
    %s218 = sphi 0, %s220
    %s221 = sphi 0, %s218
    %s222 = sphi 0, %s221
    %s238 = sphi 0, %s222
  $region4: #{nystromformer_forward.13} parent=0 // loop_header_branch
    %18 = sbr.rel (%p16) target = $region8
  $region5: #{nystromformer_forward.13} parent=0 // loop_body
    %s20 = ssub.s32 %s15, 1
    %s21 = ssub.s32 %s15, 2
    %s22 = sadd.s32 %s15, 1
    %s24 = sadd.s32 %s23, 1
    %p27 = scmp.eq.s32.totalorder %s15, 1
    %p28 = scmp.ne.s32.totalorder %s23, %s25
    %p29 = scmp.eq.s32.totalorder %s15, 0
    %p30 = por %p28, %p29
    %p31 = scmp.ne.s32.totalorder %s23, %s25
    %p32 = scmp.eq.s32.totalorder %s20, 1
    %p33 = por %p31, %p32
    %p34 = scmp.ne.s32.totalorder %s25, %s26
    %p35 = scmp.eq.s32.totalorder %s20, 0
    %p36 = por %p34, %p35
    %p37 = scmp.ne.s32.totalorder %s25, %s26
    %p38 = scmp.eq.s32.totalorder %s21, 1
    %p39 = por %p37, %p38
    %p41 = scmp.ne.s32.totalorder %s26, %s40
    %p42 = scmp.eq.s32.totalorder %s21, 0
    %p43 = por %p41, %p42
    %s44 = ssub.s32 %s15, %s22
    %p45 = scmp.eq.s32.totalorder %s44, 0
    %s47 = sadd.s32 %s46, 1
    %s48 = scalar_select %p45, %s46, %s47
    %p51 = pneg %p45
    %p52 = scmp.eq.s32.totalorder %s15, 1
    %p53 = por %p51, %p52
    %p54 = scmp.ne.s32.totalorder %s46, %s49
    %p55 = scmp.eq.s32.totalorder %s15, 0
    %p56 = por %p54, %p55
    %p57 = scmp.ne.s32.totalorder %s46, %s49
    %p58 = scmp.eq.s32.totalorder %s20, 1
    %p59 = por %p57, %p58
    %p60 = scmp.ne.s32.totalorder %s49, %s50
    %p61 = scmp.eq.s32.totalorder %s20, 0
    %p62 = por %p60, %p61
    %p63 = scmp.ne.s32.totalorder %s49, %s50
    %p64 = scmp.eq.s32.totalorder %s21, 1
    %p65 = por %p63, %p64
    %p67 = scmp.ne.s32.totalorder %s50, %s66
    %p68 = scmp.eq.s32.totalorder %s21, 0
    %p69 = por %p67, %p68
    %s70 = ssub.s32 %s15, %s22
    %p71 = scmp.eq.s32.totalorder %s70, 0
    %s73 = sadd.s32 %s72, 1
    %s74 = scalar_select %p71, %s72, %s73
    %p77 = pneg %p71
    %p78 = scmp.eq.s32.totalorder %s15, 1
    %p79 = por %p77, %p78
    %p80 = scmp.ne.s32.totalorder %s72, %s75
    %p81 = scmp.eq.s32.totalorder %s15, 0
    %p82 = por %p80, %p81
    %p83 = scmp.ne.s32.totalorder %s72, %s75
    %p84 = scmp.eq.s32.totalorder %s20, 1
    %p85 = por %p83, %p84
    %p86 = scmp.ne.s32.totalorder %s75, %s76
    %p87 = scmp.eq.s32.totalorder %s20, 0
    %p88 = por %p86, %p87
    %p89 = scmp.ne.s32.totalorder %s75, %s76
    %p90 = scmp.eq.s32.totalorder %s21, 1
    %p91 = por %p89, %p90
    %p93 = scmp.ne.s32.totalorder %s76, %s92
    %p94 = scmp.eq.s32.totalorder %s21, 0
    %p95 = por %p93, %p94
    %s96 = ssub.s32 %s15, %s22
    %p97 = scmp.eq.s32.totalorder %s96, 0
    %s99 = sadd.s32 %s98, 1
    %s100 = scalar_select %p97, %s98, %s99
    %p103 = pneg %p97
    %p104 = scmp.eq.s32.totalorder %s15, 1
    %p105 = por %p103, %p104
    %p106 = scmp.ne.s32.totalorder %s98, %s101
    %p107 = scmp.eq.s32.totalorder %s15, 0
    %p108 = por %p106, %p107
    %p109 = scmp.ne.s32.totalorder %s98, %s101
    %p110 = scmp.eq.s32.totalorder %s20, 1
    %p111 = por %p109, %p110
    %p112 = scmp.ne.s32.totalorder %s101, %s102
    %p113 = scmp.eq.s32.totalorder %s20, 0
    %p114 = por %p112, %p113
    %p115 = scmp.ne.s32.totalorder %s101, %s102
    %p116 = scmp.eq.s32.totalorder %s21, 1
    %p117 = por %p115, %p116
    %p119 = scmp.ne.s32.totalorder %s102, %s118
    %p120 = scmp.eq.s32.totalorder %s21, 0
    %p121 = por %p119, %p120
    %s122 = ssub.s32 %s15, %s22
    %p123 = scmp.eq.s32.totalorder %s122, 0
    %s125 = sadd.s32 %s124, 1
    %s126 = scalar_select %p123, %s124, %s125
    %p129 = pneg %p123
    %p130 = scmp.eq.s32.totalorder %s15, 1
    %p131 = por %p129, %p130
    %p132 = scmp.ne.s32.totalorder %s124, %s127
    %p133 = scmp.eq.s32.totalorder %s15, 0
    %p134 = por %p132, %p133
    %p135 = scmp.ne.s32.totalorder %s124, %s127
    %p136 = scmp.eq.s32.totalorder %s20, 1
    %p137 = por %p135, %p136
    %p138 = scmp.ne.s32.totalorder %s127, %s128
    %p139 = scmp.eq.s32.totalorder %s20, 0
    %p140 = por %p138, %p139
    %p141 = scmp.ne.s32.totalorder %s127, %s128
    %p142 = scmp.eq.s32.totalorder %s21, 1
    %p143 = por %p141, %p142
    %p145 = scmp.ne.s32.totalorder %s128, %s144
    %p146 = scmp.eq.s32.totalorder %s21, 0
    %p147 = por %p145, %p146
    %s148 = ssub.s32 %s15, %s22
    %p149 = scmp.eq.s32.totalorder %s148, 0
    %s151 = sadd.s32 %s150, 1
    %s152 = scalar_select %p149, %s150, %s151
    %p155 = pneg %p149
    %p156 = scmp.eq.s32.totalorder %s15, 1
    %p157 = por %p155, %p156
    %p158 = scmp.ne.s32.totalorder %s150, %s153
    %p159 = scmp.eq.s32.totalorder %s15, 0
    %p160 = por %p158, %p159
    %p161 = scmp.ne.s32.totalorder %s150, %s153
    %p162 = scmp.eq.s32.totalorder %s20, 1
    %p163 = por %p161, %p162
    %p164 = scmp.ne.s32.totalorder %s153, %s154
    %p165 = scmp.eq.s32.totalorder %s20, 0
    %p166 = por %p164, %p165
    %p167 = scmp.ne.s32.totalorder %s153, %s154
    %p168 = scmp.eq.s32.totalorder %s21, 1
    %p169 = por %p167, %p168
    %p171 = scmp.ne.s32.totalorder %s154, %s170
    %p172 = scmp.eq.s32.totalorder %s21, 0
    %p173 = por %p171, %p172
    %s175 = sadd.s32 %s174, 1
    %p178 = scmp.eq.s32.totalorder %s15, 1
    %p179 = scmp.ne.s32.totalorder %s174, %s176
    %p180 = scmp.eq.s32.totalorder %s15, 0
    %p181 = por %p179, %p180
    %p182 = scmp.ne.s32.totalorder %s174, %s176
    %p183 = scmp.eq.s32.totalorder %s20, 1
    %p184 = por %p182, %p183
    %p185 = scmp.ne.s32.totalorder %s176, %s177
    %p186 = scmp.eq.s32.totalorder %s20, 0
    %p187 = por %p185, %p186
    %p188 = scmp.ne.s32.totalorder %s176, %s177
    %p189 = scmp.eq.s32.totalorder %s21, 1
    %p190 = por %p188, %p189
    %p192 = scmp.ne.s32.totalorder %s177, %s191
    %p193 = scmp.eq.s32.totalorder %s21, 0
    %p194 = por %p192, %p193
    %s196 = sadd.s32 %s195, 1
    %p199 = scmp.eq.s32.totalorder %s15, 1
    %p200 = scmp.ne.s32.totalorder %s195, %s197
    %p201 = scmp.eq.s32.totalorder %s15, 0
    %p202 = por %p200, %p201
    %p203 = scmp.ne.s32.totalorder %s195, %s197
    %p204 = scmp.eq.s32.totalorder %s20, 1
    %p205 = por %p203, %p204
    %p206 = scmp.ne.s32.totalorder %s197, %s198
    %p207 = scmp.eq.s32.totalorder %s20, 0
    %p208 = por %p206, %p207
    %p209 = scmp.ne.s32.totalorder %s197, %s198
    %p210 = scmp.eq.s32.totalorder %s21, 1
    %p211 = por %p209, %p210
    %p213 = scmp.ne.s32.totalorder %s198, %s212
    %p214 = scmp.eq.s32.totalorder %s21, 0
    %p215 = por %p213, %p214
    %s216 = ssub.s32 %s15, %s22
    %p217 = scmp.eq.s32.totalorder %s216, 0
    %s219 = sadd.s32 %s218, 1
    %s220 = scalar_select %p217, %s218, %s219
    %p223 = pneg %p217
    %p224 = scmp.eq.s32.totalorder %s15, 1
    %p225 = por %p223, %p224
    %p226 = scmp.ne.s32.totalorder %s218, %s221
    %p227 = scmp.eq.s32.totalorder %s15, 0
    %p228 = por %p226, %p227
    %p229 = scmp.ne.s32.totalorder %s218, %s221
    %p230 = scmp.eq.s32.totalorder %s20, 1
    %p231 = por %p229, %p230
    %p232 = scmp.ne.s32.totalorder %s221, %s222
    %p233 = scmp.eq.s32.totalorder %s20, 0
    %p234 = por %p232, %p233
    %p235 = scmp.ne.s32.totalorder %s221, %s222
    %p236 = scmp.eq.s32.totalorder %s21, 1
    %p237 = por %p235, %p236
    %p239 = scmp.ne.s32.totalorder %s222, %s238
    %p240 = scmp.eq.s32.totalorder %s21, 0
    %p241 = por %p239, %p240
    %p242 = scmp.le.s32.totalorder 1, %s15
    %p243 = scmp.lt.s32.totalorder %s15, 3
    %p244 = pnand %p242, %p243
    %p245 = pneg %p244
    // Predicated region
    $region9: #{nystromformer_forward.13} parent=5 // pred_check
      _
    $region10: #{nystromformer_forward.13} parent=5 // pred_check_branch
      %247 = sbr.rel (%p244) target = $region12
    $region11: #{nystromformer_forward.13} parent=5 // pred_region
      %s248 = ssub.s32 %s15, 1
      // Predicated region
      $region13: #{nystromformer_forward.13} parent=11 // pred_check
        %p249 = pneg %p36
      $region14: #{nystromformer_forward.13} parent=11 // pred_check_branch
        %251 = sbr.rel (%p249) target = $region16
      $region15: #{nystromformer_forward.13} parent=11 // pred_region
        _
      $region16: #{nystromformer_forward.13} parent=11 // pred_fallthru
        _
      // Predicated region
      $region17: #{nystromformer_forward.13} parent=11 // pred_check
        %p252 = pneg %p187
      $region18: #{nystromformer_forward.13} parent=11 // pred_check_branch
        %254 = sbr.rel (%p252) target = $region20
      $region19: #{nystromformer_forward.13} parent=11 // pred_region
        _
      $region20: #{nystromformer_forward.13} parent=11 // pred_fallthru
        _
      // Predicated region
      $region21: #{nystromformer_forward.13} parent=11 // pred_check
        %p255 = pneg %p208
      $region22: #{nystromformer_forward.13} parent=11 // pred_check_branch
        %257 = sbr.rel (%p255) target = $region24
      $region23: #{nystromformer_forward.13} parent=11 // pred_region
        _
      $region24: #{nystromformer_forward.13} parent=11 // pred_fallthru
        _
    $region12: #{nystromformer_forward.13} parent=5 // pred_fallthru
      _
    %p258 = scmp.lt.s32.totalorder %s15, 2
    // Predicated region
    $region25: #{nystromformer_forward.13} parent=5 // pred_check
      %p259 = pneg %p258
    $region26: #{nystromformer_forward.13} parent=5 // pred_check_branch
      %261 = sbr.rel (%p259) target = $region28
    $region27: #{nystromformer_forward.13} parent=5 // pred_region
      // Predicated region
      $region29: #{nystromformer_forward.13} parent=27 // pred_check
        %p262 = pneg %p56
      $region30: #{nystromformer_forward.13} parent=27 // pred_check_branch
        %264 = sbr.rel (%p262) target = $region32
      $region31: #{nystromformer_forward.13} parent=27 // pred_region
        %p265 = scmp.lt.s32.totalorder %s15, 1
        %s266 = scalar_select %p265, %s15, 1
        %s267 = smul.addr %s266, 4
        %s268 = smul.addr %s267, 8
        %s269 = scalar_lea.vmem %s1, %s268
      $region32: #{nystromformer_forward.13} parent=27 // pred_fallthru
        _
      // Predicated region
      $region33: #{nystromformer_forward.13} parent=27 // pred_check
        %p270 = pneg %p82
      $region34: #{nystromformer_forward.13} parent=27 // pred_check_branch
        %272 = sbr.rel (%p270) target = $region36
      $region35: #{nystromformer_forward.13} parent=27 // pred_region
        %p273 = scmp.lt.s32.totalorder %s15, 1
        %s274 = scalar_select %p273, %s15, 1
        %s275 = smul.addr %s274, 4
        %s276 = smul.addr %s275, 8
        %s277 = scalar_lea.vmem %s2, %s276
      $region36: #{nystromformer_forward.13} parent=27 // pred_fallthru
        _
      // Predicated region
      $region37: #{nystromformer_forward.13} parent=27 // pred_check
        %p278 = pneg %p108
      $region38: #{nystromformer_forward.13} parent=27 // pred_check_branch
        %280 = sbr.rel (%p278) target = $region40
      $region39: #{nystromformer_forward.13} parent=27 // pred_region
        %p281 = scmp.lt.s32.totalorder %s15, 1
        %s282 = scalar_select %p281, %s15, 1
        %s283 = smul.addr %s282, 4
        %s284 = smul.addr %s283, 8
        %s285 = scalar_lea.vmem %s3, %s284
      $region40: #{nystromformer_forward.13} parent=27 // pred_fallthru
        _
      // Predicated region
      $region41: #{nystromformer_forward.13} parent=27 // pred_check
        %p286 = pneg %p134
      $region42: #{nystromformer_forward.13} parent=27 // pred_check_branch
        %288 = sbr.rel (%p286) target = $region44
      $region43: #{nystromformer_forward.13} parent=27 // pred_region
        %p289 = scmp.lt.s32.totalorder %s15, 1
        %s290 = scalar_select %p289, %s15, 1
        %s291 = smul.addr %s290, 2
        %s292 = smul.addr %s291, 8
        %s293 = scalar_lea.vmem %s4, %s292
      $region44: #{nystromformer_forward.13} parent=27 // pred_fallthru
        _
      // Predicated region
      $region45: #{nystromformer_forward.13} parent=27 // pred_check
        %p294 = pneg %p160
      $region46: #{nystromformer_forward.13} parent=27 // pred_check_branch
        %296 = sbr.rel (%p294) target = $region48
      $region47: #{nystromformer_forward.13} parent=27 // pred_region
        %p297 = scmp.lt.s32.totalorder %s15, 1
        %s298 = scalar_select %p297, %s15, 1
        %s299 = smul.addr %s298, 2
        %s300 = smul.addr %s299, 8
        %s301 = scalar_lea.vmem %s5, %s300
      $region48: #{nystromformer_forward.13} parent=27 // pred_fallthru
        _
    $region28: #{nystromformer_forward.13} parent=5 // pred_fallthru
      _
    %p302 = scmp.le.s32.totalorder 1, %s15
    %p303 = scmp.lt.s32.totalorder %s15, 3
    %p304 = pnand %p302, %p303
    %p305 = pneg %p304
    // Predicated region
    $region49: #{nystromformer_forward.13} parent=5 // pred_check
      _
    $region50: #{nystromformer_forward.13} parent=5 // pred_check_branch
      %307 = sbr.rel (%p304) target = $region52
    $region51: #{nystromformer_forward.13} parent=5 // pred_region
      %s308 = ssub.s32 %s15, 1
      %p309 = pneg %p36
      %p310 = pneg %p33
      %p311 = scmp.lt.s32.totalorder %s20, 1
      %s312 = scalar_select %p311, %s20, 1
      %s313 = smul.addr %s312, 4
      %s314 = smul.addr %s313, 8
      %s315 = scalar_lea.vmem %s1, %s314
      %p316 = pneg %p62
      %p317 = pneg %p59
      %p318 = scmp.lt.s32.totalorder %s20, 1
      %s319 = scalar_select %p318, %s20, 1
      %s320 = smul.addr %s319, 4
      %s321 = smul.addr %s320, 8
      %s322 = scalar_lea.vmem %s2, %s321
      %p323 = pneg %p88
      %p324 = pneg %p85
      %p325 = scmp.lt.s32.totalorder %s20, 1
      %s326 = scalar_select %p325, %s20, 1
      %s327 = smul.addr %s326, 4
      %s328 = smul.addr %s327, 8
      %s329 = scalar_lea.vmem %s3, %s328
      %p330 = pneg %p114
      %p331 = pneg %p111
      %p332 = scmp.lt.s32.totalorder %s20, 1
      %s333 = scalar_select %p332, %s20, 1
      %s334 = smul.addr %s333, 2
      %s335 = smul.addr %s334, 8
      %s336 = scalar_lea.vmem %s4, %s335
      %p337 = pneg %p140
      %p338 = pneg %p137
      %p339 = scmp.lt.s32.totalorder %s20, 1
      %s340 = scalar_select %p339, %s20, 1
      %s341 = smul.addr %s340, 2
      %s342 = smul.addr %s341, 8
      %s343 = scalar_lea.vmem %s5, %s342
      %p344 = pneg %p166
      %p345 = pneg %p163
      %p346 = pneg %p187
      %p347 = pneg %p184
      %p348 = pneg %p208
      %p349 = pneg %p205
      %p350 = pneg %p234
      %p351 = pneg %p231
      %p352 = scmp.lt.s32.totalorder %s20, 1
      %s353 = scalar_select %p352, %s20, 1
      %s354 = smul.addr %s353, 2
      %s355 = smul.addr %s354, 8
      %s356 = scalar_lea.vmem %s8, %s355
      %p357 = scmp.lt.s32.totalorder %s20, 1
      %s358 = scalar_select %p357, %s20, 1
      %s359 = smul.addr %s358, 4
      %s360 = smul.addr %s359, 8
      %s361 = scalar_lea.vmem %s1, %s360
      %p362 = scmp.lt.s32.totalorder %s20, 1
      %s363 = scalar_select %p362, %s20, 1
      %s364 = smul.addr %s363, 4
      %s365 = smul.addr %s364, 8
      %s366 = scalar_lea.vmem %s2, %s365
      %p367 = scmp.lt.s32.totalorder %s20, 1
      %s368 = scalar_select %p367, %s20, 1
      %s369 = smul.addr %s368, 4
      %s370 = smul.addr %s369, 8
      %s371 = scalar_lea.vmem %s3, %s370
      %p372 = scmp.lt.s32.totalorder %s20, 1
      %s373 = scalar_select %p372, %s20, 1
      %s374 = smul.addr %s373, 2
      %s375 = smul.addr %s374, 8
      %s376 = scalar_lea.vmem %s4, %s375
      %p377 = scmp.lt.s32.totalorder %s20, 1
      %s378 = scalar_select %p377, %s20, 1
      %s379 = smul.addr %s378, 2
      %s380 = smul.addr %s379, 8
      %s381 = scalar_lea.vmem %s5, %s380
      %p382 = scmp.lt.s32.totalorder %s20, 1
      %s383 = scalar_select %p382, %s20, 1
      %s384 = smul.addr %s383, 2
      %s385 = smul.addr %s384, 8
      %s386 = scalar_lea.vmem %s8, %s385
      %v388 = vld [vmem:[%s361] sm:$0xff]
      %v389 = vld [vmem:[%s361 + $0x8] sm:$0xff]
      %v390 = vld [vmem:[%s361 + $0x10] sm:$0xff]
      %v391 = vld [vmem:[%s361 + $0x18] sm:$0xff]
      %v392 = vld [vmem:[%s366] sm:$0xff]
      %v393 = vld [vmem:[%s366 + $0x8] sm:$0xff]
      %v394 = vld [vmem:[%s366 + $0x10] sm:$0xff]
      %v395 = vld [vmem:[%s366 + $0x18] sm:$0xff]
      %v396 = vld [vmem:[%s371] sm:$0xff]
      %v397 = vld [vmem:[%s371 + $0x8] sm:$0xff]
      %v398 = vld [vmem:[%s371 + $0x10] sm:$0xff]
      %v399 = vld [vmem:[%s371 + $0x18] sm:$0xff]
      %v400 = vld [vmem:[%s376] sm:$0xff]
      %v401 = vld [vmem:[%s376 + $0x8] sm:$0xff]
      %v402 = vld [vmem:[%s381] sm:$0xff]
      %v403 = vld [vmem:[%s381 + $0x8] sm:$0xff]
      %v404 = vpack.c.bf16 %v389, %v388
      %v405 = vpack.c.bf16 %v391, %v390
      %v406 = vpack.c.bf16 %v393, %v392
      %v407 = vpack.c.bf16 %v395, %v394
      %v408 = vpack.c.bf16 %v397, %v396
      %v409 = vpack.c.bf16 %v399, %v398
      %v410 = vpack.c.bf16 %v400, %v400
      %v411 = vpack.c.bf16 %v401, %v401
      %v412 = vpack.c.bf16 %v402, %v402
      %v413 = vpack.c.bf16 %v403, %v403
      %vm414 = vcmask 130048
      %v416 = vsel %vm414, %v404, 0
      %v419 = vsel %vm414, %v412, 0
      %421 = vmatprep.subr.bf16.mxu0 0
      %422 = vmatpush1.bf16.xpose.msra.mxu0 %v419
      %423 = vmatprep.subr.bf16.mxu0 0
      %424 = vmatpush1.bf16.xpose.msra.mxu0 0
      %425 = vmatprep.subr.bf16.mxu0 0
      %426 = vmatpush1.bf16.xpose.msra.mxu0 0
      %427 = vmatprep.subr.bf16.mxu0 0
      %428 = vmatpush1.bf16.xpose.msra.mxu0 0
      %429 = vmatprep.subr.bf16.mxu0 0
      %430 = vmatpush1.bf16.xpose.msra.mxu0 0
      %431 = vmatprep.subr.bf16.mxu0 0
      %432 = vmatpush1.bf16.xpose.msra.mxu0 0
      %433 = vmatprep.subr.bf16.mxu0 0
      %434 = vmatpush1.bf16.xpose.msra.mxu0 0
      %435 = vmatprep.subr.bf16.mxu0 0
      %436 = vmatpush1.bf16.xpose.msra.mxu0 0
      %437 = vmatprep.subr.bf16.mxu0 0
      %438 = vmatpush1.bf16.xpose.msra.mxu0 0
      %439 = vmatprep.subr.bf16.mxu0 0
      %440 = vmatpush1.bf16.xpose.msra.mxu0 0
      %441 = vmatprep.subr.bf16.mxu0 0
      %442 = vmatpush1.bf16.xpose.msra.mxu0 0
      %443 = vmatprep.subr.bf16.mxu0 0
      %444 = vmatpush1.bf16.xpose.msra.mxu0 0
      %445 = vmatprep.subr.bf16.mxu0 0
      %446 = vmatpush1.bf16.xpose.msra.mxu0 0
      %447 = vmatprep.subr.bf16.mxu0 0
      %448 = vmatpush1.bf16.xpose.msra.mxu0 0
      %449 = vmatprep.subr.bf16.mxu0 0
      %450 = vmatpush1.bf16.xpose.msra.mxu0 0
      %451 = vmatprep.subr.bf16.mxu0 0
      %452 = vmatpush1.bf16.xpose.msra.mxu0 0
      %453 = vmatprep.mubr.bf16.mxu0 0
      %454 = vmatmul.mubr.bf16.gmra.mrb[0].mxu0 %v416
      %v455 = vpop.f32.mrb[0].mxu0
      %v456 = vadd.f32 0.0, %v455
      %v457 = vpop.f32.mrb[0].mxu0
      %v458 = vpop.f32.mrb[0].mxu0
      %v459 = vadd.f32 0.0, %v458
      %v460 = vpop.f32.mrb[0].mxu0
      %461 = vdwg.mxu0
      %v463 = vsel %vm414, %v405, 0
      %v466 = vsel %vm414, %v413, 0
      %468 = vmatprep.subr.bf16.mxu0 0
      %469 = vmatpush1.bf16.xpose.msra.mxu0 %v466
      %470 = vmatprep.subr.bf16.mxu0 0
      %471 = vmatpush1.bf16.xpose.msra.mxu0 0
      %472 = vmatprep.subr.bf16.mxu0 0
      %473 = vmatpush1.bf16.xpose.msra.mxu0 0
      %474 = vmatprep.subr.bf16.mxu0 0
      %475 = vmatpush1.bf16.xpose.msra.mxu0 0
      %476 = vmatprep.subr.bf16.mxu0 0
      %477 = vmatpush1.bf16.xpose.msra.mxu0 0
      %478 = vmatprep.subr.bf16.mxu0 0
      %479 = vmatpush1.bf16.xpose.msra.mxu0 0
      %480 = vmatprep.subr.bf16.mxu0 0
      %481 = vmatpush1.bf16.xpose.msra.mxu0 0
      %482 = vmatprep.subr.bf16.mxu0 0
      %483 = vmatpush1.bf16.xpose.msra.mxu0 0
      %484 = vmatprep.subr.bf16.mxu0 0
      %485 = vmatpush1.bf16.xpose.msra.mxu0 0
      %486 = vmatprep.subr.bf16.mxu0 0
      %487 = vmatpush1.bf16.xpose.msra.mxu0 0
      %488 = vmatprep.subr.bf16.mxu0 0
      %489 = vmatpush1.bf16.xpose.msra.mxu0 0
      %490 = vmatprep.subr.bf16.mxu0 0
      %491 = vmatpush1.bf16.xpose.msra.mxu0 0
      %492 = vmatprep.subr.bf16.mxu0 0
      %493 = vmatpush1.bf16.xpose.msra.mxu0 0
      %494 = vmatprep.subr.bf16.mxu0 0
      %495 = vmatpush1.bf16.xpose.msra.mxu0 0
      %496 = vmatprep.subr.bf16.mxu0 0
      %497 = vmatpush1.bf16.xpose.msra.mxu0 0
      %498 = vmatprep.subr.bf16.mxu0 0
      %499 = vmatpush1.bf16.xpose.msra.mxu0 0
      %500 = vmatprep.mubr.bf16.mxu0 0
      %501 = vmatmul.mubr.bf16.gmra.mrb[0].mxu0 %v463
      %v502 = vpop.f32.mrb[0].mxu0
      %v503 = vadd.f32 0.0, %v502
      %v504 = vpop.f32.mrb[0].mxu0
      %v505 = vpop.f32.mrb[0].mxu0
      %v506 = vadd.f32 0.0, %v505
      %v507 = vpop.f32.mrb[0].mxu0
      %508 = vdwg.mxu0
      %vm509 = vcmask 64512
      %v510 = vsel %vm509, %v456, -inf
      %511 = vmax.xlane.f32.xlu0 %v510
      %v512 = vpop.xlane.xlu0 %511
      %v513 = vsel %vm509, %v459, -inf
      %514 = vmax.xlane.f32.xlu0 %v513
      %v515 = vpop.xlane.xlu0 %514
      %v516 = vsel %vm509, %v503, -inf
      %517 = vmax.xlane.f32.xlu0 %v516
      %v518 = vpop.xlane.xlu0 %517
      %v519 = vsel %vm509, %v506, -inf
      %520 = vmax.xlane.f32.xlu0 %v519
      %v521 = vpop.xlane.xlu0 %520
      %v522 = vsub.f32 %v456, %v512
      %v523 = vsub.f32 %v459, %v515
      %v524 = vsub.f32 %v503, %v518
      %v525 = vsub.f32 %v506, %v521
      %v526 = vmul.f32 %v522, 1.442695
      %v527 = vpow.pop %v526
      %v528 = vmul.f32 %v523, 1.442695
      %v529 = vpow.pop %v528
      %v530 = vmul.f32 %v524, 1.442695
      %v531 = vpow.pop %v530
      %v532 = vmul.f32 %v525, 1.442695
      %v533 = vpow.pop %v532
      %v534 = vsel %vm509, %v527, 0.0
      %535 = vadd.xlane.f32.xlu0 %v534
      %v536 = vpop.xlane.xlu0 %535
      %v537 = vsel %vm509, %v529, 0.0
      %538 = vadd.xlane.f32.xlu0 %v537
      %v539 = vpop.xlane.xlu0 %538
      %v540 = vsel %vm509, %v531, 0.0
      %541 = vadd.xlane.f32.xlu0 %v540
      %v542 = vpop.xlane.xlu0 %541
      %v543 = vsel %vm509, %v533, 0.0
      %544 = vadd.xlane.f32.xlu0 %v543
      %v545 = vpop.xlane.xlu0 %544
      %v546 = vrcp.pop %v536
      %v547 = vrcp.pop %v539
      %v548 = vrcp.pop %v542
      %v549 = vrcp.pop %v545
      %v550 = vmul.f32 %v527, %v546
      %v551 = vmul.f32 %v529, %v547
      %v552 = vmul.f32 %v531, %v548
      %v553 = vmul.f32 %v533, %v549
      %v555 = vsel %vm414, %v400, 0
      %v558 = vsel %vm414, %v402, 0
      %560 = vmatprep.subr.mxu0 0.0
      %561 = vmatpush1.xpose.msra.mxu0 %v558
      %562 = vmatprep.subr.mxu0 0.0
      %563 = vmatpush1.xpose.msra.mxu0 0.0
      %564 = vmatprep.subr.mxu0 0.0
      %565 = vmatpush1.xpose.msra.mxu0 0.0
      %566 = vmatprep.subr.mxu0 0.0
      %567 = vmatpush1.xpose.msra.mxu0 0.0
      %568 = vmatprep.subr.mxu0 0.0
      %569 = vmatpush1.xpose.msra.mxu0 0.0
      %570 = vmatprep.subr.mxu0 0.0
      %571 = vmatpush1.xpose.msra.mxu0 0.0
      %572 = vmatprep.subr.mxu0 0.0
      %573 = vmatpush1.xpose.msra.mxu0 0.0
      %574 = vmatprep.subr.mxu0 0.0
      %575 = vmatpush1.xpose.msra.mxu0 0.0
      %576 = vmatprep.subr.mxu0 0.0
      %577 = vmatpush1.xpose.msra.mxu0 0.0
      %578 = vmatprep.subr.mxu0 0.0
      %579 = vmatpush1.xpose.msra.mxu0 0.0
      %580 = vmatprep.subr.mxu0 0.0
      %581 = vmatpush1.xpose.msra.mxu0 0.0
      %582 = vmatprep.subr.mxu0 0.0
      %583 = vmatpush1.xpose.msra.mxu0 0.0
      %584 = vmatprep.subr.mxu0 0.0
      %585 = vmatpush1.xpose.msra.mxu0 0.0
      %586 = vmatprep.subr.mxu0 0.0
      %587 = vmatpush1.xpose.msra.mxu0 0.0
      %588 = vmatprep.subr.mxu0 0.0
      %589 = vmatpush1.xpose.msra.mxu0 0.0
      %590 = vmatprep.subr.mxu0 0.0
      %591 = vmatpush1.xpose.msra.mxu0 0.0
      %592 = vmatprep.subr.mxu0 0.0
      %593 = vmatpush1.xpose.msra.mxu0 0.0
      %594 = vmatprep.subr.mxu0 0.0
      %595 = vmatpush1.xpose.msra.mxu0 0.0
      %596 = vmatprep.subr.mxu0 0.0
      %597 = vmatpush1.xpose.msra.mxu0 0.0
      %598 = vmatprep.subr.mxu0 0.0
      %599 = vmatpush1.xpose.msra.mxu0 0.0
      %600 = vmatprep.subr.mxu0 0.0
      %601 = vmatpush1.xpose.msra.mxu0 0.0
      %602 = vmatprep.subr.mxu0 0.0
      %603 = vmatpush1.xpose.msra.mxu0 0.0
      %604 = vmatprep.subr.mxu0 0.0
      %605 = vmatpush1.xpose.msra.mxu0 0.0
      %606 = vmatprep.subr.mxu0 0.0
      %607 = vmatpush1.xpose.msra.mxu0 0.0
      %608 = vmatprep.subr.mxu0 0.0
      %609 = vmatpush1.xpose.msra.mxu0 0.0
      %610 = vmatprep.subr.mxu0 0.0
      %611 = vmatpush1.xpose.msra.mxu0 0.0
      %612 = vmatprep.subr.mxu0 0.0
      %613 = vmatpush1.xpose.msra.mxu0 0.0
      %614 = vmatprep.subr.mxu0 0.0
      %615 = vmatpush1.xpose.msra.mxu0 0.0
      %616 = vmatprep.subr.mxu0 0.0
      %617 = vmatpush1.xpose.msra.mxu0 0.0
      %618 = vmatprep.subr.mxu0 0.0
      %619 = vmatpush1.xpose.msra.mxu0 0.0
      %620 = vmatprep.subr.mxu0 0.0
      %621 = vmatpush1.xpose.msra.mxu0 0.0
      %622 = vmatprep.subr.mxu0 0.0
      %623 = vmatpush1.xpose.msra.mxu0 0.0
      %624 = vmatprep.mubr.f32.mxu0 0.0
      %625 = vmatmul.mubr.f32.gmra.mrb[0].mxu0 %v555
      %v626 = vpop.f32.mrb[0].mxu0
      %v627 = vadd.f32 0.0, %v626
      %v628 = vpop.f32.mrb[0].mxu0
      %629 = vdwg.mxu0
      %v631 = vsel %vm414, %v401, 0
      %v634 = vsel %vm414, %v403, 0
      %636 = vmatprep.subr.mxu0 0.0
      %637 = vmatpush1.xpose.msra.mxu0 %v634
      %638 = vmatprep.subr.mxu0 0.0
      %639 = vmatpush1.xpose.msra.mxu0 0.0
      %640 = vmatprep.subr.mxu0 0.0
      %641 = vmatpush1.xpose.msra.mxu0 0.0
      %642 = vmatprep.subr.mxu0 0.0
      %643 = vmatpush1.xpose.msra.mxu0 0.0
      %644 = vmatprep.subr.mxu0 0.0
      %645 = vmatpush1.xpose.msra.mxu0 0.0
      %646 = vmatprep.subr.mxu0 0.0
      %647 = vmatpush1.xpose.msra.mxu0 0.0
      %648 = vmatprep.subr.mxu0 0.0
      %649 = vmatpush1.xpose.msra.mxu0 0.0
      %650 = vmatprep.subr.mxu0 0.0
      %651 = vmatpush1.xpose.msra.mxu0 0.0
      %652 = vmatprep.subr.mxu0 0.0
      %653 = vmatpush1.xpose.msra.mxu0 0.0
      %654 = vmatprep.subr.mxu0 0.0
      %655 = vmatpush1.xpose.msra.mxu0 0.0
      %656 = vmatprep.subr.mxu0 0.0
      %657 = vmatpush1.xpose.msra.mxu0 0.0
      %658 = vmatprep.subr.mxu0 0.0
      %659 = vmatpush1.xpose.msra.mxu0 0.0
      %660 = vmatprep.subr.mxu0 0.0
      %661 = vmatpush1.xpose.msra.mxu0 0.0
      %662 = vmatprep.subr.mxu0 0.0
      %663 = vmatpush1.xpose.msra.mxu0 0.0
      %664 = vmatprep.subr.mxu0 0.0
      %665 = vmatpush1.xpose.msra.mxu0 0.0
      %666 = vmatprep.subr.mxu0 0.0
      %667 = vmatpush1.xpose.msra.mxu0 0.0
      %668 = vmatprep.subr.mxu0 0.0
      %669 = vmatpush1.xpose.msra.mxu0 0.0
      %670 = vmatprep.subr.mxu0 0.0
      %671 = vmatpush1.xpose.msra.mxu0 0.0
      %672 = vmatprep.subr.mxu0 0.0
      %673 = vmatpush1.xpose.msra.mxu0 0.0
      %674 = vmatprep.subr.mxu0 0.0
      %675 = vmatpush1.xpose.msra.mxu0 0.0
      %676 = vmatprep.subr.mxu0 0.0
      %677 = vmatpush1.xpose.msra.mxu0 0.0
      %678 = vmatprep.subr.mxu0 0.0
      %679 = vmatpush1.xpose.msra.mxu0 0.0
      %680 = vmatprep.subr.mxu0 0.0
      %681 = vmatpush1.xpose.msra.mxu0 0.0
      %682 = vmatprep.subr.mxu0 0.0
      %683 = vmatpush1.xpose.msra.mxu0 0.0
      %684 = vmatprep.subr.mxu0 0.0
      %685 = vmatpush1.xpose.msra.mxu0 0.0
      %686 = vmatprep.subr.mxu0 0.0
      %687 = vmatpush1.xpose.msra.mxu0 0.0
      %688 = vmatprep.subr.mxu0 0.0
      %689 = vmatpush1.xpose.msra.mxu0 0.0
      %690 = vmatprep.subr.mxu0 0.0
      %691 = vmatpush1.xpose.msra.mxu0 0.0
      %692 = vmatprep.subr.mxu0 0.0
      %693 = vmatpush1.xpose.msra.mxu0 0.0
      %694 = vmatprep.subr.mxu0 0.0
      %695 = vmatpush1.xpose.msra.mxu0 0.0
      %696 = vmatprep.subr.mxu0 0.0
      %697 = vmatpush1.xpose.msra.mxu0 0.0
      %698 = vmatprep.subr.mxu0 0.0
      %699 = vmatpush1.xpose.msra.mxu0 0.0
      %700 = vmatprep.mubr.f32.mxu0 0.0
      %701 = vmatmul.mubr.f32.gmra.mrb[0].mxu0 %v631
      %v702 = vpop.f32.mrb[0].mxu0
      %v703 = vadd.f32 0.0, %v702
      %v704 = vpop.f32.mrb[0].mxu0
      %705 = vdwg.mxu0
      %v706 = vsel %vm509, %v627, -inf
      %707 = vmax.xlane.f32.xlu0 %v706
      %v708 = vpop.xlane.xlu0 %707
      %v709 = vsel %vm509, %v703, -inf
      %710 = vmax.xlane.f32.xlu0 %v709
      %v711 = vpop.xlane.xlu0 %710
      %v712 = vsub.f32 %v627, %v708
      %v713 = vsub.f32 %v703, %v711
      %v714 = vmul.f32 %v712, 1.442695
      %v715 = vpow.pop %v714
      %v716 = vmul.f32 %v713, 1.442695
      %v717 = vpow.pop %v716
      %v718 = vsel %vm509, %v715, 0.0
      %719 = vadd.xlane.f32.xlu0 %v718
      %v720 = vpop.xlane.xlu0 %719
      %v721 = vsel %vm509, %v717, 0.0
      %722 = vadd.xlane.f32.xlu0 %v721
      %v723 = vpop.xlane.xlu0 %722
      %v724 = vrcp.pop %v720
      %v725 = vrcp.pop %v723
      %v726 = vmul.f32 %v715, %v724
      %v727 = vmul.f32 %v717, %v725
      %v729 = vsel %vm414, %v410, 0
      %v732 = vsel %vm414, %v406, 0
      %734 = vmatprep.subr.bf16.mxu0 0
      %735 = vmatpush1.bf16.xpose.msra.mxu0 %v732
      %736 = vmatprep.subr.bf16.mxu0 0
      %737 = vmatpush1.bf16.xpose.msra.mxu0 0
      %738 = vmatprep.subr.bf16.mxu0 0
      %739 = vmatpush1.bf16.xpose.msra.mxu0 0
      %740 = vmatprep.subr.bf16.mxu0 0
      %741 = vmatpush1.bf16.xpose.msra.mxu0 0
      %742 = vmatprep.subr.bf16.mxu0 0
      %743 = vmatpush1.bf16.xpose.msra.mxu0 0
      %744 = vmatprep.subr.bf16.mxu0 0
      %745 = vmatpush1.bf16.xpose.msra.mxu0 0
      %746 = vmatprep.subr.bf16.mxu0 0
      %747 = vmatpush1.bf16.xpose.msra.mxu0 0
      %748 = vmatprep.subr.bf16.mxu0 0
      %749 = vmatpush1.bf16.xpose.msra.mxu0 0
      %750 = vmatprep.subr.bf16.mxu0 0
      %751 = vmatpush1.bf16.xpose.msra.mxu0 0
      %752 = vmatprep.subr.bf16.mxu0 0
      %753 = vmatpush1.bf16.xpose.msra.mxu0 0
      %754 = vmatprep.subr.bf16.mxu0 0
      %755 = vmatpush1.bf16.xpose.msra.mxu0 0
      %756 = vmatprep.subr.bf16.mxu0 0
      %757 = vmatpush1.bf16.xpose.msra.mxu0 0
      %758 = vmatprep.subr.bf16.mxu0 0
      %759 = vmatpush1.bf16.xpose.msra.mxu0 0
      %760 = vmatprep.subr.bf16.mxu0 0
      %761 = vmatpush1.bf16.xpose.msra.mxu0 0
      %762 = vmatprep.subr.bf16.mxu0 0
      %763 = vmatpush1.bf16.xpose.msra.mxu0 0
      %764 = vmatprep.subr.bf16.mxu0 0
      %765 = vmatpush1.bf16.xpose.msra.mxu0 0
      %766 = vmatprep.mubr.bf16.mxu0 0
      %767 = vmatmul.mubr.bf16.gmra.mrb[0].mxu0 %v729
      %v768 = vpop.f32.mrb[0].mxu0
      %v769 = vadd.f32 0.0, %v768
      %v770 = vpop.f32.mrb[0].mxu0
      %v771 = vpop.f32.mrb[0].mxu0
      %v772 = vpop.f32.mrb[0].mxu0
      %773 = vdwg.mxu0
      %v775 = vsel %vm414, %v411, 0
      %v778 = vsel %vm414, %v407, 0
      %780 = vmatprep.subr.bf16.mxu0 0
      %781 = vmatpush1.bf16.xpose.msra.mxu0 %v778
      %782 = vmatprep.subr.bf16.mxu0 0
      %783 = vmatpush1.bf16.xpose.msra.mxu0 0
      %784 = vmatprep.subr.bf16.mxu0 0
      %785 = vmatpush1.bf16.xpose.msra.mxu0 0
      %786 = vmatprep.subr.bf16.mxu0 0
      %787 = vmatpush1.bf16.xpose.msra.mxu0 0
      %788 = vmatprep.subr.bf16.mxu0 0
      %789 = vmatpush1.bf16.xpose.msra.mxu0 0
      %790 = vmatprep.subr.bf16.mxu0 0
      %791 = vmatpush1.bf16.xpose.msra.mxu0 0
      %792 = vmatprep.subr.bf16.mxu0 0
      %793 = vmatpush1.bf16.xpose.msra.mxu0 0
      %794 = vmatprep.subr.bf16.mxu0 0
      %795 = vmatpush1.bf16.xpose.msra.mxu0 0
      %796 = vmatprep.subr.bf16.mxu0 0
      %797 = vmatpush1.bf16.xpose.msra.mxu0 0
      %798 = vmatprep.subr.bf16.mxu0 0
      %799 = vmatpush1.bf16.xpose.msra.mxu0 0
      %800 = vmatprep.subr.bf16.mxu0 0
      %801 = vmatpush1.bf16.xpose.msra.mxu0 0
      %802 = vmatprep.subr.bf16.mxu0 0
      %803 = vmatpush1.bf16.xpose.msra.mxu0 0
      %804 = vmatprep.subr.bf16.mxu0 0
      %805 = vmatpush1.bf16.xpose.msra.mxu0 0
      %806 = vmatprep.subr.bf16.mxu0 0
      %807 = vmatpush1.bf16.xpose.msra.mxu0 0
      %808 = vmatprep.subr.bf16.mxu0 0
      %809 = vmatpush1.bf16.xpose.msra.mxu0 0
      %810 = vmatprep.subr.bf16.mxu0 0
      %811 = vmatpush1.bf16.xpose.msra.mxu0 0
      %812 = vmatprep.mubr.bf16.mxu0 0
      %813 = vmatmul.mubr.bf16.gmra.mrb[0].mxu0 %v775
      %v814 = vpop.f32.mrb[0].mxu0
      %v815 = vadd.f32 0.0, %v814
      %v816 = vpop.f32.mrb[0].mxu0
      %v817 = vpop.f32.mrb[0].mxu0
      %v818 = vpop.f32.mrb[0].mxu0
      %819 = vdwg.mxu0
      %v820 = vsel %vm414, %v769, -inf
      %821 = vmax.xlane.f32.xlu0 %v820
      %v822 = vpop.xlane.xlu0 %821
      %v823 = vsel %vm414, %v815, -inf
      %824 = vmax.xlane.f32.xlu0 %v823
      %v825 = vpop.xlane.xlu0 %824
      %v826 = vsub.f32 %v769, %v822
      %v827 = vsub.f32 %v815, %v825
      %v828 = vmul.f32 %v826, 1.442695
      %v829 = vpow.pop %v828
      %v830 = vmul.f32 %v827, 1.442695
      %v831 = vpow.pop %v830
      %v832 = vsel %vm414, %v829, 0.0
      %833 = vadd.xlane.f32.xlu0 %v832
      %v834 = vpop.xlane.xlu0 %833
      %v835 = vsel %vm414, %v831, 0.0
      %836 = vadd.xlane.f32.xlu0 %v835
      %v837 = vpop.xlane.xlu0 %836
      %v838 = vrcp.pop %v834
      %v839 = vrcp.pop %v837
      %v840 = vmul.f32 %v829, %v838
      %v841 = vmul.f32 %v831, %v839
      %v842 = vlaneseq
      %v843 = vshrl.u32 %v842, 7
      %v844 = vlaneseq
      %v845 = vand.u32 %v844, 127
      %vm846 = vcmp.eq.s32.totalorder %v843, %v845
      %v847 = vsel %vm846, 1, 0
      %v848 = vcvt.s32.f32 %v847
      %s849 = sld [smem:[#allocation2]]
      %850 = vxpose.xlu0.b32.start [1/16] %v726, 128
      %851 = vxpose.xlu0.b32.cont [2/16] 0.0, 128
      %852 = vxpose.xlu0.b32.cont [3/16] 0.0, 128
      %853 = vxpose.xlu0.b32.cont [4/16] 0.0, 128
      %854 = vxpose.xlu0.b32.cont [5/16] 0.0, 128
      %855 = vxpose.xlu0.b32.cont [6/16] 0.0, 128
      %856 = vxpose.xlu0.b32.cont [7/16] 0.0, 128
      %857 = vxpose.xlu0.b32.cont [8/16] 0.0, 128
      %858 = vxpose.xlu0.b32.cont [9/16] 0.0, 128
      %859 = vxpose.xlu0.b32.cont [10/16] 0.0, 128
      %860 = vxpose.xlu0.b32.cont [11/16] 0.0, 128
      %861 = vxpose.xlu0.b32.cont [12/16] 0.0, 128
      %862 = vxpose.xlu0.b32.cont [13/16] 0.0, 128
      %863 = vxpose.xlu0.b32.cont [14/16] 0.0, 128
      %864 = vxpose.xlu0.b32.cont [15/16] 0.0, 128
      %865 = vxpose.xlu0.b32.end [16/16] 0.0, 128
      %v866 = vpop.trf.xlu0
      %v867 = vpop.trf.xlu0
      %v868 = vpop.trf.xlu0
      %v869 = vpop.trf.xlu0
      %v870 = vpop.trf.xlu0
      %v871 = vpop.trf.xlu0
      %v872 = vpop.trf.xlu0
      %v873 = vpop.trf.xlu0
      %v874 = vpop.trf.xlu0
      %v875 = vpop.trf.xlu0
      %v876 = vpop.trf.xlu0
      %v877 = vpop.trf.xlu0
      %v878 = vpop.trf.xlu0
      %v879 = vpop.trf.xlu0
      %v880 = vpop.trf.xlu0
      %v881 = vpop.trf.xlu0
      %882 = vxpose.xlu0.b32.start [1/16] %v727, 128
      %883 = vxpose.xlu0.b32.cont [2/16] 0.0, 128
      %884 = vxpose.xlu0.b32.cont [3/16] 0.0, 128
      %885 = vxpose.xlu0.b32.cont [4/16] 0.0, 128
      %886 = vxpose.xlu0.b32.cont [5/16] 0.0, 128
      %887 = vxpose.xlu0.b32.cont [6/16] 0.0, 128
      %888 = vxpose.xlu0.b32.cont [7/16] 0.0, 128
      %889 = vxpose.xlu0.b32.cont [8/16] 0.0, 128
      %890 = vxpose.xlu0.b32.cont [9/16] 0.0, 128
      %891 = vxpose.xlu0.b32.cont [10/16] 0.0, 128
      %892 = vxpose.xlu0.b32.cont [11/16] 0.0, 128
      %893 = vxpose.xlu0.b32.cont [12/16] 0.0, 128
      %894 = vxpose.xlu0.b32.cont [13/16] 0.0, 128
      %895 = vxpose.xlu0.b32.cont [14/16] 0.0, 128
      %896 = vxpose.xlu0.b32.cont [15/16] 0.0, 128
      %897 = vxpose.xlu0.b32.end [16/16] 0.0, 128
      %v898 = vpop.trf.xlu0
      %v899 = vpop.trf.xlu0
      %v900 = vpop.trf.xlu0
      %v901 = vpop.trf.xlu0
      %v902 = vpop.trf.xlu0
      %v903 = vpop.trf.xlu0
      %v904 = vpop.trf.xlu0
      %v905 = vpop.trf.xlu0
      %v906 = vpop.trf.xlu0
      %v907 = vpop.trf.xlu0
      %v908 = vpop.trf.xlu0
      %v909 = vpop.trf.xlu0
      %v910 = vpop.trf.xlu0
      %v911 = vpop.trf.xlu0
      %v912 = vpop.trf.xlu0
      %v913 = vpop.trf.xlu0
      %v914 = vstv %s849
      %v915 = vmul.f32 %v914, %v866
      %v916 = vmul.f32 %v914, %v898
      %v918 = vsel %vm509, %v726, 0
      %920 = vmatprep.subr.mxu0 0.0
      %921 = vmatpush1.msra.mxu0 %v915
      %922 = vmatprep.subr.mxu0 0.0
      %923 = vmatpush1.msra.mxu0 0.0
      %924 = vmatprep.subr.mxu0 0.0
      %925 = vmatpush1.msra.mxu0 0.0
      %926 = vmatprep.subr.mxu0 0.0
      %927 = vmatpush1.msra.mxu0 0.0
      %928 = vmatprep.subr.mxu0 0.0
      %929 = vmatpush1.msra.mxu0 0.0
      %930 = vmatprep.subr.mxu0 0.0
      %931 = vmatpush1.msra.mxu0 0.0
      %932 = vmatprep.subr.mxu0 0.0
      %933 = vmatpush1.msra.mxu0 0.0
      %934 = vmatprep.subr.mxu0 0.0
      %935 = vmatpush1.msra.mxu0 0.0
      %936 = vmatprep.subr.mxu0 0.0
      %937 = vmatpush1.msra.mxu0 0.0
      %938 = vmatprep.subr.mxu0 0.0
      %939 = vmatpush1.msra.mxu0 0.0
      %940 = vmatprep.subr.mxu0 0.0
      %941 = vmatpush1.msra.mxu0 0.0
      %942 = vmatprep.subr.mxu0 0.0
      %943 = vmatpush1.msra.mxu0 0.0
      %944 = vmatprep.subr.mxu0 0.0
      %945 = vmatpush1.msra.mxu0 0.0
      %946 = vmatprep.subr.mxu0 0.0
      %947 = vmatpush1.msra.mxu0 0.0
      %948 = vmatprep.subr.mxu0 0.0
      %949 = vmatpush1.msra.mxu0 0.0
      %950 = vmatprep.subr.mxu0 0.0
      %951 = vmatpush1.msra.mxu0 0.0
      %952 = vmatprep.subr.mxu0 0.0
      %953 = vmatpush1.msra.mxu0 0.0
      %954 = vmatprep.subr.mxu0 0.0
      %955 = vmatpush1.msra.mxu0 0.0
      %956 = vmatprep.subr.mxu0 0.0
      %957 = vmatpush1.msra.mxu0 0.0
      %958 = vmatprep.subr.mxu0 0.0
      %959 = vmatpush1.msra.mxu0 0.0
      %960 = vmatprep.subr.mxu0 0.0
      %961 = vmatpush1.msra.mxu0 0.0
      %962 = vmatprep.subr.mxu0 0.0
      %963 = vmatpush1.msra.mxu0 0.0
      %964 = vmatprep.subr.mxu0 0.0
      %965 = vmatpush1.msra.mxu0 0.0
      %966 = vmatprep.subr.mxu0 0.0
      %967 = vmatpush1.msra.mxu0 0.0
      %968 = vmatprep.subr.mxu0 0.0
      %969 = vmatpush1.msra.mxu0 0.0
      %970 = vmatprep.subr.mxu0 0.0
      %971 = vmatpush1.msra.mxu0 0.0
      %972 = vmatprep.subr.mxu0 0.0
      %973 = vmatpush1.msra.mxu0 0.0
      %974 = vmatprep.subr.mxu0 0.0
      %975 = vmatpush1.msra.mxu0 0.0
      %976 = vmatprep.subr.mxu0 0.0
      %977 = vmatpush1.msra.mxu0 0.0
      %978 = vmatprep.subr.mxu0 0.0
      %979 = vmatpush1.msra.mxu0 0.0
      %980 = vmatprep.subr.mxu0 0.0
      %981 = vmatpush1.msra.mxu0 0.0
      %982 = vmatprep.subr.mxu0 0.0
      %983 = vmatpush1.msra.mxu0 0.0
      %984 = vmatprep.mubr.f32.mxu0 0.0
      %985 = vmatmul.mubr.f32.gmra.mrb[0].mxu0 %v918
      %v986 = vpop.f32.mrb[0].mxu0
      %v987 = vadd.f32 0.0, %v986
      %v988 = vpop.f32.mrb[0].mxu0
      %989 = vdwg.mxu0
      %v991 = vsel %vm509, %v727, 0
      %993 = vmatprep.subr.mxu0 0.0
      %994 = vmatpush1.msra.mxu0 %v916
      %995 = vmatprep.subr.mxu0 0.0
      %996 = vmatpush1.msra.mxu0 0.0
      %997 = vmatprep.subr.mxu0 0.0
      %998 = vmatpush1.msra.mxu0 0.0
      %999 = vmatprep.subr.mxu0 0.0
      %1000 = vmatpush1.msra.mxu0 0.0
      %1001 = vmatprep.subr.mxu0 0.0
      %1002 = vmatpush1.msra.mxu0 0.0
      %1003 = vmatprep.subr.mxu0 0.0
      %1004 = vmatpush1.msra.mxu0 0.0
      %1005 = vmatprep.subr.mxu0 0.0
      %1006 = vmatpush1.msra.mxu0 0.0
      %1007 = vmatprep.subr.mxu0 0.0
      %1008 = vmatpush1.msra.mxu0 0.0
      %1009 = vmatprep.subr.mxu0 0.0
      %1010 = vmatpush1.msra.mxu0 0.0
      %1011 = vmatprep.subr.mxu0 0.0
      %1012 = vmatpush1.msra.mxu0 0.0
      %1013 = vmatprep.subr.mxu0 0.0
      %1014 = vmatpush1.msra.mxu0 0.0
      %1015 = vmatprep.subr.mxu0 0.0
      %1016 = vmatpush1.msra.mxu0 0.0
      %1017 = vmatprep.subr.mxu0 0.0
      %1018 = vmatpush1.msra.mxu0 0.0
      %1019 = vmatprep.subr.mxu0 0.0
      %1020 = vmatpush1.msra.mxu0 0.0
      %1021 = vmatprep.subr.mxu0 0.0
      %1022 = vmatpush1.msra.mxu0 0.0
      %1023 = vmatprep.subr.mxu0 0.0
      %1024 = vmatpush1.msra.mxu0 0.0
      %1025 = vmatprep.subr.mxu0 0.0
      %1026 = vmatpush1.msra.mxu0 0.0
      %1027 = vmatprep.subr.mxu0 0.0
      %1028 = vmatpush1.msra.mxu0 0.0
      %1029 = vmatprep.subr.mxu0 0.0
      %1030 = vmatpush1.msra.mxu0 0.0
      %1031 = vmatprep.subr.mxu0 0.0
      %1032 = vmatpush1.msra.mxu0 0.0
      %1033 = vmatprep.subr.mxu0 0.0
      %1034 = vmatpush1.msra.mxu0 0.0
      %1035 = vmatprep.subr.mxu0 0.0
      %1036 = vmatpush1.msra.mxu0 0.0
      %1037 = vmatprep.subr.mxu0 0.0
      %1038 = vmatpush1.msra.mxu0 0.0
      %1039 = vmatprep.subr.mxu0 0.0
      %1040 = vmatpush1.msra.mxu0 0.0
      %1041 = vmatprep.subr.mxu0 0.0
      %1042 = vmatpush1.msra.mxu0 0.0
      %1043 = vmatprep.subr.mxu0 0.0
      %1044 = vmatpush1.msra.mxu0 0.0
      %1045 = vmatprep.subr.mxu0 0.0
      %1046 = vmatpush1.msra.mxu0 0.0
      %1047 = vmatprep.subr.mxu0 0.0
      %1048 = vmatpush1.msra.mxu0 0.0
      %1049 = vmatprep.subr.mxu0 0.0
      %1050 = vmatpush1.msra.mxu0 0.0
      %1051 = vmatprep.subr.mxu0 0.0
      %1052 = vmatpush1.msra.mxu0 0.0
      %1053 = vmatprep.subr.mxu0 0.0
      %1054 = vmatpush1.msra.mxu0 0.0
      %1055 = vmatprep.subr.mxu0 0.0
      %1056 = vmatpush1.msra.mxu0 0.0
      %1057 = vmatprep.mubr.f32.mxu0 0.0
      %1058 = vmatmul.mubr.f32.gmra.mrb[0].mxu0 %v991
      %v1059 = vpop.f32.mrb[0].mxu0
      %v1060 = vadd.f32 0.0, %v1059
      %v1061 = vpop.f32.mrb[0].mxu0
      %1062 = vdwg.mxu0
      %v1063 = vmul.f32 %v848, 7.0
      %v1064 = vsub.f32 %v1063, %v987
      %v1065 = vsub.f32 %v1063, %v1060
      %v1066 = vmul.f32 %v848, 15.0
      %v1068 = vsel %vm509, %v987, 0
      %1070 = vmatprep.subr.mxu0 0.0
      %1071 = vmatpush1.msra.mxu0 %v1064
      %1072 = vmatprep.subr.mxu0 0.0
      %1073 = vmatpush1.msra.mxu0 0.0
      %1074 = vmatprep.subr.mxu0 0.0
      %1075 = vmatpush1.msra.mxu0 0.0
      %1076 = vmatprep.subr.mxu0 0.0
      %1077 = vmatpush1.msra.mxu0 0.0
      %1078 = vmatprep.subr.mxu0 0.0
      %1079 = vmatpush1.msra.mxu0 0.0
      %1080 = vmatprep.subr.mxu0 0.0
      %1081 = vmatpush1.msra.mxu0 0.0
      %1082 = vmatprep.subr.mxu0 0.0
      %1083 = vmatpush1.msra.mxu0 0.0
      %1084 = vmatprep.subr.mxu0 0.0
      %1085 = vmatpush1.msra.mxu0 0.0
      %1086 = vmatprep.subr.mxu0 0.0
      %1087 = vmatpush1.msra.mxu0 0.0
      %1088 = vmatprep.subr.mxu0 0.0
      %1089 = vmatpush1.msra.mxu0 0.0
      %1090 = vmatprep.subr.mxu0 0.0
      %1091 = vmatpush1.msra.mxu0 0.0
      %1092 = vmatprep.subr.mxu0 0.0
      %1093 = vmatpush1.msra.mxu0 0.0
      %1094 = vmatprep.subr.mxu0 0.0
      %1095 = vmatpush1.msra.mxu0 0.0
      %1096 = vmatprep.subr.mxu0 0.0
      %1097 = vmatpush1.msra.mxu0 0.0
      %1098 = vmatprep.subr.mxu0 0.0
      %1099 = vmatpush1.msra.mxu0 0.0
      %1100 = vmatprep.subr.mxu0 0.0
      %1101 = vmatpush1.msra.mxu0 0.0
      %1102 = vmatprep.subr.mxu0 0.0
      %1103 = vmatpush1.msra.mxu0 0.0
      %1104 = vmatprep.subr.mxu0 0.0
      %1105 = vmatpush1.msra.mxu0 0.0
      %1106 = vmatprep.subr.mxu0 0.0
      %1107 = vmatpush1.msra.mxu0 0.0
      %1108 = vmatprep.subr.mxu0 0.0
      %1109 = vmatpush1.msra.mxu0 0.0
      %1110 = vmatprep.subr.mxu0 0.0
      %1111 = vmatpush1.msra.mxu0 0.0
      %1112 = vmatprep.subr.mxu0 0.0
      %1113 = vmatpush1.msra.mxu0 0.0
      %1114 = vmatprep.subr.mxu0 0.0
      %1115 = vmatpush1.msra.mxu0 0.0
      %1116 = vmatprep.subr.mxu0 0.0
      %1117 = vmatpush1.msra.mxu0 0.0
      %1118 = vmatprep.subr.mxu0 0.0
      %1119 = vmatpush1.msra.mxu0 0.0
      %1120 = vmatprep.subr.mxu0 0.0
      %1121 = vmatpush1.msra.mxu0 0.0
      %1122 = vmatprep.subr.mxu0 0.0
      %1123 = vmatpush1.msra.mxu0 0.0
      %1124 = vmatprep.subr.mxu0 0.0
      %1125 = vmatpush1.msra.mxu0 0.0
      %1126 = vmatprep.subr.mxu0 0.0
      %1127 = vmatpush1.msra.mxu0 0.0
      %1128 = vmatprep.subr.mxu0 0.0
      %1129 = vmatpush1.msra.mxu0 0.0
      %1130 = vmatprep.subr.mxu0 0.0
      %1131 = vmatpush1.msra.mxu0 0.0
      %1132 = vmatprep.subr.mxu0 0.0
      %1133 = vmatpush1.msra.mxu0 0.0
      %1134 = vmatprep.mubr.f32.mxu0 0.0
      %1135 = vmatmul.mubr.f32.gmra.mrb[0].mxu0 %v1068
      %v1136 = vpop.f32.mrb[0].mxu0
      %v1137 = vadd.f32 0.0, %v1136
      %v1138 = vpop.f32.mrb[0].mxu0
      %1139 = vdwg.mxu0
      %v1141 = vsel %vm509, %v1060, 0
      %1143 = vmatprep.subr.mxu0 0.0
      %1144 = vmatpush1.msra.mxu0 %v1065
      %1145 = vmatprep.subr.mxu0 0.0
      %1146 = vmatpush1.msra.mxu0 0.0
      %1147 = vmatprep.subr.mxu0 0.0
      %1148 = vmatpush1.msra.mxu0 0.0
      %1149 = vmatprep.subr.mxu0 0.0
      %1150 = vmatpush1.msra.mxu0 0.0
      %1151 = vmatprep.subr.mxu0 0.0
      %1152 = vmatpush1.msra.mxu0 0.0
      %1153 = vmatprep.subr.mxu0 0.0
      %1154 = vmatpush1.msra.mxu0 0.0
      %1155 = vmatprep.subr.mxu0 0.0
      %1156 = vmatpush1.msra.mxu0 0.0
      %1157 = vmatprep.subr.mxu0 0.0
      %1158 = vmatpush1.msra.mxu0 0.0
      %1159 = vmatprep.subr.mxu0 0.0
      %1160 = vmatpush1.msra.mxu0 0.0
      %1161 = vmatprep.subr.mxu0 0.0
      %1162 = vmatpush1.msra.mxu0 0.0
      %1163 = vmatprep.subr.mxu0 0.0
      %1164 = vmatpush1.msra.mxu0 0.0
      %1165 = vmatprep.subr.mxu0 0.0
      %1166 = vmatpush1.msra.mxu0 0.0
      %1167 = vmatprep.subr.mxu0 0.0
      %1168 = vmatpush1.msra.mxu0 0.0
      %1169 = vmatprep.subr.mxu0 0.0
      %1170 = vmatpush1.msra.mxu0 0.0
      %1171 = vmatprep.subr.mxu0 0.0
      %1172 = vmatpush1.msra.mxu0 0.0
      %1173 = vmatprep.subr.mxu0 0.0
      %1174 = vmatpush1.msra.mxu0 0.0
      %1175 = vmatprep.subr.mxu0 0.0
      %1176 = vmatpush1.msra.mxu0 0.0
      %1177 = vmatprep.subr.mxu0 0.0
      %1178 = vmatpush1.msra.mxu0 0.0
      %1179 = vmatprep.subr.mxu0 0.0
      %1180 = vmatpush1.msra.mxu0 0.0
      %1181 = vmatprep.subr.mxu0 0.0
      %1182 = vmatpush1.msra.mxu0 0.0
      %1183 = vmatprep.subr.mxu0 0.0
      %1184 = vmatpush1.msra.mxu0 0.0
      %1185 = vmatprep.subr.mxu0 0.0
      %1186 = vmatpush1.msra.mxu0 0.0
      %1187 = vmatprep.subr.mxu0 0.0
      %1188 = vmatpush1.msra.mxu0 0.0
      %1189 = vmatprep.subr.mxu0 0.0
      %1190 = vmatpush1.msra.mxu0 0.0
      %1191 = vmatprep.subr.mxu0 0.0
      %1192 = vmatpush1.msra.mxu0 0.0
      %1193 = vmatprep.subr.mxu0 0.0
      %1194 = vmatpush1.msra.mxu0 0.0
      %1195 = vmatprep.subr.mxu0 0.0
      %1196 = vmatpush1.msra.mxu0 0.0
      %1197 = vmatprep.subr.mxu0 0.0
      %1198 = vmatpush1.msra.mxu0 0.0
      %1199 = vmatprep.subr.mxu0 0.0
      %1200 = vmatpush1.msra.mxu0 0.0
      %1201 = vmatprep.subr.mxu0 0.0
      %1202 = vmatpush1.msra.mxu0 0.0
      %1203 = vmatprep.subr.mxu0 0.0
      %1204 = vmatpush1.msra.mxu0 0.0
      %1205 = vmatprep.subr.mxu0 0.0
      %1206 = vmatpush1.msra.mxu0 0.0
      %1207 = vmatprep.mubr.f32.mxu0 0.0
      %1208 = vmatmul.mubr.f32.gmra.mrb[0].mxu0 %v1141
      %v1209 = vpop.f32.mrb[0].mxu0
      %v1210 = vadd.f32 0.0, %v1209
      %v1211 = vpop.f32.mrb[0].mxu0
      %1212 = vdwg.mxu0
      %v1213 = vsub.f32 %v1066, %v1137
      %v1214 = vsub.f32 %v1066, %v1210
      %v1215 = vmul.f32 %v848, 13.0
      %1216 = vmatprep.subr.mxu0 0.0
      %1217 = vmatpush1.msra.mxu0 %v1213
      %1218 = vmatprep.subr.mxu0 0.0
      %1219 = vmatpush1.msra.mxu0 0.0
      %1220 = vmatprep.subr.mxu0 0.0
      %1221 = vmatpush1.msra.mxu0 0.0
      %1222 = vmatprep.subr.mxu0 0.0
      %1223 = vmatpush1.msra.mxu0 0.0
      %1224 = vmatprep.subr.mxu0 0.0
      %1225 = vmatpush1.msra.mxu0 0.0
      %1226 = vmatprep.subr.mxu0 0.0
      %1227 = vmatpush1.msra.mxu0 0.0
      %1228 = vmatprep.subr.mxu0 0.0
      %1229 = vmatpush1.msra.mxu0 0.0
      %1230 = vmatprep.subr.mxu0 0.0
      %1231 = vmatpush1.msra.mxu0 0.0
      %1232 = vmatprep.subr.mxu0 0.0
      %1233 = vmatpush1.msra.mxu0 0.0
      %1234 = vmatprep.subr.mxu0 0.0
      %1235 = vmatpush1.msra.mxu0 0.0
      %1236 = vmatprep.subr.mxu0 0.0
      %1237 = vmatpush1.msra.mxu0 0.0
      %1238 = vmatprep.subr.mxu0 0.0
      %1239 = vmatpush1.msra.mxu0 0.0
      %1240 = vmatprep.subr.mxu0 0.0
      %1241 = vmatpush1.msra.mxu0 0.0
      %1242 = vmatprep.subr.mxu0 0.0
      %1243 = vmatpush1.msra.mxu0 0.0
      %1244 = vmatprep.subr.mxu0 0.0
      %1245 = vmatpush1.msra.mxu0 0.0
      %1246 = vmatprep.subr.mxu0 0.0
      %1247 = vmatpush1.msra.mxu0 0.0
      %1248 = vmatprep.subr.mxu0 0.0
      %1249 = vmatpush1.msra.mxu0 0.0
      %1250 = vmatprep.subr.mxu0 0.0
      %1251 = vmatpush1.msra.mxu0 0.0
      %1252 = vmatprep.subr.mxu0 0.0
      %1253 = vmatpush1.msra.mxu0 0.0
      %1254 = vmatprep.subr.mxu0 0.0
      %1255 = vmatpush1.msra.mxu0 0.0
      %1256 = vmatprep.subr.mxu0 0.0
      %1257 = vmatpush1.msra.mxu0 0.0
      %1258 = vmatprep.subr.mxu0 0.0
      %1259 = vmatpush1.msra.mxu0 0.0
      %1260 = vmatprep.subr.mxu0 0.0
      %1261 = vmatpush1.msra.mxu0 0.0
      %1262 = vmatprep.subr.mxu0 0.0
      %1263 = vmatpush1.msra.mxu0 0.0
      %1264 = vmatprep.subr.mxu0 0.0
      %1265 = vmatpush1.msra.mxu0 0.0
      %1266 = vmatprep.subr.mxu0 0.0
      %1267 = vmatpush1.msra.mxu0 0.0
      %1268 = vmatprep.subr.mxu0 0.0
      %1269 = vmatpush1.msra.mxu0 0.0
      %1270 = vmatprep.subr.mxu0 0.0
      %1271 = vmatpush1.msra.mxu0 0.0
      %1272 = vmatprep.subr.mxu0 0.0
      %1273 = vmatpush1.msra.mxu0 0.0
      %1274 = vmatprep.subr.mxu0 0.0
      %1275 = vmatpush1.msra.mxu0 0.0
      %1276 = vmatprep.subr.mxu0 0.0
      %1277 = vmatpush1.msra.mxu0 0.0
      %1278 = vmatprep.subr.mxu0 0.0
      %1279 = vmatpush1.msra.mxu0 0.0
      %1280 = vmatprep.mubr.f32.mxu0 0.0
      %1281 = vmatmul.mubr.f32.gmra.mrb[0].mxu0 %v1068
      %v1282 = vpop.f32.mrb[0].mxu0
      %v1283 = vadd.f32 0.0, %v1282
      %v1284 = vpop.f32.mrb[0].mxu0
      %1285 = vdwg.mxu0
      %1286 = vmatprep.subr.mxu0 0.0
      %1287 = vmatpush1.msra.mxu0 %v1214
      %1288 = vmatprep.subr.mxu0 0.0
      %1289 = vmatpush1.msra.mxu0 0.0
      %1290 = vmatprep.subr.mxu0 0.0
      %1291 = vmatpush1.msra.mxu0 0.0
      %1292 = vmatprep.subr.mxu0 0.0
      %1293 = vmatpush1.msra.mxu0 0.0
      %1294 = vmatprep.subr.mxu0 0.0
      %1295 = vmatpush1.msra.mxu0 0.0
      %1296 = vmatprep.subr.mxu0 0.0
      %1297 = vmatpush1.msra.mxu0 0.0
      %1298 = vmatprep.subr.mxu0 0.0
      %1299 = vmatpush1.msra.mxu0 0.0
      %1300 = vmatprep.subr.mxu0 0.0
      %1301 = vmatpush1.msra.mxu0 0.0
      %1302 = vmatprep.subr.mxu0 0.0
      %1303 = vmatpush1.msra.mxu0 0.0
      %1304 = vmatprep.subr.mxu0 0.0
      %1305 = vmatpush1.msra.mxu0 0.0
      %1306 = vmatprep.subr.mxu0 0.0
      %1307 = vmatpush1.msra.mxu0 0.0
      %1308 = vmatprep.subr.mxu0 0.0
      %1309 = vmatpush1.msra.mxu0 0.0
      %1310 = vmatprep.subr.mxu0 0.0
      %1311 = vmatpush1.msra.mxu0 0.0
      %1312 = vmatprep.subr.mxu0 0.0
      %1313 = vmatpush1.msra.mxu0 0.0
      %1314 = vmatprep.subr.mxu0 0.0
      %1315 = vmatpush1.msra.mxu0 0.0
      %1316 = vmatprep.subr.mxu0 0.0
      %1317 = vmatpush1.msra.mxu0 0.0
      %1318 = vmatprep.subr.mxu0 0.0
      %1319 = vmatpush1.msra.mxu0 0.0
      %1320 = vmatprep.subr.mxu0 0.0
      %1321 = vmatpush1.msra.mxu0 0.0
      %1322 = vmatprep.subr.mxu0 0.0
      %1323 = vmatpush1.msra.mxu0 0.0
      %1324 = vmatprep.subr.mxu0 0.0
      %1325 = vmatpush1.msra.mxu0 0.0
      %1326 = vmatprep.subr.mxu0 0.0
      %1327 = vmatpush1.msra.mxu0 0.0
      %1328 = vmatprep.subr.mxu0 0.0
      %1329 = vmatpush1.msra.mxu0 0.0
      %1330 = vmatprep.subr.mxu0 0.0
      %1331 = vmatpush1.msra.mxu0 0.0
      %1332 = vmatprep.subr.mxu0 0.0
      %1333 = vmatpush1.msra.mxu0 0.0
      %1334 = vmatprep.subr.mxu0 0.0
      %1335 = vmatpush1.msra.mxu0 0.0
      %1336 = vmatprep.subr.mxu0 0.0
      %1337 = vmatpush1.msra.mxu0 0.0
      %1338 = vmatprep.subr.mxu0 0.0
      %1339 = vmatpush1.msra.mxu0 0.0
      %1340 = vmatprep.subr.mxu0 0.0
      %1341 = vmatpush1.msra.mxu0 0.0
      %1342 = vmatprep.subr.mxu0 0.0
      %1343 = vmatpush1.msra.mxu0 0.0
      %1344 = vmatprep.subr.mxu0 0.0
      %1345 = vmatpush1.msra.mxu0 0.0
      %1346 = vmatprep.subr.mxu0 0.0
      %1347 = vmatpush1.msra.mxu0 0.0
      %1348 = vmatprep.subr.mxu0 0.0
      %1349 = vmatpush1.msra.mxu0 0.0
      %1350 = vmatprep.mubr.f32.mxu0 0.0
      %1351 = vmatmul.mubr.f32.gmra.mrb[0].mxu0 %v1141
      %v1352 = vpop.f32.mrb[0].mxu0
      %v1353 = vadd.f32 0.0, %v1352
      %v1354 = vpop.f32.mrb[0].mxu0
      %1355 = vdwg.mxu0
      %v1356 = vsub.f32 %v1215, %v1283
      %v1357 = vsub.f32 %v1215, %v1353
      %v1359 = vsel %vm509, %v915, 0
      %1361 = vmatprep.subr.mxu0 0.0
      %1362 = vmatpush1.msra.mxu0 %v1356
      %1363 = vmatprep.subr.mxu0 0.0
      %1364 = vmatpush1.msra.mxu0 0.0
      %1365 = vmatprep.subr.mxu0 0.0
      %1366 = vmatpush1.msra.mxu0 0.0
      %1367 = vmatprep.subr.mxu0 0.0
      %1368 = vmatpush1.msra.mxu0 0.0
      %1369 = vmatprep.subr.mxu0 0.0
      %1370 = vmatpush1.msra.mxu0 0.0
      %1371 = vmatprep.subr.mxu0 0.0
      %1372 = vmatpush1.msra.mxu0 0.0
      %1373 = vmatprep.subr.mxu0 0.0
      %1374 = vmatpush1.msra.mxu0 0.0
      %1375 = vmatprep.subr.mxu0 0.0
      %1376 = vmatpush1.msra.mxu0 0.0
      %1377 = vmatprep.subr.mxu0 0.0
      %1378 = vmatpush1.msra.mxu0 0.0
      %1379 = vmatprep.subr.mxu0 0.0
      %1380 = vmatpush1.msra.mxu0 0.0
      %1381 = vmatprep.subr.mxu0 0.0
      %1382 = vmatpush1.msra.mxu0 0.0
      %1383 = vmatprep.subr.mxu0 0.0
      %1384 = vmatpush1.msra.mxu0 0.0
      %1385 = vmatprep.subr.mxu0 0.0
      %1386 = vmatpush1.msra.mxu0 0.0
      %1387 = vmatprep.subr.mxu0 0.0
      %1388 = vmatpush1.msra.mxu0 0.0
      %1389 = vmatprep.subr.mxu0 0.0
      %1390 = vmatpush1.msra.mxu0 0.0
      %1391 = vmatprep.subr.mxu0 0.0
      %1392 = vmatpush1.msra.mxu0 0.0
      %1393 = vmatprep.subr.mxu0 0.0
      %1394 = vmatpush1.msra.mxu0 0.0
      %1395 = vmatprep.subr.mxu0 0.0
      %1396 = vmatpush1.msra.mxu0 0.0
      %1397 = vmatprep.subr.mxu0 0.0
      %1398 = vmatpush1.msra.mxu0 0.0
      %1399 = vmatprep.subr.mxu0 0.0
      %1400 = vmatpush1.msra.mxu0 0.0
      %1401 = vmatprep.subr.mxu0 0.0
      %1402 = vmatpush1.msra.mxu0 0.0
      %1403 = vmatprep.subr.mxu0 0.0
      %1404 = vmatpush1.msra.mxu0 0.0
      %1405 = vmatprep.subr.mxu0 0.0
      %1406 = vmatpush1.msra.mxu0 0.0
      %1407 = vmatprep.subr.mxu0 0.0
      %1408 = vmatpush1.msra.mxu0 0.0
      %1409 = vmatprep.subr.mxu0 0.0
      %1410 = vmatpush1.msra.mxu0 0.0
      %1411 = vmatprep.subr.mxu0 0.0
      %1412 = vmatpush1.msra.mxu0 0.0
      %1413 = vmatprep.subr.mxu0 0.0
      %1414 = vmatpush1.msra.mxu0 0.0
      %1415 = vmatprep.subr.mxu0 0.0
      %1416 = vmatpush1.msra.mxu0 0.0
      %1417 = vmatprep.subr.mxu0 0.0
      %1418 = vmatpush1.msra.mxu0 0.0
      %1419 = vmatprep.subr.mxu0 0.0
      %1420 = vmatpush1.msra.mxu0 0.0
      %1421 = vmatprep.subr.mxu0 0.0
      %1422 = vmatpush1.msra.mxu0 0.0
      %1423 = vmatprep.subr.mxu0 0.0
      %1424 = vmatpush1.msra.mxu0 0.0
      %1425 = vmatprep.mubr.f32.mxu0 0.0
      %1426 = vmatmul.mubr.f32.gmra.mrb[0].mxu0 %v1359
      %v1427 = vpop.f32.mrb[0].mxu0
      %v1428 = vadd.f32 0.0, %v1427
      %v1429 = vpop.f32.mrb[0].mxu0
      %1430 = vdwg.mxu0
      %v1432 = vsel %vm509, %v916, 0
      %1434 = vmatprep.subr.mxu0 0.0
      %1435 = vmatpush1.msra.mxu0 %v1357
      %1436 = vmatprep.subr.mxu0 0.0
      %1437 = vmatpush1.msra.mxu0 0.0
      %1438 = vmatprep.subr.mxu0 0.0
      %1439 = vmatpush1.msra.mxu0 0.0
      %1440 = vmatprep.subr.mxu0 0.0
      %1441 = vmatpush1.msra.mxu0 0.0
      %1442 = vmatprep.subr.mxu0 0.0
      %1443 = vmatpush1.msra.mxu0 0.0
      %1444 = vmatprep.subr.mxu0 0.0
      %1445 = vmatpush1.msra.mxu0 0.0
      %1446 = vmatprep.subr.mxu0 0.0
      %1447 = vmatpush1.msra.mxu0 0.0
      %1448 = vmatprep.subr.mxu0 0.0
      %1449 = vmatpush1.msra.mxu0 0.0
      %1450 = vmatprep.subr.mxu0 0.0
      %1451 = vmatpush1.msra.mxu0 0.0
      %1452 = vmatprep.subr.mxu0 0.0
      %1453 = vmatpush1.msra.mxu0 0.0
      %1454 = vmatprep.subr.mxu0 0.0
      %1455 = vmatpush1.msra.mxu0 0.0
      %1456 = vmatprep.subr.mxu0 0.0
      %1457 = vmatpush1.msra.mxu0 0.0
      %1458 = vmatprep.subr.mxu0 0.0
      %1459 = vmatpush1.msra.mxu0 0.0
      %1460 = vmatprep.subr.mxu0 0.0
      %1461 = vmatpush1.msra.mxu0 0.0
      %1462 = vmatprep.subr.mxu0 0.0
      %1463 = vmatpush1.msra.mxu0 0.0
      %1464 = vmatprep.subr.mxu0 0.0
      %1465 = vmatpush1.msra.mxu0 0.0
      %1466 = vmatprep.subr.mxu0 0.0
      %1467 = vmatpush1.msra.mxu0 0.0
      %1468 = vmatprep.subr.mxu0 0.0
      %1469 = vmatpush1.msra.mxu0 0.0
      %1470 = vmatprep.subr.mxu0 0.0
      %1471 = vmatpush1.msra.mxu0 0.0
      %1472 = vmatprep.subr.mxu0 0.0
      %1473 = vmatpush1.msra.mxu0 0.0
      %1474 = vmatprep.subr.mxu0 0.0
      %1475 = vmatpush1.msra.mxu0 0.0
      %1476 = vmatprep.subr.mxu0 0.0
      %1477 = vmatpush1.msra.mxu0 0.0
      %1478 = vmatprep.subr.mxu0 0.0
      %1479 = vmatpush1.msra.mxu0 0.0
      %1480 = vmatprep.subr.mxu0 0.0
      %1481 = vmatpush1.msra.mxu0 0.0
      %1482 = vmatprep.subr.mxu0 0.0
      %1483 = vmatpush1.msra.mxu0 0.0
      %1484 = vmatprep.subr.mxu0 0.0
      %1485 = vmatpush1.msra.mxu0 0.0
      %1486 = vmatprep.subr.mxu0 0.0
      %1487 = vmatpush1.msra.mxu0 0.0
      %1488 = vmatprep.subr.mxu0 0.0
      %1489 = vmatpush1.msra.mxu0 0.0
      %1490 = vmatprep.subr.mxu0 0.0
      %1491 = vmatpush1.msra.mxu0 0.0
      %1492 = vmatprep.subr.mxu0 0.0
      %1493 = vmatpush1.msra.mxu0 0.0
      %1494 = vmatprep.subr.mxu0 0.0
      %1495 = vmatpush1.msra.mxu0 0.0
      %1496 = vmatprep.subr.mxu0 0.0
      %1497 = vmatpush1.msra.mxu0 0.0
      %1498 = vmatprep.mubr.f32.mxu0 0.0
      %1499 = vmatmul.mubr.f32.gmra.mrb[0].mxu0 %v1432
      %v1500 = vpop.f32.mrb[0].mxu0
      %v1501 = vadd.f32 0.0, %v1500
      %v1502 = vpop.f32.mrb[0].mxu0
      %1503 = vdwg.mxu0
      %v1504 = vmul.f32 %v1428, 0.25
      %v1505 = vmul.f32 %v1501, 0.25
      %1506 = vmatprep.subr.mxu0 0.0
      %1507 = vmatpush1.msra.mxu0 %v1504
      %1508 = vmatprep.subr.mxu0 0.0
      %1509 = vmatpush1.msra.mxu0 0.0
      %1510 = vmatprep.subr.mxu0 0.0
      %1511 = vmatpush1.msra.mxu0 0.0
      %1512 = vmatprep.subr.mxu0 0.0
      %1513 = vmatpush1.msra.mxu0 0.0
      %1514 = vmatprep.subr.mxu0 0.0
      %1515 = vmatpush1.msra.mxu0 0.0
      %1516 = vmatprep.subr.mxu0 0.0
      %1517 = vmatpush1.msra.mxu0 0.0
      %1518 = vmatprep.subr.mxu0 0.0
      %1519 = vmatpush1.msra.mxu0 0.0
      %1520 = vmatprep.subr.mxu0 0.0
      %1521 = vmatpush1.msra.mxu0 0.0
      %1522 = vmatprep.subr.mxu0 0.0
      %1523 = vmatpush1.msra.mxu0 0.0
      %1524 = vmatprep.subr.mxu0 0.0
      %1525 = vmatpush1.msra.mxu0 0.0
      %1526 = vmatprep.subr.mxu0 0.0
      %1527 = vmatpush1.msra.mxu0 0.0
      %1528 = vmatprep.subr.mxu0 0.0
      %1529 = vmatpush1.msra.mxu0 0.0
      %1530 = vmatprep.subr.mxu0 0.0
      %1531 = vmatpush1.msra.mxu0 0.0
      %1532 = vmatprep.subr.mxu0 0.0
      %1533 = vmatpush1.msra.mxu0 0.0
      %1534 = vmatprep.subr.mxu0 0.0
      %1535 = vmatpush1.msra.mxu0 0.0
      %1536 = vmatprep.subr.mxu0 0.0
      %1537 = vmatpush1.msra.mxu0 0.0
      %1538 = vmatprep.subr.mxu0 0.0
      %1539 = vmatpush1.msra.mxu0 0.0
      %1540 = vmatprep.subr.mxu0 0.0
      %1541 = vmatpush1.msra.mxu0 0.0
      %1542 = vmatprep.subr.mxu0 0.0
      %1543 = vmatpush1.msra.mxu0 0.0
      %1544 = vmatprep.subr.mxu0 0.0
      %1545 = vmatpush1.msra.mxu0 0.0
      %1546 = vmatprep.subr.mxu0 0.0
      %1547 = vmatpush1.msra.mxu0 0.0
      %1548 = vmatprep.subr.mxu0 0.0
      %1549 = vmatpush1.msra.mxu0 0.0
      %1550 = vmatprep.subr.mxu0 0.0
      %1551 = vmatpush1.msra.mxu0 0.0
      %1552 = vmatprep.subr.mxu0 0.0
      %1553 = vmatpush1.msra.mxu0 0.0
      %1554 = vmatprep.subr.mxu0 0.0
      %1555 = vmatpush1.msra.mxu0 0.0
      %1556 = vmatprep.subr.mxu0 0.0
      %1557 = vmatpush1.msra.mxu0 0.0
      %1558 = vmatprep.subr.mxu0 0.0
      %1559 = vmatpush1.msra.mxu0 0.0
      %1560 = vmatprep.subr.mxu0 0.0
      %1561 = vmatpush1.msra.mxu0 0.0
      %1562 = vmatprep.subr.mxu0 0.0
      %1563 = vmatpush1.msra.mxu0 0.0
      %1564 = vmatprep.subr.mxu0 0.0
      %1565 = vmatpush1.msra.mxu0 0.0
      %1566 = vmatprep.subr.mxu0 0.0
      %1567 = vmatpush1.msra.mxu0 0.0
      %1568 = vmatprep.subr.mxu0 0.0
      %1569 = vmatpush1.msra.mxu0 0.0
      %1570 = vmatprep.mubr.f32.mxu0 0.0
      %1571 = vmatmul.mubr.f32.gmra.mrb[0].mxu0 %v918
      %v1572 = vpop.f32.mrb[0].mxu0
      %v1573 = vadd.f32 0.0, %v1572
      %v1574 = vpop.f32.mrb[0].mxu0
      %1575 = vdwg.mxu0
      %1576 = vmatprep.subr.mxu0 0.0
      %1577 = vmatpush1.msra.mxu0 %v1505
      %1578 = vmatprep.subr.mxu0 0.0
      %1579 = vmatpush1.msra.mxu0 0.0
      %1580 = vmatprep.subr.mxu0 0.0
      %1581 = vmatpush1.msra.mxu0 0.0
      %1582 = vmatprep.subr.mxu0 0.0
      %1583 = vmatpush1.msra.mxu0 0.0
      %1584 = vmatprep.subr.mxu0 0.0
      %1585 = vmatpush1.msra.mxu0 0.0
      %1586 = vmatprep.subr.mxu0 0.0
      %1587 = vmatpush1.msra.mxu0 0.0
      %1588 = vmatprep.subr.mxu0 0.0
      %1589 = vmatpush1.msra.mxu0 0.0
      %1590 = vmatprep.subr.mxu0 0.0
      %1591 = vmatpush1.msra.mxu0 0.0
      %1592 = vmatprep.subr.mxu0 0.0
      %1593 = vmatpush1.msra.mxu0 0.0
      %1594 = vmatprep.subr.mxu0 0.0
      %1595 = vmatpush1.msra.mxu0 0.0
      %1596 = vmatprep.subr.mxu0 0.0
      %1597 = vmatpush1.msra.mxu0 0.0
      %1598 = vmatprep.subr.mxu0 0.0
      %1599 = vmatpush1.msra.mxu0 0.0
      %1600 = vmatprep.subr.mxu0 0.0
      %1601 = vmatpush1.msra.mxu0 0.0
      %1602 = vmatprep.subr.mxu0 0.0
      %1603 = vmatpush1.msra.mxu0 0.0
      %1604 = vmatprep.subr.mxu0 0.0
      %1605 = vmatpush1.msra.mxu0 0.0
      %1606 = vmatprep.subr.mxu0 0.0
      %1607 = vmatpush1.msra.mxu0 0.0
      %1608 = vmatprep.subr.mxu0 0.0
      %1609 = vmatpush1.msra.mxu0 0.0
      %1610 = vmatprep.subr.mxu0 0.0
      %1611 = vmatpush1.msra.mxu0 0.0
      %1612 = vmatprep.subr.mxu0 0.0
      %1613 = vmatpush1.msra.mxu0 0.0
      %1614 = vmatprep.subr.mxu0 0.0
      %1615 = vmatpush1.msra.mxu0 0.0
      %1616 = vmatprep.subr.mxu0 0.0
      %1617 = vmatpush1.msra.mxu0 0.0
      %1618 = vmatprep.subr.mxu0 0.0
      %1619 = vmatpush1.msra.mxu0 0.0
      %1620 = vmatprep.subr.mxu0 0.0
      %1621 = vmatpush1.msra.mxu0 0.0
      %1622 = vmatprep.subr.mxu0 0.0
      %1623 = vmatpush1.msra.mxu0 0.0
      %1624 = vmatprep.subr.mxu0 0.0
      %1625 = vmatpush1.msra.mxu0 0.0
      %1626 = vmatprep.subr.mxu0 0.0
      %1627 = vmatpush1.msra.mxu0 0.0
      %1628 = vmatprep.subr.mxu0 0.0
      %1629 = vmatpush1.msra.mxu0 0.0
      %1630 = vmatprep.subr.mxu0 0.0
      %1631 = vmatpush1.msra.mxu0 0.0
      %1632 = vmatprep.subr.mxu0 0.0
      %1633 = vmatpush1.msra.mxu0 0.0
      %1634 = vmatprep.subr.mxu0 0.0
      %1635 = vmatpush1.msra.mxu0 0.0
      %1636 = vmatprep.subr.mxu0 0.0
      %1637 = vmatpush1.msra.mxu0 0.0
      %1638 = vmatprep.subr.mxu0 0.0
      %1639 = vmatpush1.msra.mxu0 0.0
      %1640 = vmatprep.mubr.f32.mxu0 0.0
      %1641 = vmatmul.mubr.f32.gmra.mrb[0].mxu0 %v991
      %v1642 = vpop.f32.mrb[0].mxu0
      %v1643 = vadd.f32 0.0, %v1642
      %v1644 = vpop.f32.mrb[0].mxu0
      %1645 = vdwg.mxu0
      %v1646 = vsub.f32 %v1063, %v1573
      %v1647 = vsub.f32 %v1063, %v1643
      %v1649 = vsel %vm509, %v1573, 0
      %1651 = vmatprep.subr.mxu0 0.0
      %1652 = vmatpush1.msra.mxu0 %v1646
      %1653 = vmatprep.subr.mxu0 0.0
      %1654 = vmatpush1.msra.mxu0 0.0
      %1655 = vmatprep.subr.mxu0 0.0
      %1656 = vmatpush1.msra.mxu0 0.0
      %1657 = vmatprep.subr.mxu0 0.0
      %1658 = vmatpush1.msra.mxu0 0.0
      %1659 = vmatprep.subr.mxu0 0.0
      %1660 = vmatpush1.msra.mxu0 0.0
      %1661 = vmatprep.subr.mxu0 0.0
      %1662 = vmatpush1.msra.mxu0 0.0
      %1663 = vmatprep.subr.mxu0 0.0
      %1664 = vmatpush1.msra.mxu0 0.0
      %1665 = vmatprep.subr.mxu0 0.0
      %1666 = vmatpush1.msra.mxu0 0.0
      %1667 = vmatprep.subr.mxu0 0.0
      %1668 = vmatpush1.msra.mxu0 0.0
      %1669 = vmatprep.subr.mxu0 0.0
      %1670 = vmatpush1.msra.mxu0 0.0
      %1671 = vmatprep.subr.mxu0 0.0
      %1672 = vmatpush1.msra.mxu0 0.0
      %1673 = vmatprep.subr.mxu0 0.0
      %1674 = vmatpush1.msra.mxu0 0.0
      %1675 = vmatprep.subr.mxu0 0.0
      %1676 = vmatpush1.msra.mxu0 0.0
      %1677 = vmatprep.subr.mxu0 0.0
      %1678 = vmatpush1.msra.mxu0 0.0
      %1679 = vmatprep.subr.mxu0 0.0
      %1680 = vmatpush1.msra.mxu0 0.0
      %1681 = vmatprep.subr.mxu0 0.0
      %1682 = vmatpush1.msra.mxu0 0.0
      %1683 = vmatprep.subr.mxu0 0.0
      %1684 = vmatpush1.msra.mxu0 0.0
      %1685 = vmatprep.subr.mxu0 0.0
      %1686 = vmatpush1.msra.mxu0 0.0
      %1687 = vmatprep.subr.mxu0 0.0
      %1688 = vmatpush1.msra.mxu0 0.0
      %1689 = vmatprep.subr.mxu0 0.0
      %1690 = vmatpush1.msra.mxu0 0.0
      %1691 = vmatprep.subr.mxu0 0.0
      %1692 = vmatpush1.msra.mxu0 0.0
      %1693 = vmatprep.subr.mxu0 0.0
      %1694 = vmatpush1.msra.mxu0 0.0
      %1695 = vmatprep.subr.mxu0 0.0
      %1696 = vmatpush1.msra.mxu0 0.0
      %1697 = vmatprep.subr.mxu0 0.0
      %1698 = vmatpush1.msra.mxu0 0.0
      %1699 = vmatprep.subr.mxu0 0.0
      %1700 = vmatpush1.msra.mxu0 0.0
      %1701 = vmatprep.subr.mxu0 0.0
      %1702 = vmatpush1.msra.mxu0 0.0
      %1703 = vmatprep.subr.mxu0 0.0
      %1704 = vmatpush1.msra.mxu0 0.0
      %1705 = vmatprep.subr.mxu0 0.0
      %1706 = vmatpush1.msra.mxu0 0.0
      %1707 = vmatprep.subr.mxu0 0.0
      %1708 = vmatpush1.msra.mxu0 0.0
      %1709 = vmatprep.subr.mxu0 0.0
      %1710 = vmatpush1.msra.mxu0 0.0
      %1711 = vmatprep.subr.mxu0 0.0
      %1712 = vmatpush1.msra.mxu0 0.0
      %1713 = vmatprep.subr.mxu0 0.0
      %1714 = vmatpush1.msra.mxu0 0.0
      %1715 = vmatprep.mubr.f32.mxu0 0.0
      %1716 = vmatmul.mubr.f32.gmra.mrb[0].mxu0 %v1649
      %v1717 = vpop.f32.mrb[0].mxu0
      %v1718 = vadd.f32 0.0, %v1717
      %v1719 = vpop.f32.mrb[0].mxu0
      %1720 = vdwg.mxu0
      %v1722 = vsel %vm509, %v1643, 0
      %1724 = vmatprep.subr.mxu0 0.0
      %1725 = vmatpush1.msra.mxu0 %v1647
      %1726 = vmatprep.subr.mxu0 0.0
      %1727 = vmatpush1.msra.mxu0 0.0
      %1728 = vmatprep.subr.mxu0 0.0
      %1729 = vmatpush1.msra.mxu0 0.0
      %1730 = vmatprep.subr.mxu0 0.0
      %1731 = vmatpush1.msra.mxu0 0.0
      %1732 = vmatprep.subr.mxu0 0.0
      %1733 = vmatpush1.msra.mxu0 0.0
      %1734 = vmatprep.subr.mxu0 0.0
      %1735 = vmatpush1.msra.mxu0 0.0
      %1736 = vmatprep.subr.mxu0 0.0
      %1737 = vmatpush1.msra.mxu0 0.0
      %1738 = vmatprep.subr.mxu0 0.0
      %1739 = vmatpush1.msra.mxu0 0.0
      %1740 = vmatprep.subr.mxu0 0.0
      %1741 = vmatpush1.msra.mxu0 0.0
      %1742 = vmatprep.subr.mxu0 0.0
      %1743 = vmatpush1.msra.mxu0 0.0
      %1744 = vmatprep.subr.mxu0 0.0
      %1745 = vmatpush1.msra.mxu0 0.0
      %1746 = vmatprep.subr.mxu0 0.0
      %1747 = vmatpush1.msra.mxu0 0.0
      %1748 = vmatprep.subr.mxu0 0.0
      %1749 = vmatpush1.msra.mxu0 0.0
      %1750 = vmatprep.subr.mxu0 0.0
      %1751 = vmatpush1.msra.mxu0 0.0
      %1752 = vmatprep.subr.mxu0 0.0
      %1753 = vmatpush1.msra.mxu0 0.0
      %1754 = vmatprep.subr.mxu0 0.0
      %1755 = vmatpush1.msra.mxu0 0.0
      %1756 = vmatprep.subr.mxu0 0.0
      %1757 = vmatpush1.msra.mxu0 0.0
      %1758 = vmatprep.subr.mxu0 0.0
      %1759 = vmatpush1.msra.mxu0 0.0
      %1760 = vmatprep.subr.mxu0 0.0
      %1761 = vmatpush1.msra.mxu0 0.0
      %1762 = vmatprep.subr.mxu0 0.0
      %1763 = vmatpush1.msra.mxu0 0.0
      %1764 = vmatprep.subr.mxu0 0.0
      %1765 = vmatpush1.msra.mxu0 0.0
      %1766 = vmatprep.subr.mxu0 0.0
      %1767 = vmatpush1.msra.mxu0 0.0
      %1768 = vmatprep.subr.mxu0 0.0
      %1769 = vmatpush1.msra.mxu0 0.0
      %1770 = vmatprep.subr.mxu0 0.0
      %1771 = vmatpush1.msra.mxu0 0.0
      %1772 = vmatprep.subr.mxu0 0.0
      %1773 = vmatpush1.msra.mxu0 0.0
      %1774 = vmatprep.subr.mxu0 0.0
      %1775 = vmatpush1.msra.mxu0 0.0
      %1776 = vmatprep.subr.mxu0 0.0
      %1777 = vmatpush1.msra.mxu0 0.0
      %1778 = vmatprep.subr.mxu0 0.0
      %1779 = vmatpush1.msra.mxu0 0.0
      %1780 = vmatprep.subr.mxu0 0.0
      %1781 = vmatpush1.msra.mxu0 0.0
      %1782 = vmatprep.subr.mxu0 0.0
      %1783 = vmatpush1.msra.mxu0 0.0
      %1784 = vmatprep.subr.mxu0 0.0
      %1785 = vmatpush1.msra.mxu0 0.0
      %1786 = vmatprep.subr.mxu0 0.0
      %1787 = vmatpush1.msra.mxu0 0.0
      %1788 = vmatprep.mubr.f32.mxu0 0.0
      %1789 = vmatmul.mubr.f32.gmra.mrb[0].mxu0 %v1722
      %v1790 = vpop.f32.mrb[0].mxu0
      %v1791 = vadd.f32 0.0, %v1790
      %v1792 = vpop.f32.mrb[0].mxu0
      %1793 = vdwg.mxu0
      %v1794 = vsub.f32 %v1066, %v1718
      %v1795 = vsub.f32 %v1066, %v1791
      %1796 = vmatprep.subr.mxu0 0.0
      %1797 = vmatpush1.msra.mxu0 %v1794
      %1798 = vmatprep.subr.mxu0 0.0
      %1799 = vmatpush1.msra.mxu0 0.0
      %1800 = vmatprep.subr.mxu0 0.0
      %1801 = vmatpush1.msra.mxu0 0.0
      %1802 = vmatprep.subr.mxu0 0.0
      %1803 = vmatpush1.msra.mxu0 0.0
      %1804 = vmatprep.subr.mxu0 0.0
      %1805 = vmatpush1.msra.mxu0 0.0
      %1806 = vmatprep.subr.mxu0 0.0
      %1807 = vmatpush1.msra.mxu0 0.0
      %1808 = vmatprep.subr.mxu0 0.0
      %1809 = vmatpush1.msra.mxu0 0.0
      %1810 = vmatprep.subr.mxu0 0.0
      %1811 = vmatpush1.msra.mxu0 0.0
      %1812 = vmatprep.subr.mxu0 0.0
      %1813 = vmatpush1.msra.mxu0 0.0
      %1814 = vmatprep.subr.mxu0 0.0
      %1815 = vmatpush1.msra.mxu0 0.0
      %1816 = vmatprep.subr.mxu0 0.0
      %1817 = vmatpush1.msra.mxu0 0.0
      %1818 = vmatprep.subr.mxu0 0.0
      %1819 = vmatpush1.msra.mxu0 0.0
      %1820 = vmatprep.subr.mxu0 0.0
      %1821 = vmatpush1.msra.mxu0 0.0
      %1822 = vmatprep.subr.mxu0 0.0
      %1823 = vmatpush1.msra.mxu0 0.0
      %1824 = vmatprep.subr.mxu0 0.0
      %1825 = vmatpush1.msra.mxu0 0.0
      %1826 = vmatprep.subr.mxu0 0.0
      %1827 = vmatpush1.msra.mxu0 0.0
      %1828 = vmatprep.subr.mxu0 0.0
      %1829 = vmatpush1.msra.mxu0 0.0
      %1830 = vmatprep.subr.mxu0 0.0
      %1831 = vmatpush1.msra.mxu0 0.0
      %1832 = vmatprep.subr.mxu0 0.0
      %1833 = vmatpush1.msra.mxu0 0.0
      %1834 = vmatprep.subr.mxu0 0.0
      %1835 = vmatpush1.msra.mxu0 0.0
      %1836 = vmatprep.subr.mxu0 0.0
      %1837 = vmatpush1.msra.mxu0 0.0
      %1838 = vmatprep.subr.mxu0 0.0
      %1839 = vmatpush1.msra.mxu0 0.0
      %1840 = vmatprep.subr.mxu0 0.0
      %1841 = vmatpush1.msra.mxu0 0.0
      %1842 = vmatprep.subr.mxu0 0.0
      %1843 = vmatpush1.msra.mxu0 0.0
      %1844 = vmatprep.subr.mxu0 0.0
      %1845 = vmatpush1.msra.mxu0 0.0
      %1846 = vmatprep.subr.mxu0 0.0
      %1847 = vmatpush1.msra.mxu0 0.0
      %1848 = vmatprep.subr.mxu0 0.0
      %1849 = vmatpush1.msra.mxu0 0.0
      %1850 = vmatprep.subr.mxu0 0.0
      %1851 = vmatpush1.msra.mxu0 0.0
      %1852 = vmatprep.subr.mxu0 0.0
      %1853 = vmatpush1.msra.mxu0 0.0
      %1854 = vmatprep.subr.mxu0 0.0
      %1855 = vmatpush1.msra.mxu0 0.0
      %1856 = vmatprep.subr.mxu0 0.0
      %1857 = vmatpush1.msra.mxu0 0.0
      %1858 = vmatprep.subr.mxu0 0.0
      %1859 = vmatpush1.msra.mxu0 0.0
      %1860 = vmatprep.mubr.f32.mxu0 0.0
      %1861 = vmatmul.mubr.f32.gmra.mrb[0].mxu0 %v1649
      %v1862 = vpop.f32.mrb[0].mxu0
      %v1863 = vadd.f32 0.0, %v1862
      %v1864 = vpop.f32.mrb[0].mxu0
      %1865 = vdwg.mxu0
      %1866 = vmatprep.subr.mxu0 0.0
      %1867 = vmatpush1.msra.mxu0 %v1795
      %1868 = vmatprep.subr.mxu0 0.0
      %1869 = vmatpush1.msra.mxu0 0.0
      %1870 = vmatprep.subr.mxu0 0.0
      %1871 = vmatpush1.msra.mxu0 0.0
      %1872 = vmatprep.subr.mxu0 0.0
      %1873 = vmatpush1.msra.mxu0 0.0
      %1874 = vmatprep.subr.mxu0 0.0
      %1875 = vmatpush1.msra.mxu0 0.0
      %1876 = vmatprep.subr.mxu0 0.0
      %1877 = vmatpush1.msra.mxu0 0.0
      %1878 = vmatprep.subr.mxu0 0.0
      %1879 = vmatpush1.msra.mxu0 0.0
      %1880 = vmatprep.subr.mxu0 0.0
      %1881 = vmatpush1.msra.mxu0 0.0
      %1882 = vmatprep.subr.mxu0 0.0
      %1883 = vmatpush1.msra.mxu0 0.0
      %1884 = vmatprep.subr.mxu0 0.0
      %1885 = vmatpush1.msra.mxu0 0.0
      %1886 = vmatprep.subr.mxu0 0.0
      %1887 = vmatpush1.msra.mxu0 0.0
      %1888 = vmatprep.subr.mxu0 0.0
      %1889 = vmatpush1.msra.mxu0 0.0
      %1890 = vmatprep.subr.mxu0 0.0
      %1891 = vmatpush1.msra.mxu0 0.0
      %1892 = vmatprep.subr.mxu0 0.0
      %1893 = vmatpush1.msra.mxu0 0.0
      %1894 = vmatprep.subr.mxu0 0.0
      %1895 = vmatpush1.msra.mxu0 0.0
      %1896 = vmatprep.subr.mxu0 0.0
      %1897 = vmatpush1.msra.mxu0 0.0
      %1898 = vmatprep.subr.mxu0 0.0
      %1899 = vmatpush1.msra.mxu0 0.0
      %1900 = vmatprep.subr.mxu0 0.0
      %1901 = vmatpush1.msra.mxu0 0.0
      %1902 = vmatprep.subr.mxu0 0.0
      %1903 = vmatpush1.msra.mxu0 0.0
      %1904 = vmatprep.subr.mxu0 0.0
      %1905 = vmatpush1.msra.mxu0 0.0
      %1906 = vmatprep.subr.mxu0 0.0
      %1907 = vmatpush1.msra.mxu0 0.0
      %1908 = vmatprep.subr.mxu0 0.0
      %1909 = vmatpush1.msra.mxu0 0.0
      %1910 = vmatprep.subr.mxu0 0.0
      %1911 = vmatpush1.msra.mxu0 0.0
      %1912 = vmatprep.subr.mxu0 0.0
      %1913 = vmatpush1.msra.mxu0 0.0
      %1914 = vmatprep.subr.mxu0 0.0
      %1915 = vmatpush1.msra.mxu0 0.0
      %1916 = vmatprep.subr.mxu0 0.0
      %1917 = vmatpush1.msra.mxu0 0.0
      %1918 = vmatprep.subr.mxu0 0.0
      %1919 = vmatpush1.msra.mxu0 0.0
      %1920 = vmatprep.subr.mxu0 0.0
      %1921 = vmatpush1.msra.mxu0 0.0
      %1922 = vmatprep.subr.mxu0 0.0
      %1923 = vmatpush1.msra.mxu0 0.0
      %1924 = vmatprep.subr.mxu0 0.0
      %1925 = vmatpush1.msra.mxu0 0.0
      %1926 = vmatprep.subr.mxu0 0.0
      %1927 = vmatpush1.msra.mxu0 0.0
      %1928 = vmatprep.subr.mxu0 0.0
      %1929 = vmatpush1.msra.mxu0 0.0
      %1930 = vmatprep.mubr.f32.mxu0 0.0
      %1931 = vmatmul.mubr.f32.gmra.mrb[0].mxu0 %v1722
      %v1932 = vpop.f32.mrb[0].mxu0
      %v1933 = vadd.f32 0.0, %v1932
      %v1934 = vpop.f32.mrb[0].mxu0
      %1935 = vdwg.mxu0
      %v1936 = vsub.f32 %v1215, %v1863
      %v1937 = vsub.f32 %v1215, %v1933
      %v1939 = vsel %vm509, %v1504, 0
      %1941 = vmatprep.subr.mxu0 0.0
      %1942 = vmatpush1.msra.mxu0 %v1936
      %1943 = vmatprep.subr.mxu0 0.0
      %1944 = vmatpush1.msra.mxu0 0.0
      %1945 = vmatprep.subr.mxu0 0.0
      %1946 = vmatpush1.msra.mxu0 0.0
      %1947 = vmatprep.subr.mxu0 0.0
      %1948 = vmatpush1.msra.mxu0 0.0
      %1949 = vmatprep.subr.mxu0 0.0
      %1950 = vmatpush1.msra.mxu0 0.0
      %1951 = vmatprep.subr.mxu0 0.0
      %1952 = vmatpush1.msra.mxu0 0.0
      %1953 = vmatprep.subr.mxu0 0.0
      %1954 = vmatpush1.msra.mxu0 0.0
      %1955 = vmatprep.subr.mxu0 0.0
      %1956 = vmatpush1.msra.mxu0 0.0
      %1957 = vmatprep.subr.mxu0 0.0
      %1958 = vmatpush1.msra.mxu0 0.0
      %1959 = vmatprep.subr.mxu0 0.0
      %1960 = vmatpush1.msra.mxu0 0.0
      %1961 = vmatprep.subr.mxu0 0.0
      %1962 = vmatpush1.msra.mxu0 0.0
      %1963 = vmatprep.subr.mxu0 0.0
      %1964 = vmatpush1.msra.mxu0 0.0
      %1965 = vmatprep.subr.mxu0 0.0
      %1966 = vmatpush1.msra.mxu0 0.0
      %1967 = vmatprep.subr.mxu0 0.0
      %1968 = vmatpush1.msra.mxu0 0.0
      %1969 = vmatprep.subr.mxu0 0.0
      %1970 = vmatpush1.msra.mxu0 0.0
      %1971 = vmatprep.subr.mxu0 0.0
      %1972 = vmatpush1.msra.mxu0 0.0
      %1973 = vmatprep.subr.mxu0 0.0
      %1974 = vmatpush1.msra.mxu0 0.0
      %1975 = vmatprep.subr.mxu0 0.0
      %1976 = vmatpush1.msra.mxu0 0.0
      %1977 = vmatprep.subr.mxu0 0.0
      %1978 = vmatpush1.msra.mxu0 0.0
      %1979 = vmatprep.subr.mxu0 0.0
      %1980 = vmatpush1.msra.mxu0 0.0
      %1981 = vmatprep.subr.mxu0 0.0
      %1982 = vmatpush1.msra.mxu0 0.0
      %1983 = vmatprep.subr.mxu0 0.0
      %1984 = vmatpush1.msra.mxu0 0.0
      %1985 = vmatprep.subr.mxu0 0.0
      %1986 = vmatpush1.msra.mxu0 0.0
      %1987 = vmatprep.subr.mxu0 0.0
      %1988 = vmatpush1.msra.mxu0 0.0
      %1989 = vmatprep.subr.mxu0 0.0
      %1990 = vmatpush1.msra.mxu0 0.0
      %1991 = vmatprep.subr.mxu0 0.0
      %1992 = vmatpush1.msra.mxu0 0.0
      %1993 = vmatprep.subr.mxu0 0.0
      %1994 = vmatpush1.msra.mxu0 0.0
      %1995 = vmatprep.subr.mxu0 0.0
      %1996 = vmatpush1.msra.mxu0 0.0
      %1997 = vmatprep.subr.mxu0 0.0
      %1998 = vmatpush1.msra.mxu0 0.0
      %1999 = vmatprep.subr.mxu0 0.0
      %2000 = vmatpush1.msra.mxu0 0.0
      %2001 = vmatprep.subr.mxu0 0.0
      %2002 = vmatpush1.msra.mxu0 0.0
      %2003 = vmatprep.subr.mxu0 0.0
      %2004 = vmatpush1.msra.mxu0 0.0
      %2005 = vmatprep.mubr.f32.mxu0 0.0
      %2006 = vmatmul.mubr.f32.gmra.mrb[0].mxu0 %v1939
      %v2007 = vpop.f32.mrb[0].mxu0
      %v2008 = vadd.f32 0.0, %v2007
      %v2009 = vpop.f32.mrb[0].mxu0
      %2010 = vdwg.mxu0
      %v2012 = vsel %vm509, %v1505, 0
      %2014 = vmatprep.subr.mxu0 0.0
      %2015 = vmatpush1.msra.mxu0 %v1937
      %2016 = vmatprep.subr.mxu0 0.0
      %2017 = vmatpush1.msra.mxu0 0.0
      %2018 = vmatprep.subr.mxu0 0.0
      %2019 = vmatpush1.msra.mxu0 0.0
      %2020 = vmatprep.subr.mxu0 0.0
      %2021 = vmatpush1.msra.mxu0 0.0
      %2022 = vmatprep.subr.mxu0 0.0
      %2023 = vmatpush1.msra.mxu0 0.0
      %2024 = vmatprep.subr.mxu0 0.0
      %2025 = vmatpush1.msra.mxu0 0.0
      %2026 = vmatprep.subr.mxu0 0.0
      %2027 = vmatpush1.msra.mxu0 0.0
      %2028 = vmatprep.subr.mxu0 0.0
      %2029 = vmatpush1.msra.mxu0 0.0
      %2030 = vmatprep.subr.mxu0 0.0
      %2031 = vmatpush1.msra.mxu0 0.0
      %2032 = vmatprep.subr.mxu0 0.0
      %2033 = vmatpush1.msra.mxu0 0.0
      %2034 = vmatprep.subr.mxu0 0.0
      %2035 = vmatpush1.msra.mxu0 0.0
      %2036 = vmatprep.subr.mxu0 0.0
      %2037 = vmatpush1.msra.mxu0 0.0
      %2038 = vmatprep.subr.mxu0 0.0
      %2039 = vmatpush1.msra.mxu0 0.0
      %2040 = vmatprep.subr.mxu0 0.0
      %2041 = vmatpush1.msra.mxu0 0.0
      %2042 = vmatprep.subr.mxu0 0.0
      %2043 = vmatpush1.msra.mxu0 0.0
      %2044 = vmatprep.subr.mxu0 0.0
      %2045 = vmatpush1.msra.mxu0 0.0
      %2046 = vmatprep.subr.mxu0 0.0
      %2047 = vmatpush1.msra.mxu0 0.0
      %2048 = vmatprep.subr.mxu0 0.0
      %2049 = vmatpush1.msra.mxu0 0.0
      %2050 = vmatprep.subr.mxu0 0.0
      %2051 = vmatpush1.msra.mxu0 0.0
      %2052 = vmatprep.subr.mxu0 0.0
      %2053 = vmatpush1.msra.mxu0 0.0
      %2054 = vmatprep.subr.mxu0 0.0
      %2055 = vmatpush1.msra.mxu0 0.0
      %2056 = vmatprep.subr.mxu0 0.0
      %2057 = vmatpush1.msra.mxu0 0.0
      %2058 = vmatprep.subr.mxu0 0.0
      %2059 = vmatpush1.msra.mxu0 0.0
      %2060 = vmatprep.subr.mxu0 0.0
      %2061 = vmatpush1.msra.mxu0 0.0
      %2062 = vmatprep.subr.mxu0 0.0
      %2063 = vmatpush1.msra.mxu0 0.0
      %2064 = vmatprep.subr.mxu0 0.0
      %2065 = vmatpush1.msra.mxu0 0.0
      %2066 = vmatprep.subr.mxu0 0.0
      %2067 = vmatpush1.msra.mxu0 0.0
      %2068 = vmatprep.subr.mxu0 0.0
      %2069 = vmatpush1.msra.mxu0 0.0
      %2070 = vmatprep.subr.mxu0 0.0
      %2071 = vmatpush1.msra.mxu0 0.0
      %2072 = vmatprep.subr.mxu0 0.0
      %2073 = vmatpush1.msra.mxu0 0.0
      %2074 = vmatprep.subr.mxu0 0.0
      %2075 = vmatpush1.msra.mxu0 0.0
      %2076 = vmatprep.subr.mxu0 0.0
      %2077 = vmatpush1.msra.mxu0 0.0
      %2078 = vmatprep.mubr.f32.mxu0 0.0
      %2079 = vmatmul.mubr.f32.gmra.mrb[0].mxu0 %v2012
      %v2080 = vpop.f32.mrb[0].mxu0
      %v2081 = vadd.f32 0.0, %v2080
      %v2082 = vpop.f32.mrb[0].mxu0
      %2083 = vdwg.mxu0
      %v2084 = vmul.f32 %v2008, 0.25
      %v2085 = vmul.f32 %v2081, 0.25
      %2086 = vmatprep.subr.mxu0 0.0
      %2087 = vmatpush1.msra.mxu0 %v2084
      %2088 = vmatprep.subr.mxu0 0.0
      %2089 = vmatpush1.msra.mxu0 0.0
      %2090 = vmatprep.subr.mxu0 0.0
      %2091 = vmatpush1.msra.mxu0 0.0
      %2092 = vmatprep.subr.mxu0 0.0
      %2093 = vmatpush1.msra.mxu0 0.0
      %2094 = vmatprep.subr.mxu0 0.0
      %2095 = vmatpush1.msra.mxu0 0.0
      %2096 = vmatprep.subr.mxu0 0.0
      %2097 = vmatpush1.msra.mxu0 0.0
      %2098 = vmatprep.subr.mxu0 0.0
      %2099 = vmatpush1.msra.mxu0 0.0
      %2100 = vmatprep.subr.mxu0 0.0
      %2101 = vmatpush1.msra.mxu0 0.0
      %2102 = vmatprep.subr.mxu0 0.0
      %2103 = vmatpush1.msra.mxu0 0.0
      %2104 = vmatprep.subr.mxu0 0.0
      %2105 = vmatpush1.msra.mxu0 0.0
      %2106 = vmatprep.subr.mxu0 0.0
      %2107 = vmatpush1.msra.mxu0 0.0
      %2108 = vmatprep.subr.mxu0 0.0
      %2109 = vmatpush1.msra.mxu0 0.0
      %2110 = vmatprep.subr.mxu0 0.0
      %2111 = vmatpush1.msra.mxu0 0.0
      %2112 = vmatprep.subr.mxu0 0.0
      %2113 = vmatpush1.msra.mxu0 0.0
      %2114 = vmatprep.subr.mxu0 0.0
      %2115 = vmatpush1.msra.mxu0 0.0
      %2116 = vmatprep.subr.mxu0 0.0
      %2117 = vmatpush1.msra.mxu0 0.0
      %2118 = vmatprep.subr.mxu0 0.0
      %2119 = vmatpush1.msra.mxu0 0.0
      %2120 = vmatprep.subr.mxu0 0.0
      %2121 = vmatpush1.msra.mxu0 0.0
      %2122 = vmatprep.subr.mxu0 0.0
      %2123 = vmatpush1.msra.mxu0 0.0
      %2124 = vmatprep.subr.mxu0 0.0
      %2125 = vmatpush1.msra.mxu0 0.0
      %2126 = vmatprep.subr.mxu0 0.0
      %2127 = vmatpush1.msra.mxu0 0.0
      %2128 = vmatprep.subr.mxu0 0.0
      %2129 = vmatpush1.msra.mxu0 0.0
      %2130 = vmatprep.subr.mxu0 0.0
      %2131 = vmatpush1.msra.mxu0 0.0
      %2132 = vmatprep.subr.mxu0 0.0
      %2133 = vmatpush1.msra.mxu0 0.0
      %2134 = vmatprep.subr.mxu0 0.0
      %2135 = vmatpush1.msra.mxu0 0.0
      %2136 = vmatprep.subr.mxu0 0.0
      %2137 = vmatpush1.msra.mxu0 0.0
      %2138 = vmatprep.subr.mxu0 0.0
      %2139 = vmatpush1.msra.mxu0 0.0
      %2140 = vmatprep.subr.mxu0 0.0
      %2141 = vmatpush1.msra.mxu0 0.0
      %2142 = vmatprep.subr.mxu0 0.0
      %2143 = vmatpush1.msra.mxu0 0.0
      %2144 = vmatprep.subr.mxu0 0.0
      %2145 = vmatpush1.msra.mxu0 0.0
      %2146 = vmatprep.subr.mxu0 0.0
      %2147 = vmatpush1.msra.mxu0 0.0
      %2148 = vmatprep.subr.mxu0 0.0
      %2149 = vmatpush1.msra.mxu0 0.0
      %2150 = vmatprep.mubr.f32.mxu0 0.0
      %2151 = vmatmul.mubr.f32.gmra.mrb[0].mxu0 %v918
      %v2152 = vpop.f32.mrb[0].mxu0
      %v2153 = vadd.f32 0.0, %v2152
      %v2154 = vpop.f32.mrb[0].mxu0
      %2155 = vdwg.mxu0
      %2156 = vmatprep.subr.mxu0 0.0
      %2157 = vmatpush1.msra.mxu0 %v2085
      %2158 = vmatprep.subr.mxu0 0.0
      %2159 = vmatpush1.msra.mxu0 0.0
      %2160 = vmatprep.subr.mxu0 0.0
      %2161 = vmatpush1.msra.mxu0 0.0
      %2162 = vmatprep.subr.mxu0 0.0
      %2163 = vmatpush1.msra.mxu0 0.0
      %2164 = vmatprep.subr.mxu0 0.0
      %2165 = vmatpush1.msra.mxu0 0.0
      %2166 = vmatprep.subr.mxu0 0.0
      %2167 = vmatpush1.msra.mxu0 0.0
      %2168 = vmatprep.subr.mxu0 0.0
      %2169 = vmatpush1.msra.mxu0 0.0
      %2170 = vmatprep.subr.mxu0 0.0
      %2171 = vmatpush1.msra.mxu0 0.0
      %2172 = vmatprep.subr.mxu0 0.0
      %2173 = vmatpush1.msra.mxu0 0.0
      %2174 = vmatprep.subr.mxu0 0.0
      %2175 = vmatpush1.msra.mxu0 0.0
      %2176 = vmatprep.subr.mxu0 0.0
      %2177 = vmatpush1.msra.mxu0 0.0
      %2178 = vmatprep.subr.mxu0 0.0
      %2179 = vmatpush1.msra.mxu0 0.0
      %2180 = vmatprep.subr.mxu0 0.0
      %2181 = vmatpush1.msra.mxu0 0.0
      %2182 = vmatprep.subr.mxu0 0.0
      %2183 = vmatpush1.msra.mxu0 0.0
      %2184 = vmatprep.subr.mxu0 0.0
      %2185 = vmatpush1.msra.mxu0 0.0
      %2186 = vmatprep.subr.mxu0 0.0
      %2187 = vmatpush1.msra.mxu0 0.0
      %2188 = vmatprep.subr.mxu0 0.0
      %2189 = vmatpush1.msra.mxu0 0.0
      %2190 = vmatprep.subr.mxu0 0.0
      %2191 = vmatpush1.msra.mxu0 0.0
      %2192 = vmatprep.subr.mxu0 0.0
      %2193 = vmatpush1.msra.mxu0 0.0
      %2194 = vmatprep.subr.mxu0 0.0
      %2195 = vmatpush1.msra.mxu0 0.0
      %2196 = vmatprep.subr.mxu0 0.0
      %2197 = vmatpush1.msra.mxu0 0.0
      %2198 = vmatprep.subr.mxu0 0.0
      %2199 = vmatpush1.msra.mxu0 0.0
      %2200 = vmatprep.subr.mxu0 0.0
      %2201 = vmatpush1.msra.mxu0 0.0
      %2202 = vmatprep.subr.mxu0 0.0
      %2203 = vmatpush1.msra.mxu0 0.0
      %2204 = vmatprep.subr.mxu0 0.0
      %2205 = vmatpush1.msra.mxu0 0.0
      %2206 = vmatprep.subr.mxu0 0.0
      %2207 = vmatpush1.msra.mxu0 0.0
      %2208 = vmatprep.subr.mxu0 0.0
      %2209 = vmatpush1.msra.mxu0 0.0
      %2210 = vmatprep.subr.mxu0 0.0
      %2211 = vmatpush1.msra.mxu0 0.0
      %2212 = vmatprep.subr.mxu0 0.0
      %2213 = vmatpush1.msra.mxu0 0.0
      %2214 = vmatprep.subr.mxu0 0.0
      %2215 = vmatpush1.msra.mxu0 0.0
      %2216 = vmatprep.subr.mxu0 0.0
      %2217 = vmatpush1.msra.mxu0 0.0
      %2218 = vmatprep.subr.mxu0 0.0
      %2219 = vmatpush1.msra.mxu0 0.0
      %2220 = vmatprep.mubr.f32.mxu0 0.0
      %2221 = vmatmul.mubr.f32.gmra.mrb[0].mxu0 %v991
      %v2222 = vpop.f32.mrb[0].mxu0
      %v2223 = vadd.f32 0.0, %v2222
      %v2224 = vpop.f32.mrb[0].mxu0
      %2225 = vdwg.mxu0
      %v2226 = vsub.f32 %v1063, %v2153
      %v2227 = vsub.f32 %v1063, %v2223
      %v2229 = vsel %vm509, %v2153, 0
      %2231 = vmatprep.subr.mxu0 0.0
      %2232 = vmatpush1.msra.mxu0 %v2226
      %2233 = vmatprep.subr.mxu0 0.0
      %2234 = vmatpush1.msra.mxu0 0.0
      %2235 = vmatprep.subr.mxu0 0.0
      %2236 = vmatpush1.msra.mxu0 0.0
      %2237 = vmatprep.subr.mxu0 0.0
      %2238 = vmatpush1.msra.mxu0 0.0
      %2239 = vmatprep.subr.mxu0 0.0
      %2240 = vmatpush1.msra.mxu0 0.0
      %2241 = vmatprep.subr.mxu0 0.0
      %2242 = vmatpush1.msra.mxu0 0.0
      %2243 = vmatprep.subr.mxu0 0.0
      %2244 = vmatpush1.msra.mxu0 0.0
      %2245 = vmatprep.subr.mxu0 0.0
      %2246 = vmatpush1.msra.mxu0 0.0
      %2247 = vmatprep.subr.mxu0 0.0
      %2248 = vmatpush1.msra.mxu0 0.0
      %2249 = vmatprep.subr.mxu0 0.0
      %2250 = vmatpush1.msra.mxu0 0.0
      %2251 = vmatprep.subr.mxu0 0.0
      %2252 = vmatpush1.msra.mxu0 0.0
      %2253 = vmatprep.subr.mxu0 0.0
      %2254 = vmatpush1.msra.mxu0 0.0
      %2255 = vmatprep.subr.mxu0 0.0
      %2256 = vmatpush1.msra.mxu0 0.0
      %2257 = vmatprep.subr.mxu0 0.0
      %2258 = vmatpush1.msra.mxu0 0.0
      %2259 = vmatprep.subr.mxu0 0.0
      %2260 = vmatpush1.msra.mxu0 0.0
      %2261 = vmatprep.subr.mxu0 0.0
      %2262 = vmatpush1.msra.mxu0 0.0
      %2263 = vmatprep.subr.mxu0 0.0
      %2264 = vmatpush1.msra.mxu0 0.0
      %2265 = vmatprep.subr.mxu0 0.0
      %2266 = vmatpush1.msra.mxu0 0.0
      %2267 = vmatprep.subr.mxu0 0.0
      %2268 = vmatpush1.msra.mxu0 0.0
      %2269 = vmatprep.subr.mxu0 0.0
      %2270 = vmatpush1.msra.mxu0 0.0
      %2271 = vmatprep.subr.mxu0 0.0
      %2272 = vmatpush1.msra.mxu0 0.0
      %2273 = vmatprep.subr.mxu0 0.0
      %2274 = vmatpush1.msra.mxu0 0.0
      %2275 = vmatprep.subr.mxu0 0.0
      %2276 = vmatpush1.msra.mxu0 0.0
      %2277 = vmatprep.subr.mxu0 0.0
      %2278 = vmatpush1.msra.mxu0 0.0
      %2279 = vmatprep.subr.mxu0 0.0
      %2280 = vmatpush1.msra.mxu0 0.0
      %2281 = vmatprep.subr.mxu0 0.0
      %2282 = vmatpush1.msra.mxu0 0.0
      %2283 = vmatprep.subr.mxu0 0.0
      %2284 = vmatpush1.msra.mxu0 0.0
      %2285 = vmatprep.subr.mxu0 0.0
      %2286 = vmatpush1.msra.mxu0 0.0
      %2287 = vmatprep.subr.mxu0 0.0
      %2288 = vmatpush1.msra.mxu0 0.0
      %2289 = vmatprep.subr.mxu0 0.0
      %2290 = vmatpush1.msra.mxu0 0.0
      %2291 = vmatprep.subr.mxu0 0.0
      %2292 = vmatpush1.msra.mxu0 0.0
      %2293 = vmatprep.subr.mxu0 0.0
      %2294 = vmatpush1.msra.mxu0 0.0
      %2295 = vmatprep.mubr.f32.mxu0 0.0
      %2296 = vmatmul.mubr.f32.gmra.mrb[0].mxu0 %v2229
      %v2297 = vpop.f32.mrb[0].mxu0
      %v2298 = vadd.f32 0.0, %v2297
      %v2299 = vpop.f32.mrb[0].mxu0
      %2300 = vdwg.mxu0
      %v2302 = vsel %vm509, %v2223, 0
      %2304 = vmatprep.subr.mxu0 0.0
      %2305 = vmatpush1.msra.mxu0 %v2227
      %2306 = vmatprep.subr.mxu0 0.0
      %2307 = vmatpush1.msra.mxu0 0.0
      %2308 = vmatprep.subr.mxu0 0.0
      %2309 = vmatpush1.msra.mxu0 0.0
      %2310 = vmatprep.subr.mxu0 0.0
      %2311 = vmatpush1.msra.mxu0 0.0
      %2312 = vmatprep.subr.mxu0 0.0
      %2313 = vmatpush1.msra.mxu0 0.0
      %2314 = vmatprep.subr.mxu0 0.0
      %2315 = vmatpush1.msra.mxu0 0.0
      %2316 = vmatprep.subr.mxu0 0.0
      %2317 = vmatpush1.msra.mxu0 0.0
      %2318 = vmatprep.subr.mxu0 0.0
      %2319 = vmatpush1.msra.mxu0 0.0
      %2320 = vmatprep.subr.mxu0 0.0
      %2321 = vmatpush1.msra.mxu0 0.0
      %2322 = vmatprep.subr.mxu0 0.0
      %2323 = vmatpush1.msra.mxu0 0.0
      %2324 = vmatprep.subr.mxu0 0.0
      %2325 = vmatpush1.msra.mxu0 0.0
      %2326 = vmatprep.subr.mxu0 0.0
      %2327 = vmatpush1.msra.mxu0 0.0
      %2328 = vmatprep.subr.mxu0 0.0
      %2329 = vmatpush1.msra.mxu0 0.0
      %2330 = vmatprep.subr.mxu0 0.0
      %2331 = vmatpush1.msra.mxu0 0.0
      %2332 = vmatprep.subr.mxu0 0.0
      %2333 = vmatpush1.msra.mxu0 0.0
      %2334 = vmatprep.subr.mxu0 0.0
      %2335 = vmatpush1.msra.mxu0 0.0
      %2336 = vmatprep.subr.mxu0 0.0
      %2337 = vmatpush1.msra.mxu0 0.0
      %2338 = vmatprep.subr.mxu0 0.0
      %2339 = vmatpush1.msra.mxu0 0.0
      %2340 = vmatprep.subr.mxu0 0.0
      %2341 = vmatpush1.msra.mxu0 0.0
      %2342 = vmatprep.subr.mxu0 0.0
      %2343 = vmatpush1.msra.mxu0 0.0
      %2344 = vmatprep.subr.mxu0 0.0
      %2345 = vmatpush1.msra.mxu0 0.0
      %2346 = vmatprep.subr.mxu0 0.0
      %2347 = vmatpush1.msra.mxu0 0.0
      %2348 = vmatprep.subr.mxu0 0.0
      %2349 = vmatpush1.msra.mxu0 0.0
      %2350 = vmatprep.subr.mxu0 0.0
      %2351 = vmatpush1.msra.mxu0 0.0
      %2352 = vmatprep.subr.mxu0 0.0
      %2353 = vmatpush1.msra.mxu0 0.0
      %2354 = vmatprep.subr.mxu0 0.0
      %2355 = vmatpush1.msra.mxu0 0.0
      %2356 = vmatprep.subr.mxu0 0.0
      %2357 = vmatpush1.msra.mxu0 0.0
      %2358 = vmatprep.subr.mxu0 0.0
      %2359 = vmatpush1.msra.mxu0 0.0
      %2360 = vmatprep.subr.mxu0 0.0
      %2361 = vmatpush1.msra.mxu0 0.0
      %2362 = vmatprep.subr.mxu0 0.0
      %2363 = vmatpush1.msra.mxu0 0.0
      %2364 = vmatprep.subr.mxu0 0.0
      %2365 = vmatpush1.msra.mxu0 0.0
      %2366 = vmatprep.subr.mxu0 0.0
      %2367 = vmatpush1.msra.mxu0 0.0
      %2368 = vmatprep.mubr.f32.mxu0 0.0
      %2369 = vmatmul.mubr.f32.gmra.mrb[0].mxu0 %v2302
      %v2370 = vpop.f32.mrb[0].mxu0
      %v2371 = vadd.f32 0.0, %v2370
      %v2372 = vpop.f32.mrb[0].mxu0
      %2373 = vdwg.mxu0
      %v2374 = vsub.f32 %v1066, %v2298
      %v2375 = vsub.f32 %v1066, %v2371
      %2376 = vmatprep.subr.mxu0 0.0
      %2377 = vmatpush1.msra.mxu0 %v2374
      %2378 = vmatprep.subr.mxu0 0.0
      %2379 = vmatpush1.msra.mxu0 0.0
      %2380 = vmatprep.subr.mxu0 0.0
      %2381 = vmatpush1.msra.mxu0 0.0
      %2382 = vmatprep.subr.mxu0 0.0
      %2383 = vmatpush1.msra.mxu0 0.0
      %2384 = vmatprep.subr.mxu0 0.0
      %2385 = vmatpush1.msra.mxu0 0.0
      %2386 = vmatprep.subr.mxu0 0.0
      %2387 = vmatpush1.msra.mxu0 0.0
      %2388 = vmatprep.subr.mxu0 0.0
      %2389 = vmatpush1.msra.mxu0 0.0
      %2390 = vmatprep.subr.mxu0 0.0
      %2391 = vmatpush1.msra.mxu0 0.0
      %2392 = vmatprep.subr.mxu0 0.0
      %2393 = vmatpush1.msra.mxu0 0.0
      %2394 = vmatprep.subr.mxu0 0.0
      %2395 = vmatpush1.msra.mxu0 0.0
      %2396 = vmatprep.subr.mxu0 0.0
      %2397 = vmatpush1.msra.mxu0 0.0
      %2398 = vmatprep.subr.mxu0 0.0
      %2399 = vmatpush1.msra.mxu0 0.0
      %2400 = vmatprep.subr.mxu0 0.0
      %2401 = vmatpush1.msra.mxu0 0.0
      %2402 = vmatprep.subr.mxu0 0.0
      %2403 = vmatpush1.msra.mxu0 0.0
      %2404 = vmatprep.subr.mxu0 0.0
      %2405 = vmatpush1.msra.mxu0 0.0
      %2406 = vmatprep.subr.mxu0 0.0
      %2407 = vmatpush1.msra.mxu0 0.0
      %2408 = vmatprep.subr.mxu0 0.0
      %2409 = vmatpush1.msra.mxu0 0.0
      %2410 = vmatprep.subr.mxu0 0.0
      %2411 = vmatpush1.msra.mxu0 0.0
      %2412 = vmatprep.subr.mxu0 0.0
      %2413 = vmatpush1.msra.mxu0 0.0
      %2414 = vmatprep.subr.mxu0 0.0
      %2415 = vmatpush1.msra.mxu0 0.0
      %2416 = vmatprep.subr.mxu0 0.0
      %2417 = vmatpush1.msra.mxu0 0.0
      %2418 = vmatprep.subr.mxu0 0.0
      %2419 = vmatpush1.msra.mxu0 0.0
      %2420 = vmatprep.subr.mxu0 0.0
      %2421 = vmatpush1.msra.mxu0 0.0
      %2422 = vmatprep.subr.mxu0 0.0
      %2423 = vmatpush1.msra.mxu0 0.0
      %2424 = vmatprep.subr.mxu0 0.0
      %2425 = vmatpush1.msra.mxu0 0.0
      %2426 = vmatprep.subr.mxu0 0.0
      %2427 = vmatpush1.msra.mxu0 0.0
      %2428 = vmatprep.subr.mxu0 0.0
      %2429 = vmatpush1.msra.mxu0 0.0
      %2430 = vmatprep.subr.mxu0 0.0
      %2431 = vmatpush1.msra.mxu0 0.0
      %2432 = vmatprep.subr.mxu0 0.0
      %2433 = vmatpush1.msra.mxu0 0.0
      %2434 = vmatprep.subr.mxu0 0.0
      %2435 = vmatpush1.msra.mxu0 0.0
      %2436 = vmatprep.subr.mxu0 0.0
      %2437 = vmatpush1.msra.mxu0 0.0
      %2438 = vmatprep.subr.mxu0 0.0
      %2439 = vmatpush1.msra.mxu0 0.0
      %2440 = vmatprep.mubr.f32.mxu0 0.0
      %2441 = vmatmul.mubr.f32.gmra.mrb[0].mxu0 %v2229
      %v2442 = vpop.f32.mrb[0].mxu0
      %v2443 = vadd.f32 0.0, %v2442
      %v2444 = vpop.f32.mrb[0].mxu0
      %2445 = vdwg.mxu0
      %2446 = vmatprep.subr.mxu0 0.0
      %2447 = vmatpush1.msra.mxu0 %v2375
      %2448 = vmatprep.subr.mxu0 0.0
      %2449 = vmatpush1.msra.mxu0 0.0
      %2450 = vmatprep.subr.mxu0 0.0
      %2451 = vmatpush1.msra.mxu0 0.0
      %2452 = vmatprep.subr.mxu0 0.0
      %2453 = vmatpush1.msra.mxu0 0.0
      %2454 = vmatprep.subr.mxu0 0.0
      %2455 = vmatpush1.msra.mxu0 0.0
      %2456 = vmatprep.subr.mxu0 0.0
      %2457 = vmatpush1.msra.mxu0 0.0
      %2458 = vmatprep.subr.mxu0 0.0
      %2459 = vmatpush1.msra.mxu0 0.0
      %2460 = vmatprep.subr.mxu0 0.0
      %2461 = vmatpush1.msra.mxu0 0.0
      %2462 = vmatprep.subr.mxu0 0.0
      %2463 = vmatpush1.msra.mxu0 0.0
      %2464 = vmatprep.subr.mxu0 0.0
      %2465 = vmatpush1.msra.mxu0 0.0
      %2466 = vmatprep.subr.mxu0 0.0
      %2467 = vmatpush1.msra.mxu0 0.0
      %2468 = vmatprep.subr.mxu0 0.0
      %2469 = vmatpush1.msra.mxu0 0.0
      %2470 = vmatprep.subr.mxu0 0.0
      %2471 = vmatpush1.msra.mxu0 0.0
      %2472 = vmatprep.subr.mxu0 0.0
      %2473 = vmatpush1.msra.mxu0 0.0
      %2474 = vmatprep.subr.mxu0 0.0
      %2475 = vmatpush1.msra.mxu0 0.0
      %2476 = vmatprep.subr.mxu0 0.0
      %2477 = vmatpush1.msra.mxu0 0.0
      %2478 = vmatprep.subr.mxu0 0.0
      %2479 = vmatpush1.msra.mxu0 0.0
      %2480 = vmatprep.subr.mxu0 0.0
      %2481 = vmatpush1.msra.mxu0 0.0
      %2482 = vmatprep.subr.mxu0 0.0
      %2483 = vmatpush1.msra.mxu0 0.0
      %2484 = vmatprep.subr.mxu0 0.0
      %2485 = vmatpush1.msra.mxu0 0.0
      %2486 = vmatprep.subr.mxu0 0.0
      %2487 = vmatpush1.msra.mxu0 0.0
      %2488 = vmatprep.subr.mxu0 0.0
      %2489 = vmatpush1.msra.mxu0 0.0
      %2490 = vmatprep.subr.mxu0 0.0
      %2491 = vmatpush1.msra.mxu0 0.0
      %2492 = vmatprep.subr.mxu0 0.0
      %2493 = vmatpush1.msra.mxu0 0.0
      %2494 = vmatprep.subr.mxu0 0.0
      %2495 = vmatpush1.msra.mxu0 0.0
      %2496 = vmatprep.subr.mxu0 0.0
      %2497 = vmatpush1.msra.mxu0 0.0
      %2498 = vmatprep.subr.mxu0 0.0
      %2499 = vmatpush1.msra.mxu0 0.0
      %2500 = vmatprep.subr.mxu0 0.0
      %2501 = vmatpush1.msra.mxu0 0.0
      %2502 = vmatprep.subr.mxu0 0.0
      %2503 = vmatpush1.msra.mxu0 0.0
      %2504 = vmatprep.subr.mxu0 0.0
      %2505 = vmatpush1.msra.mxu0 0.0
      %2506 = vmatprep.subr.mxu0 0.0
      %2507 = vmatpush1.msra.mxu0 0.0
      %2508 = vmatprep.subr.mxu0 0.0
      %2509 = vmatpush1.msra.mxu0 0.0
      %2510 = vmatprep.mubr.f32.mxu0 0.0
      %2511 = vmatmul.mubr.f32.gmra.mrb[0].mxu0 %v2302
      %v2512 = vpop.f32.mrb[0].mxu0
      %v2513 = vadd.f32 0.0, %v2512
      %v2514 = vpop.f32.mrb[0].mxu0
      %2515 = vdwg.mxu0
      %v2516 = vsub.f32 %v1215, %v2443
      %v2517 = vsub.f32 %v1215, %v2513
      %v2519 = vsel %vm509, %v2084, 0
      %2521 = vmatprep.subr.mxu0 0.0
      %2522 = vmatpush1.msra.mxu0 %v2516
      %2523 = vmatprep.subr.mxu0 0.0
      %2524 = vmatpush1.msra.mxu0 0.0
      %2525 = vmatprep.subr.mxu0 0.0
      %2526 = vmatpush1.msra.mxu0 0.0
      %2527 = vmatprep.subr.mxu0 0.0
      %2528 = vmatpush1.msra.mxu0 0.0
      %2529 = vmatprep.subr.mxu0 0.0
      %2530 = vmatpush1.msra.mxu0 0.0
      %2531 = vmatprep.subr.mxu0 0.0
      %2532 = vmatpush1.msra.mxu0 0.0
      %2533 = vmatprep.subr.mxu0 0.0
      %2534 = vmatpush1.msra.mxu0 0.0
      %2535 = vmatprep.subr.mxu0 0.0
      %2536 = vmatpush1.msra.mxu0 0.0
      %2537 = vmatprep.subr.mxu0 0.0
      %2538 = vmatpush1.msra.mxu0 0.0
      %2539 = vmatprep.subr.mxu0 0.0
      %2540 = vmatpush1.msra.mxu0 0.0
      %2541 = vmatprep.subr.mxu0 0.0
      %2542 = vmatpush1.msra.mxu0 0.0
      %2543 = vmatprep.subr.mxu0 0.0
      %2544 = vmatpush1.msra.mxu0 0.0
      %2545 = vmatprep.subr.mxu0 0.0
      %2546 = vmatpush1.msra.mxu0 0.0
      %2547 = vmatprep.subr.mxu0 0.0
      %2548 = vmatpush1.msra.mxu0 0.0
      %2549 = vmatprep.subr.mxu0 0.0
      %2550 = vmatpush1.msra.mxu0 0.0
      %2551 = vmatprep.subr.mxu0 0.0
      %2552 = vmatpush1.msra.mxu0 0.0
      %2553 = vmatprep.subr.mxu0 0.0
      %2554 = vmatpush1.msra.mxu0 0.0
      %2555 = vmatprep.subr.mxu0 0.0
      %2556 = vmatpush1.msra.mxu0 0.0
      %2557 = vmatprep.subr.mxu0 0.0
      %2558 = vmatpush1.msra.mxu0 0.0
      %2559 = vmatprep.subr.mxu0 0.0
      %2560 = vmatpush1.msra.mxu0 0.0
      %2561 = vmatprep.subr.mxu0 0.0
      %2562 = vmatpush1.msra.mxu0 0.0
      %2563 = vmatprep.subr.mxu0 0.0
      %2564 = vmatpush1.msra.mxu0 0.0
      %2565 = vmatprep.subr.mxu0 0.0
      %2566 = vmatpush1.msra.mxu0 0.0
      %2567 = vmatprep.subr.mxu0 0.0
      %2568 = vmatpush1.msra.mxu0 0.0
      %2569 = vmatprep.subr.mxu0 0.0
      %2570 = vmatpush1.msra.mxu0 0.0
      %2571 = vmatprep.subr.mxu0 0.0
      %2572 = vmatpush1.msra.mxu0 0.0
      %2573 = vmatprep.subr.mxu0 0.0
      %2574 = vmatpush1.msra.mxu0 0.0
      %2575 = vmatprep.subr.mxu0 0.0
      %2576 = vmatpush1.msra.mxu0 0.0
      %2577 = vmatprep.subr.mxu0 0.0
      %2578 = vmatpush1.msra.mxu0 0.0
      %2579 = vmatprep.subr.mxu0 0.0
      %2580 = vmatpush1.msra.mxu0 0.0
      %2581 = vmatprep.subr.mxu0 0.0
      %2582 = vmatpush1.msra.mxu0 0.0
      %2583 = vmatprep.subr.mxu0 0.0
      %2584 = vmatpush1.msra.mxu0 0.0
      %2585 = vmatprep.mubr.f32.mxu0 0.0
      %2586 = vmatmul.mubr.f32.gmra.mrb[0].mxu0 %v2519
      %v2587 = vpop.f32.mrb[0].mxu0
      %v2588 = vadd.f32 0.0, %v2587
      %v2589 = vpop.f32.mrb[0].mxu0
      %2590 = vdwg.mxu0
      %v2592 = vsel %vm509, %v2085, 0
      %2594 = vmatprep.subr.mxu0 0.0
      %2595 = vmatpush1.msra.mxu0 %v2517
      %2596 = vmatprep.subr.mxu0 0.0
      %2597 = vmatpush1.msra.mxu0 0.0
      %2598 = vmatprep.subr.mxu0 0.0
      %2599 = vmatpush1.msra.mxu0 0.0
      %2600 = vmatprep.subr.mxu0 0.0
      %2601 = vmatpush1.msra.mxu0 0.0
      %2602 = vmatprep.subr.mxu0 0.0
      %2603 = vmatpush1.msra.mxu0 0.0
      %2604 = vmatprep.subr.mxu0 0.0
      %2605 = vmatpush1.msra.mxu0 0.0
      %2606 = vmatprep.subr.mxu0 0.0
      %2607 = vmatpush1.msra.mxu0 0.0
      %2608 = vmatprep.subr.mxu0 0.0
      %2609 = vmatpush1.msra.mxu0 0.0
      %2610 = vmatprep.subr.mxu0 0.0
      %2611 = vmatpush1.msra.mxu0 0.0
      %2612 = vmatprep.subr.mxu0 0.0
      %2613 = vmatpush1.msra.mxu0 0.0
      %2614 = vmatprep.subr.mxu0 0.0
      %2615 = vmatpush1.msra.mxu0 0.0
      %2616 = vmatprep.subr.mxu0 0.0
      %2617 = vmatpush1.msra.mxu0 0.0
      %2618 = vmatprep.subr.mxu0 0.0
      %2619 = vmatpush1.msra.mxu0 0.0
      %2620 = vmatprep.subr.mxu0 0.0
      %2621 = vmatpush1.msra.mxu0 0.0
      %2622 = vmatprep.subr.mxu0 0.0
      %2623 = vmatpush1.msra.mxu0 0.0
      %2624 = vmatprep.subr.mxu0 0.0
      %2625 = vmatpush1.msra.mxu0 0.0
      %2626 = vmatprep.subr.mxu0 0.0
      %2627 = vmatpush1.msra.mxu0 0.0
      %2628 = vmatprep.subr.mxu0 0.0
      %2629 = vmatpush1.msra.mxu0 0.0
      %2630 = vmatprep.subr.mxu0 0.0
      %2631 = vmatpush1.msra.mxu0 0.0
      %2632 = vmatprep.subr.mxu0 0.0
      %2633 = vmatpush1.msra.mxu0 0.0
      %2634 = vmatprep.subr.mxu0 0.0
      %2635 = vmatpush1.msra.mxu0 0.0
      %2636 = vmatprep.subr.mxu0 0.0
      %2637 = vmatpush1.msra.mxu0 0.0
      %2638 = vmatprep.subr.mxu0 0.0
      %2639 = vmatpush1.msra.mxu0 0.0
      %2640 = vmatprep.subr.mxu0 0.0
      %2641 = vmatpush1.msra.mxu0 0.0
      %2642 = vmatprep.subr.mxu0 0.0
      %2643 = vmatpush1.msra.mxu0 0.0
      %2644 = vmatprep.subr.mxu0 0.0
      %2645 = vmatpush1.msra.mxu0 0.0
      %2646 = vmatprep.subr.mxu0 0.0
      %2647 = vmatpush1.msra.mxu0 0.0
      %2648 = vmatprep.subr.mxu0 0.0
      %2649 = vmatpush1.msra.mxu0 0.0
      %2650 = vmatprep.subr.mxu0 0.0
      %2651 = vmatpush1.msra.mxu0 0.0
      %2652 = vmatprep.subr.mxu0 0.0
      %2653 = vmatpush1.msra.mxu0 0.0
      %2654 = vmatprep.subr.mxu0 0.0
      %2655 = vmatpush1.msra.mxu0 0.0
      %2656 = vmatprep.subr.mxu0 0.0
      %2657 = vmatpush1.msra.mxu0 0.0
      %2658 = vmatprep.mubr.f32.mxu0 0.0
      %2659 = vmatmul.mubr.f32.gmra.mrb[0].mxu0 %v2592
      %v2660 = vpop.f32.mrb[0].mxu0
      %v2661 = vadd.f32 0.0, %v2660
      %v2662 = vpop.f32.mrb[0].mxu0
      %2663 = vdwg.mxu0
      %v2664 = vmul.f32 %v2588, 0.25
      %v2665 = vmul.f32 %v2661, 0.25
      %2666 = vmatprep.subr.mxu0 0.0
      %2667 = vmatpush1.msra.mxu0 %v2664
      %2668 = vmatprep.subr.mxu0 0.0
      %2669 = vmatpush1.msra.mxu0 0.0
      %2670 = vmatprep.subr.mxu0 0.0
      %2671 = vmatpush1.msra.mxu0 0.0
      %2672 = vmatprep.subr.mxu0 0.0
      %2673 = vmatpush1.msra.mxu0 0.0
      %2674 = vmatprep.subr.mxu0 0.0
      %2675 = vmatpush1.msra.mxu0 0.0
      %2676 = vmatprep.subr.mxu0 0.0
      %2677 = vmatpush1.msra.mxu0 0.0
      %2678 = vmatprep.subr.mxu0 0.0
      %2679 = vmatpush1.msra.mxu0 0.0
      %2680 = vmatprep.subr.mxu0 0.0
      %2681 = vmatpush1.msra.mxu0 0.0
      %2682 = vmatprep.subr.mxu0 0.0
      %2683 = vmatpush1.msra.mxu0 0.0
      %2684 = vmatprep.subr.mxu0 0.0
      %2685 = vmatpush1.msra.mxu0 0.0
      %2686 = vmatprep.subr.mxu0 0.0
      %2687 = vmatpush1.msra.mxu0 0.0
      %2688 = vmatprep.subr.mxu0 0.0
      %2689 = vmatpush1.msra.mxu0 0.0
      %2690 = vmatprep.subr.mxu0 0.0
      %2691 = vmatpush1.msra.mxu0 0.0
      %2692 = vmatprep.subr.mxu0 0.0
      %2693 = vmatpush1.msra.mxu0 0.0
      %2694 = vmatprep.subr.mxu0 0.0
      %2695 = vmatpush1.msra.mxu0 0.0
      %2696 = vmatprep.subr.mxu0 0.0
      %2697 = vmatpush1.msra.mxu0 0.0
      %2698 = vmatprep.subr.mxu0 0.0
      %2699 = vmatpush1.msra.mxu0 0.0
      %2700 = vmatprep.subr.mxu0 0.0
      %2701 = vmatpush1.msra.mxu0 0.0
      %2702 = vmatprep.subr.mxu0 0.0
      %2703 = vmatpush1.msra.mxu0 0.0
      %2704 = vmatprep.subr.mxu0 0.0
      %2705 = vmatpush1.msra.mxu0 0.0
      %2706 = vmatprep.subr.mxu0 0.0
      %2707 = vmatpush1.msra.mxu0 0.0
      %2708 = vmatprep.subr.mxu0 0.0
      %2709 = vmatpush1.msra.mxu0 0.0
      %2710 = vmatprep.subr.mxu0 0.0
      %2711 = vmatpush1.msra.mxu0 0.0
      %2712 = vmatprep.subr.mxu0 0.0
      %2713 = vmatpush1.msra.mxu0 0.0
      %2714 = vmatprep.subr.mxu0 0.0
      %2715 = vmatpush1.msra.mxu0 0.0
      %2716 = vmatprep.subr.mxu0 0.0
      %2717 = vmatpush1.msra.mxu0 0.0
      %2718 = vmatprep.subr.mxu0 0.0
      %2719 = vmatpush1.msra.mxu0 0.0
      %2720 = vmatprep.subr.mxu0 0.0
      %2721 = vmatpush1.msra.mxu0 0.0
      %2722 = vmatprep.subr.mxu0 0.0
      %2723 = vmatpush1.msra.mxu0 0.0
      %2724 = vmatprep.subr.mxu0 0.0
      %2725 = vmatpush1.msra.mxu0 0.0
      %2726 = vmatprep.subr.mxu0 0.0
      %2727 = vmatpush1.msra.mxu0 0.0
      %2728 = vmatprep.subr.mxu0 0.0
      %2729 = vmatpush1.msra.mxu0 0.0
      %2730 = vmatprep.mubr.f32.mxu0 0.0
      %2731 = vmatmul.mubr.f32.gmra.mrb[0].mxu0 %v918
      %v2732 = vpop.f32.mrb[0].mxu0
      %v2733 = vadd.f32 0.0, %v2732
      %v2734 = vpop.f32.mrb[0].mxu0
      %2735 = vdwg.mxu0
      %2736 = vmatprep.subr.mxu0 0.0
      %2737 = vmatpush1.msra.mxu0 %v2665
      %2738 = vmatprep.subr.mxu0 0.0
      %2739 = vmatpush1.msra.mxu0 0.0
      %2740 = vmatprep.subr.mxu0 0.0
      %2741 = vmatpush1.msra.mxu0 0.0
      %2742 = vmatprep.subr.mxu0 0.0
      %2743 = vmatpush1.msra.mxu0 0.0
      %2744 = vmatprep.subr.mxu0 0.0
      %2745 = vmatpush1.msra.mxu0 0.0
      %2746 = vmatprep.subr.mxu0 0.0
      %2747 = vmatpush1.msra.mxu0 0.0
      %2748 = vmatprep.subr.mxu0 0.0
      %2749 = vmatpush1.msra.mxu0 0.0
      %2750 = vmatprep.subr.mxu0 0.0
      %2751 = vmatpush1.msra.mxu0 0.0
      %2752 = vmatprep.subr.mxu0 0.0
      %2753 = vmatpush1.msra.mxu0 0.0
      %2754 = vmatprep.subr.mxu0 0.0
      %2755 = vmatpush1.msra.mxu0 0.0
      %2756 = vmatprep.subr.mxu0 0.0
      %2757 = vmatpush1.msra.mxu0 0.0
      %2758 = vmatprep.subr.mxu0 0.0
      %2759 = vmatpush1.msra.mxu0 0.0
      %2760 = vmatprep.subr.mxu0 0.0
      %2761 = vmatpush1.msra.mxu0 0.0
      %2762 = vmatprep.subr.mxu0 0.0
      %2763 = vmatpush1.msra.mxu0 0.0
      %2764 = vmatprep.subr.mxu0 0.0
      %2765 = vmatpush1.msra.mxu0 0.0
      %2766 = vmatprep.subr.mxu0 0.0
      %2767 = vmatpush1.msra.mxu0 0.0
      %2768 = vmatprep.subr.mxu0 0.0
      %2769 = vmatpush1.msra.mxu0 0.0
      %2770 = vmatprep.subr.mxu0 0.0
      %2771 = vmatpush1.msra.mxu0 0.0
      %2772 = vmatprep.subr.mxu0 0.0
      %2773 = vmatpush1.msra.mxu0 0.0
      %2774 = vmatprep.subr.mxu0 0.0
      %2775 = vmatpush1.msra.mxu0 0.0
      %2776 = vmatprep.subr.mxu0 0.0
      %2777 = vmatpush1.msra.mxu0 0.0
      %2778 = vmatprep.subr.mxu0 0.0
      %2779 = vmatpush1.msra.mxu0 0.0
      %2780 = vmatprep.subr.mxu0 0.0
      %2781 = vmatpush1.msra.mxu0 0.0
      %2782 = vmatprep.subr.mxu0 0.0
      %2783 = vmatpush1.msra.mxu0 0.0
      %2784 = vmatprep.subr.mxu0 0.0
      %2785 = vmatpush1.msra.mxu0 0.0
      %2786 = vmatprep.subr.mxu0 0.0
      %2787 = vmatpush1.msra.mxu0 0.0
      %2788 = vmatprep.subr.mxu0 0.0
      %2789 = vmatpush1.msra.mxu0 0.0
      %2790 = vmatprep.subr.mxu0 0.0
      %2791 = vmatpush1.msra.mxu0 0.0
      %2792 = vmatprep.subr.mxu0 0.0
      %2793 = vmatpush1.msra.mxu0 0.0
      %2794 = vmatprep.subr.mxu0 0.0
      %2795 = vmatpush1.msra.mxu0 0.0
      %2796 = vmatprep.subr.mxu0 0.0
      %2797 = vmatpush1.msra.mxu0 0.0
      %2798 = vmatprep.subr.mxu0 0.0
      %2799 = vmatpush1.msra.mxu0 0.0
      %2800 = vmatprep.mubr.f32.mxu0 0.0
      %2801 = vmatmul.mubr.f32.gmra.mrb[0].mxu0 %v991
      %v2802 = vpop.f32.mrb[0].mxu0
      %v2803 = vadd.f32 0.0, %v2802
      %v2804 = vpop.f32.mrb[0].mxu0
      %2805 = vdwg.mxu0
      %v2806 = vsub.f32 %v1063, %v2733
      %v2807 = vsub.f32 %v1063, %v2803
      %v2809 = vsel %vm509, %v2733, 0
      %2811 = vmatprep.subr.mxu0 0.0
      %2812 = vmatpush1.msra.mxu0 %v2806
      %2813 = vmatprep.subr.mxu0 0.0
      %2814 = vmatpush1.msra.mxu0 0.0
      %2815 = vmatprep.subr.mxu0 0.0
      %2816 = vmatpush1.msra.mxu0 0.0
      %2817 = vmatprep.subr.mxu0 0.0
      %2818 = vmatpush1.msra.mxu0 0.0
      %2819 = vmatprep.subr.mxu0 0.0
      %2820 = vmatpush1.msra.mxu0 0.0
      %2821 = vmatprep.subr.mxu0 0.0
      %2822 = vmatpush1.msra.mxu0 0.0
      %2823 = vmatprep.subr.mxu0 0.0
      %2824 = vmatpush1.msra.mxu0 0.0
      %2825 = vmatprep.subr.mxu0 0.0
      %2826 = vmatpush1.msra.mxu0 0.0
      %2827 = vmatprep.subr.mxu0 0.0
      %2828 = vmatpush1.msra.mxu0 0.0
      %2829 = vmatprep.subr.mxu0 0.0
      %2830 = vmatpush1.msra.mxu0 0.0
      %2831 = vmatprep.subr.mxu0 0.0
      %2832 = vmatpush1.msra.mxu0 0.0
      %2833 = vmatprep.subr.mxu0 0.0
      %2834 = vmatpush1.msra.mxu0 0.0
      %2835 = vmatprep.subr.mxu0 0.0
      %2836 = vmatpush1.msra.mxu0 0.0
      %2837 = vmatprep.subr.mxu0 0.0
      %2838 = vmatpush1.msra.mxu0 0.0
      %2839 = vmatprep.subr.mxu0 0.0
      %2840 = vmatpush1.msra.mxu0 0.0
      %2841 = vmatprep.subr.mxu0 0.0
      %2842 = vmatpush1.msra.mxu0 0.0
      %2843 = vmatprep.subr.mxu0 0.0
      %2844 = vmatpush1.msra.mxu0 0.0
      %2845 = vmatprep.subr.mxu0 0.0
      %2846 = vmatpush1.msra.mxu0 0.0
      %2847 = vmatprep.subr.mxu0 0.0
      %2848 = vmatpush1.msra.mxu0 0.0
      %2849 = vmatprep.subr.mxu0 0.0
      %2850 = vmatpush1.msra.mxu0 0.0
      %2851 = vmatprep.subr.mxu0 0.0
      %2852 = vmatpush1.msra.mxu0 0.0
      %2853 = vmatprep.subr.mxu0 0.0
      %2854 = vmatpush1.msra.mxu0 0.0
      %2855 = vmatprep.subr.mxu0 0.0
      %2856 = vmatpush1.msra.mxu0 0.0
      %2857 = vmatprep.subr.mxu0 0.0
      %2858 = vmatpush1.msra.mxu0 0.0
      %2859 = vmatprep.subr.mxu0 0.0
      %2860 = vmatpush1.msra.mxu0 0.0
      %2861 = vmatprep.subr.mxu0 0.0
      %2862 = vmatpush1.msra.mxu0 0.0
      %2863 = vmatprep.subr.mxu0 0.0
      %2864 = vmatpush1.msra.mxu0 0.0
      %2865 = vmatprep.subr.mxu0 0.0
      %2866 = vmatpush1.msra.mxu0 0.0
      %2867 = vmatprep.subr.mxu0 0.0
      %2868 = vmatpush1.msra.mxu0 0.0
      %2869 = vmatprep.subr.mxu0 0.0
      %2870 = vmatpush1.msra.mxu0 0.0
      %2871 = vmatprep.subr.mxu0 0.0
      %2872 = vmatpush1.msra.mxu0 0.0
      %2873 = vmatprep.subr.mxu0 0.0
      %2874 = vmatpush1.msra.mxu0 0.0
      %2875 = vmatprep.mubr.f32.mxu0 0.0
      %2876 = vmatmul.mubr.f32.gmra.mrb[0].mxu0 %v2809
      %v2877 = vpop.f32.mrb[0].mxu0
      %v2878 = vadd.f32 0.0, %v2877
      %v2879 = vpop.f32.mrb[0].mxu0
      %2880 = vdwg.mxu0
      %v2882 = vsel %vm509, %v2803, 0
      %2884 = vmatprep.subr.mxu0 0.0
      %2885 = vmatpush1.msra.mxu0 %v2807
      %2886 = vmatprep.subr.mxu0 0.0
      %2887 = vmatpush1.msra.mxu0 0.0
      %2888 = vmatprep.subr.mxu0 0.0
      %2889 = vmatpush1.msra.mxu0 0.0
      %2890 = vmatprep.subr.mxu0 0.0
      %2891 = vmatpush1.msra.mxu0 0.0
      %2892 = vmatprep.subr.mxu0 0.0
      %2893 = vmatpush1.msra.mxu0 0.0
      %2894 = vmatprep.subr.mxu0 0.0
      %2895 = vmatpush1.msra.mxu0 0.0
      %2896 = vmatprep.subr.mxu0 0.0
      %2897 = vmatpush1.msra.mxu0 0.0
      %2898 = vmatprep.subr.mxu0 0.0
      %2899 = vmatpush1.msra.mxu0 0.0
      %2900 = vmatprep.subr.mxu0 0.0
      %2901 = vmatpush1.msra.mxu0 0.0
      %2902 = vmatprep.subr.mxu0 0.0
      %2903 = vmatpush1.msra.mxu0 0.0
      %2904 = vmatprep.subr.mxu0 0.0
      %2905 = vmatpush1.msra.mxu0 0.0
      %2906 = vmatprep.subr.mxu0 0.0
      %2907 = vmatpush1.msra.mxu0 0.0
      %2908 = vmatprep.subr.mxu0 0.0
      %2909 = vmatpush1.msra.mxu0 0.0
      %2910 = vmatprep.subr.mxu0 0.0
      %2911 = vmatpush1.msra.mxu0 0.0
      %2912 = vmatprep.subr.mxu0 0.0
      %2913 = vmatpush1.msra.mxu0 0.0
      %2914 = vmatprep.subr.mxu0 0.0
      %2915 = vmatpush1.msra.mxu0 0.0
      %2916 = vmatprep.subr.mxu0 0.0
      %2917 = vmatpush1.msra.mxu0 0.0
      %2918 = vmatprep.subr.mxu0 0.0
      %2919 = vmatpush1.msra.mxu0 0.0
      %2920 = vmatprep.subr.mxu0 0.0
      %2921 = vmatpush1.msra.mxu0 0.0
      %2922 = vmatprep.subr.mxu0 0.0
      %2923 = vmatpush1.msra.mxu0 0.0
      %2924 = vmatprep.subr.mxu0 0.0
      %2925 = vmatpush1.msra.mxu0 0.0
      %2926 = vmatprep.subr.mxu0 0.0
      %2927 = vmatpush1.msra.mxu0 0.0
      %2928 = vmatprep.subr.mxu0 0.0
      %2929 = vmatpush1.msra.mxu0 0.0
      %2930 = vmatprep.subr.mxu0 0.0
      %2931 = vmatpush1.msra.mxu0 0.0
      %2932 = vmatprep.subr.mxu0 0.0
      %2933 = vmatpush1.msra.mxu0 0.0
      %2934 = vmatprep.subr.mxu0 0.0
      %2935 = vmatpush1.msra.mxu0 0.0
      %2936 = vmatprep.subr.mxu0 0.0
      %2937 = vmatpush1.msra.mxu0 0.0
      %2938 = vmatprep.subr.mxu0 0.0
      %2939 = vmatpush1.msra.mxu0 0.0
      %2940 = vmatprep.subr.mxu0 0.0
      %2941 = vmatpush1.msra.mxu0 0.0
      %2942 = vmatprep.subr.mxu0 0.0
      %2943 = vmatpush1.msra.mxu0 0.0
      %2944 = vmatprep.subr.mxu0 0.0
      %2945 = vmatpush1.msra.mxu0 0.0
      %2946 = vmatprep.subr.mxu0 0.0
      %2947 = vmatpush1.msra.mxu0 0.0
      %2948 = vmatprep.mubr.f32.mxu0 0.0
      %2949 = vmatmul.mubr.f32.gmra.mrb[0].mxu0 %v2882
      %v2950 = vpop.f32.mrb[0].mxu0
      %v2951 = vadd.f32 0.0, %v2950
      %v2952 = vpop.f32.mrb[0].mxu0
      %2953 = vdwg.mxu0
      %v2954 = vsub.f32 %v1066, %v2878
      %v2955 = vsub.f32 %v1066, %v2951
      %2956 = vmatprep.subr.mxu0 0.0
      %2957 = vmatpush1.msra.mxu0 %v2954
      %2958 = vmatprep.subr.mxu0 0.0
      %2959 = vmatpush1.msra.mxu0 0.0
      %2960 = vmatprep.subr.mxu0 0.0
      %2961 = vmatpush1.msra.mxu0 0.0
      %2962 = vmatprep.subr.mxu0 0.0
      %2963 = vmatpush1.msra.mxu0 0.0
      %2964 = vmatprep.subr.mxu0 0.0
      %2965 = vmatpush1.msra.mxu0 0.0
      %2966 = vmatprep.subr.mxu0 0.0
      %2967 = vmatpush1.msra.mxu0 0.0
      %2968 = vmatprep.subr.mxu0 0.0
      %2969 = vmatpush1.msra.mxu0 0.0
      %2970 = vmatprep.subr.mxu0 0.0
      %2971 = vmatpush1.msra.mxu0 0.0
      %2972 = vmatprep.subr.mxu0 0.0
      %2973 = vmatpush1.msra.mxu0 0.0
      %2974 = vmatprep.subr.mxu0 0.0
      %2975 = vmatpush1.msra.mxu0 0.0
      %2976 = vmatprep.subr.mxu0 0.0
      %2977 = vmatpush1.msra.mxu0 0.0
      %2978 = vmatprep.subr.mxu0 0.0
      %2979 = vmatpush1.msra.mxu0 0.0
      %2980 = vmatprep.subr.mxu0 0.0
      %2981 = vmatpush1.msra.mxu0 0.0
      %2982 = vmatprep.subr.mxu0 0.0
      %2983 = vmatpush1.msra.mxu0 0.0
      %2984 = vmatprep.subr.mxu0 0.0
      %2985 = vmatpush1.msra.mxu0 0.0
      %2986 = vmatprep.subr.mxu0 0.0
      %2987 = vmatpush1.msra.mxu0 0.0
      %2988 = vmatprep.subr.mxu0 0.0
      %2989 = vmatpush1.msra.mxu0 0.0
      %2990 = vmatprep.subr.mxu0 0.0
      %2991 = vmatpush1.msra.mxu0 0.0
      %2992 = vmatprep.subr.mxu0 0.0
      %2993 = vmatpush1.msra.mxu0 0.0
      %2994 = vmatprep.subr.mxu0 0.0
      %2995 = vmatpush1.msra.mxu0 0.0
      %2996 = vmatprep.subr.mxu0 0.0
      %2997 = vmatpush1.msra.mxu0 0.0
      %2998 = vmatprep.subr.mxu0 0.0
      %2999 = vmatpush1.msra.mxu0 0.0
      %3000 = vmatprep.subr.mxu0 0.0
      %3001 = vmatpush1.msra.mxu0 0.0
      %3002 = vmatprep.subr.mxu0 0.0
      %3003 = vmatpush1.msra.mxu0 0.0
      %3004 = vmatprep.subr.mxu0 0.0
      %3005 = vmatpush1.msra.mxu0 0.0
      %3006 = vmatprep.subr.mxu0 0.0
      %3007 = vmatpush1.msra.mxu0 0.0
      %3008 = vmatprep.subr.mxu0 0.0
      %3009 = vmatpush1.msra.mxu0 0.0
      %3010 = vmatprep.subr.mxu0 0.0
      %3011 = vmatpush1.msra.mxu0 0.0
      %3012 = vmatprep.subr.mxu0 0.0
      %3013 = vmatpush1.msra.mxu0 0.0
      %3014 = vmatprep.subr.mxu0 0.0
      %3015 = vmatpush1.msra.mxu0 0.0
      %3016 = vmatprep.subr.mxu0 0.0
      %3017 = vmatpush1.msra.mxu0 0.0
      %3018 = vmatprep.subr.mxu0 0.0
      %3019 = vmatpush1.msra.mxu0 0.0
      %3020 = vmatprep.mubr.f32.mxu0 0.0
      %3021 = vmatmul.mubr.f32.gmra.mrb[0].mxu0 %v2809
      %v3022 = vpop.f32.mrb[0].mxu0
      %v3023 = vadd.f32 0.0, %v3022
      %v3024 = vpop.f32.mrb[0].mxu0
      %3025 = vdwg.mxu0
      %3026 = vmatprep.subr.mxu0 0.0
      %3027 = vmatpush1.msra.mxu0 %v2955
      %3028 = vmatprep.subr.mxu0 0.0
      %3029 = vmatpush1.msra.mxu0 0.0
      %3030 = vmatprep.subr.mxu0 0.0
      %3031 = vmatpush1.msra.mxu0 0.0
      %3032 = vmatprep.subr.mxu0 0.0
      %3033 = vmatpush1.msra.mxu0 0.0
      %3034 = vmatprep.subr.mxu0 0.0
      %3035 = vmatpush1.msra.mxu0 0.0
      %3036 = vmatprep.subr.mxu0 0.0
      %3037 = vmatpush1.msra.mxu0 0.0
      %3038 = vmatprep.subr.mxu0 0.0
      %3039 = vmatpush1.msra.mxu0 0.0
      %3040 = vmatprep.subr.mxu0 0.0
      %3041 = vmatpush1.msra.mxu0 0.0
      %3042 = vmatprep.subr.mxu0 0.0
      %3043 = vmatpush1.msra.mxu0 0.0
      %3044 = vmatprep.subr.mxu0 0.0
      %3045 = vmatpush1.msra.mxu0 0.0
      %3046 = vmatprep.subr.mxu0 0.0
      %3047 = vmatpush1.msra.mxu0 0.0
      %3048 = vmatprep.subr.mxu0 0.0
      %3049 = vmatpush1.msra.mxu0 0.0
      %3050 = vmatprep.subr.mxu0 0.0
      %3051 = vmatpush1.msra.mxu0 0.0
      %3052 = vmatprep.subr.mxu0 0.0
      %3053 = vmatpush1.msra.mxu0 0.0
      %3054 = vmatprep.subr.mxu0 0.0
      %3055 = vmatpush1.msra.mxu0 0.0
      %3056 = vmatprep.subr.mxu0 0.0
      %3057 = vmatpush1.msra.mxu0 0.0
      %3058 = vmatprep.subr.mxu0 0.0
      %3059 = vmatpush1.msra.mxu0 0.0
      %3060 = vmatprep.subr.mxu0 0.0
      %3061 = vmatpush1.msra.mxu0 0.0
      %3062 = vmatprep.subr.mxu0 0.0
      %3063 = vmatpush1.msra.mxu0 0.0
      %3064 = vmatprep.subr.mxu0 0.0
      %3065 = vmatpush1.msra.mxu0 0.0
      %3066 = vmatprep.subr.mxu0 0.0
      %3067 = vmatpush1.msra.mxu0 0.0
      %3068 = vmatprep.subr.mxu0 0.0
      %3069 = vmatpush1.msra.mxu0 0.0
      %3070 = vmatprep.subr.mxu0 0.0
      %3071 = vmatpush1.msra.mxu0 0.0
      %3072 = vmatprep.subr.mxu0 0.0
      %3073 = vmatpush1.msra.mxu0 0.0
      %3074 = vmatprep.subr.mxu0 0.0
      %3075 = vmatpush1.msra.mxu0 0.0
      %3076 = vmatprep.subr.mxu0 0.0
      %3077 = vmatpush1.msra.mxu0 0.0
      %3078 = vmatprep.subr.mxu0 0.0
      %3079 = vmatpush1.msra.mxu0 0.0
      %3080 = vmatprep.subr.mxu0 0.0
      %3081 = vmatpush1.msra.mxu0 0.0
      %3082 = vmatprep.subr.mxu0 0.0
      %3083 = vmatpush1.msra.mxu0 0.0
      %3084 = vmatprep.subr.mxu0 0.0
      %3085 = vmatpush1.msra.mxu0 0.0
      %3086 = vmatprep.subr.mxu0 0.0
      %3087 = vmatpush1.msra.mxu0 0.0
      %3088 = vmatprep.subr.mxu0 0.0
      %3089 = vmatpush1.msra.mxu0 0.0
      %3090 = vmatprep.mubr.f32.mxu0 0.0
      %3091 = vmatmul.mubr.f32.gmra.mrb[0].mxu0 %v2882
      %v3092 = vpop.f32.mrb[0].mxu0
      %v3093 = vadd.f32 0.0, %v3092
      %v3094 = vpop.f32.mrb[0].mxu0
      %3095 = vdwg.mxu0
      %v3096 = vsub.f32 %v1215, %v3023
      %v3097 = vsub.f32 %v1215, %v3093
      %v3099 = vsel %vm509, %v2664, 0
      %3101 = vmatprep.subr.mxu0 0.0
      %3102 = vmatpush1.msra.mxu0 %v3096
      %3103 = vmatprep.subr.mxu0 0.0
      %3104 = vmatpush1.msra.mxu0 0.0
      %3105 = vmatprep.subr.mxu0 0.0
      %3106 = vmatpush1.msra.mxu0 0.0
      %3107 = vmatprep.subr.mxu0 0.0
      %3108 = vmatpush1.msra.mxu0 0.0
      %3109 = vmatprep.subr.mxu0 0.0
      %3110 = vmatpush1.msra.mxu0 0.0
      %3111 = vmatprep.subr.mxu0 0.0
      %3112 = vmatpush1.msra.mxu0 0.0
      %3113 = vmatprep.subr.mxu0 0.0
      %3114 = vmatpush1.msra.mxu0 0.0
      %3115 = vmatprep.subr.mxu0 0.0
      %3116 = vmatpush1.msra.mxu0 0.0
      %3117 = vmatprep.subr.mxu0 0.0
      %3118 = vmatpush1.msra.mxu0 0.0
      %3119 = vmatprep.subr.mxu0 0.0
      %3120 = vmatpush1.msra.mxu0 0.0
      %3121 = vmatprep.subr.mxu0 0.0
      %3122 = vmatpush1.msra.mxu0 0.0
      %3123 = vmatprep.subr.mxu0 0.0
      %3124 = vmatpush1.msra.mxu0 0.0
      %3125 = vmatprep.subr.mxu0 0.0
      %3126 = vmatpush1.msra.mxu0 0.0
      %3127 = vmatprep.subr.mxu0 0.0
      %3128 = vmatpush1.msra.mxu0 0.0
      %3129 = vmatprep.subr.mxu0 0.0
      %3130 = vmatpush1.msra.mxu0 0.0
      %3131 = vmatprep.subr.mxu0 0.0
      %3132 = vmatpush1.msra.mxu0 0.0
      %3133 = vmatprep.subr.mxu0 0.0
      %3134 = vmatpush1.msra.mxu0 0.0
      %3135 = vmatprep.subr.mxu0 0.0
      %3136 = vmatpush1.msra.mxu0 0.0
      %3137 = vmatprep.subr.mxu0 0.0
      %3138 = vmatpush1.msra.mxu0 0.0
      %3139 = vmatprep.subr.mxu0 0.0
      %3140 = vmatpush1.msra.mxu0 0.0
      %3141 = vmatprep.subr.mxu0 0.0
      %3142 = vmatpush1.msra.mxu0 0.0
      %3143 = vmatprep.subr.mxu0 0.0
      %3144 = vmatpush1.msra.mxu0 0.0
      %3145 = vmatprep.subr.mxu0 0.0
      %3146 = vmatpush1.msra.mxu0 0.0
      %3147 = vmatprep.subr.mxu0 0.0
      %3148 = vmatpush1.msra.mxu0 0.0
      %3149 = vmatprep.subr.mxu0 0.0
      %3150 = vmatpush1.msra.mxu0 0.0
      %3151 = vmatprep.subr.mxu0 0.0
      %3152 = vmatpush1.msra.mxu0 0.0
      %3153 = vmatprep.subr.mxu0 0.0
      %3154 = vmatpush1.msra.mxu0 0.0
      %3155 = vmatprep.subr.mxu0 0.0
      %3156 = vmatpush1.msra.mxu0 0.0
      %3157 = vmatprep.subr.mxu0 0.0
      %3158 = vmatpush1.msra.mxu0 0.0
      %3159 = vmatprep.subr.mxu0 0.0
      %3160 = vmatpush1.msra.mxu0 0.0
      %3161 = vmatprep.subr.mxu0 0.0
      %3162 = vmatpush1.msra.mxu0 0.0
      %3163 = vmatprep.subr.mxu0 0.0
      %3164 = vmatpush1.msra.mxu0 0.0
      %3165 = vmatprep.mubr.f32.mxu0 0.0
      %3166 = vmatmul.mubr.f32.gmra.mrb[0].mxu0 %v3099
      %v3167 = vpop.f32.mrb[0].mxu0
      %v3168 = vadd.f32 0.0, %v3167
      %v3169 = vpop.f32.mrb[0].mxu0
      %3170 = vdwg.mxu0
      %v3172 = vsel %vm509, %v2665, 0
      %3174 = vmatprep.subr.mxu0 0.0
      %3175 = vmatpush1.msra.mxu0 %v3097
      %3176 = vmatprep.subr.mxu0 0.0
      %3177 = vmatpush1.msra.mxu0 0.0
      %3178 = vmatprep.subr.mxu0 0.0
      %3179 = vmatpush1.msra.mxu0 0.0
      %3180 = vmatprep.subr.mxu0 0.0
      %3181 = vmatpush1.msra.mxu0 0.0
      %3182 = vmatprep.subr.mxu0 0.0
      %3183 = vmatpush1.msra.mxu0 0.0
      %3184 = vmatprep.subr.mxu0 0.0
      %3185 = vmatpush1.msra.mxu0 0.0
      %3186 = vmatprep.subr.mxu0 0.0
      %3187 = vmatpush1.msra.mxu0 0.0
      %3188 = vmatprep.subr.mxu0 0.0
      %3189 = vmatpush1.msra.mxu0 0.0
      %3190 = vmatprep.subr.mxu0 0.0
      %3191 = vmatpush1.msra.mxu0 0.0
      %3192 = vmatprep.subr.mxu0 0.0
      %3193 = vmatpush1.msra.mxu0 0.0
      %3194 = vmatprep.subr.mxu0 0.0
      %3195 = vmatpush1.msra.mxu0 0.0
      %3196 = vmatprep.subr.mxu0 0.0
      %3197 = vmatpush1.msra.mxu0 0.0
      %3198 = vmatprep.subr.mxu0 0.0
      %3199 = vmatpush1.msra.mxu0 0.0
      %3200 = vmatprep.subr.mxu0 0.0
      %3201 = vmatpush1.msra.mxu0 0.0
      %3202 = vmatprep.subr.mxu0 0.0
      %3203 = vmatpush1.msra.mxu0 0.0
      %3204 = vmatprep.subr.mxu0 0.0
      %3205 = vmatpush1.msra.mxu0 0.0
      %3206 = vmatprep.subr.mxu0 0.0
      %3207 = vmatpush1.msra.mxu0 0.0
      %3208 = vmatprep.subr.mxu0 0.0
      %3209 = vmatpush1.msra.mxu0 0.0
      %3210 = vmatprep.subr.mxu0 0.0
      %3211 = vmatpush1.msra.mxu0 0.0
      %3212 = vmatprep.subr.mxu0 0.0
      %3213 = vmatpush1.msra.mxu0 0.0
      %3214 = vmatprep.subr.mxu0 0.0
      %3215 = vmatpush1.msra.mxu0 0.0
      %3216 = vmatprep.subr.mxu0 0.0
      %3217 = vmatpush1.msra.mxu0 0.0
      %3218 = vmatprep.subr.mxu0 0.0
      %3219 = vmatpush1.msra.mxu0 0.0
      %3220 = vmatprep.subr.mxu0 0.0
      %3221 = vmatpush1.msra.mxu0 0.0
      %3222 = vmatprep.subr.mxu0 0.0
      %3223 = vmatpush1.msra.mxu0 0.0
      %3224 = vmatprep.subr.mxu0 0.0
      %3225 = vmatpush1.msra.mxu0 0.0
      %3226 = vmatprep.subr.mxu0 0.0
      %3227 = vmatpush1.msra.mxu0 0.0
      %3228 = vmatprep.subr.mxu0 0.0
      %3229 = vmatpush1.msra.mxu0 0.0
      %3230 = vmatprep.subr.mxu0 0.0
      %3231 = vmatpush1.msra.mxu0 0.0
      %3232 = vmatprep.subr.mxu0 0.0
      %3233 = vmatpush1.msra.mxu0 0.0
      %3234 = vmatprep.subr.mxu0 0.0
      %3235 = vmatpush1.msra.mxu0 0.0
      %3236 = vmatprep.subr.mxu0 0.0
      %3237 = vmatpush1.msra.mxu0 0.0
      %3238 = vmatprep.mubr.f32.mxu0 0.0
      %3239 = vmatmul.mubr.f32.gmra.mrb[0].mxu0 %v3172
      %v3240 = vpop.f32.mrb[0].mxu0
      %v3241 = vadd.f32 0.0, %v3240
      %v3242 = vpop.f32.mrb[0].mxu0
      %3243 = vdwg.mxu0
      %v3244 = vmul.f32 %v3168, 0.25
      %v3245 = vmul.f32 %v3241, 0.25
      %3246 = vmatprep.subr.mxu0 0.0
      %3247 = vmatpush1.msra.mxu0 %v3244
      %3248 = vmatprep.subr.mxu0 0.0
      %3249 = vmatpush1.msra.mxu0 0.0
      %3250 = vmatprep.subr.mxu0 0.0
      %3251 = vmatpush1.msra.mxu0 0.0
      %3252 = vmatprep.subr.mxu0 0.0
      %3253 = vmatpush1.msra.mxu0 0.0
      %3254 = vmatprep.subr.mxu0 0.0
      %3255 = vmatpush1.msra.mxu0 0.0
      %3256 = vmatprep.subr.mxu0 0.0
      %3257 = vmatpush1.msra.mxu0 0.0
      %3258 = vmatprep.subr.mxu0 0.0
      %3259 = vmatpush1.msra.mxu0 0.0
      %3260 = vmatprep.subr.mxu0 0.0
      %3261 = vmatpush1.msra.mxu0 0.0
      %3262 = vmatprep.subr.mxu0 0.0
      %3263 = vmatpush1.msra.mxu0 0.0
      %3264 = vmatprep.subr.mxu0 0.0
      %3265 = vmatpush1.msra.mxu0 0.0
      %3266 = vmatprep.subr.mxu0 0.0
      %3267 = vmatpush1.msra.mxu0 0.0
      %3268 = vmatprep.subr.mxu0 0.0
      %3269 = vmatpush1.msra.mxu0 0.0
      %3270 = vmatprep.subr.mxu0 0.0
      %3271 = vmatpush1.msra.mxu0 0.0
      %3272 = vmatprep.subr.mxu0 0.0
      %3273 = vmatpush1.msra.mxu0 0.0
      %3274 = vmatprep.subr.mxu0 0.0
      %3275 = vmatpush1.msra.mxu0 0.0
      %3276 = vmatprep.subr.mxu0 0.0
      %3277 = vmatpush1.msra.mxu0 0.0
      %3278 = vmatprep.subr.mxu0 0.0
      %3279 = vmatpush1.msra.mxu0 0.0
      %3280 = vmatprep.subr.mxu0 0.0
      %3281 = vmatpush1.msra.mxu0 0.0
      %3282 = vmatprep.subr.mxu0 0.0
      %3283 = vmatpush1.msra.mxu0 0.0
      %3284 = vmatprep.subr.mxu0 0.0
      %3285 = vmatpush1.msra.mxu0 0.0
      %3286 = vmatprep.subr.mxu0 0.0
      %3287 = vmatpush1.msra.mxu0 0.0
      %3288 = vmatprep.subr.mxu0 0.0
      %3289 = vmatpush1.msra.mxu0 0.0
      %3290 = vmatprep.subr.mxu0 0.0
      %3291 = vmatpush1.msra.mxu0 0.0
      %3292 = vmatprep.subr.mxu0 0.0
      %3293 = vmatpush1.msra.mxu0 0.0
      %3294 = vmatprep.subr.mxu0 0.0
      %3295 = vmatpush1.msra.mxu0 0.0
      %3296 = vmatprep.subr.mxu0 0.0
      %3297 = vmatpush1.msra.mxu0 0.0
      %3298 = vmatprep.subr.mxu0 0.0
      %3299 = vmatpush1.msra.mxu0 0.0
      %3300 = vmatprep.subr.mxu0 0.0
      %3301 = vmatpush1.msra.mxu0 0.0
      %3302 = vmatprep.subr.mxu0 0.0
      %3303 = vmatpush1.msra.mxu0 0.0
      %3304 = vmatprep.subr.mxu0 0.0
      %3305 = vmatpush1.msra.mxu0 0.0
      %3306 = vmatprep.subr.mxu0 0.0
      %3307 = vmatpush1.msra.mxu0 0.0
      %3308 = vmatprep.subr.mxu0 0.0
      %3309 = vmatpush1.msra.mxu0 0.0
      %3310 = vmatprep.mubr.f32.mxu0 0.0
      %3311 = vmatmul.mubr.f32.gmra.mrb[0].mxu0 %v918
      %v3312 = vpop.f32.mrb[0].mxu0
      %v3313 = vadd.f32 0.0, %v3312
      %v3314 = vpop.f32.mrb[0].mxu0
      %3315 = vdwg.mxu0
      %3316 = vmatprep.subr.mxu0 0.0
      %3317 = vmatpush1.msra.mxu0 %v3245
      %3318 = vmatprep.subr.mxu0 0.0
      %3319 = vmatpush1.msra.mxu0 0.0
      %3320 = vmatprep.subr.mxu0 0.0
      %3321 = vmatpush1.msra.mxu0 0.0
      %3322 = vmatprep.subr.mxu0 0.0
      %3323 = vmatpush1.msra.mxu0 0.0
      %3324 = vmatprep.subr.mxu0 0.0
      %3325 = vmatpush1.msra.mxu0 0.0
      %3326 = vmatprep.subr.mxu0 0.0
      %3327 = vmatpush1.msra.mxu0 0.0
      %3328 = vmatprep.subr.mxu0 0.0
      %3329 = vmatpush1.msra.mxu0 0.0
      %3330 = vmatprep.subr.mxu0 0.0
      %3331 = vmatpush1.msra.mxu0 0.0
      %3332 = vmatprep.subr.mxu0 0.0
      %3333 = vmatpush1.msra.mxu0 0.0
      %3334 = vmatprep.subr.mxu0 0.0
      %3335 = vmatpush1.msra.mxu0 0.0
      %3336 = vmatprep.subr.mxu0 0.0
      %3337 = vmatpush1.msra.mxu0 0.0
      %3338 = vmatprep.subr.mxu0 0.0
      %3339 = vmatpush1.msra.mxu0 0.0
      %3340 = vmatprep.subr.mxu0 0.0
      %3341 = vmatpush1.msra.mxu0 0.0
      %3342 = vmatprep.subr.mxu0 0.0
      %3343 = vmatpush1.msra.mxu0 0.0
      %3344 = vmatprep.subr.mxu0 0.0
      %3345 = vmatpush1.msra.mxu0 0.0
      %3346 = vmatprep.subr.mxu0 0.0
      %3347 = vmatpush1.msra.mxu0 0.0
      %3348 = vmatprep.subr.mxu0 0.0
      %3349 = vmatpush1.msra.mxu0 0.0
      %3350 = vmatprep.subr.mxu0 0.0
      %3351 = vmatpush1.msra.mxu0 0.0
      %3352 = vmatprep.subr.mxu0 0.0
      %3353 = vmatpush1.msra.mxu0 0.0
      %3354 = vmatprep.subr.mxu0 0.0
      %3355 = vmatpush1.msra.mxu0 0.0
      %3356 = vmatprep.subr.mxu0 0.0
      %3357 = vmatpush1.msra.mxu0 0.0
      %3358 = vmatprep.subr.mxu0 0.0
      %3359 = vmatpush1.msra.mxu0 0.0
      %3360 = vmatprep.subr.mxu0 0.0
      %3361 = vmatpush1.msra.mxu0 0.0
      %3362 = vmatprep.subr.mxu0 0.0
      %3363 = vmatpush1.msra.mxu0 0.0
      %3364 = vmatprep.subr.mxu0 0.0
      %3365 = vmatpush1.msra.mxu0 0.0
      %3366 = vmatprep.subr.mxu0 0.0
      %3367 = vmatpush1.msra.mxu0 0.0
      %3368 = vmatprep.subr.mxu0 0.0
      %3369 = vmatpush1.msra.mxu0 0.0
      %3370 = vmatprep.subr.mxu0 0.0
      %3371 = vmatpush1.msra.mxu0 0.0
      %3372 = vmatprep.subr.mxu0 0.0
      %3373 = vmatpush1.msra.mxu0 0.0
      %3374 = vmatprep.subr.mxu0 0.0
      %3375 = vmatpush1.msra.mxu0 0.0
      %3376 = vmatprep.subr.mxu0 0.0
      %3377 = vmatpush1.msra.mxu0 0.0
      %3378 = vmatprep.subr.mxu0 0.0
      %3379 = vmatpush1.msra.mxu0 0.0
      %3380 = vmatprep.mubr.f32.mxu0 0.0
      %3381 = vmatmul.mubr.f32.gmra.mrb[0].mxu0 %v991
      %v3382 = vpop.f32.mrb[0].mxu0
      %v3383 = vadd.f32 0.0, %v3382
      %v3384 = vpop.f32.mrb[0].mxu0
      %3385 = vdwg.mxu0
      %v3386 = vsub.f32 %v1063, %v3313
      %v3387 = vsub.f32 %v1063, %v3383
      %v3389 = vsel %vm509, %v3313, 0
      %3391 = vmatprep.subr.mxu0 0.0
      %3392 = vmatpush1.msra.mxu0 %v3386
      %3393 = vmatprep.subr.mxu0 0.0
      %3394 = vmatpush1.msra.mxu0 0.0
      %3395 = vmatprep.subr.mxu0 0.0
      %3396 = vmatpush1.msra.mxu0 0.0
      %3397 = vmatprep.subr.mxu0 0.0
      %3398 = vmatpush1.msra.mxu0 0.0
      %3399 = vmatprep.subr.mxu0 0.0
      %3400 = vmatpush1.msra.mxu0 0.0
      %3401 = vmatprep.subr.mxu0 0.0
      %3402 = vmatpush1.msra.mxu0 0.0
      %3403 = vmatprep.subr.mxu0 0.0
      %3404 = vmatpush1.msra.mxu0 0.0
      %3405 = vmatprep.subr.mxu0 0.0
      %3406 = vmatpush1.msra.mxu0 0.0
      %3407 = vmatprep.subr.mxu0 0.0
      %3408 = vmatpush1.msra.mxu0 0.0
      %3409 = vmatprep.subr.mxu0 0.0
      %3410 = vmatpush1.msra.mxu0 0.0
      %3411 = vmatprep.subr.mxu0 0.0
      %3412 = vmatpush1.msra.mxu0 0.0
      %3413 = vmatprep.subr.mxu0 0.0
      %3414 = vmatpush1.msra.mxu0 0.0
      %3415 = vmatprep.subr.mxu0 0.0
      %3416 = vmatpush1.msra.mxu0 0.0
      %3417 = vmatprep.subr.mxu0 0.0
      %3418 = vmatpush1.msra.mxu0 0.0
      %3419 = vmatprep.subr.mxu0 0.0
      %3420 = vmatpush1.msra.mxu0 0.0
      %3421 = vmatprep.subr.mxu0 0.0
      %3422 = vmatpush1.msra.mxu0 0.0
      %3423 = vmatprep.subr.mxu0 0.0
      %3424 = vmatpush1.msra.mxu0 0.0
      %3425 = vmatprep.subr.mxu0 0.0
      %3426 = vmatpush1.msra.mxu0 0.0
      %3427 = vmatprep.subr.mxu0 0.0
      %3428 = vmatpush1.msra.mxu0 0.0
      %3429 = vmatprep.subr.mxu0 0.0
      %3430 = vmatpush1.msra.mxu0 0.0
      %3431 = vmatprep.subr.mxu0 0.0
      %3432 = vmatpush1.msra.mxu0 0.0
      %3433 = vmatprep.subr.mxu0 0.0
      %3434 = vmatpush1.msra.mxu0 0.0
      %3435 = vmatprep.subr.mxu0 0.0
      %3436 = vmatpush1.msra.mxu0 0.0
      %3437 = vmatprep.subr.mxu0 0.0
      %3438 = vmatpush1.msra.mxu0 0.0
      %3439 = vmatprep.subr.mxu0 0.0
      %3440 = vmatpush1.msra.mxu0 0.0
      %3441 = vmatprep.subr.mxu0 0.0
      %3442 = vmatpush1.msra.mxu0 0.0
      %3443 = vmatprep.subr.mxu0 0.0
      %3444 = vmatpush1.msra.mxu0 0.0
      %3445 = vmatprep.subr.mxu0 0.0
      %3446 = vmatpush1.msra.mxu0 0.0
      %3447 = vmatprep.subr.mxu0 0.0
      %3448 = vmatpush1.msra.mxu0 0.0
      %3449 = vmatprep.subr.mxu0 0.0
      %3450 = vmatpush1.msra.mxu0 0.0
      %3451 = vmatprep.subr.mxu0 0.0
      %3452 = vmatpush1.msra.mxu0 0.0
      %3453 = vmatprep.subr.mxu0 0.0
      %3454 = vmatpush1.msra.mxu0 0.0
      %3455 = vmatprep.mubr.f32.mxu0 0.0
      %3456 = vmatmul.mubr.f32.gmra.mrb[0].mxu0 %v3389
      %v3457 = vpop.f32.mrb[0].mxu0
      %v3458 = vadd.f32 0.0, %v3457
      %v3459 = vpop.f32.mrb[0].mxu0
      %3460 = vdwg.mxu0
      %v3462 = vsel %vm509, %v3383, 0
      %3464 = vmatprep.subr.mxu0 0.0
      %3465 = vmatpush1.msra.mxu0 %v3387
      %3466 = vmatprep.subr.mxu0 0.0
      %3467 = vmatpush1.msra.mxu0 0.0
      %3468 = vmatprep.subr.mxu0 0.0
      %3469 = vmatpush1.msra.mxu0 0.0
      %3470 = vmatprep.subr.mxu0 0.0
      %3471 = vmatpush1.msra.mxu0 0.0
      %3472 = vmatprep.subr.mxu0 0.0
      %3473 = vmatpush1.msra.mxu0 0.0
      %3474 = vmatprep.subr.mxu0 0.0
      %3475 = vmatpush1.msra.mxu0 0.0
      %3476 = vmatprep.subr.mxu0 0.0
      %3477 = vmatpush1.msra.mxu0 0.0
      %3478 = vmatprep.subr.mxu0 0.0
      %3479 = vmatpush1.msra.mxu0 0.0
      %3480 = vmatprep.subr.mxu0 0.0
      %3481 = vmatpush1.msra.mxu0 0.0
      %3482 = vmatprep.subr.mxu0 0.0
      %3483 = vmatpush1.msra.mxu0 0.0
      %3484 = vmatprep.subr.mxu0 0.0
      %3485 = vmatpush1.msra.mxu0 0.0
      %3486 = vmatprep.subr.mxu0 0.0
      %3487 = vmatpush1.msra.mxu0 0.0
      %3488 = vmatprep.subr.mxu0 0.0
      %3489 = vmatpush1.msra.mxu0 0.0
      %3490 = vmatprep.subr.mxu0 0.0
      %3491 = vmatpush1.msra.mxu0 0.0
      %3492 = vmatprep.subr.mxu0 0.0
      %3493 = vmatpush1.msra.mxu0 0.0
      %3494 = vmatprep.subr.mxu0 0.0
      %3495 = vmatpush1.msra.mxu0 0.0
      %3496 = vmatprep.subr.mxu0 0.0
      %3497 = vmatpush1.msra.mxu0 0.0
      %3498 = vmatprep.subr.mxu0 0.0
      %3499 = vmatpush1.msra.mxu0 0.0
      %3500 = vmatprep.subr.mxu0 0.0
      %3501 = vmatpush1.msra.mxu0 0.0
      %3502 = vmatprep.subr.mxu0 0.0
      %3503 = vmatpush1.msra.mxu0 0.0
      %3504 = vmatprep.subr.mxu0 0.0
      %3505 = vmatpush1.msra.mxu0 0.0
      %3506 = vmatprep.subr.mxu0 0.0
      %3507 = vmatpush1.msra.mxu0 0.0
      %3508 = vmatprep.subr.mxu0 0.0
      %3509 = vmatpush1.msra.mxu0 0.0
      %3510 = vmatprep.subr.mxu0 0.0
      %3511 = vmatpush1.msra.mxu0 0.0
      %3512 = vmatprep.subr.mxu0 0.0
      %3513 = vmatpush1.msra.mxu0 0.0
      %3514 = vmatprep.subr.mxu0 0.0
      %3515 = vmatpush1.msra.mxu0 0.0
      %3516 = vmatprep.subr.mxu0 0.0
      %3517 = vmatpush1.msra.mxu0 0.0
      %3518 = vmatprep.subr.mxu0 0.0
      %3519 = vmatpush1.msra.mxu0 0.0
      %3520 = vmatprep.subr.mxu0 0.0
      %3521 = vmatpush1.msra.mxu0 0.0
      %3522 = vmatprep.subr.mxu0 0.0
      %3523 = vmatpush1.msra.mxu0 0.0
      %3524 = vmatprep.subr.mxu0 0.0
      %3525 = vmatpush1.msra.mxu0 0.0
      %3526 = vmatprep.subr.mxu0 0.0
      %3527 = vmatpush1.msra.mxu0 0.0
      %3528 = vmatprep.mubr.f32.mxu0 0.0
      %3529 = vmatmul.mubr.f32.gmra.mrb[0].mxu0 %v3462
      %v3530 = vpop.f32.mrb[0].mxu0
      %v3531 = vadd.f32 0.0, %v3530
      %v3532 = vpop.f32.mrb[0].mxu0
      %3533 = vdwg.mxu0
      %v3534 = vsub.f32 %v1066, %v3458
      %v3535 = vsub.f32 %v1066, %v3531
      %3536 = vmatprep.subr.mxu0 0.0
      %3537 = vmatpush1.msra.mxu0 %v3534
      %3538 = vmatprep.subr.mxu0 0.0
      %3539 = vmatpush1.msra.mxu0 0.0
      %3540 = vmatprep.subr.mxu0 0.0
      %3541 = vmatpush1.msra.mxu0 0.0
      %3542 = vmatprep.subr.mxu0 0.0
      %3543 = vmatpush1.msra.mxu0 0.0
      %3544 = vmatprep.subr.mxu0 0.0
      %3545 = vmatpush1.msra.mxu0 0.0
      %3546 = vmatprep.subr.mxu0 0.0
      %3547 = vmatpush1.msra.mxu0 0.0
      %3548 = vmatprep.subr.mxu0 0.0
      %3549 = vmatpush1.msra.mxu0 0.0
      %3550 = vmatprep.subr.mxu0 0.0
      %3551 = vmatpush1.msra.mxu0 0.0
      %3552 = vmatprep.subr.mxu0 0.0
      %3553 = vmatpush1.msra.mxu0 0.0
      %3554 = vmatprep.subr.mxu0 0.0
      %3555 = vmatpush1.msra.mxu0 0.0
      %3556 = vmatprep.subr.mxu0 0.0
      %3557 = vmatpush1.msra.mxu0 0.0
      %3558 = vmatprep.subr.mxu0 0.0
      %3559 = vmatpush1.msra.mxu0 0.0
      %3560 = vmatprep.subr.mxu0 0.0
      %3561 = vmatpush1.msra.mxu0 0.0
      %3562 = vmatprep.subr.mxu0 0.0
      %3563 = vmatpush1.msra.mxu0 0.0
      %3564 = vmatprep.subr.mxu0 0.0
      %3565 = vmatpush1.msra.mxu0 0.0
      %3566 = vmatprep.subr.mxu0 0.0
      %3567 = vmatpush1.msra.mxu0 0.0
      %3568 = vmatprep.subr.mxu0 0.0
      %3569 = vmatpush1.msra.mxu0 0.0
      %3570 = vmatprep.subr.mxu0 0.0
      %3571 = vmatpush1.msra.mxu0 0.0
      %3572 = vmatprep.subr.mxu0 0.0
      %3573 = vmatpush1.msra.mxu0 0.0
      %3574 = vmatprep.subr.mxu0 0.0
      %3575 = vmatpush1.msra.mxu0 0.0
      %3576 = vmatprep.subr.mxu0 0.0
      %3577 = vmatpush1.msra.mxu0 0.0
      %3578 = vmatprep.subr.mxu0 0.0
      %3579 = vmatpush1.msra.mxu0 0.0
      %3580 = vmatprep.subr.mxu0 0.0
      %3581 = vmatpush1.msra.mxu0 0.0
      %3582 = vmatprep.subr.mxu0 0.0
      %3583 = vmatpush1.msra.mxu0 0.0
      %3584 = vmatprep.subr.mxu0 0.0
      %3585 = vmatpush1.msra.mxu0 0.0
      %3586 = vmatprep.subr.mxu0 0.0
      %3587 = vmatpush1.msra.mxu0 0.0
      %3588 = vmatprep.subr.mxu0 0.0
      %3589 = vmatpush1.msra.mxu0 0.0
      %3590 = vmatprep.subr.mxu0 0.0
      %3591 = vmatpush1.msra.mxu0 0.0
      %3592 = vmatprep.subr.mxu0 0.0
      %3593 = vmatpush1.msra.mxu0 0.0
      %3594 = vmatprep.subr.mxu0 0.0
      %3595 = vmatpush1.msra.mxu0 0.0
      %3596 = vmatprep.subr.mxu0 0.0
      %3597 = vmatpush1.msra.mxu0 0.0
      %3598 = vmatprep.subr.mxu0 0.0
      %3599 = vmatpush1.msra.mxu0 0.0
      %3600 = vmatprep.mubr.f32.mxu0 0.0
      %3601 = vmatmul.mubr.f32.gmra.mrb[0].mxu0 %v3389
      %v3602 = vpop.f32.mrb[0].mxu0
      %v3603 = vadd.f32 0.0, %v3602
      %v3604 = vpop.f32.mrb[0].mxu0
      %3605 = vdwg.mxu0
      %3606 = vmatprep.subr.mxu0 0.0
      %3607 = vmatpush1.msra.mxu0 %v3535
      %3608 = vmatprep.subr.mxu0 0.0
      %3609 = vmatpush1.msra.mxu0 0.0
      %3610 = vmatprep.subr.mxu0 0.0
      %3611 = vmatpush1.msra.mxu0 0.0
      %3612 = vmatprep.subr.mxu0 0.0
      %3613 = vmatpush1.msra.mxu0 0.0
      %3614 = vmatprep.subr.mxu0 0.0
      %3615 = vmatpush1.msra.mxu0 0.0
      %3616 = vmatprep.subr.mxu0 0.0
      %3617 = vmatpush1.msra.mxu0 0.0
      %3618 = vmatprep.subr.mxu0 0.0
      %3619 = vmatpush1.msra.mxu0 0.0
      %3620 = vmatprep.subr.mxu0 0.0
      %3621 = vmatpush1.msra.mxu0 0.0
      %3622 = vmatprep.subr.mxu0 0.0
      %3623 = vmatpush1.msra.mxu0 0.0
      %3624 = vmatprep.subr.mxu0 0.0
      %3625 = vmatpush1.msra.mxu0 0.0
      %3626 = vmatprep.subr.mxu0 0.0
      %3627 = vmatpush1.msra.mxu0 0.0
      %3628 = vmatprep.subr.mxu0 0.0
      %3629 = vmatpush1.msra.mxu0 0.0
      %3630 = vmatprep.subr.mxu0 0.0
      %3631 = vmatpush1.msra.mxu0 0.0
      %3632 = vmatprep.subr.mxu0 0.0
      %3633 = vmatpush1.msra.mxu0 0.0
      %3634 = vmatprep.subr.mxu0 0.0
      %3635 = vmatpush1.msra.mxu0 0.0
      %3636 = vmatprep.subr.mxu0 0.0
      %3637 = vmatpush1.msra.mxu0 0.0
      %3638 = vmatprep.subr.mxu0 0.0
      %3639 = vmatpush1.msra.mxu0 0.0
      %3640 = vmatprep.subr.mxu0 0.0
      %3641 = vmatpush1.msra.mxu0 0.0
      %3642 = vmatprep.subr.mxu0 0.0
      %3643 = vmatpush1.msra.mxu0 0.0
      %3644 = vmatprep.subr.mxu0 0.0
      %3645 = vmatpush1.msra.mxu0 0.0
      %3646 = vmatprep.subr.mxu0 0.0
      %3647 = vmatpush1.msra.mxu0 0.0
      %3648 = vmatprep.subr.mxu0 0.0
      %3649 = vmatpush1.msra.mxu0 0.0
      %3650 = vmatprep.subr.mxu0 0.0
      %3651 = vmatpush1.msra.mxu0 0.0
      %3652 = vmatprep.subr.mxu0 0.0
      %3653 = vmatpush1.msra.mxu0 0.0
      %3654 = vmatprep.subr.mxu0 0.0
      %3655 = vmatpush1.msra.mxu0 0.0
      %3656 = vmatprep.subr.mxu0 0.0
      %3657 = vmatpush1.msra.mxu0 0.0
      %3658 = vmatprep.subr.mxu0 0.0
      %3659 = vmatpush1.msra.mxu0 0.0
      %3660 = vmatprep.subr.mxu0 0.0
      %3661 = vmatpush1.msra.mxu0 0.0
      %3662 = vmatprep.subr.mxu0 0.0
      %3663 = vmatpush1.msra.mxu0 0.0
      %3664 = vmatprep.subr.mxu0 0.0
      %3665 = vmatpush1.msra.mxu0 0.0
      %3666 = vmatprep.subr.mxu0 0.0
      %3667 = vmatpush1.msra.mxu0 0.0
      %3668 = vmatprep.subr.mxu0 0.0
      %3669 = vmatpush1.msra.mxu0 0.0
      %3670 = vmatprep.mubr.f32.mxu0 0.0
      %3671 = vmatmul.mubr.f32.gmra.mrb[0].mxu0 %v3462
      %v3672 = vpop.f32.mrb[0].mxu0
      %v3673 = vadd.f32 0.0, %v3672
      %v3674 = vpop.f32.mrb[0].mxu0
      %3675 = vdwg.mxu0
      %v3676 = vsub.f32 %v1215, %v3603
      %v3677 = vsub.f32 %v1215, %v3673
      %v3679 = vsel %vm509, %v3244, 0
      %3681 = vmatprep.subr.mxu0 0.0
      %3682 = vmatpush1.msra.mxu0 %v3676
      %3683 = vmatprep.subr.mxu0 0.0
      %3684 = vmatpush1.msra.mxu0 0.0
      %3685 = vmatprep.subr.mxu0 0.0
      %3686 = vmatpush1.msra.mxu0 0.0
      %3687 = vmatprep.subr.mxu0 0.0
      %3688 = vmatpush1.msra.mxu0 0.0
      %3689 = vmatprep.subr.mxu0 0.0
      %3690 = vmatpush1.msra.mxu0 0.0
      %3691 = vmatprep.subr.mxu0 0.0
      %3692 = vmatpush1.msra.mxu0 0.0
      %3693 = vmatprep.subr.mxu0 0.0
      %3694 = vmatpush1.msra.mxu0 0.0
      %3695 = vmatprep.subr.mxu0 0.0
      %3696 = vmatpush1.msra.mxu0 0.0
      %3697 = vmatprep.subr.mxu0 0.0
      %3698 = vmatpush1.msra.mxu0 0.0
      %3699 = vmatprep.subr.mxu0 0.0
      %3700 = vmatpush1.msra.mxu0 0.0
      %3701 = vmatprep.subr.mxu0 0.0
      %3702 = vmatpush1.msra.mxu0 0.0
      %3703 = vmatprep.subr.mxu0 0.0
      %3704 = vmatpush1.msra.mxu0 0.0
      %3705 = vmatprep.subr.mxu0 0.0
      %3706 = vmatpush1.msra.mxu0 0.0
      %3707 = vmatprep.subr.mxu0 0.0
      %3708 = vmatpush1.msra.mxu0 0.0
      %3709 = vmatprep.subr.mxu0 0.0
      %3710 = vmatpush1.msra.mxu0 0.0
      %3711 = vmatprep.subr.mxu0 0.0
      %3712 = vmatpush1.msra.mxu0 0.0
      %3713 = vmatprep.subr.mxu0 0.0
      %3714 = vmatpush1.msra.mxu0 0.0
      %3715 = vmatprep.subr.mxu0 0.0
      %3716 = vmatpush1.msra.mxu0 0.0
      %3717 = vmatprep.subr.mxu0 0.0
      %3718 = vmatpush1.msra.mxu0 0.0
      %3719 = vmatprep.subr.mxu0 0.0
      %3720 = vmatpush1.msra.mxu0 0.0
      %3721 = vmatprep.subr.mxu0 0.0
      %3722 = vmatpush1.msra.mxu0 0.0
      %3723 = vmatprep.subr.mxu0 0.0
      %3724 = vmatpush1.msra.mxu0 0.0
      %3725 = vmatprep.subr.mxu0 0.0
      %3726 = vmatpush1.msra.mxu0 0.0
      %3727 = vmatprep.subr.mxu0 0.0
      %3728 = vmatpush1.msra.mxu0 0.0
      %3729 = vmatprep.subr.mxu0 0.0
      %3730 = vmatpush1.msra.mxu0 0.0
      %3731 = vmatprep.subr.mxu0 0.0
      %3732 = vmatpush1.msra.mxu0 0.0
      %3733 = vmatprep.subr.mxu0 0.0
      %3734 = vmatpush1.msra.mxu0 0.0
      %3735 = vmatprep.subr.mxu0 0.0
      %3736 = vmatpush1.msra.mxu0 0.0
      %3737 = vmatprep.subr.mxu0 0.0
      %3738 = vmatpush1.msra.mxu0 0.0
      %3739 = vmatprep.subr.mxu0 0.0
      %3740 = vmatpush1.msra.mxu0 0.0
      %3741 = vmatprep.subr.mxu0 0.0
      %3742 = vmatpush1.msra.mxu0 0.0
      %3743 = vmatprep.subr.mxu0 0.0
      %3744 = vmatpush1.msra.mxu0 0.0
      %3745 = vmatprep.mubr.f32.mxu0 0.0
      %3746 = vmatmul.mubr.f32.gmra.mrb[0].mxu0 %v3679
      %v3747 = vpop.f32.mrb[0].mxu0
      %v3748 = vadd.f32 0.0, %v3747
      %v3749 = vpop.f32.mrb[0].mxu0
      %3750 = vdwg.mxu0
      %v3752 = vsel %vm509, %v3245, 0
      %3754 = vmatprep.subr.mxu0 0.0
      %3755 = vmatpush1.msra.mxu0 %v3677
      %3756 = vmatprep.subr.mxu0 0.0
      %3757 = vmatpush1.msra.mxu0 0.0
      %3758 = vmatprep.subr.mxu0 0.0
      %3759 = vmatpush1.msra.mxu0 0.0
      %3760 = vmatprep.subr.mxu0 0.0
      %3761 = vmatpush1.msra.mxu0 0.0
      %3762 = vmatprep.subr.mxu0 0.0
      %3763 = vmatpush1.msra.mxu0 0.0
      %3764 = vmatprep.subr.mxu0 0.0
      %3765 = vmatpush1.msra.mxu0 0.0
      %3766 = vmatprep.subr.mxu0 0.0
      %3767 = vmatpush1.msra.mxu0 0.0
      %3768 = vmatprep.subr.mxu0 0.0
      %3769 = vmatpush1.msra.mxu0 0.0
      %3770 = vmatprep.subr.mxu0 0.0
      %3771 = vmatpush1.msra.mxu0 0.0
      %3772 = vmatprep.subr.mxu0 0.0
      %3773 = vmatpush1.msra.mxu0 0.0
      %3774 = vmatprep.subr.mxu0 0.0
      %3775 = vmatpush1.msra.mxu0 0.0
      %3776 = vmatprep.subr.mxu0 0.0
      %3777 = vmatpush1.msra.mxu0 0.0
      %3778 = vmatprep.subr.mxu0 0.0
      %3779 = vmatpush1.msra.mxu0 0.0
      %3780 = vmatprep.subr.mxu0 0.0
      %3781 = vmatpush1.msra.mxu0 0.0
      %3782 = vmatprep.subr.mxu0 0.0
      %3783 = vmatpush1.msra.mxu0 0.0
      %3784 = vmatprep.subr.mxu0 0.0
      %3785 = vmatpush1.msra.mxu0 0.0
      %3786 = vmatprep.subr.mxu0 0.0
      %3787 = vmatpush1.msra.mxu0 0.0
      %3788 = vmatprep.subr.mxu0 0.0
      %3789 = vmatpush1.msra.mxu0 0.0
      %3790 = vmatprep.subr.mxu0 0.0
      %3791 = vmatpush1.msra.mxu0 0.0
      %3792 = vmatprep.subr.mxu0 0.0
      %3793 = vmatpush1.msra.mxu0 0.0
      %3794 = vmatprep.subr.mxu0 0.0
      %3795 = vmatpush1.msra.mxu0 0.0
      %3796 = vmatprep.subr.mxu0 0.0
      %3797 = vmatpush1.msra.mxu0 0.0
      %3798 = vmatprep.subr.mxu0 0.0
      %3799 = vmatpush1.msra.mxu0 0.0
      %3800 = vmatprep.subr.mxu0 0.0
      %3801 = vmatpush1.msra.mxu0 0.0
      %3802 = vmatprep.subr.mxu0 0.0
      %3803 = vmatpush1.msra.mxu0 0.0
      %3804 = vmatprep.subr.mxu0 0.0
      %3805 = vmatpush1.msra.mxu0 0.0
      %3806 = vmatprep.subr.mxu0 0.0
      %3807 = vmatpush1.msra.mxu0 0.0
      %3808 = vmatprep.subr.mxu0 0.0
      %3809 = vmatpush1.msra.mxu0 0.0
      %3810 = vmatprep.subr.mxu0 0.0
      %3811 = vmatpush1.msra.mxu0 0.0
      %3812 = vmatprep.subr.mxu0 0.0
      %3813 = vmatpush1.msra.mxu0 0.0
      %3814 = vmatprep.subr.mxu0 0.0
      %3815 = vmatpush1.msra.mxu0 0.0
      %3816 = vmatprep.subr.mxu0 0.0
      %3817 = vmatpush1.msra.mxu0 0.0
      %3818 = vmatprep.mubr.f32.mxu0 0.0
      %3819 = vmatmul.mubr.f32.gmra.mrb[0].mxu0 %v3752
      %v3820 = vpop.f32.mrb[0].mxu0
      %v3821 = vadd.f32 0.0, %v3820
      %v3822 = vpop.f32.mrb[0].mxu0
      %3823 = vdwg.mxu0
      %v3824 = vmul.f32 %v3748, 0.25
      %v3825 = vmul.f32 %v3821, 0.25
      %3826 = vmatprep.subr.mxu0 0.0
      %3827 = vmatpush1.msra.mxu0 %v3824
      %3828 = vmatprep.subr.mxu0 0.0
      %3829 = vmatpush1.msra.mxu0 0.0
      %3830 = vmatprep.subr.mxu0 0.0
      %3831 = vmatpush1.msra.mxu0 0.0
      %3832 = vmatprep.subr.mxu0 0.0
      %3833 = vmatpush1.msra.mxu0 0.0
      %3834 = vmatprep.subr.mxu0 0.0
      %3835 = vmatpush1.msra.mxu0 0.0
      %3836 = vmatprep.subr.mxu0 0.0
      %3837 = vmatpush1.msra.mxu0 0.0
      %3838 = vmatprep.subr.mxu0 0.0
      %3839 = vmatpush1.msra.mxu0 0.0
      %3840 = vmatprep.subr.mxu0 0.0
      %3841 = vmatpush1.msra.mxu0 0.0
      %3842 = vmatprep.subr.mxu0 0.0
      %3843 = vmatpush1.msra.mxu0 0.0
      %3844 = vmatprep.subr.mxu0 0.0
      %3845 = vmatpush1.msra.mxu0 0.0
      %3846 = vmatprep.subr.mxu0 0.0
      %3847 = vmatpush1.msra.mxu0 0.0
      %3848 = vmatprep.subr.mxu0 0.0
      %3849 = vmatpush1.msra.mxu0 0.0
      %3850 = vmatprep.subr.mxu0 0.0
      %3851 = vmatpush1.msra.mxu0 0.0
      %3852 = vmatprep.subr.mxu0 0.0
      %3853 = vmatpush1.msra.mxu0 0.0
      %3854 = vmatprep.subr.mxu0 0.0
      %3855 = vmatpush1.msra.mxu0 0.0
      %3856 = vmatprep.subr.mxu0 0.0
      %3857 = vmatpush1.msra.mxu0 0.0
      %3858 = vmatprep.subr.mxu0 0.0
      %3859 = vmatpush1.msra.mxu0 0.0
      %3860 = vmatprep.subr.mxu0 0.0
      %3861 = vmatpush1.msra.mxu0 0.0
      %3862 = vmatprep.subr.mxu0 0.0
      %3863 = vmatpush1.msra.mxu0 0.0
      %3864 = vmatprep.subr.mxu0 0.0
      %3865 = vmatpush1.msra.mxu0 0.0
      %3866 = vmatprep.subr.mxu0 0.0
      %3867 = vmatpush1.msra.mxu0 0.0
      %3868 = vmatprep.subr.mxu0 0.0
      %3869 = vmatpush1.msra.mxu0 0.0
      %3870 = vmatprep.subr.mxu0 0.0
      %3871 = vmatpush1.msra.mxu0 0.0
      %3872 = vmatprep.subr.mxu0 0.0
      %3873 = vmatpush1.msra.mxu0 0.0
      %3874 = vmatprep.subr.mxu0 0.0
      %3875 = vmatpush1.msra.mxu0 0.0
      %3876 = vmatprep.subr.mxu0 0.0
      %3877 = vmatpush1.msra.mxu0 0.0
      %3878 = vmatprep.subr.mxu0 0.0
      %3879 = vmatpush1.msra.mxu0 0.0
      %3880 = vmatprep.subr.mxu0 0.0
      %3881 = vmatpush1.msra.mxu0 0.0
      %3882 = vmatprep.subr.mxu0 0.0
      %3883 = vmatpush1.msra.mxu0 0.0
      %3884 = vmatprep.subr.mxu0 0.0
      %3885 = vmatpush1.msra.mxu0 0.0
      %3886 = vmatprep.subr.mxu0 0.0
      %3887 = vmatpush1.msra.mxu0 0.0
      %3888 = vmatprep.subr.mxu0 0.0
      %3889 = vmatpush1.msra.mxu0 0.0
      %3890 = vmatprep.mubr.f32.mxu0 0.0
      %3891 = vmatmul.mubr.f32.gmra.mrb[0].mxu0 %v918
      %v3892 = vpop.f32.mrb[0].mxu0
      %v3893 = vadd.f32 0.0, %v3892
      %v3894 = vpop.f32.mrb[0].mxu0
      %3895 = vdwg.mxu0
      %3896 = vmatprep.subr.mxu0 0.0
      %3897 = vmatpush1.msra.mxu0 %v3825
      %3898 = vmatprep.subr.mxu0 0.0
      %3899 = vmatpush1.msra.mxu0 0.0
      %3900 = vmatprep.subr.mxu0 0.0
      %3901 = vmatpush1.msra.mxu0 0.0
      %3902 = vmatprep.subr.mxu0 0.0
      %3903 = vmatpush1.msra.mxu0 0.0
      %3904 = vmatprep.subr.mxu0 0.0
      %3905 = vmatpush1.msra.mxu0 0.0
      %3906 = vmatprep.subr.mxu0 0.0
      %3907 = vmatpush1.msra.mxu0 0.0
      %3908 = vmatprep.subr.mxu0 0.0
      %3909 = vmatpush1.msra.mxu0 0.0
      %3910 = vmatprep.subr.mxu0 0.0
      %3911 = vmatpush1.msra.mxu0 0.0
      %3912 = vmatprep.subr.mxu0 0.0
      %3913 = vmatpush1.msra.mxu0 0.0
      %3914 = vmatprep.subr.mxu0 0.0
      %3915 = vmatpush1.msra.mxu0 0.0
      %3916 = vmatprep.subr.mxu0 0.0
      %3917 = vmatpush1.msra.mxu0 0.0
      %3918 = vmatprep.subr.mxu0 0.0
      %3919 = vmatpush1.msra.mxu0 0.0
      %3920 = vmatprep.subr.mxu0 0.0
      %3921 = vmatpush1.msra.mxu0 0.0
      %3922 = vmatprep.subr.mxu0 0.0
      %3923 = vmatpush1.msra.mxu0 0.0
      %3924 = vmatprep.subr.mxu0 0.0
      %3925 = vmatpush1.msra.mxu0 0.0
      %3926 = vmatprep.subr.mxu0 0.0
      %3927 = vmatpush1.msra.mxu0 0.0
      %3928 = vmatprep.subr.mxu0 0.0
      %3929 = vmatpush1.msra.mxu0 0.0
      %3930 = vmatprep.subr.mxu0 0.0
      %3931 = vmatpush1.msra.mxu0 0.0
      %3932 = vmatprep.subr.mxu0 0.0
      %3933 = vmatpush1.msra.mxu0 0.0
      %3934 = vmatprep.subr.mxu0 0.0
      %3935 = vmatpush1.msra.mxu0 0.0
      %3936 = vmatprep.subr.mxu0 0.0
      %3937 = vmatpush1.msra.mxu0 0.0
      %3938 = vmatprep.subr.mxu0 0.0
      %3939 = vmatpush1.msra.mxu0 0.0
      %3940 = vmatprep.subr.mxu0 0.0
      %3941 = vmatpush1.msra.mxu0 0.0
      %3942 = vmatprep.subr.mxu0 0.0
      %3943 = vmatpush1.msra.mxu0 0.0
      %3944 = vmatprep.subr.mxu0 0.0
      %3945 = vmatpush1.msra.mxu0 0.0
      %3946 = vmatprep.subr.mxu0 0.0
      %3947 = vmatpush1.msra.mxu0 0.0
      %3948 = vmatprep.subr.mxu0 0.0
      %3949 = vmatpush1.msra.mxu0 0.0
      %3950 = vmatprep.subr.mxu0 0.0
      %3951 = vmatpush1.msra.mxu0 0.0
      %3952 = vmatprep.subr.mxu0 0.0
      %3953 = vmatpush1.msra.mxu0 0.0
      %3954 = vmatprep.subr.mxu0 0.0
      %3955 = vmatpush1.msra.mxu0 0.0
      %3956 = vmatprep.subr.mxu0 0.0
      %3957 = vmatpush1.msra.mxu0 0.0
      %3958 = vmatprep.subr.mxu0 0.0
      %3959 = vmatpush1.msra.mxu0 0.0
      %3960 = vmatprep.mubr.f32.mxu0 0.0
      %3961 = vmatmul.mubr.f32.gmra.mrb[0].mxu0 %v991
      %v3962 = vpop.f32.mrb[0].mxu0
      %v3963 = vadd.f32 0.0, %v3962
      %v3964 = vpop.f32.mrb[0].mxu0
      %3965 = vdwg.mxu0
      %v3966 = vsub.f32 %v1063, %v3893
      %v3967 = vsub.f32 %v1063, %v3963
      %v3969 = vsel %vm509, %v3893, 0
      %3971 = vmatprep.subr.mxu0 0.0
      %3972 = vmatpush1.msra.mxu0 %v3966
      %3973 = vmatprep.subr.mxu0 0.0
      %3974 = vmatpush1.msra.mxu0 0.0
      %3975 = vmatprep.subr.mxu0 0.0
      %3976 = vmatpush1.msra.mxu0 0.0
      %3977 = vmatprep.subr.mxu0 0.0
      %3978 = vmatpush1.msra.mxu0 0.0
      %3979 = vmatprep.subr.mxu0 0.0
      %3980 = vmatpush1.msra.mxu0 0.0
      %3981 = vmatprep.subr.mxu0 0.0
      %3982 = vmatpush1.msra.mxu0 0.0
      %3983 = vmatprep.subr.mxu0 0.0
      %3984 = vmatpush1.msra.mxu0 0.0
      %3985 = vmatprep.subr.mxu0 0.0
      %3986 = vmatpush1.msra.mxu0 0.0
      %3987 = vmatprep.subr.mxu0 0.0
      %3988 = vmatpush1.msra.mxu0 0.0
      %3989 = vmatprep.subr.mxu0 0.0
      %3990 = vmatpush1.msra.mxu0 0.0
      %3991 = vmatprep.subr.mxu0 0.0
      %3992 = vmatpush1.msra.mxu0 0.0
      %3993 = vmatprep.subr.mxu0 0.0
      %3994 = vmatpush1.msra.mxu0 0.0
      %3995 = vmatprep.subr.mxu0 0.0
      %3996 = vmatpush1.msra.mxu0 0.0
      %3997 = vmatprep.subr.mxu0 0.0
      %3998 = vmatpush1.msra.mxu0 0.0
      %3999 = vmatprep.subr.mxu0 0.0
      %4000 = vmatpush1.msra.mxu0 0.0
      %4001 = vmatprep.subr.mxu0 0.0
      %4002 = vmatpush1.msra.mxu0 0.0
      %4003 = vmatprep.subr.mxu0 0.0
      %4004 = vmatpush1.msra.mxu0 0.0
      %4005 = vmatprep.subr.mxu0 0.0
      %4006 = vmatpush1.msra.mxu0 0.0
      %4007 = vmatprep.subr.mxu0 0.0
      %4008 = vmatpush1.msra.mxu0 0.0
      %4009 = vmatprep.subr.mxu0 0.0
      %4010 = vmatpush1.msra.mxu0 0.0
      %4011 = vmatprep.subr.mxu0 0.0
      %4012 = vmatpush1.msra.mxu0 0.0
      %4013 = vmatprep.subr.mxu0 0.0
      %4014 = vmatpush1.msra.mxu0 0.0
      %4015 = vmatprep.subr.mxu0 0.0
      %4016 = vmatpush1.msra.mxu0 0.0
      %4017 = vmatprep.subr.mxu0 0.0
      %4018 = vmatpush1.msra.mxu0 0.0
      %4019 = vmatprep.subr.mxu0 0.0
      %4020 = vmatpush1.msra.mxu0 0.0
      %4021 = vmatprep.subr.mxu0 0.0
      %4022 = vmatpush1.msra.mxu0 0.0
      %4023 = vmatprep.subr.mxu0 0.0
      %4024 = vmatpush1.msra.mxu0 0.0
      %4025 = vmatprep.subr.mxu0 0.0
      %4026 = vmatpush1.msra.mxu0 0.0
      %4027 = vmatprep.subr.mxu0 0.0
      %4028 = vmatpush1.msra.mxu0 0.0
      %4029 = vmatprep.subr.mxu0 0.0
      %4030 = vmatpush1.msra.mxu0 0.0
      %4031 = vmatprep.subr.mxu0 0.0
      %4032 = vmatpush1.msra.mxu0 0.0
      %4033 = vmatprep.subr.mxu0 0.0
      %4034 = vmatpush1.msra.mxu0 0.0
      %4035 = vmatprep.mubr.f32.mxu0 0.0
      %4036 = vmatmul.mubr.f32.gmra.mrb[0].mxu0 %v3969
      %v4037 = vpop.f32.mrb[0].mxu0
      %v4038 = vadd.f32 0.0, %v4037
      %v4039 = vpop.f32.mrb[0].mxu0
      %4040 = vdwg.mxu0
      %v4042 = vsel %vm509, %v3963, 0
      %4044 = vmatprep.subr.mxu0 0.0
      %4045 = vmatpush1.msra.mxu0 %v3967
      %4046 = vmatprep.subr.mxu0 0.0
      %4047 = vmatpush1.msra.mxu0 0.0
      %4048 = vmatprep.subr.mxu0 0.0
      %4049 = vmatpush1.msra.mxu0 0.0
      %4050 = vmatprep.subr.mxu0 0.0
      %4051 = vmatpush1.msra.mxu0 0.0
      %4052 = vmatprep.subr.mxu0 0.0
      %4053 = vmatpush1.msra.mxu0 0.0
      %4054 = vmatprep.subr.mxu0 0.0
      %4055 = vmatpush1.msra.mxu0 0.0
      %4056 = vmatprep.subr.mxu0 0.0
      %4057 = vmatpush1.msra.mxu0 0.0
      %4058 = vmatprep.subr.mxu0 0.0
      %4059 = vmatpush1.msra.mxu0 0.0
      %4060 = vmatprep.subr.mxu0 0.0
      %4061 = vmatpush1.msra.mxu0 0.0
      %4062 = vmatprep.subr.mxu0 0.0
      %4063 = vmatpush1.msra.mxu0 0.0
      %4064 = vmatprep.subr.mxu0 0.0
      %4065 = vmatpush1.msra.mxu0 0.0
      %4066 = vmatprep.subr.mxu0 0.0
      %4067 = vmatpush1.msra.mxu0 0.0
      %4068 = vmatprep.subr.mxu0 0.0
      %4069 = vmatpush1.msra.mxu0 0.0
      %4070 = vmatprep.subr.mxu0 0.0
      %4071 = vmatpush1.msra.mxu0 0.0
      %4072 = vmatprep.subr.mxu0 0.0
      %4073 = vmatpush1.msra.mxu0 0.0
      %4074 = vmatprep.subr.mxu0 0.0
      %4075 = vmatpush1.msra.mxu0 0.0
      %4076 = vmatprep.subr.mxu0 0.0
      %4077 = vmatpush1.msra.mxu0 0.0
      %4078 = vmatprep.subr.mxu0 0.0
      %4079 = vmatpush1.msra.mxu0 0.0
      %4080 = vmatprep.subr.mxu0 0.0
      %4081 = vmatpush1.msra.mxu0 0.0
      %4082 = vmatprep.subr.mxu0 0.0
      %4083 = vmatpush1.msra.mxu0 0.0
      %4084 = vmatprep.subr.mxu0 0.0
      %4085 = vmatpush1.msra.mxu0 0.0
      %4086 = vmatprep.subr.mxu0 0.0
      %4087 = vmatpush1.msra.mxu0 0.0
      %4088 = vmatprep.subr.mxu0 0.0
      %4089 = vmatpush1.msra.mxu0 0.0
      %4090 = vmatprep.subr.mxu0 0.0
      %4091 = vmatpush1.msra.mxu0 0.0
      %4092 = vmatprep.subr.mxu0 0.0
      %4093 = vmatpush1.msra.mxu0 0.0
      %4094 = vmatprep.subr.mxu0 0.0
      %4095 = vmatpush1.msra.mxu0 0.0
      %4096 = vmatprep.subr.mxu0 0.0
      %4097 = vmatpush1.msra.mxu0 0.0
      %4098 = vmatprep.subr.mxu0 0.0
      %4099 = vmatpush1.msra.mxu0 0.0
      %4100 = vmatprep.subr.mxu0 0.0
      %4101 = vmatpush1.msra.mxu0 0.0
      %4102 = vmatprep.subr.mxu0 0.0
      %4103 = vmatpush1.msra.mxu0 0.0
      %4104 = vmatprep.subr.mxu0 0.0
      %4105 = vmatpush1.msra.mxu0 0.0
      %4106 = vmatprep.subr.mxu0 0.0
      %4107 = vmatpush1.msra.mxu0 0.0
      %4108 = vmatprep.mubr.f32.mxu0 0.0
      %4109 = vmatmul.mubr.f32.gmra.mrb[0].mxu0 %v4042
      %v4110 = vpop.f32.mrb[0].mxu0
      %v4111 = vadd.f32 0.0, %v4110
      %v4112 = vpop.f32.mrb[0].mxu0
      %4113 = vdwg.mxu0
      %v4114 = vsub.f32 %v1066, %v4038
      %v4115 = vsub.f32 %v1066, %v4111
      %4116 = vmatprep.subr.mxu0 0.0
      %4117 = vmatpush1.msra.mxu0 %v4114
      %4118 = vmatprep.subr.mxu0 0.0
      %4119 = vmatpush1.msra.mxu0 0.0
      %4120 = vmatprep.subr.mxu0 0.0
      %4121 = vmatpush1.msra.mxu0 0.0
      %4122 = vmatprep.subr.mxu0 0.0
      %4123 = vmatpush1.msra.mxu0 0.0
      %4124 = vmatprep.subr.mxu0 0.0
      %4125 = vmatpush1.msra.mxu0 0.0
      %4126 = vmatprep.subr.mxu0 0.0
      %4127 = vmatpush1.msra.mxu0 0.0
      %4128 = vmatprep.subr.mxu0 0.0
      %4129 = vmatpush1.msra.mxu0 0.0
      %4130 = vmatprep.subr.mxu0 0.0
      %4131 = vmatpush1.msra.mxu0 0.0
      %4132 = vmatprep.subr.mxu0 0.0
      %4133 = vmatpush1.msra.mxu0 0.0
      %4134 = vmatprep.subr.mxu0 0.0
      %4135 = vmatpush1.msra.mxu0 0.0
      %4136 = vmatprep.subr.mxu0 0.0
      %4137 = vmatpush1.msra.mxu0 0.0
      %4138 = vmatprep.subr.mxu0 0.0
      %4139 = vmatpush1.msra.mxu0 0.0
      %4140 = vmatprep.subr.mxu0 0.0
      %4141 = vmatpush1.msra.mxu0 0.0
      %4142 = vmatprep.subr.mxu0 0.0
      %4143 = vmatpush1.msra.mxu0 0.0
      %4144 = vmatprep.subr.mxu0 0.0
      %4145 = vmatpush1.msra.mxu0 0.0
      %4146 = vmatprep.subr.mxu0 0.0
      %4147 = vmatpush1.msra.mxu0 0.0
      %4148 = vmatprep.subr.mxu0 0.0
      %4149 = vmatpush1.msra.mxu0 0.0
      %4150 = vmatprep.subr.mxu0 0.0
      %4151 = vmatpush1.msra.mxu0 0.0
      %4152 = vmatprep.subr.mxu0 0.0
      %4153 = vmatpush1.msra.mxu0 0.0
      %4154 = vmatprep.subr.mxu0 0.0
      %4155 = vmatpush1.msra.mxu0 0.0
      %4156 = vmatprep.subr.mxu0 0.0
      %4157 = vmatpush1.msra.mxu0 0.0
      %4158 = vmatprep.subr.mxu0 0.0
      %4159 = vmatpush1.msra.mxu0 0.0
      %4160 = vmatprep.subr.mxu0 0.0
      %4161 = vmatpush1.msra.mxu0 0.0
      %4162 = vmatprep.subr.mxu0 0.0
      %4163 = vmatpush1.msra.mxu0 0.0
      %4164 = vmatprep.subr.mxu0 0.0
      %4165 = vmatpush1.msra.mxu0 0.0
      %4166 = vmatprep.subr.mxu0 0.0
      %4167 = vmatpush1.msra.mxu0 0.0
      %4168 = vmatprep.subr.mxu0 0.0
      %4169 = vmatpush1.msra.mxu0 0.0
      %4170 = vmatprep.subr.mxu0 0.0
      %4171 = vmatpush1.msra.mxu0 0.0
      %4172 = vmatprep.subr.mxu0 0.0
      %4173 = vmatpush1.msra.mxu0 0.0
      %4174 = vmatprep.subr.mxu0 0.0
      %4175 = vmatpush1.msra.mxu0 0.0
      %4176 = vmatprep.subr.mxu0 0.0
      %4177 = vmatpush1.msra.mxu0 0.0
      %4178 = vmatprep.subr.mxu0 0.0
      %4179 = vmatpush1.msra.mxu0 0.0
      %4180 = vmatprep.mubr.f32.mxu0 0.0
      %4181 = vmatmul.mubr.f32.gmra.mrb[0].mxu0 %v3969
      %v4182 = vpop.f32.mrb[0].mxu0
      %v4183 = vadd.f32 0.0, %v4182
      %v4184 = vpop.f32.mrb[0].mxu0
      %4185 = vdwg.mxu0
      %4186 = vmatprep.subr.mxu0 0.0
      %4187 = vmatpush1.msra.mxu0 %v4115
      %4188 = vmatprep.subr.mxu0 0.0
      %4189 = vmatpush1.msra.mxu0 0.0
      %4190 = vmatprep.subr.mxu0 0.0
      %4191 = vmatpush1.msra.mxu0 0.0
      %4192 = vmatprep.subr.mxu0 0.0
      %4193 = vmatpush1.msra.mxu0 0.0
      %4194 = vmatprep.subr.mxu0 0.0
      %4195 = vmatpush1.msra.mxu0 0.0
      %4196 = vmatprep.subr.mxu0 0.0
      %4197 = vmatpush1.msra.mxu0 0.0
      %4198 = vmatprep.subr.mxu0 0.0
      %4199 = vmatpush1.msra.mxu0 0.0
      %4200 = vmatprep.subr.mxu0 0.0
      %4201 = vmatpush1.msra.mxu0 0.0
      %4202 = vmatprep.subr.mxu0 0.0
      %4203 = vmatpush1.msra.mxu0 0.0
      %4204 = vmatprep.subr.mxu0 0.0
      %4205 = vmatpush1.msra.mxu0 0.0
      %4206 = vmatprep.subr.mxu0 0.0
      %4207 = vmatpush1.msra.mxu0 0.0
      %4208 = vmatprep.subr.mxu0 0.0
      %4209 = vmatpush1.msra.mxu0 0.0
      %4210 = vmatprep.subr.mxu0 0.0
      %4211 = vmatpush1.msra.mxu0 0.0
      %4212 = vmatprep.subr.mxu0 0.0
      %4213 = vmatpush1.msra.mxu0 0.0
      %4214 = vmatprep.subr.mxu0 0.0
      %4215 = vmatpush1.msra.mxu0 0.0
      %4216 = vmatprep.subr.mxu0 0.0
      %4217 = vmatpush1.msra.mxu0 0.0
      %4218 = vmatprep.subr.mxu0 0.0
      %4219 = vmatpush1.msra.mxu0 0.0
      %4220 = vmatprep.subr.mxu0 0.0
      %4221 = vmatpush1.msra.mxu0 0.0
      %4222 = vmatprep.subr.mxu0 0.0
      %4223 = vmatpush1.msra.mxu0 0.0
      %4224 = vmatprep.subr.mxu0 0.0
      %4225 = vmatpush1.msra.mxu0 0.0
      %4226 = vmatprep.subr.mxu0 0.0
      %4227 = vmatpush1.msra.mxu0 0.0
      %4228 = vmatprep.subr.mxu0 0.0
      %4229 = vmatpush1.msra.mxu0 0.0
      %4230 = vmatprep.subr.mxu0 0.0
      %4231 = vmatpush1.msra.mxu0 0.0
      %4232 = vmatprep.subr.mxu0 0.0
      %4233 = vmatpush1.msra.mxu0 0.0
      %4234 = vmatprep.subr.mxu0 0.0
      %4235 = vmatpush1.msra.mxu0 0.0
      %4236 = vmatprep.subr.mxu0 0.0
      %4237 = vmatpush1.msra.mxu0 0.0
      %4238 = vmatprep.subr.mxu0 0.0
      %4239 = vmatpush1.msra.mxu0 0.0
      %4240 = vmatprep.subr.mxu0 0.0
      %4241 = vmatpush1.msra.mxu0 0.0
      %4242 = vmatprep.subr.mxu0 0.0
      %4243 = vmatpush1.msra.mxu0 0.0
      %4244 = vmatprep.subr.mxu0 0.0
      %4245 = vmatpush1.msra.mxu0 0.0
      %4246 = vmatprep.subr.mxu0 0.0
      %4247 = vmatpush1.msra.mxu0 0.0
      %4248 = vmatprep.subr.mxu0 0.0
      %4249 = vmatpush1.msra.mxu0 0.0
      %4250 = vmatprep.mubr.f32.mxu0 0.0
      %4251 = vmatmul.mubr.f32.gmra.mrb[0].mxu0 %v4042
      %v4252 = vpop.f32.mrb[0].mxu0
      %v4253 = vadd.f32 0.0, %v4252
      %v4254 = vpop.f32.mrb[0].mxu0
      %4255 = vdwg.mxu0
      %v4256 = vsub.f32 %v1215, %v4183
      %v4257 = vsub.f32 %v1215, %v4253
      %v4259 = vsel %vm509, %v3824, 0
      %4261 = vmatprep.subr.mxu0 0.0
      %4262 = vmatpush1.msra.mxu0 %v4256
      %4263 = vmatprep.subr.mxu0 0.0
      %4264 = vmatpush1.msra.mxu0 0.0
      %4265 = vmatprep.subr.mxu0 0.0
      %4266 = vmatpush1.msra.mxu0 0.0
      %4267 = vmatprep.subr.mxu0 0.0
      %4268 = vmatpush1.msra.mxu0 0.0
      %4269 = vmatprep.subr.mxu0 0.0
      %4270 = vmatpush1.msra.mxu0 0.0
      %4271 = vmatprep.subr.mxu0 0.0
      %4272 = vmatpush1.msra.mxu0 0.0
      %4273 = vmatprep.subr.mxu0 0.0
      %4274 = vmatpush1.msra.mxu0 0.0
      %4275 = vmatprep.subr.mxu0 0.0
      %4276 = vmatpush1.msra.mxu0 0.0
      %4277 = vmatprep.subr.mxu0 0.0
      %4278 = vmatpush1.msra.mxu0 0.0
      %4279 = vmatprep.subr.mxu0 0.0
      %4280 = vmatpush1.msra.mxu0 0.0
      %4281 = vmatprep.subr.mxu0 0.0
      %4282 = vmatpush1.msra.mxu0 0.0
      %4283 = vmatprep.subr.mxu0 0.0
      %4284 = vmatpush1.msra.mxu0 0.0
      %4285 = vmatprep.subr.mxu0 0.0
      %4286 = vmatpush1.msra.mxu0 0.0
      %4287 = vmatprep.subr.mxu0 0.0
      %4288 = vmatpush1.msra.mxu0 0.0
      %4289 = vmatprep.subr.mxu0 0.0
      %4290 = vmatpush1.msra.mxu0 0.0
      %4291 = vmatprep.subr.mxu0 0.0
      %4292 = vmatpush1.msra.mxu0 0.0
      %4293 = vmatprep.subr.mxu0 0.0
      %4294 = vmatpush1.msra.mxu0 0.0
      %4295 = vmatprep.subr.mxu0 0.0
      %4296 = vmatpush1.msra.mxu0 0.0
      %4297 = vmatprep.subr.mxu0 0.0
      %4298 = vmatpush1.msra.mxu0 0.0
      %4299 = vmatprep.subr.mxu0 0.0
      %4300 = vmatpush1.msra.mxu0 0.0
      %4301 = vmatprep.subr.mxu0 0.0
      %4302 = vmatpush1.msra.mxu0 0.0
      %4303 = vmatprep.subr.mxu0 0.0
      %4304 = vmatpush1.msra.mxu0 0.0
      %4305 = vmatprep.subr.mxu0 0.0
      %4306 = vmatpush1.msra.mxu0 0.0
      %4307 = vmatprep.subr.mxu0 0.0
      %4308 = vmatpush1.msra.mxu0 0.0
      %4309 = vmatprep.subr.mxu0 0.0
      %4310 = vmatpush1.msra.mxu0 0.0
      %4311 = vmatprep.subr.mxu0 0.0
      %4312 = vmatpush1.msra.mxu0 0.0
      %4313 = vmatprep.subr.mxu0 0.0
      %4314 = vmatpush1.msra.mxu0 0.0
      %4315 = vmatprep.subr.mxu0 0.0
      %4316 = vmatpush1.msra.mxu0 0.0
      %4317 = vmatprep.subr.mxu0 0.0
      %4318 = vmatpush1.msra.mxu0 0.0
      %4319 = vmatprep.subr.mxu0 0.0
      %4320 = vmatpush1.msra.mxu0 0.0
      %4321 = vmatprep.subr.mxu0 0.0
      %4322 = vmatpush1.msra.mxu0 0.0
      %4323 = vmatprep.subr.mxu0 0.0
      %4324 = vmatpush1.msra.mxu0 0.0
      %4325 = vmatprep.mubr.f32.mxu0 0.0
      %4326 = vmatmul.mubr.f32.gmra.mrb[0].mxu0 %v4259
      %v4327 = vpop.f32.mrb[0].mxu0
      %v4328 = vadd.f32 0.0, %v4327
      %v4329 = vpop.f32.mrb[0].mxu0
      %4330 = vdwg.mxu0
      %v4332 = vsel %vm509, %v3825, 0
      %4334 = vmatprep.subr.mxu0 0.0
      %4335 = vmatpush1.msra.mxu0 %v4257
      %4336 = vmatprep.subr.mxu0 0.0
      %4337 = vmatpush1.msra.mxu0 0.0
      %4338 = vmatprep.subr.mxu0 0.0
      %4339 = vmatpush1.msra.mxu0 0.0
      %4340 = vmatprep.subr.mxu0 0.0
      %4341 = vmatpush1.msra.mxu0 0.0
      %4342 = vmatprep.subr.mxu0 0.0
      %4343 = vmatpush1.msra.mxu0 0.0
      %4344 = vmatprep.subr.mxu0 0.0
      %4345 = vmatpush1.msra.mxu0 0.0
      %4346 = vmatprep.subr.mxu0 0.0
      %4347 = vmatpush1.msra.mxu0 0.0
      %4348 = vmatprep.subr.mxu0 0.0
      %4349 = vmatpush1.msra.mxu0 0.0
      %4350 = vmatprep.subr.mxu0 0.0
      %4351 = vmatpush1.msra.mxu0 0.0
      %4352 = vmatprep.subr.mxu0 0.0
      %4353 = vmatpush1.msra.mxu0 0.0
      %4354 = vmatprep.subr.mxu0 0.0
      %4355 = vmatpush1.msra.mxu0 0.0
      %4356 = vmatprep.subr.mxu0 0.0
      %4357 = vmatpush1.msra.mxu0 0.0
      %4358 = vmatprep.subr.mxu0 0.0
      %4359 = vmatpush1.msra.mxu0 0.0
      %4360 = vmatprep.subr.mxu0 0.0
      %4361 = vmatpush1.msra.mxu0 0.0
      %4362 = vmatprep.subr.mxu0 0.0
      %4363 = vmatpush1.msra.mxu0 0.0
      %4364 = vmatprep.subr.mxu0 0.0
      %4365 = vmatpush1.msra.mxu0 0.0
      %4366 = vmatprep.subr.mxu0 0.0
      %4367 = vmatpush1.msra.mxu0 0.0
      %4368 = vmatprep.subr.mxu0 0.0
      %4369 = vmatpush1.msra.mxu0 0.0
      %4370 = vmatprep.subr.mxu0 0.0
      %4371 = vmatpush1.msra.mxu0 0.0
      %4372 = vmatprep.subr.mxu0 0.0
      %4373 = vmatpush1.msra.mxu0 0.0
      %4374 = vmatprep.subr.mxu0 0.0
      %4375 = vmatpush1.msra.mxu0 0.0
      %4376 = vmatprep.subr.mxu0 0.0
      %4377 = vmatpush1.msra.mxu0 0.0
      %4378 = vmatprep.subr.mxu0 0.0
      %4379 = vmatpush1.msra.mxu0 0.0
      %4380 = vmatprep.subr.mxu0 0.0
      %4381 = vmatpush1.msra.mxu0 0.0
      %4382 = vmatprep.subr.mxu0 0.0
      %4383 = vmatpush1.msra.mxu0 0.0
      %4384 = vmatprep.subr.mxu0 0.0
      %4385 = vmatpush1.msra.mxu0 0.0
      %4386 = vmatprep.subr.mxu0 0.0
      %4387 = vmatpush1.msra.mxu0 0.0
      %4388 = vmatprep.subr.mxu0 0.0
      %4389 = vmatpush1.msra.mxu0 0.0
      %4390 = vmatprep.subr.mxu0 0.0
      %4391 = vmatpush1.msra.mxu0 0.0
      %4392 = vmatprep.subr.mxu0 0.0
      %4393 = vmatpush1.msra.mxu0 0.0
      %4394 = vmatprep.subr.mxu0 0.0
      %4395 = vmatpush1.msra.mxu0 0.0
      %4396 = vmatprep.subr.mxu0 0.0
      %4397 = vmatpush1.msra.mxu0 0.0
      %4398 = vmatprep.mubr.f32.mxu0 0.0
      %4399 = vmatmul.mubr.f32.gmra.mrb[0].mxu0 %v4332
      %v4400 = vpop.f32.mrb[0].mxu0
      %v4401 = vadd.f32 0.0, %v4400
      %v4402 = vpop.f32.mrb[0].mxu0
      %4403 = vdwg.mxu0
      %v4404 = vmul.f32 %v4328, 0.25
      %v4405 = vmul.f32 %v4401, 0.25
      %v4406 = vpack.c.bf16 %v840, %v840
      %v4407 = vpack.c.bf16 %v841, %v841
      %v4409 = vsel %vm414, %v4406, 0
      %4411 = vmatprep.subr.bf16.mxu0 0
      %4412 = vmatpush1.bf16.msra.mxu0 %v408
      %4413 = vmatprep.subr.bf16.mxu0 0
      %4414 = vmatpush1.bf16.msra.mxu0 0
      %4415 = vmatprep.subr.bf16.mxu0 0
      %4416 = vmatpush1.bf16.msra.mxu0 0
      %4417 = vmatprep.subr.bf16.mxu0 0
      %4418 = vmatpush1.bf16.msra.mxu0 0
      %4419 = vmatprep.subr.bf16.mxu0 0
      %4420 = vmatpush1.bf16.msra.mxu0 0
      %4421 = vmatprep.subr.bf16.mxu0 0
      %4422 = vmatpush1.bf16.msra.mxu0 0
      %4423 = vmatprep.subr.bf16.mxu0 0
      %4424 = vmatpush1.bf16.msra.mxu0 0
      %4425 = vmatprep.subr.bf16.mxu0 0
      %4426 = vmatpush1.bf16.msra.mxu0 0
      %4427 = vmatprep.subr.bf16.mxu0 0
      %4428 = vmatpush1.bf16.msra.mxu0 0
      %4429 = vmatprep.subr.bf16.mxu0 0
      %4430 = vmatpush1.bf16.msra.mxu0 0
      %4431 = vmatprep.subr.bf16.mxu0 0
      %4432 = vmatpush1.bf16.msra.mxu0 0
      %4433 = vmatprep.subr.bf16.mxu0 0
      %4434 = vmatpush1.bf16.msra.mxu0 0
      %4435 = vmatprep.subr.bf16.mxu0 0
      %4436 = vmatpush1.bf16.msra.mxu0 0
      %4437 = vmatprep.subr.bf16.mxu0 0
      %4438 = vmatpush1.bf16.msra.mxu0 0
      %4439 = vmatprep.subr.bf16.mxu0 0
      %4440 = vmatpush1.bf16.msra.mxu0 0
      %4441 = vmatprep.subr.bf16.mxu0 0
      %4442 = vmatpush1.bf16.msra.mxu0 0
      %4443 = vmatprep.mubr.bf16.mxu0 0
      %4444 = vmatmul.mubr.bf16.gmra.mrb[0].mxu0 %v4409
      %v4445 = vpop.f32.mrb[0].mxu0
      %v4446 = vadd.f32 0.0, %v4445
      %v4447 = vpop.f32.mrb[0].mxu0
      %v4448 = vpop.f32.mrb[0].mxu0
      %v4449 = vpop.f32.mrb[0].mxu0
      %4450 = vdwg.mxu0
      %v4452 = vsel %vm414, %v4407, 0
      %4454 = vmatprep.subr.bf16.mxu0 0
      %4455 = vmatpush1.bf16.msra.mxu0 %v409
      %4456 = vmatprep.subr.bf16.mxu0 0
      %4457 = vmatpush1.bf16.msra.mxu0 0
      %4458 = vmatprep.subr.bf16.mxu0 0
      %4459 = vmatpush1.bf16.msra.mxu0 0
      %4460 = vmatprep.subr.bf16.mxu0 0
      %4461 = vmatpush1.bf16.msra.mxu0 0
      %4462 = vmatprep.subr.bf16.mxu0 0
      %4463 = vmatpush1.bf16.msra.mxu0 0
      %4464 = vmatprep.subr.bf16.mxu0 0
      %4465 = vmatpush1.bf16.msra.mxu0 0
      %4466 = vmatprep.subr.bf16.mxu0 0
      %4467 = vmatpush1.bf16.msra.mxu0 0
      %4468 = vmatprep.subr.bf16.mxu0 0
      %4469 = vmatpush1.bf16.msra.mxu0 0
      %4470 = vmatprep.subr.bf16.mxu0 0
      %4471 = vmatpush1.bf16.msra.mxu0 0
      %4472 = vmatprep.subr.bf16.mxu0 0
      %4473 = vmatpush1.bf16.msra.mxu0 0
      %4474 = vmatprep.subr.bf16.mxu0 0
      %4475 = vmatpush1.bf16.msra.mxu0 0
      %4476 = vmatprep.subr.bf16.mxu0 0
      %4477 = vmatpush1.bf16.msra.mxu0 0
      %4478 = vmatprep.subr.bf16.mxu0 0
      %4479 = vmatpush1.bf16.msra.mxu0 0
      %4480 = vmatprep.subr.bf16.mxu0 0
      %4481 = vmatpush1.bf16.msra.mxu0 0
      %4482 = vmatprep.subr.bf16.mxu0 0
      %4483 = vmatpush1.bf16.msra.mxu0 0
      %4484 = vmatprep.subr.bf16.mxu0 0
      %4485 = vmatpush1.bf16.msra.mxu0 0
      %4486 = vmatprep.mubr.bf16.mxu0 0
      %4487 = vmatmul.mubr.bf16.gmra.mrb[0].mxu0 %v4452
      %v4488 = vpop.f32.mrb[0].mxu0
      %v4489 = vadd.f32 0.0, %v4488
      %v4490 = vpop.f32.mrb[0].mxu0
      %v4491 = vpop.f32.mrb[0].mxu0
      %v4492 = vpop.f32.mrb[0].mxu0
      %4493 = vdwg.mxu0
      %v4494 = vpack.c.bf16 %v551, %v550
      %v4495 = vpack.c.bf16 %v553, %v552
      %v4496 = vpack.c.bf16 %v4404, %v4404
      %v4497 = vpack.c.bf16 %v4405, %v4405
      %v4499 = vsel %vm509, %v4494, 0
      %vm4501 = vcmask 1043456
      %v4503 = vsel %vm4501, %v4496, 0
      %4505 = vmatprep.subr.bf16.mxu0 0
      %4506 = vmatpush1.bf16.msra.mxu0 %v4503
      %4507 = vmatprep.subr.bf16.mxu0 0
      %4508 = vmatpush1.bf16.msra.mxu0 0
      %4509 = vmatprep.subr.bf16.mxu0 0
      %4510 = vmatpush1.bf16.msra.mxu0 0
      %4511 = vmatprep.subr.bf16.mxu0 0
      %4512 = vmatpush1.bf16.msra.mxu0 0
      %4513 = vmatprep.subr.bf16.mxu0 0
      %4514 = vmatpush1.bf16.msra.mxu0 0
      %4515 = vmatprep.subr.bf16.mxu0 0
      %4516 = vmatpush1.bf16.msra.mxu0 0
      %4517 = vmatprep.subr.bf16.mxu0 0
      %4518 = vmatpush1.bf16.msra.mxu0 0
      %4519 = vmatprep.subr.bf16.mxu0 0
      %4520 = vmatpush1.bf16.msra.mxu0 0
      %4521 = vmatprep.subr.bf16.mxu0 0
      %4522 = vmatpush1.bf16.msra.mxu0 0
      %4523 = vmatprep.subr.bf16.mxu0 0
      %4524 = vmatpush1.bf16.msra.mxu0 0
      %4525 = vmatprep.subr.bf16.mxu0 0
      %4526 = vmatpush1.bf16.msra.mxu0 0
      %4527 = vmatprep.subr.bf16.mxu0 0
      %4528 = vmatpush1.bf16.msra.mxu0 0
      %4529 = vmatprep.subr.bf16.mxu0 0
      %4530 = vmatpush1.bf16.msra.mxu0 0
      %4531 = vmatprep.subr.bf16.mxu0 0
      %4532 = vmatpush1.bf16.msra.mxu0 0
      %4533 = vmatprep.subr.bf16.mxu0 0
      %4534 = vmatpush1.bf16.msra.mxu0 0
      %4535 = vmatprep.subr.bf16.mxu0 0
      %4536 = vmatpush1.bf16.msra.mxu0 0
      %4537 = vmatprep.mubr.bf16.mxu0 0
      %4538 = vmatmul.mubr.bf16.gmra.mrb[0].mxu0 %v4499
      %v4539 = vpop.f32.mrb[0].mxu0
      %v4540 = vadd.f32 0.0, %v4539
      %v4541 = vpop.f32.mrb[0].mxu0
      %v4542 = vpop.f32.mrb[0].mxu0
      %v4543 = vadd.f32 0.0, %v4542
      %v4544 = vpop.f32.mrb[0].mxu0
      %4545 = vdwg.mxu0
      %v4547 = vsel %vm509, %v4495, 0
      %v4550 = vsel %vm4501, %v4497, 0
      %4552 = vmatprep.subr.bf16.mxu0 0
      %4553 = vmatpush1.bf16.msra.mxu0 %v4550
      %4554 = vmatprep.subr.bf16.mxu0 0
      %4555 = vmatpush1.bf16.msra.mxu0 0
      %4556 = vmatprep.subr.bf16.mxu0 0
      %4557 = vmatpush1.bf16.msra.mxu0 0
      %4558 = vmatprep.subr.bf16.mxu0 0
      %4559 = vmatpush1.bf16.msra.mxu0 0
      %4560 = vmatprep.subr.bf16.mxu0 0
      %4561 = vmatpush1.bf16.msra.mxu0 0
      %4562 = vmatprep.subr.bf16.mxu0 0
      %4563 = vmatpush1.bf16.msra.mxu0 0
      %4564 = vmatprep.subr.bf16.mxu0 0
      %4565 = vmatpush1.bf16.msra.mxu0 0
      %4566 = vmatprep.subr.bf16.mxu0 0
      %4567 = vmatpush1.bf16.msra.mxu0 0
      %4568 = vmatprep.subr.bf16.mxu0 0
      %4569 = vmatpush1.bf16.msra.mxu0 0
      %4570 = vmatprep.subr.bf16.mxu0 0
      %4571 = vmatpush1.bf16.msra.mxu0 0
      %4572 = vmatprep.subr.bf16.mxu0 0
      %4573 = vmatpush1.bf16.msra.mxu0 0
      %4574 = vmatprep.subr.bf16.mxu0 0
      %4575 = vmatpush1.bf16.msra.mxu0 0
      %4576 = vmatprep.subr.bf16.mxu0 0
      %4577 = vmatpush1.bf16.msra.mxu0 0
      %4578 = vmatprep.subr.bf16.mxu0 0
      %4579 = vmatpush1.bf16.msra.mxu0 0
      %4580 = vmatprep.subr.bf16.mxu0 0
      %4581 = vmatpush1.bf16.msra.mxu0 0
      %4582 = vmatprep.subr.bf16.mxu0 0
      %4583 = vmatpush1.bf16.msra.mxu0 0
      %4584 = vmatprep.mubr.bf16.mxu0 0
      %4585 = vmatmul.mubr.bf16.gmra.mrb[0].mxu0 %v4547
      %v4586 = vpop.f32.mrb[0].mxu0
      %v4587 = vadd.f32 0.0, %v4586
      %v4588 = vpop.f32.mrb[0].mxu0
      %v4589 = vpop.f32.mrb[0].mxu0
      %v4590 = vadd.f32 0.0, %v4589
      %v4591 = vpop.f32.mrb[0].mxu0
      %4592 = vdwg.mxu0
      %v4593 = vpack.c.bf16 %v4543, %v4540
      %v4594 = vpack.c.bf16 %v4590, %v4587
      %v4595 = vpack.c.bf16 %v4446, %v4446
      %v4596 = vpack.c.bf16 %v4489, %v4489
      %v4598 = vsel %vm509, %v4593, 0
      %v4601 = vsel %vm4501, %v4595, 0
      %4603 = vmatprep.subr.bf16.mxu0 0
      %4604 = vmatpush1.bf16.msra.mxu0 %v4601
      %4605 = vmatprep.subr.bf16.mxu0 0
      %4606 = vmatpush1.bf16.msra.mxu0 0
      %4607 = vmatprep.subr.bf16.mxu0 0
      %4608 = vmatpush1.bf16.msra.mxu0 0
      %4609 = vmatprep.subr.bf16.mxu0 0
      %4610 = vmatpush1.bf16.msra.mxu0 0
      %4611 = vmatprep.subr.bf16.mxu0 0
      %4612 = vmatpush1.bf16.msra.mxu0 0
      %4613 = vmatprep.subr.bf16.mxu0 0
      %4614 = vmatpush1.bf16.msra.mxu0 0
      %4615 = vmatprep.subr.bf16.mxu0 0
      %4616 = vmatpush1.bf16.msra.mxu0 0
      %4617 = vmatprep.subr.bf16.mxu0 0
      %4618 = vmatpush1.bf16.msra.mxu0 0
      %4619 = vmatprep.subr.bf16.mxu0 0
      %4620 = vmatpush1.bf16.msra.mxu0 0
      %4621 = vmatprep.subr.bf16.mxu0 0
      %4622 = vmatpush1.bf16.msra.mxu0 0
      %4623 = vmatprep.subr.bf16.mxu0 0
      %4624 = vmatpush1.bf16.msra.mxu0 0
      %4625 = vmatprep.subr.bf16.mxu0 0
      %4626 = vmatpush1.bf16.msra.mxu0 0
      %4627 = vmatprep.subr.bf16.mxu0 0
      %4628 = vmatpush1.bf16.msra.mxu0 0
      %4629 = vmatprep.subr.bf16.mxu0 0
      %4630 = vmatpush1.bf16.msra.mxu0 0
      %4631 = vmatprep.subr.bf16.mxu0 0
      %4632 = vmatpush1.bf16.msra.mxu0 0
      %4633 = vmatprep.subr.bf16.mxu0 0
      %4634 = vmatpush1.bf16.msra.mxu0 0
      %4635 = vmatprep.mubr.bf16.mxu0 0
      %4636 = vmatmul.mubr.bf16.gmra.mrb[0].mxu0 %v4598
      %v4637 = vpop.f32.mrb[0].mxu0
      %v4638 = vadd.f32 0.0, %v4637
      %v4639 = vpop.f32.mrb[0].mxu0
      %v4640 = vpop.f32.mrb[0].mxu0
      %v4641 = vadd.f32 0.0, %v4640
      %v4642 = vpop.f32.mrb[0].mxu0
      %4643 = vdwg.mxu0
      %v4645 = vsel %vm509, %v4594, 0
      %v4648 = vsel %vm4501, %v4596, 0
      %4650 = vmatprep.subr.bf16.mxu0 0
      %4651 = vmatpush1.bf16.msra.mxu0 %v4648
      %4652 = vmatprep.subr.bf16.mxu0 0
      %4653 = vmatpush1.bf16.msra.mxu0 0
      %4654 = vmatprep.subr.bf16.mxu0 0
      %4655 = vmatpush1.bf16.msra.mxu0 0
      %4656 = vmatprep.subr.bf16.mxu0 0
      %4657 = vmatpush1.bf16.msra.mxu0 0
      %4658 = vmatprep.subr.bf16.mxu0 0
      %4659 = vmatpush1.bf16.msra.mxu0 0
      %4660 = vmatprep.subr.bf16.mxu0 0
      %4661 = vmatpush1.bf16.msra.mxu0 0
      %4662 = vmatprep.subr.bf16.mxu0 0
      %4663 = vmatpush1.bf16.msra.mxu0 0
      %4664 = vmatprep.subr.bf16.mxu0 0
      %4665 = vmatpush1.bf16.msra.mxu0 0
      %4666 = vmatprep.subr.bf16.mxu0 0
      %4667 = vmatpush1.bf16.msra.mxu0 0
      %4668 = vmatprep.subr.bf16.mxu0 0
      %4669 = vmatpush1.bf16.msra.mxu0 0
      %4670 = vmatprep.subr.bf16.mxu0 0
      %4671 = vmatpush1.bf16.msra.mxu0 0
      %4672 = vmatprep.subr.bf16.mxu0 0
      %4673 = vmatpush1.bf16.msra.mxu0 0
      %4674 = vmatprep.subr.bf16.mxu0 0
      %4675 = vmatpush1.bf16.msra.mxu0 0
      %4676 = vmatprep.subr.bf16.mxu0 0
      %4677 = vmatpush1.bf16.msra.mxu0 0
      %4678 = vmatprep.subr.bf16.mxu0 0
      %4679 = vmatpush1.bf16.msra.mxu0 0
      %4680 = vmatprep.subr.bf16.mxu0 0
      %4681 = vmatpush1.bf16.msra.mxu0 0
      %4682 = vmatprep.mubr.bf16.mxu0 0
      %4683 = vmatmul.mubr.bf16.gmra.mrb[0].mxu0 %v4645
      %v4684 = vpop.f32.mrb[0].mxu0
      %v4685 = vadd.f32 0.0, %v4684
      %v4686 = vpop.f32.mrb[0].mxu0
      %v4687 = vpop.f32.mrb[0].mxu0
      %v4688 = vadd.f32 0.0, %v4687
      %v4689 = vpop.f32.mrb[0].mxu0
      %4690 = vdwg.mxu0
      %v4691 = vld [vmem:[%s6] sm:$0xf]
      %v4692 = vld [vmem:[%s6 + $0x4] sm:$0xf]
      %v4693 = vld [vmem:[%s6 + $0x8] sm:$0xf]
      %v4694 = vld [vmem:[%s6 + $0xc] sm:$0xf]
      %v4695 = vld [vmem:[%s7] sm:$0x1]
      %v4696 = vpack.c.bf16 %v4641, %v4638
      %v4697 = vpack.c.bf16 %v4688, %v4685
      %v4700 = vunpack.c.l.b16 %v4693
      %v4701 = vunpack.c.l.b16 %v4694
      %v4702 = vpack.c.b16 %v4701, %v4700
      %v4705 = vsel %vm414, %v4697, 0
      %4707 = vmatprep.subr.bf16.mxu0 0
      %4708 = vmatpush1.bf16.msra.mxu0 %v4702
      %4709 = vmatprep.subr.bf16.mxu0 0
      %4710 = vmatpush1.bf16.msra.mxu0 0
      %4711 = vmatprep.subr.bf16.mxu0 0
      %4712 = vmatpush1.bf16.msra.mxu0 0
      %4713 = vmatprep.subr.bf16.mxu0 0
      %4714 = vmatpush1.bf16.msra.mxu0 0
      %4715 = vmatprep.subr.bf16.mxu0 0
      %4716 = vmatpush1.bf16.msra.mxu0 0
      %4717 = vmatprep.subr.bf16.mxu0 0
      %4718 = vmatpush1.bf16.msra.mxu0 0
      %4719 = vmatprep.subr.bf16.mxu0 0
      %4720 = vmatpush1.bf16.msra.mxu0 0
      %4721 = vmatprep.subr.bf16.mxu0 0
      %4722 = vmatpush1.bf16.msra.mxu0 0
      %4723 = vmatprep.subr.bf16.mxu0 0
      %4724 = vmatpush1.bf16.msra.mxu0 0
      %4725 = vmatprep.subr.bf16.mxu0 0
      %4726 = vmatpush1.bf16.msra.mxu0 0
      %4727 = vmatprep.subr.bf16.mxu0 0
      %4728 = vmatpush1.bf16.msra.mxu0 0
      %4729 = vmatprep.subr.bf16.mxu0 0
      %4730 = vmatpush1.bf16.msra.mxu0 0
      %4731 = vmatprep.subr.bf16.mxu0 0
      %4732 = vmatpush1.bf16.msra.mxu0 0
      %4733 = vmatprep.subr.bf16.mxu0 0
      %4734 = vmatpush1.bf16.msra.mxu0 0
      %4735 = vmatprep.subr.bf16.mxu0 0
      %4736 = vmatpush1.bf16.msra.mxu0 0
      %4737 = vmatprep.subr.bf16.mxu0 0
      %4738 = vmatpush1.bf16.msra.mxu0 0
      %4739 = vmatprep.mubr.bf16.mxu0 0
      %4740 = vmatmul.mubr.bf16.gmra.mrb[0].mxu0 %v4705
      %v4741 = vpop.f32.mrb[0].mxu0
      %v4742 = vadd.f32 0.0, %v4741
      %v4743 = vpop.f32.mrb[0].mxu0
      %v4744 = vpop.f32.mrb[0].mxu0
      %v4745 = vadd.f32 0.0, %v4744
      %v4746 = vpop.f32.mrb[0].mxu0
      %4747 = vdwg.mxu0
      %v4750 = vunpack.c.l.b16 %v4691
      %v4751 = vunpack.c.l.b16 %v4692
      %v4752 = vpack.c.b16 %v4751, %v4750
      %v4755 = vsel %vm414, %v4696, 0
      %4757 = vmatprep.subr.bf16.mxu0 0
      %4758 = vmatpush1.bf16.msra.mxu0 %v4752
      %4759 = vmatprep.subr.bf16.mxu0 0
      %4760 = vmatpush1.bf16.msra.mxu0 0
      %4761 = vmatprep.subr.bf16.mxu0 0
      %4762 = vmatpush1.bf16.msra.mxu0 0
      %4763 = vmatprep.subr.bf16.mxu0 0
      %4764 = vmatpush1.bf16.msra.mxu0 0
      %4765 = vmatprep.subr.bf16.mxu0 0
      %4766 = vmatpush1.bf16.msra.mxu0 0
      %4767 = vmatprep.subr.bf16.mxu0 0
      %4768 = vmatpush1.bf16.msra.mxu0 0
      %4769 = vmatprep.subr.bf16.mxu0 0
      %4770 = vmatpush1.bf16.msra.mxu0 0
      %4771 = vmatprep.subr.bf16.mxu0 0
      %4772 = vmatpush1.bf16.msra.mxu0 0
      %4773 = vmatprep.subr.bf16.mxu0 0
      %4774 = vmatpush1.bf16.msra.mxu0 0
      %4775 = vmatprep.subr.bf16.mxu0 0
      %4776 = vmatpush1.bf16.msra.mxu0 0
      %4777 = vmatprep.subr.bf16.mxu0 0
      %4778 = vmatpush1.bf16.msra.mxu0 0
      %4779 = vmatprep.subr.bf16.mxu0 0
      %4780 = vmatpush1.bf16.msra.mxu0 0
      %4781 = vmatprep.subr.bf16.mxu0 0
      %4782 = vmatpush1.bf16.msra.mxu0 0
      %4783 = vmatprep.subr.bf16.mxu0 0
      %4784 = vmatpush1.bf16.msra.mxu0 0
      %4785 = vmatprep.subr.bf16.mxu0 0
      %4786 = vmatpush1.bf16.msra.mxu0 0
      %4787 = vmatprep.subr.bf16.mxu0 0
      %4788 = vmatpush1.bf16.msra.mxu0 0
      %4789 = vmatprep.mubr.bf16.mxu0 0
      %4790 = vmatmul.mubr.bf16.gmra.mrb[0].mxu0 %v4755
      %v4791 = vpop.f32.mrb[0].mxu0
      %v4792 = vadd.f32 %v4742, %v4791
      %v4793 = vpop.f32.mrb[0].mxu0
      %v4794 = vpop.f32.mrb[0].mxu0
      %v4795 = vadd.f32 %v4745, %v4794
      %v4796 = vpop.f32.mrb[0].mxu0
      %4797 = vdwg.mxu0
      %v4799 = vlaneseq
      %v4800 = vshrl.u32 %v4799, 7
      %v4801 = vsub.s32 0, %v4800
      %v4802 = vrot.slane %v4695, %v4801
      %v4804 = vadd.f32 %v4792, %v4802
      %v4805 = vadd.f32 %v4795, %v4802
      %vm4806 = vcmask 261120
      %4807 = vst.msk [vmem:[%s386] sm:$0xff] %vm4806, %v4804
      %4808 = vst.msk [vmem:[%s386 + $0x8] sm:$0xff] %vm4806, %v4805
      %p4809 = scmp.lt.s32.totalorder %s20, 1
      %s4810 = scalar_select %p4809, %s20, 1
      %s4811 = smul.addr %s4810, 2
      %s4812 = smul.addr %s4811, 8
      %s4813 = scalar_lea.vmem %s8, %s4812
      // Predicated region
      $region53: #{nystromformer_forward.13} parent=51 // pred_check
        %p4814 = pneg %p231
      $region54: #{nystromformer_forward.13} parent=51 // pred_check_branch
        %4816 = sbr.rel (%p4814) target = $region56
      $region55: #{nystromformer_forward.13} parent=51 // pred_region
        _
      $region56: #{nystromformer_forward.13} parent=51 // pred_fallthru
        _
    $region52: #{nystromformer_forward.13} parent=5 // pred_fallthru
      _
    %p4817 = scmp.le.s32.totalorder 2, %s15
    // Predicated region
    $region57: #{nystromformer_forward.13} parent=5 // pred_check
      %p4818 = pneg %p4817
    $region58: #{nystromformer_forward.13} parent=5 // pred_check_branch
      %4820 = sbr.rel (%p4818) target = $region60
    $region59: #{nystromformer_forward.13} parent=5 // pred_region
      %s4821 = ssub.s32 %s15, 2
      // Predicated region
      $region61: #{nystromformer_forward.13} parent=59 // pred_check
        %p4822 = pneg %p237
      $region62: #{nystromformer_forward.13} parent=59 // pred_check_branch
        %4824 = sbr.rel (%p4822) target = $region64
      $region63: #{nystromformer_forward.13} parent=59 // pred_region
        %p4825 = scmp.lt.s32.totalorder %s21, 1
        %s4826 = scalar_select %p4825, %s21, 1
        %s4827 = smul.addr %s4826, 2
        %s4828 = smul.addr %s4827, 8
        %s4829 = scalar_lea.vmem %s8, %s4828
      $region64: #{nystromformer_forward.13} parent=59 // pred_fallthru
        _
    $region60: #{nystromformer_forward.13} parent=5 // pred_fallthru
      _
  $region6: #{nystromformer_forward.13} parent=0 // loop_footer
    %s19 = sadd.s32 1, %s15
  $region7: #{nystromformer_forward.13} parent=0 // loop_footer_branch
    %14 = sbr.rel target = $region3
  $region8: #{nystromformer_forward.13} parent=0 // loop_exit
    _

</llo_original>
